<compile_context>
chip_gen: v7x
topology: tpu7x:2x2x1
jax: 0.10.0
libtpu: 0.0.40
codegen_flags: <defaults>
</compile_context>

<pallas_src>
import jax
import jax.numpy as jnp
from jax.experimental import pallas as pl
from jax.experimental.pallas import tpu as pltpu

# ----------------------------- configuration --------------------------------
B = 2            # batch
T = 8            # sequence length (word_size)
D_IN = 32        # lstm_input_size (bert_out feature dim)
H = 16           # lstm_hidden  -> bidirectional output = 2H = 32
LSTM_LAYERS = 2
HB = 32          # biaffine_hidden
NUM_CAT = 8      # dep_cats


# ----------------------------- fused Pallas kernel ---------------------------
def make_joint_kernel(T_, B_, H_, HB_, O_, n_layers):
    """Whole-model trunk: HighwayLSTM stack + ReLU + both biaffine heads."""
    H2 = 2 * H_
    BT = B_ * T_

    def kernel(*refs):
        (x_ref, m_ref, gsel_ref, ssel_ref, perm_ref) = refs[:5]
        lw = refs[5:5 + 7 * n_layers]
        (wb1_ref, bb1_ref, wb2_ref, bb2_ref,
         uu_ref, r1u_ref, r2u_ref, cu_ref,
         ud_ref, r1d_ref, r2d_ref, cd_ref) = refs[5 + 7 * n_layers:5 + 7 * n_layers + 12]
        unlab_ref, deprel_ref, seq_ref = refs[-3], refs[-2], refs[-1]

        f32 = jnp.float32
        mask_all = m_ref[...]                 # (T*B, 1) 1.0 = valid token
        gsel = gsel_ref[...] > 0.0            # (1, 8H) forward-direction gate columns
        ssel = ssel_ref[...] > 0.0            # (1, 2H) forward-direction state columns

        # ---------------- HighwayLSTM stack (both directions fused) ----------
        inp = x_ref[...]                      # (T*B, D_l), time-major rows t*B+b
        for l in range(n_layers):
            wih_ref, bih_ref, whh_ref, wg_ref, bg_ref, wh_ref, bh_ref = lw[7 * l:7 * l + 7]
            # input->gates for every timestep & both directions: ONE matmul
            pre = jnp.dot(inp, wih_ref[...], preferred_element_type=f32) + bih_ref[...]
            # highway gate / transform (independent of the recurrence)
            gate_all = jax.nn.sigmoid(
                jnp.dot(inp, wg_ref[...], preferred_element_type=f32) + bg_ref[...])
            hw_all = jnp.dot(inp, wh_ref[...], preferred_element_type=f32) + bh_ref[...]

            whh = whh_ref[...]                # (2H, 8H) block-diagonal fwd/bwd
            h_cat = jnp.zeros((B_, H2), f32)  # [h_fwd | h_bwd]
            c_cat = jnp.zeros((B_, H2), f32)
            for s in range(T_):               # statically unrolled recurrence
                r = T_ - 1 - s                # backward direction processes time r
                gx = jnp.where(gsel,
                               pre[s * B_:(s + 1) * B_, :],
                               pre[r * B_:(r + 1) * B_, :])                    # (B, 8H)
                gates = gx + jnp.dot(h_cat, whh, preferred_element_type=f32)   # (B, 8H)
                i_g = jax.nn.sigmoid(gates[:, 0 * H2:1 * H2])
                f_g = jax.nn.sigmoid(gates[:, 1 * H2:2 * H2])
                g_g = jnp.tanh(gates[:, 2 * H2:3 * H2])
                o_g = jax.nn.sigmoid(gates[:, 3 * H2:4 * H2])
                c_new = f_g * c_cat + i_g * g_g
                h_new = o_g * jnp.tanh(c_new)
                # packed-sequence semantics: padded steps keep state, output 0
                mvec = jnp.where(ssel,
                                 mask_all[s * B_:(s + 1) * B_, :],
                                 mask_all[r * B_:(r + 1) * B_, :])             # (B, 2H)
                keep = mvec > 0
                h_cat = jnp.where(keep, h_new, h_cat)
                c_cat = jnp.where(keep, c_new, c_cat)
                out_step = jnp.where(keep, h_new, 0.0)
                seq_ref[s * B_:(s + 1) * B_, 0:H_] = out_step[:, 0:H_]
                seq_ref[r * B_:(r + 1) * B_, H_:H2] = out_step[:, H_:H2]
            lstm_out = seq_ref[...]                                            # (T*B, 2H)
            inp = (lstm_out + gate_all * hw_all) * mask_all                    # next layer in

        unpacked = jnp.maximum(inp, 0.0)       # relu, still time-major (T*B, 2H)
        # time-major -> batch-major rows (b*T + t) via a constant permutation matmul
        unp_bt = jnp.dot(perm_ref[...], unpacked, preferred_element_type=f32)

        # ---------------- deep biaffine heads ---------------------------------
        # Shared hidden projections + first contraction + rank-1 bias terms are
        # computed ONCE over all B*T rows (no per-batch re-issue).
        dims = (((1,), (1,)), ((), ()))        # contract last axes (A @ Bmat^T)

        h1 = jnp.maximum(jnp.dot(unp_bt, wb1_ref[...], preferred_element_type=f32)
                         + bb1_ref[...], 0.0)                                  # (BT, 2HB)
        h2 = jnp.maximum(jnp.dot(unp_bt, wb2_ref[...], preferred_element_type=f32)
                         + bb2_ref[...], 0.0)                                  # (BT, 2HB)
        h1u, h1d = h1[:, 0:HB_], h1[:, HB_:2 * HB_]
        h2u, h2d = h2[:, 0:HB_], h2[:, HB_:2 * HB_]

        au = jnp.dot(h1u, uu_ref[...], preferred_element_type=f32)             # (BT, HB)
        ad = jnp.dot(h1d, ud_ref[...], preferred_element_type=f32)             # (BT, O*HB)
        r1u = jnp.dot(h1u, r1u_ref[...], preferred_element_type=f32) + cu_ref[...]   # (BT, 1)
        r1d = jnp.dot(h1d, r1d_ref[...], preferred_element_type=f32) + cd_ref[...]   # (BT, O)
        r2u = jax.lax.dot_general(r2u_ref[...], h2u, dims,
                                  preferred_element_type=f32)                  # (1, BT)
        r2d = jax.lax.dot_general(r2d_ref[...], h2d, dims,
                                  preferred_element_type=f32)                  # (O, BT)

        # unlabeled head: one (BT, HB) x (HB, BT) pass, keep per-batch diagonal blocks
        su_full = jax.lax.dot_general(au, h2u, dims, preferred_element_type=f32)  # (BT, BT)
        for b in range(B_):
            lo, hi = b * T_, (b + 1) * T_
            unlab_ref[b, :, :] = su_full[lo:hi, lo:hi] + r1u[lo:hi, :] + r2u[:, lo:hi]

        # dep-rel head: one pass per class over all rows (8 matmuls instead of 16)
        for o in range(O_):
            so_full = jax.lax.dot_general(ad[:, o * HB_:(o + 1) * HB_], h2d, dims,
                                          preferred_element_type=f32)          # (BT, BT)
            for b in range(B_):
                lo, hi = b * T_, (b + 1) * T_
                deprel_ref[b, o, :, :] = (so_full[lo:hi, lo:hi]
                                          + r1d[lo:hi, o:o + 1]
                                          + r2d[o:o + 1, lo:hi])

    return kernel


def _full_spec(arr):
    nd = arr.ndim
    return pl.BlockSpec(arr.shape, lambda i, nd=nd: (0,) * nd)


def fused_parser(x_tm, m_tm, packed, B_, T_, H_, HB_, O_, L_):
    """x_tm: (T*B, D) time-major bert_out, m_tm: (T*B, 1) valid mask."""
    # constant selector / permutation inputs (constant-folded by XLA)
    col8 = jnp.arange(8 * H_, dtype=jnp.int32)[None, :]
    gsel = (((col8 // H_) % 2) == 0).astype(jnp.float32)                # (1, 8H)
    ssel = (jnp.arange(2 * H_, dtype=jnp.int32)[None, :] < H_).astype(jnp.float32)
    q = jnp.arange(B_ * T_, dtype=jnp.int32)[:, None]
    rr = jnp.arange(T_ * B_, dtype=jnp.int32)[None, :]
    perm = (rr == (q % T_) * B_ + (q // T_)).astype(jnp.float32)        # (B*T, T*B)

    args = (x_tm, m_tm, gsel, ssel, perm) + tuple(packed)
    out_shape = (jax.ShapeDtypeStruct((B_, T_, T_), jnp.float32),
                 jax.ShapeDtypeStruct((B_, O_, T_, T_), jnp.float32))
    out_specs = [pl.BlockSpec((B_, T_, T_), lambda i: (0, 0, 0)),
                 pl.BlockSpec((B_, O_, T_, T_), lambda i: (0, 0, 0, 0))]
    return pl.pallas_call(
        make_joint_kernel(T_, B_, H_, HB_, O_, L_),
        out_shape=out_shape,
        grid_spec=pltpu.PrefetchScalarGridSpec(
            num_scalar_prefetch=0,
            grid=(1,),
            in_specs=[_full_spec(a) for a in args],
            out_specs=out_specs,
            scratch_shapes=[pltpu.VMEM((T_ * B_, 2 * H_), jnp.float32)]),
        compiler_params=pltpu.CompilerParams(dimension_semantics=("arbitrary",)),
    )(*args)


# ----------------------------- forward (glue) --------------------------------
def cross_entropy_sum(logits_bct, targets_bt, ignore_index):
    """nn.CrossEntropyLoss(ignore_index=.., reduction='sum'). logits: (B,C,L)."""
    logp = jax.nn.log_softmax(logits_bct, axis=1)
    Cn = logits_bct.shape[1]
    safe_t = jnp.clip(targets_bt, 0, Cn - 1)
    nll = -jnp.take_along_axis(logp, safe_t[:, None, :], axis=1)[:, 0, :]
    return jnp.sum(jnp.where(targets_bt == ignore_index, 0.0, nll))


def joint_parser_forward(packed, masks, bert_out, heads, dep_rels, pos_ids, sent_lens):
    """task='DEP', training=True branch of JointParser.forward."""
    del pos_ids  # unused on this branch
    Bb, Tt = masks.shape
    valid = jnp.logical_not(masks).astype(jnp.float32)                      # (B, T)
    x_tm = jnp.transpose(bert_out, (1, 0, 2)).reshape(Tt * Bb, bert_out.shape[-1])
    m_tm = jnp.transpose(valid, (1, 0)).reshape(Tt * Bb, 1)

    unlabeled_scores, deprel_bott = fused_parser(
        x_tm, m_tm, packed, Bb, Tt, H, HB, NUM_CAT, LSTM_LAYERS)
    # unlabeled_scores: (B, T, T);  deprel_bott: (B, O, T, T) [b, o, dep_i, head_j]

    Cn = deprel_bott.shape[1]
    diag = jnp.eye(Tt, dtype=bool)
    unlabeled_scores = jnp.where(diag[None, :, :], -jnp.inf, unlabeled_scores)

    # head_scores[b, c, i] = deprel[b, c, i, heads[b, i]]  (gather on axis=3, no transpose)
    idx = jnp.broadcast_to(heads[:, None, :, None], (Bb, Cn, Tt, 1))
    head_scores = jnp.take_along_axis(deprel_bott, idx, axis=3)[..., 0]     # (B, C, T)

    # "no_grad" diagnostics
    cat_mask = (jnp.arange(Cn) < 4)[None, :, None, None]
    deprel_save = jnp.where(cat_mask, -jnp.inf, deprel_bott)
    preds0 = jax.nn.log_softmax(unlabeled_scores, axis=2)
    preds1 = jnp.argmax(deprel_save, axis=1)                                # (B, T, T)
    arc_scores = jnp.argmax(unlabeled_scores, axis=2)
    dep_scores = preds1
    dep_ind_preds = jnp.take_along_axis(dep_scores, arc_scores[:, :, None], axis=2)[:, :, 0]
    total = jnp.sum(sent_lens).astype(jnp.float32)
    head_eq = jnp.sum(arc_scores[:, 1:] == heads[:, 1:])
    rel_eq = jnp.sum(dep_ind_preds == dep_rels)
    acc = rel_eq.astype(jnp.float32) / total
    head_acc = head_eq.astype(jnp.float32) / total

    # losses
    heads_ = jnp.where(masks, -1, heads)
    deprel_loss = cross_entropy_sum(head_scores, dep_rels, ignore_index=0)
    logits_arc = jnp.transpose(unlabeled_scores[:, 1:, :], (0, 2, 1))       # (B, T, T-1)
    depind_loss = cross_entropy_sum(logits_arc, heads_[:, 1:], ignore_index=-1)
    loss = (deprel_loss + depind_loss) / total
    deprel_loss = deprel_loss / total
    depind_loss = depind_loss / total
    preds = [preds0, preds1]
    return preds, loss, deprel_loss, depind_loss, acc, head_acc


# ----------------------------- parameter init / packing ----------------------
def uniform(key, shape, scale=0.1):
    return jax.random.uniform(key, shape, jnp.float32, -scale, scale)


def init_params(key):
    keys = iter(jax.random.split(key, 64))
    hlstm = []
    in_size = D_IN
    for _ in range(LSTM_LAYERS):
        layer = {
            "wih_f": uniform(next(keys), (in_size, 4 * H)),
            "whh_f": uniform(next(keys), (H, 4 * H)),
            "b_f": uniform(next(keys), (1, 4 * H)),
            "wih_b": uniform(next(keys), (in_size, 4 * H)),
            "whh_b": uniform(next(keys), (H, 4 * H)),
            "b_b": uniform(next(keys), (1, 4 * H)),
            "w_gate": uniform(next(keys), (2 * H, in_size)),
            "b_gate": jnp.zeros((2 * H,), jnp.float32),   # zero-init as in HighwayLSTM
            "w_high": uniform(next(keys), (2 * H, in_size)),
            "b_high": jnp.zeros((2 * H,), jnp.float32),
        }
        hlstm.append(layer)
        in_size = 2 * H

    def biaffine(o):
        d = 2 * H
        return {
            "w1": uniform(next(keys), (d, HB)),
            "b1": uniform(next(keys), (HB,)),
            "w2": uniform(next(keys), (d, HB)),
            "b2": uniform(next(keys), (HB,)),
            # TODO(synk): stanza zero-inits the bilinear weight/bias; random init used here
            "u": uniform(next(keys), (o, HB + 1, HB + 1), scale=0.05),
            "ubias": uniform(next(keys), (o,), scale=0.05),
        }

    return {"hlstm": hlstm, "unlabeled": biaffine(1), "dep_rel": biaffine(NUM_CAT)}


def pack_params(params):
    """Pack torch-layout params into the fused-kernel layouts (done once)."""
    def interleave(mf, mb, h):
        # per gate type (i,f,g,o): [forward H cols | backward H cols]
        parts = []
        for g in range(4):
            parts.append(mf[..., g * h:(g + 1) * h])
            parts.append(mb[..., g * h:(g + 1) * h])
        return jnp.concatenate(parts, axis=-1)

    flat = []
    for lp in params["hlstm"]:
        h = lp["whh_f"].shape[0]
        wih = interleave(lp["wih_f"], lp["wih_b"], h)            # (D, 8H)
        bih = interleave(lp["b_f"], lp["b_b"], h)                # (1, 8H)
        top = interleave(lp["whh_f"], jnp.zeros_like(lp["whh_f"]), h)
        bot = interleave(jnp.zeros_like(lp["whh_b"]), lp["whh_b"], h)
        whh = jnp.concatenate([top, bot], axis=0)                # (2H, 8H) block-diag
        wgate = lp["w_gate"].T                                   # (D, 2H)
        bgate = lp["b_gate"][None, :]                            # (1, 2H)
        whigh = lp["w_high"].T
        bhigh = lp["b_high"][None, :]
        flat += [wih, bih, whh, wgate, bgate, whigh, bhigh]

    bu, bd = params["unlabeled"], params["dep_rel"]
    wb1 = jnp.concatenate([bu["w1"], bd["w1"]], axis=1)          # (2H, 2*HB)
    bb1 = jnp.concatenate([bu["b1"], bd["b1"]])[None, :]
    wb2 = jnp.concatenate([bu["w2"], bd["w2"]], axis=1)
    bb2 = jnp.concatenate([bu["b2"], bd["b2"]])[None, :]
    flat += [wb1, bb1, wb2, bb2]

    def bilinear_parts(bp):
        u = bp["u"]                                              # (O, HB+1, HB+1)
        o, hb1, _ = u.shape
        hb = hb1 - 1
        u_hh = u[:, :hb, :hb]
        u2d = jnp.transpose(u_hh, (1, 0, 2)).reshape(hb, o * hb)  # (HB, O*HB)
        r1_w = jnp.transpose(u[:, :hb, hb])                      # (HB, O)
        r2_w = u[:, hb, :hb]                                     # (O, HB)
        const = (u[:, hb, hb] + bp["ubias"])[None, :]            # (1, O)
        return [u2d, r1_w, r2_w, const]

    flat += bilinear_parts(bu) + bilinear_parts(bd)
    return flat


# ----------------------------- main -------------------------------------------
if __name__ == "__main__":
    key = jax.random.PRNGKey(0)
    k_param, k_x, k_rel, k_pos = jax.random.split(key, 4)

    params = init_params(k_param)
    packed = tuple(pack_params(params))

    bert_out = jax.random.normal(k_x, (B, T, D_IN), jnp.float32)
    sent_lens = jnp.array([T, T - 2], jnp.int32)              # sorted descending
    masks = jnp.arange(T)[None, :] >= sent_lens[:, None]      # True = padded
    heads = jnp.broadcast_to(jnp.maximum(jnp.arange(T) - 1, 0), (B, T)).astype(jnp.int32)
    dep_rels = jax.random.randint(k_rel, (B, T), 0, NUM_CAT, jnp.int32)
    dep_rels = jnp.where(masks, 0, dep_rels)
    pos_ids = jax.random.randint(k_pos, (B, T), 0, 10, jnp.int32)

    fwd = jax.jit(joint_parser_forward)
    preds, loss, deprel_loss, depind_loss, acc, head_acc = fwd(
        packed, masks, bert_out, heads, dep_rels, pos_ids, sent_lens)

    jax.block_until_ready((preds, loss, deprel_loss, depind_loss, acc, head_acc))
    print("KERNEL_OK")
</pallas_src>

<mosaic_0001>
module attributes {stable_mosaic.version = 11 : i64} {
  func.func @kernel(%arg0: i32, %arg1: memref<16x32xf32, #tpu.memory_space<vmem>>, %arg2: memref<16x1xf32, #tpu.memory_space<vmem>>, %arg3: memref<1x128xf32, #tpu.memory_space<vmem>>, %arg4: memref<1x32xf32, #tpu.memory_space<vmem>>, %arg5: memref<16x16xf32, #tpu.memory_space<vmem>>, %arg6: memref<32x128xf32, #tpu.memory_space<vmem>>, %arg7: memref<1x128xf32, #tpu.memory_space<vmem>>, %arg8: memref<32x128xf32, #tpu.memory_space<vmem>>, %arg9: memref<32x32xf32, #tpu.memory_space<vmem>>, %arg10: memref<1x32xf32, #tpu.memory_space<vmem>>, %arg11: memref<32x32xf32, #tpu.memory_space<vmem>>, %arg12: memref<1x32xf32, #tpu.memory_space<vmem>>, %arg13: memref<32x128xf32, #tpu.memory_space<vmem>>, %arg14: memref<1x128xf32, #tpu.memory_space<vmem>>, %arg15: memref<32x128xf32, #tpu.memory_space<vmem>>, %arg16: memref<32x32xf32, #tpu.memory_space<vmem>>, %arg17: memref<1x32xf32, #tpu.memory_space<vmem>>, %arg18: memref<32x32xf32, #tpu.memory_space<vmem>>, %arg19: memref<1x32xf32, #tpu.memory_space<vmem>>, %arg20: memref<32x64xf32, #tpu.memory_space<vmem>>, %arg21: memref<1x64xf32, #tpu.memory_space<vmem>>, %arg22: memref<32x64xf32, #tpu.memory_space<vmem>>, %arg23: memref<1x64xf32, #tpu.memory_space<vmem>>, %arg24: memref<32x32xf32, #tpu.memory_space<vmem>>, %arg25: memref<32x1xf32, #tpu.memory_space<vmem>>, %arg26: memref<1x32xf32, #tpu.memory_space<vmem>>, %arg27: memref<1x1xf32, #tpu.memory_space<vmem>>, %arg28: memref<32x256xf32, #tpu.memory_space<vmem>>, %arg29: memref<32x8xf32, #tpu.memory_space<vmem>>, %arg30: memref<8x32xf32, #tpu.memory_space<vmem>>, %arg31: memref<1x8xf32, #tpu.memory_space<vmem>>, %arg32: memref<2x8x8xf32, #tpu.memory_space<vmem>>, %arg33: memref<2x8x8x8xf32, #tpu.memory_space<vmem>>, %arg34: memref<16x32xf32, #tpu.memory_space<vmem>>) attributes {dimension_semantics = [#tpu.dimension_semantics<arbitrary>], iteration_bounds = array<i64: 1>, scalar_prefetch = 0 : i64, scratch_operands = 1 : i64, tpu.core_type = #tpu.core_type<tc>, window_params = [{pipeline_mode = #tpu.pipeline_mode<synchronous>, transform_indices = @transform_0, window_bounds = array<i64: 16, 32>}, {pipeline_mode = #tpu.pipeline_mode<synchronous>, transform_indices = @transform_1, window_bounds = array<i64: 16, 1>}, {pipeline_mode = #tpu.pipeline_mode<synchronous>, transform_indices = @transform_2, window_bounds = array<i64: 1, 128>}, {pipeline_mode = #tpu.pipeline_mode<synchronous>, transform_indices = @transform_3, window_bounds = array<i64: 1, 32>}, {pipeline_mode = #tpu.pipeline_mode<synchronous>, transform_indices = @transform_4, window_bounds = array<i64: 16, 16>}, {pipeline_mode = #tpu.pipeline_mode<synchronous>, transform_indices = @transform_5, window_bounds = array<i64: 32, 128>}, {pipeline_mode = #tpu.pipeline_mode<synchronous>, transform_indices = @transform_6, window_bounds = array<i64: 1, 128>}, {pipeline_mode = #tpu.pipeline_mode<synchronous>, transform_indices = @transform_7, window_bounds = array<i64: 32, 128>}, {pipeline_mode = #tpu.pipeline_mode<synchronous>, transform_indices = @transform_8, window_bounds = array<i64: 32, 32>}, {pipeline_mode = #tpu.pipeline_mode<synchronous>, transform_indices = @transform_9, window_bounds = array<i64: 1, 32>}, {pipeline_mode = #tpu.pipeline_mode<synchronous>, transform_indices = @transform_10, window_bounds = array<i64: 32, 32>}, {pipeline_mode = #tpu.pipeline_mode<synchronous>, transform_indices = @transform_11, window_bounds = array<i64: 1, 32>}, {pipeline_mode = #tpu.pipeline_mode<synchronous>, transform_indices = @transform_12, window_bounds = array<i64: 32, 128>}, {pipeline_mode = #tpu.pipeline_mode<synchronous>, transform_indices = @transform_13, window_bounds = array<i64: 1, 128>}, {pipeline_mode = #tpu.pipeline_mode<synchronous>, transform_indices = @transform_14, window_bounds = array<i64: 32, 128>}, {pipeline_mode = #tpu.pipeline_mode<synchronous>, transform_indices = @transform_15, window_bounds = array<i64: 32, 32>}, {pipeline_mode = #tpu.pipeline_mode<synchronous>, transform_indices = @transform_16, window_bounds = array<i64: 1, 32>}, {pipeline_mode = #tpu.pipeline_mode<synchronous>, transform_indices = @transform_17, window_bounds = array<i64: 32, 32>}, {pipeline_mode = #tpu.pipeline_mode<synchronous>, transform_indices = @transform_18, window_bounds = array<i64: 1, 32>}, {pipeline_mode = #tpu.pipeline_mode<synchronous>, transform_indices = @transform_19, window_bounds = array<i64: 32, 64>}, {pipeline_mode = #tpu.pipeline_mode<synchronous>, transform_indices = @transform_20, window_bounds = array<i64: 1, 64>}, {pipeline_mode = #tpu.pipeline_mode<synchronous>, transform_indices = @transform_21, window_bounds = array<i64: 32, 64>}, {pipeline_mode = #tpu.pipeline_mode<synchronous>, transform_indices = @transform_22, window_bounds = array<i64: 1, 64>}, {pipeline_mode = #tpu.pipeline_mode<synchronous>, transform_indices = @transform_23, window_bounds = array<i64: 32, 32>}, {pipeline_mode = #tpu.pipeline_mode<synchronous>, transform_indices = @transform_24, window_bounds = array<i64: 32, 1>}, {pipeline_mode = #tpu.pipeline_mode<synchronous>, transform_indices = @transform_25, window_bounds = array<i64: 1, 32>}, {pipeline_mode = #tpu.pipeline_mode<synchronous>, transform_indices = @transform_26, window_bounds = array<i64: 1, 1>}, {pipeline_mode = #tpu.pipeline_mode<synchronous>, transform_indices = @transform_27, window_bounds = array<i64: 32, 256>}, {pipeline_mode = #tpu.pipeline_mode<synchronous>, transform_indices = @transform_28, window_bounds = array<i64: 32, 8>}, {pipeline_mode = #tpu.pipeline_mode<synchronous>, transform_indices = @transform_29, window_bounds = array<i64: 8, 32>}, {pipeline_mode = #tpu.pipeline_mode<synchronous>, transform_indices = @transform_30, window_bounds = array<i64: 1, 8>}, {pipeline_mode = #tpu.pipeline_mode<synchronous>, transform_indices = @transform_31, window_bounds = array<i64: 2, 8, 8>}, {pipeline_mode = #tpu.pipeline_mode<synchronous>, transform_indices = @transform_32, window_bounds = array<i64: 2, 8, 8, 8>}]} {
    %c0 = arith.constant 0 : index
    %c0_0 = arith.constant 0 : index
    %0 = vector.load %arg2[%c0, %c0_0] : memref<16x1xf32, #tpu.memory_space<vmem>>, vector<16x1xf32>
    %c0_1 = arith.constant 0 : index
    %c0_2 = arith.constant 0 : index
    %1 = vector.load %arg3[%c0_1, %c0_2] : memref<1x128xf32, #tpu.memory_space<vmem>>, vector<1x128xf32>
    %cst = arith.constant 0.000000e+00 : f32
    %2 = vector.broadcast %cst : f32 to vector<1x128xf32>
    %3 = arith.cmpf ogt, %1, %2 : vector<1x128xf32>
    %c0_3 = arith.constant 0 : index
    %c0_4 = arith.constant 0 : index
    %4 = vector.load %arg4[%c0_3, %c0_4] : memref<1x32xf32, #tpu.memory_space<vmem>>, vector<1x32xf32>
    %cst_5 = arith.constant 0.000000e+00 : f32
    %5 = vector.broadcast %cst_5 : f32 to vector<1x32xf32>
    %6 = arith.cmpf ogt, %4, %5 : vector<1x32xf32>
    %c0_6 = arith.constant 0 : index
    %c0_7 = arith.constant 0 : index
    %7 = vector.load %arg1[%c0_6, %c0_7] : memref<16x32xf32, #tpu.memory_space<vmem>>, vector<16x32xf32>
    %c0_8 = arith.constant 0 : index
    %c0_9 = arith.constant 0 : index
    %8 = vector.load %arg6[%c0_8, %c0_9] : memref<32x128xf32, #tpu.memory_space<vmem>>, vector<32x128xf32>
    %cst_10 = arith.constant dense<0.000000e+00> : vector<16x128xf32>
    %9 = tpu.matmul %7, %8, %cst_10 {dimension_numbers = #tpu.dot_dimension_numbers<[1], [0], [0], [1], [0, 0, 1, 1], [], []>} : vector<16x32xf32>, vector<32x128xf32>, vector<16x128xf32> -> vector<16x128xf32>
    %c0_11 = arith.constant 0 : index
    %c0_12 = arith.constant 0 : index
    %10 = vector.load %arg7[%c0_11, %c0_12] : memref<1x128xf32, #tpu.memory_space<vmem>>, vector<1x128xf32>
    %11 = vector.broadcast %10 : vector<1x128xf32> to vector<16x128xf32>
    %12 = arith.addf %9, %11 : vector<16x128xf32>
    %c0_13 = arith.constant 0 : index
    %c0_14 = arith.constant 0 : index
    %13 = vector.load %arg9[%c0_13, %c0_14] : memref<32x32xf32, #tpu.memory_space<vmem>>, vector<32x32xf32>
    %cst_15 = arith.constant dense<0.000000e+00> : vector<16x32xf32>
    %14 = tpu.matmul %7, %13, %cst_15 {dimension_numbers = #tpu.dot_dimension_numbers<[1], [0], [0], [1], [0, 0, 1, 1], [], []>} : vector<16x32xf32>, vector<32x32xf32>, vector<16x32xf32> -> vector<16x32xf32>
    %c0_16 = arith.constant 0 : index
    %c0_17 = arith.constant 0 : index
    %15 = vector.load %arg10[%c0_16, %c0_17] : memref<1x32xf32, #tpu.memory_space<vmem>>, vector<1x32xf32>
    %16 = vector.broadcast %15 : vector<1x32xf32> to vector<16x32xf32>
    %17 = arith.addf %14, %16 : vector<16x32xf32>
    %18 = arith.negf %17 : vector<16x32xf32>
    %19 = math.exp %18 : vector<16x32xf32>
    %cst_18 = arith.constant 1.000000e+00 : f32
    %20 = vector.broadcast %cst_18 : f32 to vector<16x32xf32>
    %21 = arith.addf %20, %19 : vector<16x32xf32>
    %22 = arith.divf %20, %21 : vector<16x32xf32>
    %c0_19 = arith.constant 0 : index
    %c0_20 = arith.constant 0 : index
    %23 = vector.load %arg11[%c0_19, %c0_20] : memref<32x32xf32, #tpu.memory_space<vmem>>, vector<32x32xf32>
    %cst_21 = arith.constant dense<0.000000e+00> : vector<16x32xf32>
    %24 = tpu.matmul %7, %23, %cst_21 {dimension_numbers = #tpu.dot_dimension_numbers<[1], [0], [0], [1], [0, 0, 1, 1], [], []>} : vector<16x32xf32>, vector<32x32xf32>, vector<16x32xf32> -> vector<16x32xf32>
    %c0_22 = arith.constant 0 : index
    %c0_23 = arith.constant 0 : index
    %25 = vector.load %arg12[%c0_22, %c0_23] : memref<1x32xf32, #tpu.memory_space<vmem>>, vector<1x32xf32>
    %26 = vector.broadcast %25 : vector<1x32xf32> to vector<16x32xf32>
    %27 = arith.addf %24, %26 : vector<16x32xf32>
    %c0_24 = arith.constant 0 : index
    %c0_25 = arith.constant 0 : index
    %28 = vector.load %arg8[%c0_24, %c0_25] : memref<32x128xf32, #tpu.memory_space<vmem>>, vector<32x128xf32>
    %cst_26 = arith.constant 0.000000e+00 : f32
    %29 = vector.broadcast %cst_26 : f32 to vector<2x32xf32>
    %cst_27 = arith.constant 0.000000e+00 : f32
    %30 = vector.broadcast %cst_27 : f32 to vector<2x32xf32>
    %31 = vector.extract_strided_slice %12 {offsets = [0, 0], sizes = [2, 128], strides = [1, 1]} : vector<16x128xf32> to vector<2x128xf32>
    %32 = vector.extract_strided_slice %12 {offsets = [14, 0], sizes = [2, 128], strides = [1, 1]} : vector<16x128xf32> to vector<2x128xf32>
    %33 = vector.shape_cast %3 : vector<1x128xi1> to vector<1x128xi1>
    %34 = vector.broadcast %33 : vector<1x128xi1> to vector<2x128xi1>
    %35 = arith.select %34, %31, %32 : vector<2x128xi1>, vector<2x128xf32>
    %cst_28 = arith.constant dense<0.000000e+00> : vector<2x128xf32>
    %36 = tpu.matmul %29, %28, %cst_28 {dimension_numbers = #tpu.dot_dimension_numbers<[1], [0], [0], [1], [0, 0, 1, 1], [], []>} : vector<2x32xf32>, vector<32x128xf32>, vector<2x128xf32> -> vector<2x128xf32>
    %37 = arith.addf %35, %36 : vector<2x128xf32>
    %38 = vector.extract_strided_slice %37 {offsets = [0, 0], sizes = [2, 32], strides = [1, 1]} : vector<2x128xf32> to vector<2x32xf32>
    %39 = arith.negf %38 : vector<2x32xf32>
    %40 = math.exp %39 : vector<2x32xf32>
    %cst_29 = arith.constant 1.000000e+00 : f32
    %41 = vector.broadcast %cst_29 : f32 to vector<2x32xf32>
    %42 = arith.addf %41, %40 : vector<2x32xf32>
    %43 = arith.divf %41, %42 : vector<2x32xf32>
    %44 = vector.extract_strided_slice %37 {offsets = [0, 32], sizes = [2, 32], strides = [1, 1]} : vector<2x128xf32> to vector<2x32xf32>
    %45 = arith.negf %44 : vector<2x32xf32>
    %46 = math.exp %45 : vector<2x32xf32>
    %cst_30 = arith.constant 1.000000e+00 : f32
    %47 = vector.broadcast %cst_30 : f32 to vector<2x32xf32>
    %48 = arith.addf %47, %46 : vector<2x32xf32>
    %49 = arith.divf %47, %48 : vector<2x32xf32>
    %50 = vector.extract_strided_slice %37 {offsets = [0, 64], sizes = [2, 32], strides = [1, 1]} : vector<2x128xf32> to vector<2x32xf32>
    %51 = math.tanh %50 : vector<2x32xf32>
    %52 = vector.extract_strided_slice %37 {offsets = [0, 96], sizes = [2, 32], strides = [1, 1]} : vector<2x128xf32> to vector<2x32xf32>
    %53 = arith.negf %52 : vector<2x32xf32>
    %54 = math.exp %53 : vector<2x32xf32>
    %cst_31 = arith.constant 1.000000e+00 : f32
    %55 = vector.broadcast %cst_31 : f32 to vector<2x32xf32>
    %56 = arith.addf %55, %54 : vector<2x32xf32>
    %57 = arith.divf %55, %56 : vector<2x32xf32>
    %58 = arith.mulf %49, %30 : vector<2x32xf32>
    %59 = arith.mulf %43, %51 : vector<2x32xf32>
    %60 = arith.addf %58, %59 : vector<2x32xf32>
    %61 = math.tanh %60 : vector<2x32xf32>
    %62 = arith.mulf %57, %61 : vector<2x32xf32>
    %63 = vector.extract_strided_slice %0 {offsets = [0, 0], sizes = [2, 1], strides = [1, 1]} : vector<16x1xf32> to vector<2x1xf32>
    %64 = vector.extract_strided_slice %0 {offsets = [14, 0], sizes = [2, 1], strides = [1, 1]} : vector<16x1xf32> to vector<2x1xf32>
    %65 = vector.shape_cast %6 : vector<1x32xi1> to vector<1x32xi1>
    %66 = vector.broadcast %65 : vector<1x32xi1> to vector<2x32xi1>
    %67 = vector.shape_cast %63 : vector<2x1xf32> to vector<2x1xf32>
    %68 = vector.broadcast %67 : vector<2x1xf32> to vector<2x32xf32>
    %69 = vector.shape_cast %64 : vector<2x1xf32> to vector<2x1xf32>
    %70 = vector.broadcast %69 : vector<2x1xf32> to vector<2x32xf32>
    %71 = arith.select %66, %68, %70 : vector<2x32xi1>, vector<2x32xf32>
    %cst_32 = arith.constant 0.000000e+00 : f32
    %72 = vector.broadcast %cst_32 : f32 to vector<2x32xf32>
    %73 = arith.cmpf ogt, %71, %72 : vector<2x32xf32>
    %74 = arith.select %73, %62, %29 : vector<2x32xi1>, vector<2x32xf32>
    %75 = arith.select %73, %60, %30 : vector<2x32xi1>, vector<2x32xf32>
    %cst_33 = arith.constant 0.000000e+00 : f32
    %76 = vector.broadcast %cst_33 : f32 to vector<2x32xf32>
    %77 = arith.select %73, %62, %76 : vector<2x32xi1>, vector<2x32xf32>
    %78 = vector.extract_strided_slice %77 {offsets = [0, 0], sizes = [2, 16], strides = [1, 1]} : vector<2x32xf32> to vector<2x16xf32>
    %c0_34 = arith.constant 0 : index
    %c0_35 = arith.constant 0 : index
    %79 = vector.load %arg34[%c0_34, %c0_35] : memref<16x32xf32, #tpu.memory_space<vmem>>, vector<2x16xf32>
    tpu.vector_store %arg34[%c0_34, %c0_35], %78 {strides = array<i32>} : memref<16x32xf32, #tpu.memory_space<vmem>>, vector<2x16xf32>,
    %80 = vector.extract_strided_slice %77 {offsets = [0, 16], sizes = [2, 16], strides = [1, 1]} : vector<2x32xf32> to vector<2x16xf32>
    %c14 = arith.constant 14 : index
    %c16 = arith.constant 16 : index
    %81 = vector.load %arg34[%c14, %c16] : memref<16x32xf32, #tpu.memory_space<vmem>>, vector<2x16xf32>
    tpu.vector_store %arg34[%c14, %c16], %80 {strides = array<i32>} : memref<16x32xf32, #tpu.memory_space<vmem>>, vector<2x16xf32>,
    %82 = vector.extract_strided_slice %12 {offsets = [2, 0], sizes = [2, 128], strides = [1, 1]} : vector<16x128xf32> to vector<2x128xf32>
    %83 = vector.extract_strided_slice %12 {offsets = [12, 0], sizes = [2, 128], strides = [1, 1]} : vector<16x128xf32> to vector<2x128xf32>
    %84 = vector.shape_cast %3 : vector<1x128xi1> to vector<1x128xi1>
    %85 = vector.broadcast %84 : vector<1x128xi1> to vector<2x128xi1>
    %86 = arith.select %85, %82, %83 : vector<2x128xi1>, vector<2x128xf32>
    %cst_36 = arith.constant dense<0.000000e+00> : vector<2x128xf32>
    %87 = tpu.matmul %74, %28, %cst_36 {dimension_numbers = #tpu.dot_dimension_numbers<[1], [0], [0], [1], [0, 0, 1, 1], [], []>} : vector<2x32xf32>, vector<32x128xf32>, vector<2x128xf32> -> vector<2x128xf32>
    %88 = arith.addf %86, %87 : vector<2x128xf32>
    %89 = vector.extract_strided_slice %88 {offsets = [0, 0], sizes = [2, 32], strides = [1, 1]} : vector<2x128xf32> to vector<2x32xf32>
    %90 = arith.negf %89 : vector<2x32xf32>
    %91 = math.exp %90 : vector<2x32xf32>
    %cst_37 = arith.constant 1.000000e+00 : f32
    %92 = vector.broadcast %cst_37 : f32 to vector<2x32xf32>
    %93 = arith.addf %92, %91 : vector<2x32xf32>
    %94 = arith.divf %92, %93 : vector<2x32xf32>
    %95 = vector.extract_strided_slice %88 {offsets = [0, 32], sizes = [2, 32], strides = [1, 1]} : vector<2x128xf32> to vector<2x32xf32>
    %96 = arith.negf %95 : vector<2x32xf32>
    %97 = math.exp %96 : vector<2x32xf32>
    %cst_38 = arith.constant 1.000000e+00 : f32
    %98 = vector.broadcast %cst_38 : f32 to vector<2x32xf32>
    %99 = arith.addf %98, %97 : vector<2x32xf32>
    %100 = arith.divf %98, %99 : vector<2x32xf32>
    %101 = vector.extract_strided_slice %88 {offsets = [0, 64], sizes = [2, 32], strides = [1, 1]} : vector<2x128xf32> to vector<2x32xf32>
    %102 = math.tanh %101 : vector<2x32xf32>
    %103 = vector.extract_strided_slice %88 {offsets = [0, 96], sizes = [2, 32], strides = [1, 1]} : vector<2x128xf32> to vector<2x32xf32>
    %104 = arith.negf %103 : vector<2x32xf32>
    %105 = math.exp %104 : vector<2x32xf32>
    %cst_39 = arith.constant 1.000000e+00 : f32
    %106 = vector.broadcast %cst_39 : f32 to vector<2x32xf32>
    %107 = arith.addf %106, %105 : vector<2x32xf32>
    %108 = arith.divf %106, %107 : vector<2x32xf32>
    %109 = arith.mulf %100, %75 : vector<2x32xf32>
    %110 = arith.mulf %94, %102 : vector<2x32xf32>
    %111 = arith.addf %109, %110 : vector<2x32xf32>
    %112 = math.tanh %111 : vector<2x32xf32>
    %113 = arith.mulf %108, %112 : vector<2x32xf32>
    %114 = vector.extract_strided_slice %0 {offsets = [2, 0], sizes = [2, 1], strides = [1, 1]} : vector<16x1xf32> to vector<2x1xf32>
    %115 = vector.extract_strided_slice %0 {offsets = [12, 0], sizes = [2, 1], strides = [1, 1]} : vector<16x1xf32> to vector<2x1xf32>
    %116 = vector.shape_cast %6 : vector<1x32xi1> to vector<1x32xi1>
    %117 = vector.broadcast %116 : vector<1x32xi1> to vector<2x32xi1>
    %118 = vector.shape_cast %114 : vector<2x1xf32> to vector<2x1xf32>
    %119 = vector.broadcast %118 : vector<2x1xf32> to vector<2x32xf32>
    %120 = vector.shape_cast %115 : vector<2x1xf32> to vector<2x1xf32>
    %121 = vector.broadcast %120 : vector<2x1xf32> to vector<2x32xf32>
    %122 = arith.select %117, %119, %121 : vector<2x32xi1>, vector<2x32xf32>
    %cst_40 = arith.constant 0.000000e+00 : f32
    %123 = vector.broadcast %cst_40 : f32 to vector<2x32xf32>
    %124 = arith.cmpf ogt, %122, %123 : vector<2x32xf32>
    %125 = arith.select %124, %113, %74 : vector<2x32xi1>, vector<2x32xf32>
    %126 = arith.select %124, %111, %75 : vector<2x32xi1>, vector<2x32xf32>
    %cst_41 = arith.constant 0.000000e+00 : f32
    %127 = vector.broadcast %cst_41 : f32 to vector<2x32xf32>
    %128 = arith.select %124, %113, %127 : vector<2x32xi1>, vector<2x32xf32>
    %129 = vector.extract_strided_slice %128 {offsets = [0, 0], sizes = [2, 16], strides = [1, 1]} : vector<2x32xf32> to vector<2x16xf32>
    %c2 = arith.constant 2 : index
    %c0_42 = arith.constant 0 : index
    %130 = vector.load %arg34[%c2, %c0_42] : memref<16x32xf32, #tpu.memory_space<vmem>>, vector<2x16xf32>
    tpu.vector_store %arg34[%c2, %c0_42], %129 {strides = array<i32>} : memref<16x32xf32, #tpu.memory_space<vmem>>, vector<2x16xf32>,
    %131 = vector.extract_strided_slice %128 {offsets = [0, 16], sizes = [2, 16], strides = [1, 1]} : vector<2x32xf32> to vector<2x16xf32>
    %c12 = arith.constant 12 : index
    %c16_43 = arith.constant 16 : index
    %132 = vector.load %arg34[%c12, %c16_43] : memref<16x32xf32, #tpu.memory_space<vmem>>, vector<2x16xf32>
    tpu.vector_store %arg34[%c12, %c16_43], %131 {strides = array<i32>} : memref<16x32xf32, #tpu.memory_space<vmem>>, vector<2x16xf32>,
    %133 = vector.extract_strided_slice %12 {offsets = [4, 0], sizes = [2, 128], strides = [1, 1]} : vector<16x128xf32> to vector<2x128xf32>
    %134 = vector.extract_strided_slice %12 {offsets = [10, 0], sizes = [2, 128], strides = [1, 1]} : vector<16x128xf32> to vector<2x128xf32>
    %135 = vector.shape_cast %3 : vector<1x128xi1> to vector<1x128xi1>
    %136 = vector.broadcast %135 : vector<1x128xi1> to vector<2x128xi1>
    %137 = arith.select %136, %133, %134 : vector<2x128xi1>, vector<2x128xf32>
    %cst_44 = arith.constant dense<0.000000e+00> : vector<2x128xf32>
    %138 = tpu.matmul %125, %28, %cst_44 {dimension_numbers = #tpu.dot_dimension_numbers<[1], [0], [0], [1], [0, 0, 1, 1], [], []>} : vector<2x32xf32>, vector<32x128xf32>, vector<2x128xf32> -> vector<2x128xf32>
    %139 = arith.addf %137, %138 : vector<2x128xf32>
    %140 = vector.extract_strided_slice %139 {offsets = [0, 0], sizes = [2, 32], strides = [1, 1]} : vector<2x128xf32> to vector<2x32xf32>
    %141 = arith.negf %140 : vector<2x32xf32>
    %142 = math.exp %141 : vector<2x32xf32>
    %cst_45 = arith.constant 1.000000e+00 : f32
    %143 = vector.broadcast %cst_45 : f32 to vector<2x32xf32>
    %144 = arith.addf %143, %142 : vector<2x32xf32>
    %145 = arith.divf %143, %144 : vector<2x32xf32>
    %146 = vector.extract_strided_slice %139 {offsets = [0, 32], sizes = [2, 32], strides = [1, 1]} : vector<2x128xf32> to vector<2x32xf32>
    %147 = arith.negf %146 : vector<2x32xf32>
    %148 = math.exp %147 : vector<2x32xf32>
    %cst_46 = arith.constant 1.000000e+00 : f32
    %149 = vector.broadcast %cst_46 : f32 to vector<2x32xf32>
    %150 = arith.addf %149, %148 : vector<2x32xf32>
    %151 = arith.divf %149, %150 : vector<2x32xf32>
    %152 = vector.extract_strided_slice %139 {offsets = [0, 64], sizes = [2, 32], strides = [1, 1]} : vector<2x128xf32> to vector<2x32xf32>
    %153 = math.tanh %152 : vector<2x32xf32>
    %154 = vector.extract_strided_slice %139 {offsets = [0, 96], sizes = [2, 32], strides = [1, 1]} : vector<2x128xf32> to vector<2x32xf32>
    %155 = arith.negf %154 : vector<2x32xf32>
    %156 = math.exp %155 : vector<2x32xf32>
    %cst_47 = arith.constant 1.000000e+00 : f32
    %157 = vector.broadcast %cst_47 : f32 to vector<2x32xf32>
    %158 = arith.addf %157, %156 : vector<2x32xf32>
    %159 = arith.divf %157, %158 : vector<2x32xf32>
    %160 = arith.mulf %151, %126 : vector<2x32xf32>
    %161 = arith.mulf %145, %153 : vector<2x32xf32>
    %162 = arith.addf %160, %161 : vector<2x32xf32>
    %163 = math.tanh %162 : vector<2x32xf32>
    %164 = arith.mulf %159, %163 : vector<2x32xf32>
    %165 = vector.extract_strided_slice %0 {offsets = [4, 0], sizes = [2, 1], strides = [1, 1]} : vector<16x1xf32> to vector<2x1xf32>
    %166 = vector.extract_strided_slice %0 {offsets = [10, 0], sizes = [2, 1], strides = [1, 1]} : vector<16x1xf32> to vector<2x1xf32>
    %167 = vector.shape_cast %6 : vector<1x32xi1> to vector<1x32xi1>
    %168 = vector.broadcast %167 : vector<1x32xi1> to vector<2x32xi1>
    %169 = vector.shape_cast %165 : vector<2x1xf32> to vector<2x1xf32>
    %170 = vector.broadcast %169 : vector<2x1xf32> to vector<2x32xf32>
    %171 = vector.shape_cast %166 : vector<2x1xf32> to vector<2x1xf32>
    %172 = vector.broadcast %171 : vector<2x1xf32> to vector<2x32xf32>
    %173 = arith.select %168, %170, %172 : vector<2x32xi1>, vector<2x32xf32>
    %cst_48 = arith.constant 0.000000e+00 : f32
    %174 = vector.broadcast %cst_48 : f32 to vector<2x32xf32>
    %175 = arith.cmpf ogt, %173, %174 : vector<2x32xf32>
    %176 = arith.select %175, %164, %125 : vector<2x32xi1>, vector<2x32xf32>
    %177 = arith.select %175, %162, %126 : vector<2x32xi1>, vector<2x32xf32>
    %cst_49 = arith.constant 0.000000e+00 : f32
    %178 = vector.broadcast %cst_49 : f32 to vector<2x32xf32>
    %179 = arith.select %175, %164, %178 : vector<2x32xi1>, vector<2x32xf32>
    %180 = vector.extract_strided_slice %179 {offsets = [0, 0], sizes = [2, 16], strides = [1, 1]} : vector<2x32xf32> to vector<2x16xf32>
    %c4 = arith.constant 4 : index
    %c0_50 = arith.constant 0 : index
    %181 = vector.load %arg34[%c4, %c0_50] : memref<16x32xf32, #tpu.memory_space<vmem>>, vector<2x16xf32>
    tpu.vector_store %arg34[%c4, %c0_50], %180 {strides = array<i32>} : memref<16x32xf32, #tpu.memory_space<vmem>>, vector<2x16xf32>,
    %182 = vector.extract_strided_slice %179 {offsets = [0, 16], sizes = [2, 16], strides = [1, 1]} : vector<2x32xf32> to vector<2x16xf32>
    %c10 = arith.constant 10 : index
    %c16_51 = arith.constant 16 : index
    %183 = vector.load %arg34[%c10, %c16_51] : memref<16x32xf32, #tpu.memory_space<vmem>>, vector<2x16xf32>
    tpu.vector_store %arg34[%c10, %c16_51], %182 {strides = array<i32>} : memref<16x32xf32, #tpu.memory_space<vmem>>, vector<2x16xf32>,
    %184 = vector.extract_strided_slice %12 {offsets = [6, 0], sizes = [2, 128], strides = [1, 1]} : vector<16x128xf32> to vector<2x128xf32>
    %185 = vector.extract_strided_slice %12 {offsets = [8, 0], sizes = [2, 128], strides = [1, 1]} : vector<16x128xf32> to vector<2x128xf32>
    %186 = vector.shape_cast %3 : vector<1x128xi1> to vector<1x128xi1>
    %187 = vector.broadcast %186 : vector<1x128xi1> to vector<2x128xi1>
    %188 = arith.select %187, %184, %185 : vector<2x128xi1>, vector<2x128xf32>
    %cst_52 = arith.constant dense<0.000000e+00> : vector<2x128xf32>
    %189 = tpu.matmul %176, %28, %cst_52 {dimension_numbers = #tpu.dot_dimension_numbers<[1], [0], [0], [1], [0, 0, 1, 1], [], []>} : vector<2x32xf32>, vector<32x128xf32>, vector<2x128xf32> -> vector<2x128xf32>
    %190 = arith.addf %188, %189 : vector<2x128xf32>
    %191 = vector.extract_strided_slice %190 {offsets = [0, 0], sizes = [2, 32], strides = [1, 1]} : vector<2x128xf32> to vector<2x32xf32>
    %192 = arith.negf %191 : vector<2x32xf32>
    %193 = math.exp %192 : vector<2x32xf32>
    %cst_53 = arith.constant 1.000000e+00 : f32
    %194 = vector.broadcast %cst_53 : f32 to vector<2x32xf32>
    %195 = arith.addf %194, %193 : vector<2x32xf32>
    %196 = arith.divf %194, %195 : vector<2x32xf32>
    %197 = vector.extract_strided_slice %190 {offsets = [0, 32], sizes = [2, 32], strides = [1, 1]} : vector<2x128xf32> to vector<2x32xf32>
    %198 = arith.negf %197 : vector<2x32xf32>
    %199 = math.exp %198 : vector<2x32xf32>
    %cst_54 = arith.constant 1.000000e+00 : f32
    %200 = vector.broadcast %cst_54 : f32 to vector<2x32xf32>
    %201 = arith.addf %200, %199 : vector<2x32xf32>
    %202 = arith.divf %200, %201 : vector<2x32xf32>
    %203 = vector.extract_strided_slice %190 {offsets = [0, 64], sizes = [2, 32], strides = [1, 1]} : vector<2x128xf32> to vector<2x32xf32>
    %204 = math.tanh %203 : vector<2x32xf32>
    %205 = vector.extract_strided_slice %190 {offsets = [0, 96], sizes = [2, 32], strides = [1, 1]} : vector<2x128xf32> to vector<2x32xf32>
    %206 = arith.negf %205 : vector<2x32xf32>
    %207 = math.exp %206 : vector<2x32xf32>
    %cst_55 = arith.constant 1.000000e+00 : f32
    %208 = vector.broadcast %cst_55 : f32 to vector<2x32xf32>
    %209 = arith.addf %208, %207 : vector<2x32xf32>
    %210 = arith.divf %208, %209 : vector<2x32xf32>
    %211 = arith.mulf %202, %177 : vector<2x32xf32>
    %212 = arith.mulf %196, %204 : vector<2x32xf32>
    %213 = arith.addf %211, %212 : vector<2x32xf32>
    %214 = math.tanh %213 : vector<2x32xf32>
    %215 = arith.mulf %210, %214 : vector<2x32xf32>
    %216 = vector.extract_strided_slice %0 {offsets = [6, 0], sizes = [2, 1], strides = [1, 1]} : vector<16x1xf32> to vector<2x1xf32>
    %217 = vector.extract_strided_slice %0 {offsets = [8, 0], sizes = [2, 1], strides = [1, 1]} : vector<16x1xf32> to vector<2x1xf32>
    %218 = vector.shape_cast %6 : vector<1x32xi1> to vector<1x32xi1>
    %219 = vector.broadcast %218 : vector<1x32xi1> to vector<2x32xi1>
    %220 = vector.shape_cast %216 : vector<2x1xf32> to vector<2x1xf32>
    %221 = vector.broadcast %220 : vector<2x1xf32> to vector<2x32xf32>
    %222 = vector.shape_cast %217 : vector<2x1xf32> to vector<2x1xf32>
    %223 = vector.broadcast %222 : vector<2x1xf32> to vector<2x32xf32>
    %224 = arith.select %219, %221, %223 : vector<2x32xi1>, vector<2x32xf32>
    %cst_56 = arith.constant 0.000000e+00 : f32
    %225 = vector.broadcast %cst_56 : f32 to vector<2x32xf32>
    %226 = arith.cmpf ogt, %224, %225 : vector<2x32xf32>
    %227 = arith.select %226, %215, %176 : vector<2x32xi1>, vector<2x32xf32>
    %228 = arith.select %226, %213, %177 : vector<2x32xi1>, vector<2x32xf32>
    %cst_57 = arith.constant 0.000000e+00 : f32
    %229 = vector.broadcast %cst_57 : f32 to vector<2x32xf32>
    %230 = arith.select %226, %215, %229 : vector<2x32xi1>, vector<2x32xf32>
    %231 = vector.extract_strided_slice %230 {offsets = [0, 0], sizes = [2, 16], strides = [1, 1]} : vector<2x32xf32> to vector<2x16xf32>
    %c6 = arith.constant 6 : index
    %c0_58 = arith.constant 0 : index
    %232 = vector.load %arg34[%c6, %c0_58] : memref<16x32xf32, #tpu.memory_space<vmem>>, vector<2x16xf32>
    tpu.vector_store %arg34[%c6, %c0_58], %231 {strides = array<i32>} : memref<16x32xf32, #tpu.memory_space<vmem>>, vector<2x16xf32>,
    %233 = vector.extract_strided_slice %230 {offsets = [0, 16], sizes = [2, 16], strides = [1, 1]} : vector<2x32xf32> to vector<2x16xf32>
    %c8 = arith.constant 8 : index
    %c16_59 = arith.constant 16 : index
    %234 = vector.load %arg34[%c8, %c16_59] : memref<16x32xf32, #tpu.memory_space<vmem>>, vector<2x16xf32>
    tpu.vector_store %arg34[%c8, %c16_59], %233 {strides = array<i32>} : memref<16x32xf32, #tpu.memory_space<vmem>>, vector<2x16xf32>,
    %235 = vector.extract_strided_slice %12 {offsets = [8, 0], sizes = [2, 128], strides = [1, 1]} : vector<16x128xf32> to vector<2x128xf32>
    %236 = vector.extract_strided_slice %12 {offsets = [6, 0], sizes = [2, 128], strides = [1, 1]} : vector<16x128xf32> to vector<2x128xf32>
    %237 = vector.shape_cast %3 : vector<1x128xi1> to vector<1x128xi1>
    %238 = vector.broadcast %237 : vector<1x128xi1> to vector<2x128xi1>
    %239 = arith.select %238, %235, %236 : vector<2x128xi1>, vector<2x128xf32>
    %cst_60 = arith.constant dense<0.000000e+00> : vector<2x128xf32>
    %240 = tpu.matmul %227, %28, %cst_60 {dimension_numbers = #tpu.dot_dimension_numbers<[1], [0], [0], [1], [0, 0, 1, 1], [], []>} : vector<2x32xf32>, vector<32x128xf32>, vector<2x128xf32> -> vector<2x128xf32>
    %241 = arith.addf %239, %240 : vector<2x128xf32>
    %242 = vector.extract_strided_slice %241 {offsets = [0, 0], sizes = [2, 32], strides = [1, 1]} : vector<2x128xf32> to vector<2x32xf32>
    %243 = arith.negf %242 : vector<2x32xf32>
    %244 = math.exp %243 : vector<2x32xf32>
    %cst_61 = arith.constant 1.000000e+00 : f32
    %245 = vector.broadcast %cst_61 : f32 to vector<2x32xf32>
    %246 = arith.addf %245, %244 : vector<2x32xf32>
    %247 = arith.divf %245, %246 : vector<2x32xf32>
    %248 = vector.extract_strided_slice %241 {offsets = [0, 32], sizes = [2, 32], strides = [1, 1]} : vector<2x128xf32> to vector<2x32xf32>
    %249 = arith.negf %248 : vector<2x32xf32>
    %250 = math.exp %249 : vector<2x32xf32>
    %cst_62 = arith.constant 1.000000e+00 : f32
    %251 = vector.broadcast %cst_62 : f32 to vector<2x32xf32>
    %252 = arith.addf %251, %250 : vector<2x32xf32>
    %253 = arith.divf %251, %252 : vector<2x32xf32>
    %254 = vector.extract_strided_slice %241 {offsets = [0, 64], sizes = [2, 32], strides = [1, 1]} : vector<2x128xf32> to vector<2x32xf32>
    %255 = math.tanh %254 : vector<2x32xf32>
    %256 = vector.extract_strided_slice %241 {offsets = [0, 96], sizes = [2, 32], strides = [1, 1]} : vector<2x128xf32> to vector<2x32xf32>
    %257 = arith.negf %256 : vector<2x32xf32>
    %258 = math.exp %257 : vector<2x32xf32>
    %cst_63 = arith.constant 1.000000e+00 : f32
    %259 = vector.broadcast %cst_63 : f32 to vector<2x32xf32>
    %260 = arith.addf %259, %258 : vector<2x32xf32>
    %261 = arith.divf %259, %260 : vector<2x32xf32>
    %262 = arith.mulf %253, %228 : vector<2x32xf32>
    %263 = arith.mulf %247, %255 : vector<2x32xf32>
    %264 = arith.addf %262, %263 : vector<2x32xf32>
    %265 = math.tanh %264 : vector<2x32xf32>
    %266 = arith.mulf %261, %265 : vector<2x32xf32>
    %267 = vector.extract_strided_slice %0 {offsets = [8, 0], sizes = [2, 1], strides = [1, 1]} : vector<16x1xf32> to vector<2x1xf32>
    %268 = vector.extract_strided_slice %0 {offsets = [6, 0], sizes = [2, 1], strides = [1, 1]} : vector<16x1xf32> to vector<2x1xf32>
    %269 = vector.shape_cast %6 : vector<1x32xi1> to vector<1x32xi1>
    %270 = vector.broadcast %269 : vector<1x32xi1> to vector<2x32xi1>
    %271 = vector.shape_cast %267 : vector<2x1xf32> to vector<2x1xf32>
    %272 = vector.broadcast %271 : vector<2x1xf32> to vector<2x32xf32>
    %273 = vector.shape_cast %268 : vector<2x1xf32> to vector<2x1xf32>
    %274 = vector.broadcast %273 : vector<2x1xf32> to vector<2x32xf32>
    %275 = arith.select %270, %272, %274 : vector<2x32xi1>, vector<2x32xf32>
    %cst_64 = arith.constant 0.000000e+00 : f32
    %276 = vector.broadcast %cst_64 : f32 to vector<2x32xf32>
    %277 = arith.cmpf ogt, %275, %276 : vector<2x32xf32>
    %278 = arith.select %277, %266, %227 : vector<2x32xi1>, vector<2x32xf32>
    %279 = arith.select %277, %264, %228 : vector<2x32xi1>, vector<2x32xf32>
    %cst_65 = arith.constant 0.000000e+00 : f32
    %280 = vector.broadcast %cst_65 : f32 to vector<2x32xf32>
    %281 = arith.select %277, %266, %280 : vector<2x32xi1>, vector<2x32xf32>
    %282 = vector.extract_strided_slice %281 {offsets = [0, 0], sizes = [2, 16], strides = [1, 1]} : vector<2x32xf32> to vector<2x16xf32>
    %c8_66 = arith.constant 8 : index
    %c0_67 = arith.constant 0 : index
    %283 = vector.load %arg34[%c8_66, %c0_67] : memref<16x32xf32, #tpu.memory_space<vmem>>, vector<2x16xf32>
    tpu.vector_store %arg34[%c8_66, %c0_67], %282 {strides = array<i32>} : memref<16x32xf32, #tpu.memory_space<vmem>>, vector<2x16xf32>,
    %284 = vector.extract_strided_slice %281 {offsets = [0, 16], sizes = [2, 16], strides = [1, 1]} : vector<2x32xf32> to vector<2x16xf32>
    %c6_68 = arith.constant 6 : index
    %c16_69 = arith.constant 16 : index
    %285 = vector.load %arg34[%c6_68, %c16_69] : memref<16x32xf32, #tpu.memory_space<vmem>>, vector<2x16xf32>
    tpu.vector_store %arg34[%c6_68, %c16_69], %284 {strides = array<i32>} : memref<16x32xf32, #tpu.memory_space<vmem>>, vector<2x16xf32>,
    %286 = vector.extract_strided_slice %12 {offsets = [10, 0], sizes = [2, 128], strides = [1, 1]} : vector<16x128xf32> to vector<2x128xf32>
    %287 = vector.extract_strided_slice %12 {offsets = [4, 0], sizes = [2, 128], strides = [1, 1]} : vector<16x128xf32> to vector<2x128xf32>
    %288 = vector.shape_cast %3 : vector<1x128xi1> to vector<1x128xi1>
    %289 = vector.broadcast %288 : vector<1x128xi1> to vector<2x128xi1>
    %290 = arith.select %289, %286, %287 : vector<2x128xi1>, vector<2x128xf32>
    %cst_70 = arith.constant dense<0.000000e+00> : vector<2x128xf32>
    %291 = tpu.matmul %278, %28, %cst_70 {dimension_numbers = #tpu.dot_dimension_numbers<[1], [0], [0], [1], [0, 0, 1, 1], [], []>} : vector<2x32xf32>, vector<32x128xf32>, vector<2x128xf32> -> vector<2x128xf32>
    %292 = arith.addf %290, %291 : vector<2x128xf32>
    %293 = vector.extract_strided_slice %292 {offsets = [0, 0], sizes = [2, 32], strides = [1, 1]} : vector<2x128xf32> to vector<2x32xf32>
    %294 = arith.negf %293 : vector<2x32xf32>
    %295 = math.exp %294 : vector<2x32xf32>
    %cst_71 = arith.constant 1.000000e+00 : f32
    %296 = vector.broadcast %cst_71 : f32 to vector<2x32xf32>
    %297 = arith.addf %296, %295 : vector<2x32xf32>
    %298 = arith.divf %296, %297 : vector<2x32xf32>
    %299 = vector.extract_strided_slice %292 {offsets = [0, 32], sizes = [2, 32], strides = [1, 1]} : vector<2x128xf32> to vector<2x32xf32>
    %300 = arith.negf %299 : vector<2x32xf32>
    %301 = math.exp %300 : vector<2x32xf32>
    %cst_72 = arith.constant 1.000000e+00 : f32
    %302 = vector.broadcast %cst_72 : f32 to vector<2x32xf32>
    %303 = arith.addf %302, %301 : vector<2x32xf32>
    %304 = arith.divf %302, %303 : vector<2x32xf32>
    %305 = vector.extract_strided_slice %292 {offsets = [0, 64], sizes = [2, 32], strides = [1, 1]} : vector<2x128xf32> to vector<2x32xf32>
    %306 = math.tanh %305 : vector<2x32xf32>
    %307 = vector.extract_strided_slice %292 {offsets = [0, 96], sizes = [2, 32], strides = [1, 1]} : vector<2x128xf32> to vector<2x32xf32>
    %308 = arith.negf %307 : vector<2x32xf32>
    %309 = math.exp %308 : vector<2x32xf32>
    %cst_73 = arith.constant 1.000000e+00 : f32
    %310 = vector.broadcast %cst_73 : f32 to vector<2x32xf32>
    %311 = arith.addf %310, %309 : vector<2x32xf32>
    %312 = arith.divf %310, %311 : vector<2x32xf32>
    %313 = arith.mulf %304, %279 : vector<2x32xf32>
    %314 = arith.mulf %298, %306 : vector<2x32xf32>
    %315 = arith.addf %313, %314 : vector<2x32xf32>
    %316 = math.tanh %315 : vector<2x32xf32>
    %317 = arith.mulf %312, %316 : vector<2x32xf32>
    %318 = vector.extract_strided_slice %0 {offsets = [10, 0], sizes = [2, 1], strides = [1, 1]} : vector<16x1xf32> to vector<2x1xf32>
    %319 = vector.extract_strided_slice %0 {offsets = [4, 0], sizes = [2, 1], strides = [1, 1]} : vector<16x1xf32> to vector<2x1xf32>
    %320 = vector.shape_cast %6 : vector<1x32xi1> to vector<1x32xi1>
    %321 = vector.broadcast %320 : vector<1x32xi1> to vector<2x32xi1>
    %322 = vector.shape_cast %318 : vector<2x1xf32> to vector<2x1xf32>
    %323 = vector.broadcast %322 : vector<2x1xf32> to vector<2x32xf32>
    %324 = vector.shape_cast %319 : vector<2x1xf32> to vector<2x1xf32>
    %325 = vector.broadcast %324 : vector<2x1xf32> to vector<2x32xf32>
    %326 = arith.select %321, %323, %325 : vector<2x32xi1>, vector<2x32xf32>
    %cst_74 = arith.constant 0.000000e+00 : f32
    %327 = vector.broadcast %cst_74 : f32 to vector<2x32xf32>
    %328 = arith.cmpf ogt, %326, %327 : vector<2x32xf32>
    %329 = arith.select %328, %317, %278 : vector<2x32xi1>, vector<2x32xf32>
    %330 = arith.select %328, %315, %279 : vector<2x32xi1>, vector<2x32xf32>
    %cst_75 = arith.constant 0.000000e+00 : f32
    %331 = vector.broadcast %cst_75 : f32 to vector<2x32xf32>
    %332 = arith.select %328, %317, %331 : vector<2x32xi1>, vector<2x32xf32>
    %333 = vector.extract_strided_slice %332 {offsets = [0, 0], sizes = [2, 16], strides = [1, 1]} : vector<2x32xf32> to vector<2x16xf32>
    %c10_76 = arith.constant 10 : index
    %c0_77 = arith.constant 0 : index
    %334 = vector.load %arg34[%c10_76, %c0_77] : memref<16x32xf32, #tpu.memory_space<vmem>>, vector<2x16xf32>
    tpu.vector_store %arg34[%c10_76, %c0_77], %333 {strides = array<i32>} : memref<16x32xf32, #tpu.memory_space<vmem>>, vector<2x16xf32>,
    %335 = vector.extract_strided_slice %332 {offsets = [0, 16], sizes = [2, 16], strides = [1, 1]} : vector<2x32xf32> to vector<2x16xf32>
    %c4_78 = arith.constant 4 : index
    %c16_79 = arith.constant 16 : index
    %336 = vector.load %arg34[%c4_78, %c16_79] : memref<16x32xf32, #tpu.memory_space<vmem>>, vector<2x16xf32>
    tpu.vector_store %arg34[%c4_78, %c16_79], %335 {strides = array<i32>} : memref<16x32xf32, #tpu.memory_space<vmem>>, vector<2x16xf32>,
    %337 = vector.extract_strided_slice %12 {offsets = [12, 0], sizes = [2, 128], strides = [1, 1]} : vector<16x128xf32> to vector<2x128xf32>
    %338 = vector.extract_strided_slice %12 {offsets = [2, 0], sizes = [2, 128], strides = [1, 1]} : vector<16x128xf32> to vector<2x128xf32>
    %339 = vector.shape_cast %3 : vector<1x128xi1> to vector<1x128xi1>
    %340 = vector.broadcast %339 : vector<1x128xi1> to vector<2x128xi1>
    %341 = arith.select %340, %337, %338 : vector<2x128xi1>, vector<2x128xf32>
    %cst_80 = arith.constant dense<0.000000e+00> : vector<2x128xf32>
    %342 = tpu.matmul %329, %28, %cst_80 {dimension_numbers = #tpu.dot_dimension_numbers<[1], [0], [0], [1], [0, 0, 1, 1], [], []>} : vector<2x32xf32>, vector<32x128xf32>, vector<2x128xf32> -> vector<2x128xf32>
    %343 = arith.addf %341, %342 : vector<2x128xf32>
    %344 = vector.extract_strided_slice %343 {offsets = [0, 0], sizes = [2, 32], strides = [1, 1]} : vector<2x128xf32> to vector<2x32xf32>
    %345 = arith.negf %344 : vector<2x32xf32>
    %346 = math.exp %345 : vector<2x32xf32>
    %cst_81 = arith.constant 1.000000e+00 : f32
    %347 = vector.broadcast %cst_81 : f32 to vector<2x32xf32>
    %348 = arith.addf %347, %346 : vector<2x32xf32>
    %349 = arith.divf %347, %348 : vector<2x32xf32>
    %350 = vector.extract_strided_slice %343 {offsets = [0, 32], sizes = [2, 32], strides = [1, 1]} : vector<2x128xf32> to vector<2x32xf32>
    %351 = arith.negf %350 : vector<2x32xf32>
    %352 = math.exp %351 : vector<2x32xf32>
    %cst_82 = arith.constant 1.000000e+00 : f32
    %353 = vector.broadcast %cst_82 : f32 to vector<2x32xf32>
    %354 = arith.addf %353, %352 : vector<2x32xf32>
    %355 = arith.divf %353, %354 : vector<2x32xf32>
    %356 = vector.extract_strided_slice %343 {offsets = [0, 64], sizes = [2, 32], strides = [1, 1]} : vector<2x128xf32> to vector<2x32xf32>
    %357 = math.tanh %356 : vector<2x32xf32>
    %358 = vector.extract_strided_slice %343 {offsets = [0, 96], sizes = [2, 32], strides = [1, 1]} : vector<2x128xf32> to vector<2x32xf32>
    %359 = arith.negf %358 : vector<2x32xf32>
    %360 = math.exp %359 : vector<2x32xf32>
    %cst_83 = arith.constant 1.000000e+00 : f32
    %361 = vector.broadcast %cst_83 : f32 to vector<2x32xf32>
    %362 = arith.addf %361, %360 : vector<2x32xf32>
    %363 = arith.divf %361, %362 : vector<2x32xf32>
    %364 = arith.mulf %355, %330 : vector<2x32xf32>
    %365 = arith.mulf %349, %357 : vector<2x32xf32>
    %366 = arith.addf %364, %365 : vector<2x32xf32>
    %367 = math.tanh %366 : vector<2x32xf32>
    %368 = arith.mulf %363, %367 : vector<2x32xf32>
    %369 = vector.extract_strided_slice %0 {offsets = [12, 0], sizes = [2, 1], strides = [1, 1]} : vector<16x1xf32> to vector<2x1xf32>
    %370 = vector.extract_strided_slice %0 {offsets = [2, 0], sizes = [2, 1], strides = [1, 1]} : vector<16x1xf32> to vector<2x1xf32>
    %371 = vector.shape_cast %6 : vector<1x32xi1> to vector<1x32xi1>
    %372 = vector.broadcast %371 : vector<1x32xi1> to vector<2x32xi1>
    %373 = vector.shape_cast %369 : vector<2x1xf32> to vector<2x1xf32>
    %374 = vector.broadcast %373 : vector<2x1xf32> to vector<2x32xf32>
    %375 = vector.shape_cast %370 : vector<2x1xf32> to vector<2x1xf32>
    %376 = vector.broadcast %375 : vector<2x1xf32> to vector<2x32xf32>
    %377 = arith.select %372, %374, %376 : vector<2x32xi1>, vector<2x32xf32>
    %cst_84 = arith.constant 0.000000e+00 : f32
    %378 = vector.broadcast %cst_84 : f32 to vector<2x32xf32>
    %379 = arith.cmpf ogt, %377, %378 : vector<2x32xf32>
    %380 = arith.select %379, %368, %329 : vector<2x32xi1>, vector<2x32xf32>
    %381 = arith.select %379, %366, %330 : vector<2x32xi1>, vector<2x32xf32>
    %cst_85 = arith.constant 0.000000e+00 : f32
    %382 = vector.broadcast %cst_85 : f32 to vector<2x32xf32>
    %383 = arith.select %379, %368, %382 : vector<2x32xi1>, vector<2x32xf32>
    %384 = vector.extract_strided_slice %383 {offsets = [0, 0], sizes = [2, 16], strides = [1, 1]} : vector<2x32xf32> to vector<2x16xf32>
    %c12_86 = arith.constant 12 : index
    %c0_87 = arith.constant 0 : index
    %385 = vector.load %arg34[%c12_86, %c0_87] : memref<16x32xf32, #tpu.memory_space<vmem>>, vector<2x16xf32>
    tpu.vector_store %arg34[%c12_86, %c0_87], %384 {strides = array<i32>} : memref<16x32xf32, #tpu.memory_space<vmem>>, vector<2x16xf32>,
    %386 = vector.extract_strided_slice %383 {offsets = [0, 16], sizes = [2, 16], strides = [1, 1]} : vector<2x32xf32> to vector<2x16xf32>
    %c2_88 = arith.constant 2 : index
    %c16_89 = arith.constant 16 : index
    %387 = vector.load %arg34[%c2_88, %c16_89] : memref<16x32xf32, #tpu.memory_space<vmem>>, vector<2x16xf32>
    tpu.vector_store %arg34[%c2_88, %c16_89], %386 {strides = array<i32>} : memref<16x32xf32, #tpu.memory_space<vmem>>, vector<2x16xf32>,
    %388 = vector.extract_strided_slice %12 {offsets = [14, 0], sizes = [2, 128], strides = [1, 1]} : vector<16x128xf32> to vector<2x128xf32>
    %389 = vector.extract_strided_slice %12 {offsets = [0, 0], sizes = [2, 128], strides = [1, 1]} : vector<16x128xf32> to vector<2x128xf32>
    %390 = vector.shape_cast %3 : vector<1x128xi1> to vector<1x128xi1>
    %391 = vector.broadcast %390 : vector<1x128xi1> to vector<2x128xi1>
    %392 = arith.select %391, %388, %389 : vector<2x128xi1>, vector<2x128xf32>
    %cst_90 = arith.constant dense<0.000000e+00> : vector<2x128xf32>
    %393 = tpu.matmul %380, %28, %cst_90 {dimension_numbers = #tpu.dot_dimension_numbers<[1], [0], [0], [1], [0, 0, 1, 1], [], []>} : vector<2x32xf32>, vector<32x128xf32>, vector<2x128xf32> -> vector<2x128xf32>
    %394 = arith.addf %392, %393 : vector<2x128xf32>
    %395 = vector.extract_strided_slice %394 {offsets = [0, 0], sizes = [2, 32], strides = [1, 1]} : vector<2x128xf32> to vector<2x32xf32>
    %396 = arith.negf %395 : vector<2x32xf32>
    %397 = math.exp %396 : vector<2x32xf32>
    %cst_91 = arith.constant 1.000000e+00 : f32
    %398 = vector.broadcast %cst_91 : f32 to vector<2x32xf32>
    %399 = arith.addf %398, %397 : vector<2x32xf32>
    %400 = arith.divf %398, %399 : vector<2x32xf32>
    %401 = vector.extract_strided_slice %394 {offsets = [0, 32], sizes = [2, 32], strides = [1, 1]} : vector<2x128xf32> to vector<2x32xf32>
    %402 = arith.negf %401 : vector<2x32xf32>
    %403 = math.exp %402 : vector<2x32xf32>
    %cst_92 = arith.constant 1.000000e+00 : f32
    %404 = vector.broadcast %cst_92 : f32 to vector<2x32xf32>
    %405 = arith.addf %404, %403 : vector<2x32xf32>
    %406 = arith.divf %404, %405 : vector<2x32xf32>
    %407 = vector.extract_strided_slice %394 {offsets = [0, 64], sizes = [2, 32], strides = [1, 1]} : vector<2x128xf32> to vector<2x32xf32>
    %408 = math.tanh %407 : vector<2x32xf32>
    %409 = vector.extract_strided_slice %394 {offsets = [0, 96], sizes = [2, 32], strides = [1, 1]} : vector<2x128xf32> to vector<2x32xf32>
    %410 = arith.negf %409 : vector<2x32xf32>
    %411 = math.exp %410 : vector<2x32xf32>
    %cst_93 = arith.constant 1.000000e+00 : f32
    %412 = vector.broadcast %cst_93 : f32 to vector<2x32xf32>
    %413 = arith.addf %412, %411 : vector<2x32xf32>
    %414 = arith.divf %412, %413 : vector<2x32xf32>
    %415 = arith.mulf %406, %381 : vector<2x32xf32>
    %416 = arith.mulf %400, %408 : vector<2x32xf32>
    %417 = arith.addf %415, %416 : vector<2x32xf32>
    %418 = math.tanh %417 : vector<2x32xf32>
    %419 = arith.mulf %414, %418 : vector<2x32xf32>
    %420 = vector.extract_strided_slice %0 {offsets = [14, 0], sizes = [2, 1], strides = [1, 1]} : vector<16x1xf32> to vector<2x1xf32>
    %421 = vector.extract_strided_slice %0 {offsets = [0, 0], sizes = [2, 1], strides = [1, 1]} : vector<16x1xf32> to vector<2x1xf32>
    %422 = vector.shape_cast %6 : vector<1x32xi1> to vector<1x32xi1>
    %423 = vector.broadcast %422 : vector<1x32xi1> to vector<2x32xi1>
    %424 = vector.shape_cast %420 : vector<2x1xf32> to vector<2x1xf32>
    %425 = vector.broadcast %424 : vector<2x1xf32> to vector<2x32xf32>
    %426 = vector.shape_cast %421 : vector<2x1xf32> to vector<2x1xf32>
    %427 = vector.broadcast %426 : vector<2x1xf32> to vector<2x32xf32>
    %428 = arith.select %423, %425, %427 : vector<2x32xi1>, vector<2x32xf32>
    %cst_94 = arith.constant 0.000000e+00 : f32
    %429 = vector.broadcast %cst_94 : f32 to vector<2x32xf32>
    %430 = arith.cmpf ogt, %428, %429 : vector<2x32xf32>
    %cst_95 = arith.constant 0.000000e+00 : f32
    %431 = vector.broadcast %cst_95 : f32 to vector<2x32xf32>
    %432 = arith.select %430, %419, %431 : vector<2x32xi1>, vector<2x32xf32>
    %433 = vector.extract_strided_slice %432 {offsets = [0, 0], sizes = [2, 16], strides = [1, 1]} : vector<2x32xf32> to vector<2x16xf32>
    %c14_96 = arith.constant 14 : index
    %c0_97 = arith.constant 0 : index
    %434 = vector.load %arg34[%c14_96, %c0_97] : memref<16x32xf32, #tpu.memory_space<vmem>>, vector<2x16xf32>
    tpu.vector_store %arg34[%c14_96, %c0_97], %433 {strides = array<i32>} : memref<16x32xf32, #tpu.memory_space<vmem>>, vector<2x16xf32>,
    %435 = vector.extract_strided_slice %432 {offsets = [0, 16], sizes = [2, 16], strides = [1, 1]} : vector<2x32xf32> to vector<2x16xf32>
    %c0_98 = arith.constant 0 : index
    %c16_99 = arith.constant 16 : index
    %436 = vector.load %arg34[%c0_98, %c16_99] : memref<16x32xf32, #tpu.memory_space<vmem>>, vector<2x16xf32>
    tpu.vector_store %arg34[%c0_98, %c16_99], %435 {strides = array<i32>} : memref<16x32xf32, #tpu.memory_space<vmem>>, vector<2x16xf32>,
    %c0_100 = arith.constant 0 : index
    %c0_101 = arith.constant 0 : index
    %437 = vector.load %arg34[%c0_100, %c0_101] : memref<16x32xf32, #tpu.memory_space<vmem>>, vector<16x32xf32>
    %438 = arith.mulf %22, %27 : vector<16x32xf32>
    %439 = arith.addf %437, %438 : vector<16x32xf32>
    %440 = vector.broadcast %0 : vector<16x1xf32> to vector<16x32xf32>
    %441 = arith.mulf %439, %440 : vector<16x32xf32>
    %c0_102 = arith.constant 0 : index
    %c0_103 = arith.constant 0 : index
    %442 = vector.load %arg13[%c0_102, %c0_103] : memref<32x128xf32, #tpu.memory_space<vmem>>, vector<32x128xf32>
    %cst_104 = arith.constant dense<0.000000e+00> : vector<16x128xf32>
    %443 = tpu.matmul %441, %442, %cst_104 {dimension_numbers = #tpu.dot_dimension_numbers<[1], [0], [0], [1], [0, 0, 1, 1], [], []>} : vector<16x32xf32>, vector<32x128xf32>, vector<16x128xf32> -> vector<16x128xf32>
    %c0_105 = arith.constant 0 : index
    %c0_106 = arith.constant 0 : index
    %444 = vector.load %arg14[%c0_105, %c0_106] : memref<1x128xf32, #tpu.memory_space<vmem>>, vector<1x128xf32>
    %445 = vector.broadcast %444 : vector<1x128xf32> to vector<16x128xf32>
    %446 = arith.addf %443, %445 : vector<16x128xf32>
    %c0_107 = arith.constant 0 : index
    %c0_108 = arith.constant 0 : index
    %447 = vector.load %arg16[%c0_107, %c0_108] : memref<32x32xf32, #tpu.memory_space<vmem>>, vector<32x32xf32>
    %cst_109 = arith.constant dense<0.000000e+00> : vector<16x32xf32>
    %448 = tpu.matmul %441, %447, %cst_109 {dimension_numbers = #tpu.dot_dimension_numbers<[1], [0], [0], [1], [0, 0, 1, 1], [], []>} : vector<16x32xf32>, vector<32x32xf32>, vector<16x32xf32> -> vector<16x32xf32>
    %c0_110 = arith.constant 0 : index
    %c0_111 = arith.constant 0 : index
    %449 = vector.load %arg17[%c0_110, %c0_111] : memref<1x32xf32, #tpu.memory_space<vmem>>, vector<1x32xf32>
    %450 = vector.broadcast %449 : vector<1x32xf32> to vector<16x32xf32>
    %451 = arith.addf %448, %450 : vector<16x32xf32>
    %452 = arith.negf %451 : vector<16x32xf32>
    %453 = math.exp %452 : vector<16x32xf32>
    %cst_112 = arith.constant 1.000000e+00 : f32
    %454 = vector.broadcast %cst_112 : f32 to vector<16x32xf32>
    %455 = arith.addf %454, %453 : vector<16x32xf32>
    %456 = arith.divf %454, %455 : vector<16x32xf32>
    %c0_113 = arith.constant 0 : index
    %c0_114 = arith.constant 0 : index
    %457 = vector.load %arg18[%c0_113, %c0_114] : memref<32x32xf32, #tpu.memory_space<vmem>>, vector<32x32xf32>
    %cst_115 = arith.constant dense<0.000000e+00> : vector<16x32xf32>
    %458 = tpu.matmul %441, %457, %cst_115 {dimension_numbers = #tpu.dot_dimension_numbers<[1], [0], [0], [1], [0, 0, 1, 1], [], []>} : vector<16x32xf32>, vector<32x32xf32>, vector<16x32xf32> -> vector<16x32xf32>
    %c0_116 = arith.constant 0 : index
    %c0_117 = arith.constant 0 : index
    %459 = vector.load %arg19[%c0_116, %c0_117] : memref<1x32xf32, #tpu.memory_space<vmem>>, vector<1x32xf32>
    %460 = vector.broadcast %459 : vector<1x32xf32> to vector<16x32xf32>
    %461 = arith.addf %458, %460 : vector<16x32xf32>
    %c0_118 = arith.constant 0 : index
    %c0_119 = arith.constant 0 : index
    %462 = vector.load %arg15[%c0_118, %c0_119] : memref<32x128xf32, #tpu.memory_space<vmem>>, vector<32x128xf32>
    %cst_120 = arith.constant 0.000000e+00 : f32
    %463 = vector.broadcast %cst_120 : f32 to vector<2x32xf32>
    %cst_121 = arith.constant 0.000000e+00 : f32
    %464 = vector.broadcast %cst_121 : f32 to vector<2x32xf32>
    %465 = vector.extract_strided_slice %446 {offsets = [0, 0], sizes = [2, 128], strides = [1, 1]} : vector<16x128xf32> to vector<2x128xf32>
    %466 = vector.extract_strided_slice %446 {offsets = [14, 0], sizes = [2, 128], strides = [1, 1]} : vector<16x128xf32> to vector<2x128xf32>
    %467 = vector.shape_cast %3 : vector<1x128xi1> to vector<1x128xi1>
    %468 = vector.broadcast %467 : vector<1x128xi1> to vector<2x128xi1>
    %469 = arith.select %468, %465, %466 : vector<2x128xi1>, vector<2x128xf32>
    %cst_122 = arith.constant dense<0.000000e+00> : vector<2x128xf32>
    %470 = tpu.matmul %463, %462, %cst_122 {dimension_numbers = #tpu.dot_dimension_numbers<[1], [0], [0], [1], [0, 0, 1, 1], [], []>} : vector<2x32xf32>, vector<32x128xf32>, vector<2x128xf32> -> vector<2x128xf32>
    %471 = arith.addf %469, %470 : vector<2x128xf32>
    %472 = vector.extract_strided_slice %471 {offsets = [0, 0], sizes = [2, 32], strides = [1, 1]} : vector<2x128xf32> to vector<2x32xf32>
    %473 = arith.negf %472 : vector<2x32xf32>
    %474 = math.exp %473 : vector<2x32xf32>
    %cst_123 = arith.constant 1.000000e+00 : f32
    %475 = vector.broadcast %cst_123 : f32 to vector<2x32xf32>
    %476 = arith.addf %475, %474 : vector<2x32xf32>
    %477 = arith.divf %475, %476 : vector<2x32xf32>
    %478 = vector.extract_strided_slice %471 {offsets = [0, 32], sizes = [2, 32], strides = [1, 1]} : vector<2x128xf32> to vector<2x32xf32>
    %479 = arith.negf %478 : vector<2x32xf32>
    %480 = math.exp %479 : vector<2x32xf32>
    %cst_124 = arith.constant 1.000000e+00 : f32
    %481 = vector.broadcast %cst_124 : f32 to vector<2x32xf32>
    %482 = arith.addf %481, %480 : vector<2x32xf32>
    %483 = arith.divf %481, %482 : vector<2x32xf32>
    %484 = vector.extract_strided_slice %471 {offsets = [0, 64], sizes = [2, 32], strides = [1, 1]} : vector<2x128xf32> to vector<2x32xf32>
    %485 = math.tanh %484 : vector<2x32xf32>
    %486 = vector.extract_strided_slice %471 {offsets = [0, 96], sizes = [2, 32], strides = [1, 1]} : vector<2x128xf32> to vector<2x32xf32>
    %487 = arith.negf %486 : vector<2x32xf32>
    %488 = math.exp %487 : vector<2x32xf32>
    %cst_125 = arith.constant 1.000000e+00 : f32
    %489 = vector.broadcast %cst_125 : f32 to vector<2x32xf32>
    %490 = arith.addf %489, %488 : vector<2x32xf32>
    %491 = arith.divf %489, %490 : vector<2x32xf32>
    %492 = arith.mulf %483, %464 : vector<2x32xf32>
    %493 = arith.mulf %477, %485 : vector<2x32xf32>
    %494 = arith.addf %492, %493 : vector<2x32xf32>
    %495 = math.tanh %494 : vector<2x32xf32>
    %496 = arith.mulf %491, %495 : vector<2x32xf32>
    %497 = vector.extract_strided_slice %0 {offsets = [0, 0], sizes = [2, 1], strides = [1, 1]} : vector<16x1xf32> to vector<2x1xf32>
    %498 = vector.extract_strided_slice %0 {offsets = [14, 0], sizes = [2, 1], strides = [1, 1]} : vector<16x1xf32> to vector<2x1xf32>
    %499 = vector.shape_cast %6 : vector<1x32xi1> to vector<1x32xi1>
    %500 = vector.broadcast %499 : vector<1x32xi1> to vector<2x32xi1>
    %501 = vector.shape_cast %497 : vector<2x1xf32> to vector<2x1xf32>
    %502 = vector.broadcast %501 : vector<2x1xf32> to vector<2x32xf32>
    %503 = vector.shape_cast %498 : vector<2x1xf32> to vector<2x1xf32>
    %504 = vector.broadcast %503 : vector<2x1xf32> to vector<2x32xf32>
    %505 = arith.select %500, %502, %504 : vector<2x32xi1>, vector<2x32xf32>
    %cst_126 = arith.constant 0.000000e+00 : f32
    %506 = vector.broadcast %cst_126 : f32 to vector<2x32xf32>
    %507 = arith.cmpf ogt, %505, %506 : vector<2x32xf32>
    %508 = arith.select %507, %496, %463 : vector<2x32xi1>, vector<2x32xf32>
    %509 = arith.select %507, %494, %464 : vector<2x32xi1>, vector<2x32xf32>
    %cst_127 = arith.constant 0.000000e+00 : f32
    %510 = vector.broadcast %cst_127 : f32 to vector<2x32xf32>
    %511 = arith.select %507, %496, %510 : vector<2x32xi1>, vector<2x32xf32>
    %512 = vector.extract_strided_slice %511 {offsets = [0, 0], sizes = [2, 16], strides = [1, 1]} : vector<2x32xf32> to vector<2x16xf32>
    %c0_128 = arith.constant 0 : index
    %c0_129 = arith.constant 0 : index
    %513 = vector.load %arg34[%c0_128, %c0_129] : memref<16x32xf32, #tpu.memory_space<vmem>>, vector<2x16xf32>
    tpu.vector_store %arg34[%c0_128, %c0_129], %512 {strides = array<i32>} : memref<16x32xf32, #tpu.memory_space<vmem>>, vector<2x16xf32>,
    %514 = vector.extract_strided_slice %511 {offsets = [0, 16], sizes = [2, 16], strides = [1, 1]} : vector<2x32xf32> to vector<2x16xf32>
    %c14_130 = arith.constant 14 : index
    %c16_131 = arith.constant 16 : index
    %515 = vector.load %arg34[%c14_130, %c16_131] : memref<16x32xf32, #tpu.memory_space<vmem>>, vector<2x16xf32>
    tpu.vector_store %arg34[%c14_130, %c16_131], %514 {strides = array<i32>} : memref<16x32xf32, #tpu.memory_space<vmem>>, vector<2x16xf32>,
    %516 = vector.extract_strided_slice %446 {offsets = [2, 0], sizes = [2, 128], strides = [1, 1]} : vector<16x128xf32> to vector<2x128xf32>
    %517 = vector.extract_strided_slice %446 {offsets = [12, 0], sizes = [2, 128], strides = [1, 1]} : vector<16x128xf32> to vector<2x128xf32>
    %518 = vector.shape_cast %3 : vector<1x128xi1> to vector<1x128xi1>
    %519 = vector.broadcast %518 : vector<1x128xi1> to vector<2x128xi1>
    %520 = arith.select %519, %516, %517 : vector<2x128xi1>, vector<2x128xf32>
    %cst_132 = arith.constant dense<0.000000e+00> : vector<2x128xf32>
    %521 = tpu.matmul %508, %462, %cst_132 {dimension_numbers = #tpu.dot_dimension_numbers<[1], [0], [0], [1], [0, 0, 1, 1], [], []>} : vector<2x32xf32>, vector<32x128xf32>, vector<2x128xf32> -> vector<2x128xf32>
    %522 = arith.addf %520, %521 : vector<2x128xf32>
    %523 = vector.extract_strided_slice %522 {offsets = [0, 0], sizes = [2, 32], strides = [1, 1]} : vector<2x128xf32> to vector<2x32xf32>
    %524 = arith.negf %523 : vector<2x32xf32>
    %525 = math.exp %524 : vector<2x32xf32>
    %cst_133 = arith.constant 1.000000e+00 : f32
    %526 = vector.broadcast %cst_133 : f32 to vector<2x32xf32>
    %527 = arith.addf %526, %525 : vector<2x32xf32>
    %528 = arith.divf %526, %527 : vector<2x32xf32>
    %529 = vector.extract_strided_slice %522 {offsets = [0, 32], sizes = [2, 32], strides = [1, 1]} : vector<2x128xf32> to vector<2x32xf32>
    %530 = arith.negf %529 : vector<2x32xf32>
    %531 = math.exp %530 : vector<2x32xf32>
    %cst_134 = arith.constant 1.000000e+00 : f32
    %532 = vector.broadcast %cst_134 : f32 to vector<2x32xf32>
    %533 = arith.addf %532, %531 : vector<2x32xf32>
    %534 = arith.divf %532, %533 : vector<2x32xf32>
    %535 = vector.extract_strided_slice %522 {offsets = [0, 64], sizes = [2, 32], strides = [1, 1]} : vector<2x128xf32> to vector<2x32xf32>
    %536 = math.tanh %535 : vector<2x32xf32>
    %537 = vector.extract_strided_slice %522 {offsets = [0, 96], sizes = [2, 32], strides = [1, 1]} : vector<2x128xf32> to vector<2x32xf32>
    %538 = arith.negf %537 : vector<2x32xf32>
    %539 = math.exp %538 : vector<2x32xf32>
    %cst_135 = arith.constant 1.000000e+00 : f32
    %540 = vector.broadcast %cst_135 : f32 to vector<2x32xf32>
    %541 = arith.addf %540, %539 : vector<2x32xf32>
    %542 = arith.divf %540, %541 : vector<2x32xf32>
    %543 = arith.mulf %534, %509 : vector<2x32xf32>
    %544 = arith.mulf %528, %536 : vector<2x32xf32>
    %545 = arith.addf %543, %544 : vector<2x32xf32>
    %546 = math.tanh %545 : vector<2x32xf32>
    %547 = arith.mulf %542, %546 : vector<2x32xf32>
    %548 = vector.extract_strided_slice %0 {offsets = [2, 0], sizes = [2, 1], strides = [1, 1]} : vector<16x1xf32> to vector<2x1xf32>
    %549 = vector.extract_strided_slice %0 {offsets = [12, 0], sizes = [2, 1], strides = [1, 1]} : vector<16x1xf32> to vector<2x1xf32>
    %550 = vector.shape_cast %6 : vector<1x32xi1> to vector<1x32xi1>
    %551 = vector.broadcast %550 : vector<1x32xi1> to vector<2x32xi1>
    %552 = vector.shape_cast %548 : vector<2x1xf32> to vector<2x1xf32>
    %553 = vector.broadcast %552 : vector<2x1xf32> to vector<2x32xf32>
    %554 = vector.shape_cast %549 : vector<2x1xf32> to vector<2x1xf32>
    %555 = vector.broadcast %554 : vector<2x1xf32> to vector<2x32xf32>
    %556 = arith.select %551, %553, %555 : vector<2x32xi1>, vector<2x32xf32>
    %cst_136 = arith.constant 0.000000e+00 : f32
    %557 = vector.broadcast %cst_136 : f32 to vector<2x32xf32>
    %558 = arith.cmpf ogt, %556, %557 : vector<2x32xf32>
    %559 = arith.select %558, %547, %508 : vector<2x32xi1>, vector<2x32xf32>
    %560 = arith.select %558, %545, %509 : vector<2x32xi1>, vector<2x32xf32>
    %cst_137 = arith.constant 0.000000e+00 : f32
    %561 = vector.broadcast %cst_137 : f32 to vector<2x32xf32>
    %562 = arith.select %558, %547, %561 : vector<2x32xi1>, vector<2x32xf32>
    %563 = vector.extract_strided_slice %562 {offsets = [0, 0], sizes = [2, 16], strides = [1, 1]} : vector<2x32xf32> to vector<2x16xf32>
    %c2_138 = arith.constant 2 : index
    %c0_139 = arith.constant 0 : index
    %564 = vector.load %arg34[%c2_138, %c0_139] : memref<16x32xf32, #tpu.memory_space<vmem>>, vector<2x16xf32>
    tpu.vector_store %arg34[%c2_138, %c0_139], %563 {strides = array<i32>} : memref<16x32xf32, #tpu.memory_space<vmem>>, vector<2x16xf32>,
    %565 = vector.extract_strided_slice %562 {offsets = [0, 16], sizes = [2, 16], strides = [1, 1]} : vector<2x32xf32> to vector<2x16xf32>
    %c12_140 = arith.constant 12 : index
    %c16_141 = arith.constant 16 : index
    %566 = vector.load %arg34[%c12_140, %c16_141] : memref<16x32xf32, #tpu.memory_space<vmem>>, vector<2x16xf32>
    tpu.vector_store %arg34[%c12_140, %c16_141], %565 {strides = array<i32>} : memref<16x32xf32, #tpu.memory_space<vmem>>, vector<2x16xf32>,
    %567 = vector.extract_strided_slice %446 {offsets = [4, 0], sizes = [2, 128], strides = [1, 1]} : vector<16x128xf32> to vector<2x128xf32>
    %568 = vector.extract_strided_slice %446 {offsets = [10, 0], sizes = [2, 128], strides = [1, 1]} : vector<16x128xf32> to vector<2x128xf32>
    %569 = vector.shape_cast %3 : vector<1x128xi1> to vector<1x128xi1>
    %570 = vector.broadcast %569 : vector<1x128xi1> to vector<2x128xi1>
    %571 = arith.select %570, %567, %568 : vector<2x128xi1>, vector<2x128xf32>
    %cst_142 = arith.constant dense<0.000000e+00> : vector<2x128xf32>
    %572 = tpu.matmul %559, %462, %cst_142 {dimension_numbers = #tpu.dot_dimension_numbers<[1], [0], [0], [1], [0, 0, 1, 1], [], []>} : vector<2x32xf32>, vector<32x128xf32>, vector<2x128xf32> -> vector<2x128xf32>
    %573 = arith.addf %571, %572 : vector<2x128xf32>
    %574 = vector.extract_strided_slice %573 {offsets = [0, 0], sizes = [2, 32], strides = [1, 1]} : vector<2x128xf32> to vector<2x32xf32>
    %575 = arith.negf %574 : vector<2x32xf32>
    %576 = math.exp %575 : vector<2x32xf32>
    %cst_143 = arith.constant 1.000000e+00 : f32
    %577 = vector.broadcast %cst_143 : f32 to vector<2x32xf32>
    %578 = arith.addf %577, %576 : vector<2x32xf32>
    %579 = arith.divf %577, %578 : vector<2x32xf32>
    %580 = vector.extract_strided_slice %573 {offsets = [0, 32], sizes = [2, 32], strides = [1, 1]} : vector<2x128xf32> to vector<2x32xf32>
    %581 = arith.negf %580 : vector<2x32xf32>
    %582 = math.exp %581 : vector<2x32xf32>
    %cst_144 = arith.constant 1.000000e+00 : f32
    %583 = vector.broadcast %cst_144 : f32 to vector<2x32xf32>
    %584 = arith.addf %583, %582 : vector<2x32xf32>
    %585 = arith.divf %583, %584 : vector<2x32xf32>
    %586 = vector.extract_strided_slice %573 {offsets = [0, 64], sizes = [2, 32], strides = [1, 1]} : vector<2x128xf32> to vector<2x32xf32>
    %587 = math.tanh %586 : vector<2x32xf32>
    %588 = vector.extract_strided_slice %573 {offsets = [0, 96], sizes = [2, 32], strides = [1, 1]} : vector<2x128xf32> to vector<2x32xf32>
    %589 = arith.negf %588 : vector<2x32xf32>
    %590 = math.exp %589 : vector<2x32xf32>
    %cst_145 = arith.constant 1.000000e+00 : f32
    %591 = vector.broadcast %cst_145 : f32 to vector<2x32xf32>
    %592 = arith.addf %591, %590 : vector<2x32xf32>
    %593 = arith.divf %591, %592 : vector<2x32xf32>
    %594 = arith.mulf %585, %560 : vector<2x32xf32>
    %595 = arith.mulf %579, %587 : vector<2x32xf32>
    %596 = arith.addf %594, %595 : vector<2x32xf32>
    %597 = math.tanh %596 : vector<2x32xf32>
    %598 = arith.mulf %593, %597 : vector<2x32xf32>
    %599 = vector.extract_strided_slice %0 {offsets = [4, 0], sizes = [2, 1], strides = [1, 1]} : vector<16x1xf32> to vector<2x1xf32>
    %600 = vector.extract_strided_slice %0 {offsets = [10, 0], sizes = [2, 1], strides = [1, 1]} : vector<16x1xf32> to vector<2x1xf32>
    %601 = vector.shape_cast %6 : vector<1x32xi1> to vector<1x32xi1>
    %602 = vector.broadcast %601 : vector<1x32xi1> to vector<2x32xi1>
    %603 = vector.shape_cast %599 : vector<2x1xf32> to vector<2x1xf32>
    %604 = vector.broadcast %603 : vector<2x1xf32> to vector<2x32xf32>
    %605 = vector.shape_cast %600 : vector<2x1xf32> to vector<2x1xf32>
    %606 = vector.broadcast %605 : vector<2x1xf32> to vector<2x32xf32>
    %607 = arith.select %602, %604, %606 : vector<2x32xi1>, vector<2x32xf32>
    %cst_146 = arith.constant 0.000000e+00 : f32
    %608 = vector.broadcast %cst_146 : f32 to vector<2x32xf32>
    %609 = arith.cmpf ogt, %607, %608 : vector<2x32xf32>
    %610 = arith.select %609, %598, %559 : vector<2x32xi1>, vector<2x32xf32>
    %611 = arith.select %609, %596, %560 : vector<2x32xi1>, vector<2x32xf32>
    %cst_147 = arith.constant 0.000000e+00 : f32
    %612 = vector.broadcast %cst_147 : f32 to vector<2x32xf32>
    %613 = arith.select %609, %598, %612 : vector<2x32xi1>, vector<2x32xf32>
    %614 = vector.extract_strided_slice %613 {offsets = [0, 0], sizes = [2, 16], strides = [1, 1]} : vector<2x32xf32> to vector<2x16xf32>
    %c4_148 = arith.constant 4 : index
    %c0_149 = arith.constant 0 : index
    %615 = vector.load %arg34[%c4_148, %c0_149] : memref<16x32xf32, #tpu.memory_space<vmem>>, vector<2x16xf32>
    tpu.vector_store %arg34[%c4_148, %c0_149], %614 {strides = array<i32>} : memref<16x32xf32, #tpu.memory_space<vmem>>, vector<2x16xf32>,
    %616 = vector.extract_strided_slice %613 {offsets = [0, 16], sizes = [2, 16], strides = [1, 1]} : vector<2x32xf32> to vector<2x16xf32>
    %c10_150 = arith.constant 10 : index
    %c16_151 = arith.constant 16 : index
    %617 = vector.load %arg34[%c10_150, %c16_151] : memref<16x32xf32, #tpu.memory_space<vmem>>, vector<2x16xf32>
    tpu.vector_store %arg34[%c10_150, %c16_151], %616 {strides = array<i32>} : memref<16x32xf32, #tpu.memory_space<vmem>>, vector<2x16xf32>,
    %618 = vector.extract_strided_slice %446 {offsets = [6, 0], sizes = [2, 128], strides = [1, 1]} : vector<16x128xf32> to vector<2x128xf32>
    %619 = vector.extract_strided_slice %446 {offsets = [8, 0], sizes = [2, 128], strides = [1, 1]} : vector<16x128xf32> to vector<2x128xf32>
    %620 = vector.shape_cast %3 : vector<1x128xi1> to vector<1x128xi1>
    %621 = vector.broadcast %620 : vector<1x128xi1> to vector<2x128xi1>
    %622 = arith.select %621, %618, %619 : vector<2x128xi1>, vector<2x128xf32>
    %cst_152 = arith.constant dense<0.000000e+00> : vector<2x128xf32>
    %623 = tpu.matmul %610, %462, %cst_152 {dimension_numbers = #tpu.dot_dimension_numbers<[1], [0], [0], [1], [0, 0, 1, 1], [], []>} : vector<2x32xf32>, vector<32x128xf32>, vector<2x128xf32> -> vector<2x128xf32>
    %624 = arith.addf %622, %623 : vector<2x128xf32>
    %625 = vector.extract_strided_slice %624 {offsets = [0, 0], sizes = [2, 32], strides = [1, 1]} : vector<2x128xf32> to vector<2x32xf32>
    %626 = arith.negf %625 : vector<2x32xf32>
    %627 = math.exp %626 : vector<2x32xf32>
    %cst_153 = arith.constant 1.000000e+00 : f32
    %628 = vector.broadcast %cst_153 : f32 to vector<2x32xf32>
    %629 = arith.addf %628, %627 : vector<2x32xf32>
    %630 = arith.divf %628, %629 : vector<2x32xf32>
    %631 = vector.extract_strided_slice %624 {offsets = [0, 32], sizes = [2, 32], strides = [1, 1]} : vector<2x128xf32> to vector<2x32xf32>
    %632 = arith.negf %631 : vector<2x32xf32>
    %633 = math.exp %632 : vector<2x32xf32>
    %cst_154 = arith.constant 1.000000e+00 : f32
    %634 = vector.broadcast %cst_154 : f32 to vector<2x32xf32>
    %635 = arith.addf %634, %633 : vector<2x32xf32>
    %636 = arith.divf %634, %635 : vector<2x32xf32>
    %637 = vector.extract_strided_slice %624 {offsets = [0, 64], sizes = [2, 32], strides = [1, 1]} : vector<2x128xf32> to vector<2x32xf32>
    %638 = math.tanh %637 : vector<2x32xf32>
    %639 = vector.extract_strided_slice %624 {offsets = [0, 96], sizes = [2, 32], strides = [1, 1]} : vector<2x128xf32> to vector<2x32xf32>
    %640 = arith.negf %639 : vector<2x32xf32>
    %641 = math.exp %640 : vector<2x32xf32>
    %cst_155 = arith.constant 1.000000e+00 : f32
    %642 = vector.broadcast %cst_155 : f32 to vector<2x32xf32>
    %643 = arith.addf %642, %641 : vector<2x32xf32>
    %644 = arith.divf %642, %643 : vector<2x32xf32>
    %645 = arith.mulf %636, %611 : vector<2x32xf32>
    %646 = arith.mulf %630, %638 : vector<2x32xf32>
    %647 = arith.addf %645, %646 : vector<2x32xf32>
    %648 = math.tanh %647 : vector<2x32xf32>
    %649 = arith.mulf %644, %648 : vector<2x32xf32>
    %650 = vector.extract_strided_slice %0 {offsets = [6, 0], sizes = [2, 1], strides = [1, 1]} : vector<16x1xf32> to vector<2x1xf32>
    %651 = vector.extract_strided_slice %0 {offsets = [8, 0], sizes = [2, 1], strides = [1, 1]} : vector<16x1xf32> to vector<2x1xf32>
    %652 = vector.shape_cast %6 : vector<1x32xi1> to vector<1x32xi1>
    %653 = vector.broadcast %652 : vector<1x32xi1> to vector<2x32xi1>
    %654 = vector.shape_cast %650 : vector<2x1xf32> to vector<2x1xf32>
    %655 = vector.broadcast %654 : vector<2x1xf32> to vector<2x32xf32>
    %656 = vector.shape_cast %651 : vector<2x1xf32> to vector<2x1xf32>
    %657 = vector.broadcast %656 : vector<2x1xf32> to vector<2x32xf32>
    %658 = arith.select %653, %655, %657 : vector<2x32xi1>, vector<2x32xf32>
    %cst_156 = arith.constant 0.000000e+00 : f32
    %659 = vector.broadcast %cst_156 : f32 to vector<2x32xf32>
    %660 = arith.cmpf ogt, %658, %659 : vector<2x32xf32>
    %661 = arith.select %660, %649, %610 : vector<2x32xi1>, vector<2x32xf32>
    %662 = arith.select %660, %647, %611 : vector<2x32xi1>, vector<2x32xf32>
    %cst_157 = arith.constant 0.000000e+00 : f32
    %663 = vector.broadcast %cst_157 : f32 to vector<2x32xf32>
    %664 = arith.select %660, %649, %663 : vector<2x32xi1>, vector<2x32xf32>
    %665 = vector.extract_strided_slice %664 {offsets = [0, 0], sizes = [2, 16], strides = [1, 1]} : vector<2x32xf32> to vector<2x16xf32>
    %c6_158 = arith.constant 6 : index
    %c0_159 = arith.constant 0 : index
    %666 = vector.load %arg34[%c6_158, %c0_159] : memref<16x32xf32, #tpu.memory_space<vmem>>, vector<2x16xf32>
    tpu.vector_store %arg34[%c6_158, %c0_159], %665 {strides = array<i32>} : memref<16x32xf32, #tpu.memory_space<vmem>>, vector<2x16xf32>,
    %667 = vector.extract_strided_slice %664 {offsets = [0, 16], sizes = [2, 16], strides = [1, 1]} : vector<2x32xf32> to vector<2x16xf32>
    %c8_160 = arith.constant 8 : index
    %c16_161 = arith.constant 16 : index
    %668 = vector.load %arg34[%c8_160, %c16_161] : memref<16x32xf32, #tpu.memory_space<vmem>>, vector<2x16xf32>
    tpu.vector_store %arg34[%c8_160, %c16_161], %667 {strides = array<i32>} : memref<16x32xf32, #tpu.memory_space<vmem>>, vector<2x16xf32>,
    %669 = vector.extract_strided_slice %446 {offsets = [8, 0], sizes = [2, 128], strides = [1, 1]} : vector<16x128xf32> to vector<2x128xf32>
    %670 = vector.extract_strided_slice %446 {offsets = [6, 0], sizes = [2, 128], strides = [1, 1]} : vector<16x128xf32> to vector<2x128xf32>
    %671 = vector.shape_cast %3 : vector<1x128xi1> to vector<1x128xi1>
    %672 = vector.broadcast %671 : vector<1x128xi1> to vector<2x128xi1>
    %673 = arith.select %672, %669, %670 : vector<2x128xi1>, vector<2x128xf32>
    %cst_162 = arith.constant dense<0.000000e+00> : vector<2x128xf32>
    %674 = tpu.matmul %661, %462, %cst_162 {dimension_numbers = #tpu.dot_dimension_numbers<[1], [0], [0], [1], [0, 0, 1, 1], [], []>} : vector<2x32xf32>, vector<32x128xf32>, vector<2x128xf32> -> vector<2x128xf32>
    %675 = arith.addf %673, %674 : vector<2x128xf32>
    %676 = vector.extract_strided_slice %675 {offsets = [0, 0], sizes = [2, 32], strides = [1, 1]} : vector<2x128xf32> to vector<2x32xf32>
    %677 = arith.negf %676 : vector<2x32xf32>
    %678 = math.exp %677 : vector<2x32xf32>
    %cst_163 = arith.constant 1.000000e+00 : f32
    %679 = vector.broadcast %cst_163 : f32 to vector<2x32xf32>
    %680 = arith.addf %679, %678 : vector<2x32xf32>
    %681 = arith.divf %679, %680 : vector<2x32xf32>
    %682 = vector.extract_strided_slice %675 {offsets = [0, 32], sizes = [2, 32], strides = [1, 1]} : vector<2x128xf32> to vector<2x32xf32>
    %683 = arith.negf %682 : vector<2x32xf32>
    %684 = math.exp %683 : vector<2x32xf32>
    %cst_164 = arith.constant 1.000000e+00 : f32
    %685 = vector.broadcast %cst_164 : f32 to vector<2x32xf32>
    %686 = arith.addf %685, %684 : vector<2x32xf32>
    %687 = arith.divf %685, %686 : vector<2x32xf32>
    %688 = vector.extract_strided_slice %675 {offsets = [0, 64], sizes = [2, 32], strides = [1, 1]} : vector<2x128xf32> to vector<2x32xf32>
    %689 = math.tanh %688 : vector<2x32xf32>
    %690 = vector.extract_strided_slice %675 {offsets = [0, 96], sizes = [2, 32], strides = [1, 1]} : vector<2x128xf32> to vector<2x32xf32>
    %691 = arith.negf %690 : vector<2x32xf32>
    %692 = math.exp %691 : vector<2x32xf32>
    %cst_165 = arith.constant 1.000000e+00 : f32
    %693 = vector.broadcast %cst_165 : f32 to vector<2x32xf32>
    %694 = arith.addf %693, %692 : vector<2x32xf32>
    %695 = arith.divf %693, %694 : vector<2x32xf32>
    %696 = arith.mulf %687, %662 : vector<2x32xf32>
    %697 = arith.mulf %681, %689 : vector<2x32xf32>
    %698 = arith.addf %696, %697 : vector<2x32xf32>
    %699 = math.tanh %698 : vector<2x32xf32>
    %700 = arith.mulf %695, %699 : vector<2x32xf32>
    %701 = vector.extract_strided_slice %0 {offsets = [8, 0], sizes = [2, 1], strides = [1, 1]} : vector<16x1xf32> to vector<2x1xf32>
    %702 = vector.extract_strided_slice %0 {offsets = [6, 0], sizes = [2, 1], strides = [1, 1]} : vector<16x1xf32> to vector<2x1xf32>
    %703 = vector.shape_cast %6 : vector<1x32xi1> to vector<1x32xi1>
    %704 = vector.broadcast %703 : vector<1x32xi1> to vector<2x32xi1>
    %705 = vector.shape_cast %701 : vector<2x1xf32> to vector<2x1xf32>
    %706 = vector.broadcast %705 : vector<2x1xf32> to vector<2x32xf32>
    %707 = vector.shape_cast %702 : vector<2x1xf32> to vector<2x1xf32>
    %708 = vector.broadcast %707 : vector<2x1xf32> to vector<2x32xf32>
    %709 = arith.select %704, %706, %708 : vector<2x32xi1>, vector<2x32xf32>
    %cst_166 = arith.constant 0.000000e+00 : f32
    %710 = vector.broadcast %cst_166 : f32 to vector<2x32xf32>
    %711 = arith.cmpf ogt, %709, %710 : vector<2x32xf32>
    %712 = arith.select %711, %700, %661 : vector<2x32xi1>, vector<2x32xf32>
    %713 = arith.select %711, %698, %662 : vector<2x32xi1>, vector<2x32xf32>
    %cst_167 = arith.constant 0.000000e+00 : f32
    %714 = vector.broadcast %cst_167 : f32 to vector<2x32xf32>
    %715 = arith.select %711, %700, %714 : vector<2x32xi1>, vector<2x32xf32>
    %716 = vector.extract_strided_slice %715 {offsets = [0, 0], sizes = [2, 16], strides = [1, 1]} : vector<2x32xf32> to vector<2x16xf32>
    %c8_168 = arith.constant 8 : index
    %c0_169 = arith.constant 0 : index
    %717 = vector.load %arg34[%c8_168, %c0_169] : memref<16x32xf32, #tpu.memory_space<vmem>>, vector<2x16xf32>
    tpu.vector_store %arg34[%c8_168, %c0_169], %716 {strides = array<i32>} : memref<16x32xf32, #tpu.memory_space<vmem>>, vector<2x16xf32>,
    %718 = vector.extract_strided_slice %715 {offsets = [0, 16], sizes = [2, 16], strides = [1, 1]} : vector<2x32xf32> to vector<2x16xf32>
    %c6_170 = arith.constant 6 : index
    %c16_171 = arith.constant 16 : index
    %719 = vector.load %arg34[%c6_170, %c16_171] : memref<16x32xf32, #tpu.memory_space<vmem>>, vector<2x16xf32>
    tpu.vector_store %arg34[%c6_170, %c16_171], %718 {strides = array<i32>} : memref<16x32xf32, #tpu.memory_space<vmem>>, vector<2x16xf32>,
    %720 = vector.extract_strided_slice %446 {offsets = [10, 0], sizes = [2, 128], strides = [1, 1]} : vector<16x128xf32> to vector<2x128xf32>
    %721 = vector.extract_strided_slice %446 {offsets = [4, 0], sizes = [2, 128], strides = [1, 1]} : vector<16x128xf32> to vector<2x128xf32>
    %722 = vector.shape_cast %3 : vector<1x128xi1> to vector<1x128xi1>
    %723 = vector.broadcast %722 : vector<1x128xi1> to vector<2x128xi1>
    %724 = arith.select %723, %720, %721 : vector<2x128xi1>, vector<2x128xf32>
    %cst_172 = arith.constant dense<0.000000e+00> : vector<2x128xf32>
    %725 = tpu.matmul %712, %462, %cst_172 {dimension_numbers = #tpu.dot_dimension_numbers<[1], [0], [0], [1], [0, 0, 1, 1], [], []>} : vector<2x32xf32>, vector<32x128xf32>, vector<2x128xf32> -> vector<2x128xf32>
    %726 = arith.addf %724, %725 : vector<2x128xf32>
    %727 = vector.extract_strided_slice %726 {offsets = [0, 0], sizes = [2, 32], strides = [1, 1]} : vector<2x128xf32> to vector<2x32xf32>
    %728 = arith.negf %727 : vector<2x32xf32>
    %729 = math.exp %728 : vector<2x32xf32>
    %cst_173 = arith.constant 1.000000e+00 : f32
    %730 = vector.broadcast %cst_173 : f32 to vector<2x32xf32>
    %731 = arith.addf %730, %729 : vector<2x32xf32>
    %732 = arith.divf %730, %731 : vector<2x32xf32>
    %733 = vector.extract_strided_slice %726 {offsets = [0, 32], sizes = [2, 32], strides = [1, 1]} : vector<2x128xf32> to vector<2x32xf32>
    %734 = arith.negf %733 : vector<2x32xf32>
    %735 = math.exp %734 : vector<2x32xf32>
    %cst_174 = arith.constant 1.000000e+00 : f32
    %736 = vector.broadcast %cst_174 : f32 to vector<2x32xf32>
    %737 = arith.addf %736, %735 : vector<2x32xf32>
    %738 = arith.divf %736, %737 : vector<2x32xf32>
    %739 = vector.extract_strided_slice %726 {offsets = [0, 64], sizes = [2, 32], strides = [1, 1]} : vector<2x128xf32> to vector<2x32xf32>
    %740 = math.tanh %739 : vector<2x32xf32>
    %741 = vector.extract_strided_slice %726 {offsets = [0, 96], sizes = [2, 32], strides = [1, 1]} : vector<2x128xf32> to vector<2x32xf32>
    %742 = arith.negf %741 : vector<2x32xf32>
    %743 = math.exp %742 : vector<2x32xf32>
    %cst_175 = arith.constant 1.000000e+00 : f32
    %744 = vector.broadcast %cst_175 : f32 to vector<2x32xf32>
    %745 = arith.addf %744, %743 : vector<2x32xf32>
    %746 = arith.divf %744, %745 : vector<2x32xf32>
    %747 = arith.mulf %738, %713 : vector<2x32xf32>
    %748 = arith.mulf %732, %740 : vector<2x32xf32>
    %749 = arith.addf %747, %748 : vector<2x32xf32>
    %750 = math.tanh %749 : vector<2x32xf32>
    %751 = arith.mulf %746, %750 : vector<2x32xf32>
    %752 = vector.extract_strided_slice %0 {offsets = [10, 0], sizes = [2, 1], strides = [1, 1]} : vector<16x1xf32> to vector<2x1xf32>
    %753 = vector.extract_strided_slice %0 {offsets = [4, 0], sizes = [2, 1], strides = [1, 1]} : vector<16x1xf32> to vector<2x1xf32>
    %754 = vector.shape_cast %6 : vector<1x32xi1> to vector<1x32xi1>
    %755 = vector.broadcast %754 : vector<1x32xi1> to vector<2x32xi1>
    %756 = vector.shape_cast %752 : vector<2x1xf32> to vector<2x1xf32>
    %757 = vector.broadcast %756 : vector<2x1xf32> to vector<2x32xf32>
    %758 = vector.shape_cast %753 : vector<2x1xf32> to vector<2x1xf32>
    %759 = vector.broadcast %758 : vector<2x1xf32> to vector<2x32xf32>
    %760 = arith.select %755, %757, %759 : vector<2x32xi1>, vector<2x32xf32>
    %cst_176 = arith.constant 0.000000e+00 : f32
    %761 = vector.broadcast %cst_176 : f32 to vector<2x32xf32>
    %762 = arith.cmpf ogt, %760, %761 : vector<2x32xf32>
    %763 = arith.select %762, %751, %712 : vector<2x32xi1>, vector<2x32xf32>
    %764 = arith.select %762, %749, %713 : vector<2x32xi1>, vector<2x32xf32>
    %cst_177 = arith.constant 0.000000e+00 : f32
    %765 = vector.broadcast %cst_177 : f32 to vector<2x32xf32>
    %766 = arith.select %762, %751, %765 : vector<2x32xi1>, vector<2x32xf32>
    %767 = vector.extract_strided_slice %766 {offsets = [0, 0], sizes = [2, 16], strides = [1, 1]} : vector<2x32xf32> to vector<2x16xf32>
    %c10_178 = arith.constant 10 : index
    %c0_179 = arith.constant 0 : index
    %768 = vector.load %arg34[%c10_178, %c0_179] : memref<16x32xf32, #tpu.memory_space<vmem>>, vector<2x16xf32>
    tpu.vector_store %arg34[%c10_178, %c0_179], %767 {strides = array<i32>} : memref<16x32xf32, #tpu.memory_space<vmem>>, vector<2x16xf32>,
    %769 = vector.extract_strided_slice %766 {offsets = [0, 16], sizes = [2, 16], strides = [1, 1]} : vector<2x32xf32> to vector<2x16xf32>
    %c4_180 = arith.constant 4 : index
    %c16_181 = arith.constant 16 : index
    %770 = vector.load %arg34[%c4_180, %c16_181] : memref<16x32xf32, #tpu.memory_space<vmem>>, vector<2x16xf32>
    tpu.vector_store %arg34[%c4_180, %c16_181], %769 {strides = array<i32>} : memref<16x32xf32, #tpu.memory_space<vmem>>, vector<2x16xf32>,
    %771 = vector.extract_strided_slice %446 {offsets = [12, 0], sizes = [2, 128], strides = [1, 1]} : vector<16x128xf32> to vector<2x128xf32>
    %772 = vector.extract_strided_slice %446 {offsets = [2, 0], sizes = [2, 128], strides = [1, 1]} : vector<16x128xf32> to vector<2x128xf32>
    %773 = vector.shape_cast %3 : vector<1x128xi1> to vector<1x128xi1>
    %774 = vector.broadcast %773 : vector<1x128xi1> to vector<2x128xi1>
    %775 = arith.select %774, %771, %772 : vector<2x128xi1>, vector<2x128xf32>
    %cst_182 = arith.constant dense<0.000000e+00> : vector<2x128xf32>
    %776 = tpu.matmul %763, %462, %cst_182 {dimension_numbers = #tpu.dot_dimension_numbers<[1], [0], [0], [1], [0, 0, 1, 1], [], []>} : vector<2x32xf32>, vector<32x128xf32>, vector<2x128xf32> -> vector<2x128xf32>
    %777 = arith.addf %775, %776 : vector<2x128xf32>
    %778 = vector.extract_strided_slice %777 {offsets = [0, 0], sizes = [2, 32], strides = [1, 1]} : vector<2x128xf32> to vector<2x32xf32>
    %779 = arith.negf %778 : vector<2x32xf32>
    %780 = math.exp %779 : vector<2x32xf32>
    %cst_183 = arith.constant 1.000000e+00 : f32
    %781 = vector.broadcast %cst_183 : f32 to vector<2x32xf32>
    %782 = arith.addf %781, %780 : vector<2x32xf32>
    %783 = arith.divf %781, %782 : vector<2x32xf32>
    %784 = vector.extract_strided_slice %777 {offsets = [0, 32], sizes = [2, 32], strides = [1, 1]} : vector<2x128xf32> to vector<2x32xf32>
    %785 = arith.negf %784 : vector<2x32xf32>
    %786 = math.exp %785 : vector<2x32xf32>
    %cst_184 = arith.constant 1.000000e+00 : f32
    %787 = vector.broadcast %cst_184 : f32 to vector<2x32xf32>
    %788 = arith.addf %787, %786 : vector<2x32xf32>
    %789 = arith.divf %787, %788 : vector<2x32xf32>
    %790 = vector.extract_strided_slice %777 {offsets = [0, 64], sizes = [2, 32], strides = [1, 1]} : vector<2x128xf32> to vector<2x32xf32>
    %791 = math.tanh %790 : vector<2x32xf32>
    %792 = vector.extract_strided_slice %777 {offsets = [0, 96], sizes = [2, 32], strides = [1, 1]} : vector<2x128xf32> to vector<2x32xf32>
    %793 = arith.negf %792 : vector<2x32xf32>
    %794 = math.exp %793 : vector<2x32xf32>
    %cst_185 = arith.constant 1.000000e+00 : f32
    %795 = vector.broadcast %cst_185 : f32 to vector<2x32xf32>
    %796 = arith.addf %795, %794 : vector<2x32xf32>
    %797 = arith.divf %795, %796 : vector<2x32xf32>
    %798 = arith.mulf %789, %764 : vector<2x32xf32>
    %799 = arith.mulf %783, %791 : vector<2x32xf32>
    %800 = arith.addf %798, %799 : vector<2x32xf32>
    %801 = math.tanh %800 : vector<2x32xf32>
    %802 = arith.mulf %797, %801 : vector<2x32xf32>
    %803 = vector.extract_strided_slice %0 {offsets = [12, 0], sizes = [2, 1], strides = [1, 1]} : vector<16x1xf32> to vector<2x1xf32>
    %804 = vector.extract_strided_slice %0 {offsets = [2, 0], sizes = [2, 1], strides = [1, 1]} : vector<16x1xf32> to vector<2x1xf32>
    %805 = vector.shape_cast %6 : vector<1x32xi1> to vector<1x32xi1>
    %806 = vector.broadcast %805 : vector<1x32xi1> to vector<2x32xi1>
    %807 = vector.shape_cast %803 : vector<2x1xf32> to vector<2x1xf32>
    %808 = vector.broadcast %807 : vector<2x1xf32> to vector<2x32xf32>
    %809 = vector.shape_cast %804 : vector<2x1xf32> to vector<2x1xf32>
    %810 = vector.broadcast %809 : vector<2x1xf32> to vector<2x32xf32>
    %811 = arith.select %806, %808, %810 : vector<2x32xi1>, vector<2x32xf32>
    %cst_186 = arith.constant 0.000000e+00 : f32
    %812 = vector.broadcast %cst_186 : f32 to vector<2x32xf32>
    %813 = arith.cmpf ogt, %811, %812 : vector<2x32xf32>
    %814 = arith.select %813, %802, %763 : vector<2x32xi1>, vector<2x32xf32>
    %815 = arith.select %813, %800, %764 : vector<2x32xi1>, vector<2x32xf32>
    %cst_187 = arith.constant 0.000000e+00 : f32
    %816 = vector.broadcast %cst_187 : f32 to vector<2x32xf32>
    %817 = arith.select %813, %802, %816 : vector<2x32xi1>, vector<2x32xf32>
    %818 = vector.extract_strided_slice %817 {offsets = [0, 0], sizes = [2, 16], strides = [1, 1]} : vector<2x32xf32> to vector<2x16xf32>
    %c12_188 = arith.constant 12 : index
    %c0_189 = arith.constant 0 : index
    %819 = vector.load %arg34[%c12_188, %c0_189] : memref<16x32xf32, #tpu.memory_space<vmem>>, vector<2x16xf32>
    tpu.vector_store %arg34[%c12_188, %c0_189], %818 {strides = array<i32>} : memref<16x32xf32, #tpu.memory_space<vmem>>, vector<2x16xf32>,
    %820 = vector.extract_strided_slice %817 {offsets = [0, 16], sizes = [2, 16], strides = [1, 1]} : vector<2x32xf32> to vector<2x16xf32>
    %c2_190 = arith.constant 2 : index
    %c16_191 = arith.constant 16 : index
    %821 = vector.load %arg34[%c2_190, %c16_191] : memref<16x32xf32, #tpu.memory_space<vmem>>, vector<2x16xf32>
    tpu.vector_store %arg34[%c2_190, %c16_191], %820 {strides = array<i32>} : memref<16x32xf32, #tpu.memory_space<vmem>>, vector<2x16xf32>,
    %822 = vector.extract_strided_slice %446 {offsets = [14, 0], sizes = [2, 128], strides = [1, 1]} : vector<16x128xf32> to vector<2x128xf32>
    %823 = vector.extract_strided_slice %446 {offsets = [0, 0], sizes = [2, 128], strides = [1, 1]} : vector<16x128xf32> to vector<2x128xf32>
    %824 = vector.shape_cast %3 : vector<1x128xi1> to vector<1x128xi1>
    %825 = vector.broadcast %824 : vector<1x128xi1> to vector<2x128xi1>
    %826 = arith.select %825, %822, %823 : vector<2x128xi1>, vector<2x128xf32>
    %cst_192 = arith.constant dense<0.000000e+00> : vector<2x128xf32>
    %827 = tpu.matmul %814, %462, %cst_192 {dimension_numbers = #tpu.dot_dimension_numbers<[1], [0], [0], [1], [0, 0, 1, 1], [], []>} : vector<2x32xf32>, vector<32x128xf32>, vector<2x128xf32> -> vector<2x128xf32>
    %828 = arith.addf %826, %827 : vector<2x128xf32>
    %829 = vector.extract_strided_slice %828 {offsets = [0, 0], sizes = [2, 32], strides = [1, 1]} : vector<2x128xf32> to vector<2x32xf32>
    %830 = arith.negf %829 : vector<2x32xf32>
    %831 = math.exp %830 : vector<2x32xf32>
    %cst_193 = arith.constant 1.000000e+00 : f32
    %832 = vector.broadcast %cst_193 : f32 to vector<2x32xf32>
    %833 = arith.addf %832, %831 : vector<2x32xf32>
    %834 = arith.divf %832, %833 : vector<2x32xf32>
    %835 = vector.extract_strided_slice %828 {offsets = [0, 32], sizes = [2, 32], strides = [1, 1]} : vector<2x128xf32> to vector<2x32xf32>
    %836 = arith.negf %835 : vector<2x32xf32>
    %837 = math.exp %836 : vector<2x32xf32>
    %cst_194 = arith.constant 1.000000e+00 : f32
    %838 = vector.broadcast %cst_194 : f32 to vector<2x32xf32>
    %839 = arith.addf %838, %837 : vector<2x32xf32>
    %840 = arith.divf %838, %839 : vector<2x32xf32>
    %841 = vector.extract_strided_slice %828 {offsets = [0, 64], sizes = [2, 32], strides = [1, 1]} : vector<2x128xf32> to vector<2x32xf32>
    %842 = math.tanh %841 : vector<2x32xf32>
    %843 = vector.extract_strided_slice %828 {offsets = [0, 96], sizes = [2, 32], strides = [1, 1]} : vector<2x128xf32> to vector<2x32xf32>
    %844 = arith.negf %843 : vector<2x32xf32>
    %845 = math.exp %844 : vector<2x32xf32>
    %cst_195 = arith.constant 1.000000e+00 : f32
    %846 = vector.broadcast %cst_195 : f32 to vector<2x32xf32>
    %847 = arith.addf %846, %845 : vector<2x32xf32>
    %848 = arith.divf %846, %847 : vector<2x32xf32>
    %849 = arith.mulf %840, %815 : vector<2x32xf32>
    %850 = arith.mulf %834, %842 : vector<2x32xf32>
    %851 = arith.addf %849, %850 : vector<2x32xf32>
    %852 = math.tanh %851 : vector<2x32xf32>
    %853 = arith.mulf %848, %852 : vector<2x32xf32>
    %854 = vector.extract_strided_slice %0 {offsets = [14, 0], sizes = [2, 1], strides = [1, 1]} : vector<16x1xf32> to vector<2x1xf32>
    %855 = vector.extract_strided_slice %0 {offsets = [0, 0], sizes = [2, 1], strides = [1, 1]} : vector<16x1xf32> to vector<2x1xf32>
    %856 = vector.shape_cast %6 : vector<1x32xi1> to vector<1x32xi1>
    %857 = vector.broadcast %856 : vector<1x32xi1> to vector<2x32xi1>
    %858 = vector.shape_cast %854 : vector<2x1xf32> to vector<2x1xf32>
    %859 = vector.broadcast %858 : vector<2x1xf32> to vector<2x32xf32>
    %860 = vector.shape_cast %855 : vector<2x1xf32> to vector<2x1xf32>
    %861 = vector.broadcast %860 : vector<2x1xf32> to vector<2x32xf32>
    %862 = arith.select %857, %859, %861 : vector<2x32xi1>, vector<2x32xf32>
    %cst_196 = arith.constant 0.000000e+00 : f32
    %863 = vector.broadcast %cst_196 : f32 to vector<2x32xf32>
    %864 = arith.cmpf ogt, %862, %863 : vector<2x32xf32>
    %cst_197 = arith.constant 0.000000e+00 : f32
    %865 = vector.broadcast %cst_197 : f32 to vector<2x32xf32>
    %866 = arith.select %864, %853, %865 : vector<2x32xi1>, vector<2x32xf32>
    %867 = vector.extract_strided_slice %866 {offsets = [0, 0], sizes = [2, 16], strides = [1, 1]} : vector<2x32xf32> to vector<2x16xf32>
    %c14_198 = arith.constant 14 : index
    %c0_199 = arith.constant 0 : index
    %868 = vector.load %arg34[%c14_198, %c0_199] : memref<16x32xf32, #tpu.memory_space<vmem>>, vector<2x16xf32>
    tpu.vector_store %arg34[%c14_198, %c0_199], %867 {strides = array<i32>} : memref<16x32xf32, #tpu.memory_space<vmem>>, vector<2x16xf32>,
    %869 = vector.extract_strided_slice %866 {offsets = [0, 16], sizes = [2, 16], strides = [1, 1]} : vector<2x32xf32> to vector<2x16xf32>
    %c0_200 = arith.constant 0 : index
    %c16_201 = arith.constant 16 : index
    %870 = vector.load %arg34[%c0_200, %c16_201] : memref<16x32xf32, #tpu.memory_space<vmem>>, vector<2x16xf32>
    tpu.vector_store %arg34[%c0_200, %c16_201], %869 {strides = array<i32>} : memref<16x32xf32, #tpu.memory_space<vmem>>, vector<2x16xf32>,
    %c0_202 = arith.constant 0 : index
    %c0_203 = arith.constant 0 : index
    %871 = vector.load %arg34[%c0_202, %c0_203] : memref<16x32xf32, #tpu.memory_space<vmem>>, vector<16x32xf32>
    %872 = arith.mulf %456, %461 : vector<16x32xf32>
    %873 = arith.addf %871, %872 : vector<16x32xf32>
    %874 = vector.broadcast %0 : vector<16x1xf32> to vector<16x32xf32>
    %875 = arith.mulf %873, %874 : vector<16x32xf32>
    %cst_204 = arith.constant 0.000000e+00 : f32
    %876 = vector.broadcast %cst_204 : f32 to vector<16x32xf32>
    %877 = arith.maximumf %875, %876 : vector<16x32xf32>
    %c0_205 = arith.constant 0 : index
    %c0_206 = arith.constant 0 : index
    %878 = vector.load %arg5[%c0_205, %c0_206] : memref<16x16xf32, #tpu.memory_space<vmem>>, vector<16x16xf32>
    %cst_207 = arith.constant dense<0.000000e+00> : vector<16x32xf32>
    %879 = tpu.matmul %878, %877, %cst_207 {dimension_numbers = #tpu.dot_dimension_numbers<[1], [0], [0], [1], [0, 0, 1, 1], [], []>} : vector<16x16xf32>, vector<16x32xf32>, vector<16x32xf32> -> vector<16x32xf32>
    %c0_208 = arith.constant 0 : index
    %c0_209 = arith.constant 0 : index
    %880 = vector.load %arg20[%c0_208, %c0_209] : memref<32x64xf32, #tpu.memory_space<vmem>>, vector<32x64xf32>
    %cst_210 = arith.constant dense<0.000000e+00> : vector<16x64xf32>
    %881 = tpu.matmul %879, %880, %cst_210 {dimension_numbers = #tpu.dot_dimension_numbers<[1], [0], [0], [1], [0, 0, 1, 1], [], []>} : vector<16x32xf32>, vector<32x64xf32>, vector<16x64xf32> -> vector<16x64xf32>
    %c0_211 = arith.constant 0 : index
    %c0_212 = arith.constant 0 : index
    %882 = vector.load %arg21[%c0_211, %c0_212] : memref<1x64xf32, #tpu.memory_space<vmem>>, vector<1x64xf32>
    %883 = vector.broadcast %882 : vector<1x64xf32> to vector<16x64xf32>
    %884 = arith.addf %881, %883 : vector<16x64xf32>
    %cst_213 = arith.constant 0.000000e+00 : f32
    %885 = vector.broadcast %cst_213 : f32 to vector<16x64xf32>
    %886 = arith.maximumf %884, %885 : vector<16x64xf32>
    %c0_214 = arith.constant 0 : index
    %c0_215 = arith.constant 0 : index
    %887 = vector.load %arg22[%c0_214, %c0_215] : memref<32x64xf32, #tpu.memory_space<vmem>>, vector<32x64xf32>
    %cst_216 = arith.constant dense<0.000000e+00> : vector<16x64xf32>
    %888 = tpu.matmul %879, %887, %cst_216 {dimension_numbers = #tpu.dot_dimension_numbers<[1], [0], [0], [1], [0, 0, 1, 1], [], []>} : vector<16x32xf32>, vector<32x64xf32>, vector<16x64xf32> -> vector<16x64xf32>
    %c0_217 = arith.constant 0 : index
    %c0_218 = arith.constant 0 : index
    %889 = vector.load %arg23[%c0_217, %c0_218] : memref<1x64xf32, #tpu.memory_space<vmem>>, vector<1x64xf32>
    %890 = vector.broadcast %889 : vector<1x64xf32> to vector<16x64xf32>
    %891 = arith.addf %888, %890 : vector<16x64xf32>
    %cst_219 = arith.constant 0.000000e+00 : f32
    %892 = vector.broadcast %cst_219 : f32 to vector<16x64xf32>
    %893 = arith.maximumf %891, %892 : vector<16x64xf32>
    %894 = vector.extract_strided_slice %886 {offsets = [0, 0], sizes = [16, 32], strides = [1, 1]} : vector<16x64xf32> to vector<16x32xf32>
    %895 = vector.extract_strided_slice %886 {offsets = [0, 32], sizes = [16, 32], strides = [1, 1]} : vector<16x64xf32> to vector<16x32xf32>
    %896 = vector.extract_strided_slice %893 {offsets = [0, 0], sizes = [16, 32], strides = [1, 1]} : vector<16x64xf32> to vector<16x32xf32>
    %897 = vector.extract_strided_slice %893 {offsets = [0, 32], sizes = [16, 32], strides = [1, 1]} : vector<16x64xf32> to vector<16x32xf32>
    %c0_220 = arith.constant 0 : index
    %c0_221 = arith.constant 0 : index
    %898 = vector.load %arg24[%c0_220, %c0_221] : memref<32x32xf32, #tpu.memory_space<vmem>>, vector<32x32xf32>
    %cst_222 = arith.constant dense<0.000000e+00> : vector<16x32xf32>
    %899 = tpu.matmul %894, %898, %cst_222 {dimension_numbers = #tpu.dot_dimension_numbers<[1], [0], [0], [1], [0, 0, 1, 1], [], []>} : vector<16x32xf32>, vector<32x32xf32>, vector<16x32xf32> -> vector<16x32xf32>
    %c0_223 = arith.constant 0 : index
    %c0_224 = arith.constant 0 : index
    %900 = vector.load %arg28[%c0_223, %c0_224] : memref<32x256xf32, #tpu.memory_space<vmem>>, vector<32x256xf32>
    %cst_225 = arith.constant dense<0.000000e+00> : vector<16x256xf32>
    %901 = tpu.matmul %895, %900, %cst_225 {dimension_numbers = #tpu.dot_dimension_numbers<[1], [0], [0], [1], [0, 0, 1, 1], [], []>} : vector<16x32xf32>, vector<32x256xf32>, vector<16x256xf32> -> vector<16x256xf32>
    %c0_226 = arith.constant 0 : index
    %c0_227 = arith.constant 0 : index
    %902 = vector.load %arg25[%c0_226, %c0_227] : memref<32x1xf32, #tpu.memory_space<vmem>>, vector<32x1xf32>
    %cst_228 = arith.constant dense<0.000000e+00> : vector<16x1xf32>
    %903 = tpu.matmul %894, %902, %cst_228 {dimension_numbers = #tpu.dot_dimension_numbers<[1], [0], [0], [1], [0, 0, 1, 1], [], []>} : vector<16x32xf32>, vector<32x1xf32>, vector<16x1xf32> -> vector<16x1xf32>
    %c0_229 = arith.constant 0 : index
    %c0_230 = arith.constant 0 : index
    %904 = vector.load %arg27[%c0_229, %c0_230] : memref<1x1xf32, #tpu.memory_space<vmem>>, vector<1x1xf32>
    %905 = vector.broadcast %904 : vector<1x1xf32> to vector<16x1xf32>
    %906 = arith.addf %903, %905 : vector<16x1xf32>
    %c0_231 = arith.constant 0 : index
    %c0_232 = arith.constant 0 : index
    %907 = vector.load %arg29[%c0_231, %c0_232] : memref<32x8xf32, #tpu.memory_space<vmem>>, vector<32x8xf32>
    %cst_233 = arith.constant dense<0.000000e+00> : vector<16x8xf32>
    %908 = tpu.matmul %895, %907, %cst_233 {dimension_numbers = #tpu.dot_dimension_numbers<[1], [0], [0], [1], [0, 0, 1, 1], [], []>} : vector<16x32xf32>, vector<32x8xf32>, vector<16x8xf32> -> vector<16x8xf32>
    %c0_234 = arith.constant 0 : index
    %c0_235 = arith.constant 0 : index
    %909 = vector.load %arg31[%c0_234, %c0_235] : memref<1x8xf32, #tpu.memory_space<vmem>>, vector<1x8xf32>
    %910 = vector.broadcast %909 : vector<1x8xf32> to vector<16x8xf32>
    %911 = arith.addf %908, %910 : vector<16x8xf32>
    %c0_236 = arith.constant 0 : index
    %c0_237 = arith.constant 0 : index
    %912 = vector.load %arg26[%c0_236, %c0_237] : memref<1x32xf32, #tpu.memory_space<vmem>>, vector<1x32xf32>
    %cst_238 = arith.constant dense<0.000000e+00> : vector<1x16xf32>
    %913 = tpu.matmul %912, %896, %cst_238 {dimension_numbers = #tpu.dot_dimension_numbers<[1], [1], [0], [0], [0, 0, 1, 0], [], []>} : vector<1x32xf32>, vector<16x32xf32>, vector<1x16xf32> -> vector<1x16xf32>
    %c0_239 = arith.constant 0 : index
    %c0_240 = arith.constant 0 : index
    %914 = vector.load %arg30[%c0_239, %c0_240] : memref<8x32xf32, #tpu.memory_space<vmem>>, vector<8x32xf32>
    %cst_241 = arith.constant dense<0.000000e+00> : vector<8x16xf32>
    %915 = tpu.matmul %914, %897, %cst_241 {dimension_numbers = #tpu.dot_dimension_numbers<[1], [1], [0], [0], [0, 0, 1, 0], [], []>} : vector<8x32xf32>, vector<16x32xf32>, vector<8x16xf32> -> vector<8x16xf32>
    %cst_242 = arith.constant dense<0.000000e+00> : vector<16x16xf32>
    %916 = tpu.matmul %899, %896, %cst_242 {dimension_numbers = #tpu.dot_dimension_numbers<[1], [1], [0], [0], [0, 0, 1, 0], [], []>} : vector<16x32xf32>, vector<16x32xf32>, vector<16x16xf32> -> vector<16x16xf32>
    %917 = vector.extract_strided_slice %916 {offsets = [0, 0], sizes = [8, 8], strides = [1, 1]} : vector<16x16xf32> to vector<8x8xf32>
    %918 = vector.extract_strided_slice %906 {offsets = [0, 0], sizes = [8, 1], strides = [1, 1]} : vector<16x1xf32> to vector<8x1xf32>
    %919 = vector.broadcast %918 : vector<8x1xf32> to vector<8x8xf32>
    %920 = arith.addf %917, %919 : vector<8x8xf32>
    %921 = vector.extract_strided_slice %913 {offsets = [0, 0], sizes = [1, 8], strides = [1, 1]} : vector<1x16xf32> to vector<1x8xf32>
    %922 = vector.broadcast %921 : vector<1x8xf32> to vector<8x8xf32>
    %923 = arith.addf %920, %922 : vector<8x8xf32>
    %c0_243 = arith.constant 0 : index
    %c0_244 = arith.constant 0 : index
    %c0_245 = arith.constant 0 : index
    %924 = vector.load %arg32[%c0_243, %c0_244, %c0_245] : memref<2x8x8xf32, #tpu.memory_space<vmem>>, vector<1x8x8xf32>
    %925 = vector.shape_cast %924 : vector<1x8x8xf32> to vector<8x8xf32>
    %926 = vector.shape_cast %923 : vector<8x8xf32> to vector<1x8x8xf32>
    tpu.vector_store %arg32[%c0_243, %c0_244, %c0_245], %926 {strides = array<i32>} : memref<2x8x8xf32, #tpu.memory_space<vmem>>, vector<1x8x8xf32>,
    %927 = vector.extract_strided_slice %916 {offsets = [8, 8], sizes = [8, 8], strides = [1, 1]} : vector<16x16xf32> to vector<8x8xf32>
    %928 = vector.extract_strided_slice %906 {offsets = [8, 0], sizes = [8, 1], strides = [1, 1]} : vector<16x1xf32> to vector<8x1xf32>
    %929 = vector.broadcast %928 : vector<8x1xf32> to vector<8x8xf32>
    %930 = arith.addf %927, %929 : vector<8x8xf32>
    %931 = vector.extract_strided_slice %913 {offsets = [0, 8], sizes = [1, 8], strides = [1, 1]} : vector<1x16xf32> to vector<1x8xf32>
    %932 = vector.broadcast %931 : vector<1x8xf32> to vector<8x8xf32>
    %933 = arith.addf %930, %932 : vector<8x8xf32>
    %c1 = arith.constant 1 : index
    %c0_246 = arith.constant 0 : index
    %c0_247 = arith.constant 0 : index
    %934 = vector.load %arg32[%c1, %c0_246, %c0_247] : memref<2x8x8xf32, #tpu.memory_space<vmem>>, vector<1x8x8xf32>
    %935 = vector.shape_cast %934 : vector<1x8x8xf32> to vector<8x8xf32>
    %936 = vector.shape_cast %933 : vector<8x8xf32> to vector<1x8x8xf32>
    tpu.vector_store %arg32[%c1, %c0_246, %c0_247], %936 {strides = array<i32>} : memref<2x8x8xf32, #tpu.memory_space<vmem>>, vector<1x8x8xf32>,
    %937 = vector.extract_strided_slice %901 {offsets = [0, 0], sizes = [16, 32], strides = [1, 1]} : vector<16x256xf32> to vector<16x32xf32>
    %cst_248 = arith.constant dense<0.000000e+00> : vector<16x16xf32>
    %938 = tpu.matmul %937, %897, %cst_248 {dimension_numbers = #tpu.dot_dimension_numbers<[1], [1], [0], [0], [0, 0, 1, 0], [], []>} : vector<16x32xf32>, vector<16x32xf32>, vector<16x16xf32> -> vector<16x16xf32>
    %939 = vector.extract_strided_slice %938 {offsets = [0, 0], sizes = [8, 8], strides = [1, 1]} : vector<16x16xf32> to vector<8x8xf32>
    %940 = vector.extract_strided_slice %911 {offsets = [0, 0], sizes = [8, 1], strides = [1, 1]} : vector<16x8xf32> to vector<8x1xf32>
    %941 = vector.broadcast %940 : vector<8x1xf32> to vector<8x8xf32>
    %942 = arith.addf %939, %941 : vector<8x8xf32>
    %943 = vector.extract_strided_slice %915 {offsets = [0, 0], sizes = [1, 8], strides = [1, 1]} : vector<8x16xf32> to vector<1x8xf32>
    %944 = vector.broadcast %943 : vector<1x8xf32> to vector<8x8xf32>
    %945 = arith.addf %942, %944 : vector<8x8xf32>
    %c0_249 = arith.constant 0 : index
    %c0_250 = arith.constant 0 : index
    %c0_251 = arith.constant 0 : index
    %c0_252 = arith.constant 0 : index
    %946 = vector.load %arg33[%c0_249, %c0_250, %c0_251, %c0_252] : memref<2x8x8x8xf32, #tpu.memory_space<vmem>>, vector<1x1x8x8xf32>
    %947 = vector.shape_cast %946 : vector<1x1x8x8xf32> to vector<8x8xf32>
    %948 = vector.shape_cast %945 : vector<8x8xf32> to vector<1x1x8x8xf32>
    tpu.vector_store %arg33[%c0_249, %c0_250, %c0_251, %c0_252], %948 {strides = array<i32>} : memref<2x8x8x8xf32, #tpu.memory_space<vmem>>, vector<1x1x8x8xf32>,
    %949 = vector.extract_strided_slice %938 {offsets = [8, 8], sizes = [8, 8], strides = [1, 1]} : vector<16x16xf32> to vector<8x8xf32>
    %950 = vector.extract_strided_slice %911 {offsets = [8, 0], sizes = [8, 1], strides = [1, 1]} : vector<16x8xf32> to vector<8x1xf32>
    %951 = vector.broadcast %950 : vector<8x1xf32> to vector<8x8xf32>
    %952 = arith.addf %949, %951 : vector<8x8xf32>
    %953 = vector.extract_strided_slice %915 {offsets = [0, 8], sizes = [1, 8], strides = [1, 1]} : vector<8x16xf32> to vector<1x8xf32>
    %954 = vector.broadcast %953 : vector<1x8xf32> to vector<8x8xf32>
    %955 = arith.addf %952, %954 : vector<8x8xf32>
    %c1_253 = arith.constant 1 : index
    %c0_254 = arith.constant 0 : index
    %c0_255 = arith.constant 0 : index
    %c0_256 = arith.constant 0 : index
    %956 = vector.load %arg33[%c1_253, %c0_254, %c0_255, %c0_256] : memref<2x8x8x8xf32, #tpu.memory_space<vmem>>, vector<1x1x8x8xf32>
    %957 = vector.shape_cast %956 : vector<1x1x8x8xf32> to vector<8x8xf32>
    %958 = vector.shape_cast %955 : vector<8x8xf32> to vector<1x1x8x8xf32>
    tpu.vector_store %arg33[%c1_253, %c0_254, %c0_255, %c0_256], %958 {strides = array<i32>} : memref<2x8x8x8xf32, #tpu.memory_space<vmem>>, vector<1x1x8x8xf32>,
    %959 = vector.extract_strided_slice %901 {offsets = [0, 32], sizes = [16, 32], strides = [1, 1]} : vector<16x256xf32> to vector<16x32xf32>
    %cst_257 = arith.constant dense<0.000000e+00> : vector<16x16xf32>
    %960 = tpu.matmul %959, %897, %cst_257 {dimension_numbers = #tpu.dot_dimension_numbers<[1], [1], [0], [0], [0, 0, 1, 0], [], []>} : vector<16x32xf32>, vector<16x32xf32>, vector<16x16xf32> -> vector<16x16xf32>
    %961 = vector.extract_strided_slice %960 {offsets = [0, 0], sizes = [8, 8], strides = [1, 1]} : vector<16x16xf32> to vector<8x8xf32>
    %962 = vector.extract_strided_slice %911 {offsets = [0, 1], sizes = [8, 1], strides = [1, 1]} : vector<16x8xf32> to vector<8x1xf32>
    %963 = vector.broadcast %962 : vector<8x1xf32> to vector<8x8xf32>
    %964 = arith.addf %961, %963 : vector<8x8xf32>
    %965 = vector.extract_strided_slice %915 {offsets = [1, 0], sizes = [1, 8], strides = [1, 1]} : vector<8x16xf32> to vector<1x8xf32>
    %966 = vector.broadcast %965 : vector<1x8xf32> to vector<8x8xf32>
    %967 = arith.addf %964, %966 : vector<8x8xf32>
    %c0_258 = arith.constant 0 : index
    %c1_259 = arith.constant 1 : index
    %c0_260 = arith.constant 0 : index
    %c0_261 = arith.constant 0 : index
    %968 = vector.load %arg33[%c0_258, %c1_259, %c0_260, %c0_261] : memref<2x8x8x8xf32, #tpu.memory_space<vmem>>, vector<1x1x8x8xf32>
    %969 = vector.shape_cast %968 : vector<1x1x8x8xf32> to vector<8x8xf32>
    %970 = vector.shape_cast %967 : vector<8x8xf32> to vector<1x1x8x8xf32>
    tpu.vector_store %arg33[%c0_258, %c1_259, %c0_260, %c0_261], %970 {strides = array<i32>} : memref<2x8x8x8xf32, #tpu.memory_space<vmem>>, vector<1x1x8x8xf32>,
    %971 = vector.extract_strided_slice %960 {offsets = [8, 8], sizes = [8, 8], strides = [1, 1]} : vector<16x16xf32> to vector<8x8xf32>
    %972 = vector.extract_strided_slice %911 {offsets = [8, 1], sizes = [8, 1], strides = [1, 1]} : vector<16x8xf32> to vector<8x1xf32>
    %973 = vector.broadcast %972 : vector<8x1xf32> to vector<8x8xf32>
    %974 = arith.addf %971, %973 : vector<8x8xf32>
    %975 = vector.extract_strided_slice %915 {offsets = [1, 8], sizes = [1, 8], strides = [1, 1]} : vector<8x16xf32> to vector<1x8xf32>
    %976 = vector.broadcast %975 : vector<1x8xf32> to vector<8x8xf32>
    %977 = arith.addf %974, %976 : vector<8x8xf32>
    %c1_262 = arith.constant 1 : index
    %c1_263 = arith.constant 1 : index
    %c0_264 = arith.constant 0 : index
    %c0_265 = arith.constant 0 : index
    %978 = vector.load %arg33[%c1_262, %c1_263, %c0_264, %c0_265] : memref<2x8x8x8xf32, #tpu.memory_space<vmem>>, vector<1x1x8x8xf32>
    %979 = vector.shape_cast %978 : vector<1x1x8x8xf32> to vector<8x8xf32>
    %980 = vector.shape_cast %977 : vector<8x8xf32> to vector<1x1x8x8xf32>
    tpu.vector_store %arg33[%c1_262, %c1_263, %c0_264, %c0_265], %980 {strides = array<i32>} : memref<2x8x8x8xf32, #tpu.memory_space<vmem>>, vector<1x1x8x8xf32>,
    %981 = vector.extract_strided_slice %901 {offsets = [0, 64], sizes = [16, 32], strides = [1, 1]} : vector<16x256xf32> to vector<16x32xf32>
    %cst_266 = arith.constant dense<0.000000e+00> : vector<16x16xf32>
    %982 = tpu.matmul %981, %897, %cst_266 {dimension_numbers = #tpu.dot_dimension_numbers<[1], [1], [0], [0], [0, 0, 1, 0], [], []>} : vector<16x32xf32>, vector<16x32xf32>, vector<16x16xf32> -> vector<16x16xf32>
    %983 = vector.extract_strided_slice %982 {offsets = [0, 0], sizes = [8, 8], strides = [1, 1]} : vector<16x16xf32> to vector<8x8xf32>
    %984 = vector.extract_strided_slice %911 {offsets = [0, 2], sizes = [8, 1], strides = [1, 1]} : vector<16x8xf32> to vector<8x1xf32>
    %985 = vector.broadcast %984 : vector<8x1xf32> to vector<8x8xf32>
    %986 = arith.addf %983, %985 : vector<8x8xf32>
    %987 = vector.extract_strided_slice %915 {offsets = [2, 0], sizes = [1, 8], strides = [1, 1]} : vector<8x16xf32> to vector<1x8xf32>
    %988 = vector.broadcast %987 : vector<1x8xf32> to vector<8x8xf32>
    %989 = arith.addf %986, %988 : vector<8x8xf32>
    %c0_267 = arith.constant 0 : index
    %c2_268 = arith.constant 2 : index
    %c0_269 = arith.constant 0 : index
    %c0_270 = arith.constant 0 : index
    %990 = vector.load %arg33[%c0_267, %c2_268, %c0_269, %c0_270] : memref<2x8x8x8xf32, #tpu.memory_space<vmem>>, vector<1x1x8x8xf32>
    %991 = vector.shape_cast %990 : vector<1x1x8x8xf32> to vector<8x8xf32>
    %992 = vector.shape_cast %989 : vector<8x8xf32> to vector<1x1x8x8xf32>
    tpu.vector_store %arg33[%c0_267, %c2_268, %c0_269, %c0_270], %992 {strides = array<i32>} : memref<2x8x8x8xf32, #tpu.memory_space<vmem>>, vector<1x1x8x8xf32>,
    %993 = vector.extract_strided_slice %982 {offsets = [8, 8], sizes = [8, 8], strides = [1, 1]} : vector<16x16xf32> to vector<8x8xf32>
    %994 = vector.extract_strided_slice %911 {offsets = [8, 2], sizes = [8, 1], strides = [1, 1]} : vector<16x8xf32> to vector<8x1xf32>
    %995 = vector.broadcast %994 : vector<8x1xf32> to vector<8x8xf32>
    %996 = arith.addf %993, %995 : vector<8x8xf32>
    %997 = vector.extract_strided_slice %915 {offsets = [2, 8], sizes = [1, 8], strides = [1, 1]} : vector<8x16xf32> to vector<1x8xf32>
    %998 = vector.broadcast %997 : vector<1x8xf32> to vector<8x8xf32>
    %999 = arith.addf %996, %998 : vector<8x8xf32>
    %c1_271 = arith.constant 1 : index
    %c2_272 = arith.constant 2 : index
    %c0_273 = arith.constant 0 : index
    %c0_274 = arith.constant 0 : index
    %1000 = vector.load %arg33[%c1_271, %c2_272, %c0_273, %c0_274] : memref<2x8x8x8xf32, #tpu.memory_space<vmem>>, vector<1x1x8x8xf32>
    %1001 = vector.shape_cast %1000 : vector<1x1x8x8xf32> to vector<8x8xf32>
    %1002 = vector.shape_cast %999 : vector<8x8xf32> to vector<1x1x8x8xf32>
    tpu.vector_store %arg33[%c1_271, %c2_272, %c0_273, %c0_274], %1002 {strides = array<i32>} : memref<2x8x8x8xf32, #tpu.memory_space<vmem>>, vector<1x1x8x8xf32>,
    %1003 = vector.extract_strided_slice %901 {offsets = [0, 96], sizes = [16, 32], strides = [1, 1]} : vector<16x256xf32> to vector<16x32xf32>
    %cst_275 = arith.constant dense<0.000000e+00> : vector<16x16xf32>
    %1004 = tpu.matmul %1003, %897, %cst_275 {dimension_numbers = #tpu.dot_dimension_numbers<[1], [1], [0], [0], [0, 0, 1, 0], [], []>} : vector<16x32xf32>, vector<16x32xf32>, vector<16x16xf32> -> vector<16x16xf32>
    %1005 = vector.extract_strided_slice %1004 {offsets = [0, 0], sizes = [8, 8], strides = [1, 1]} : vector<16x16xf32> to vector<8x8xf32>
    %1006 = vector.extract_strided_slice %911 {offsets = [0, 3], sizes = [8, 1], strides = [1, 1]} : vector<16x8xf32> to vector<8x1xf32>
    %1007 = vector.broadcast %1006 : vector<8x1xf32> to vector<8x8xf32>
    %1008 = arith.addf %1005, %1007 : vector<8x8xf32>
    %1009 = vector.extract_strided_slice %915 {offsets = [3, 0], sizes = [1, 8], strides = [1, 1]} : vector<8x16xf32> to vector<1x8xf32>
    %1010 = vector.broadcast %1009 : vector<1x8xf32> to vector<8x8xf32>
    %1011 = arith.addf %1008, %1010 : vector<8x8xf32>
    %c0_276 = arith.constant 0 : index
    %c3 = arith.constant 3 : index
    %c0_277 = arith.constant 0 : index
    %c0_278 = arith.constant 0 : index
    %1012 = vector.load %arg33[%c0_276, %c3, %c0_277, %c0_278] : memref<2x8x8x8xf32, #tpu.memory_space<vmem>>, vector<1x1x8x8xf32>
    %1013 = vector.shape_cast %1012 : vector<1x1x8x8xf32> to vector<8x8xf32>
    %1014 = vector.shape_cast %1011 : vector<8x8xf32> to vector<1x1x8x8xf32>
    tpu.vector_store %arg33[%c0_276, %c3, %c0_277, %c0_278], %1014 {strides = array<i32>} : memref<2x8x8x8xf32, #tpu.memory_space<vmem>>, vector<1x1x8x8xf32>,
    %1015 = vector.extract_strided_slice %1004 {offsets = [8, 8], sizes = [8, 8], strides = [1, 1]} : vector<16x16xf32> to vector<8x8xf32>
    %1016 = vector.extract_strided_slice %911 {offsets = [8, 3], sizes = [8, 1], strides = [1, 1]} : vector<16x8xf32> to vector<8x1xf32>
    %1017 = vector.broadcast %1016 : vector<8x1xf32> to vector<8x8xf32>
    %1018 = arith.addf %1015, %1017 : vector<8x8xf32>
    %1019 = vector.extract_strided_slice %915 {offsets = [3, 8], sizes = [1, 8], strides = [1, 1]} : vector<8x16xf32> to vector<1x8xf32>
    %1020 = vector.broadcast %1019 : vector<1x8xf32> to vector<8x8xf32>
    %1021 = arith.addf %1018, %1020 : vector<8x8xf32>
    %c1_279 = arith.constant 1 : index
    %c3_280 = arith.constant 3 : index
    %c0_281 = arith.constant 0 : index
    %c0_282 = arith.constant 0 : index
    %1022 = vector.load %arg33[%c1_279, %c3_280, %c0_281, %c0_282] : memref<2x8x8x8xf32, #tpu.memory_space<vmem>>, vector<1x1x8x8xf32>
    %1023 = vector.shape_cast %1022 : vector<1x1x8x8xf32> to vector<8x8xf32>
    %1024 = vector.shape_cast %1021 : vector<8x8xf32> to vector<1x1x8x8xf32>
    tpu.vector_store %arg33[%c1_279, %c3_280, %c0_281, %c0_282], %1024 {strides = array<i32>} : memref<2x8x8x8xf32, #tpu.memory_space<vmem>>, vector<1x1x8x8xf32>,
    %1025 = vector.extract_strided_slice %901 {offsets = [0, 128], sizes = [16, 32], strides = [1, 1]} : vector<16x256xf32> to vector<16x32xf32>
    %cst_283 = arith.constant dense<0.000000e+00> : vector<16x16xf32>
    %1026 = tpu.matmul %1025, %897, %cst_283 {dimension_numbers = #tpu.dot_dimension_numbers<[1], [1], [0], [0], [0, 0, 1, 0], [], []>} : vector<16x32xf32>, vector<16x32xf32>, vector<16x16xf32> -> vector<16x16xf32>
    %1027 = vector.extract_strided_slice %1026 {offsets = [0, 0], sizes = [8, 8], strides = [1, 1]} : vector<16x16xf32> to vector<8x8xf32>
    %1028 = vector.extract_strided_slice %911 {offsets = [0, 4], sizes = [8, 1], strides = [1, 1]} : vector<16x8xf32> to vector<8x1xf32>
    %1029 = vector.broadcast %1028 : vector<8x1xf32> to vector<8x8xf32>
    %1030 = arith.addf %1027, %1029 : vector<8x8xf32>
    %1031 = vector.extract_strided_slice %915 {offsets = [4, 0], sizes = [1, 8], strides = [1, 1]} : vector<8x16xf32> to vector<1x8xf32>
    %1032 = vector.broadcast %1031 : vector<1x8xf32> to vector<8x8xf32>
    %1033 = arith.addf %1030, %1032 : vector<8x8xf32>
    %c0_284 = arith.constant 0 : index
    %c4_285 = arith.constant 4 : index
    %c0_286 = arith.constant 0 : index
    %c0_287 = arith.constant 0 : index
    %1034 = vector.load %arg33[%c0_284, %c4_285, %c0_286, %c0_287] : memref<2x8x8x8xf32, #tpu.memory_space<vmem>>, vector<1x1x8x8xf32>
    %1035 = vector.shape_cast %1034 : vector<1x1x8x8xf32> to vector<8x8xf32>
    %1036 = vector.shape_cast %1033 : vector<8x8xf32> to vector<1x1x8x8xf32>
    tpu.vector_store %arg33[%c0_284, %c4_285, %c0_286, %c0_287], %1036 {strides = array<i32>} : memref<2x8x8x8xf32, #tpu.memory_space<vmem>>, vector<1x1x8x8xf32>,
    %1037 = vector.extract_strided_slice %1026 {offsets = [8, 8], sizes = [8, 8], strides = [1, 1]} : vector<16x16xf32> to vector<8x8xf32>
    %1038 = vector.extract_strided_slice %911 {offsets = [8, 4], sizes = [8, 1], strides = [1, 1]} : vector<16x8xf32> to vector<8x1xf32>
    %1039 = vector.broadcast %1038 : vector<8x1xf32> to vector<8x8xf32>
    %1040 = arith.addf %1037, %1039 : vector<8x8xf32>
    %1041 = vector.extract_strided_slice %915 {offsets = [4, 8], sizes = [1, 8], strides = [1, 1]} : vector<8x16xf32> to vector<1x8xf32>
    %1042 = vector.broadcast %1041 : vector<1x8xf32> to vector<8x8xf32>
    %1043 = arith.addf %1040, %1042 : vector<8x8xf32>
    %c1_288 = arith.constant 1 : index
    %c4_289 = arith.constant 4 : index
    %c0_290 = arith.constant 0 : index
    %c0_291 = arith.constant 0 : index
    %1044 = vector.load %arg33[%c1_288, %c4_289, %c0_290, %c0_291] : memref<2x8x8x8xf32, #tpu.memory_space<vmem>>, vector<1x1x8x8xf32>
    %1045 = vector.shape_cast %1044 : vector<1x1x8x8xf32> to vector<8x8xf32>
    %1046 = vector.shape_cast %1043 : vector<8x8xf32> to vector<1x1x8x8xf32>
    tpu.vector_store %arg33[%c1_288, %c4_289, %c0_290, %c0_291], %1046 {strides = array<i32>} : memref<2x8x8x8xf32, #tpu.memory_space<vmem>>, vector<1x1x8x8xf32>,
    %1047 = vector.extract_strided_slice %901 {offsets = [0, 160], sizes = [16, 32], strides = [1, 1]} : vector<16x256xf32> to vector<16x32xf32>
    %cst_292 = arith.constant dense<0.000000e+00> : vector<16x16xf32>
    %1048 = tpu.matmul %1047, %897, %cst_292 {dimension_numbers = #tpu.dot_dimension_numbers<[1], [1], [0], [0], [0, 0, 1, 0], [], []>} : vector<16x32xf32>, vector<16x32xf32>, vector<16x16xf32> -> vector<16x16xf32>
    %1049 = vector.extract_strided_slice %1048 {offsets = [0, 0], sizes = [8, 8], strides = [1, 1]} : vector<16x16xf32> to vector<8x8xf32>
    %1050 = vector.extract_strided_slice %911 {offsets = [0, 5], sizes = [8, 1], strides = [1, 1]} : vector<16x8xf32> to vector<8x1xf32>
    %1051 = vector.broadcast %1050 : vector<8x1xf32> to vector<8x8xf32>
    %1052 = arith.addf %1049, %1051 : vector<8x8xf32>
    %1053 = vector.extract_strided_slice %915 {offsets = [5, 0], sizes = [1, 8], strides = [1, 1]} : vector<8x16xf32> to vector<1x8xf32>
    %1054 = vector.broadcast %1053 : vector<1x8xf32> to vector<8x8xf32>
    %1055 = arith.addf %1052, %1054 : vector<8x8xf32>
    %c0_293 = arith.constant 0 : index
    %c5 = arith.constant 5 : index
    %c0_294 = arith.constant 0 : index
    %c0_295 = arith.constant 0 : index
    %1056 = vector.load %arg33[%c0_293, %c5, %c0_294, %c0_295] : memref<2x8x8x8xf32, #tpu.memory_space<vmem>>, vector<1x1x8x8xf32>
    %1057 = vector.shape_cast %1056 : vector<1x1x8x8xf32> to vector<8x8xf32>
    %1058 = vector.shape_cast %1055 : vector<8x8xf32> to vector<1x1x8x8xf32>
    tpu.vector_store %arg33[%c0_293, %c5, %c0_294, %c0_295], %1058 {strides = array<i32>} : memref<2x8x8x8xf32, #tpu.memory_space<vmem>>, vector<1x1x8x8xf32>,
    %1059 = vector.extract_strided_slice %1048 {offsets = [8, 8], sizes = [8, 8], strides = [1, 1]} : vector<16x16xf32> to vector<8x8xf32>
    %1060 = vector.extract_strided_slice %911 {offsets = [8, 5], sizes = [8, 1], strides = [1, 1]} : vector<16x8xf32> to vector<8x1xf32>
    %1061 = vector.broadcast %1060 : vector<8x1xf32> to vector<8x8xf32>
    %1062 = arith.addf %1059, %1061 : vector<8x8xf32>
    %1063 = vector.extract_strided_slice %915 {offsets = [5, 8], sizes = [1, 8], strides = [1, 1]} : vector<8x16xf32> to vector<1x8xf32>
    %1064 = vector.broadcast %1063 : vector<1x8xf32> to vector<8x8xf32>
    %1065 = arith.addf %1062, %1064 : vector<8x8xf32>
    %c1_296 = arith.constant 1 : index
    %c5_297 = arith.constant 5 : index
    %c0_298 = arith.constant 0 : index
    %c0_299 = arith.constant 0 : index
    %1066 = vector.load %arg33[%c1_296, %c5_297, %c0_298, %c0_299] : memref<2x8x8x8xf32, #tpu.memory_space<vmem>>, vector<1x1x8x8xf32>
    %1067 = vector.shape_cast %1066 : vector<1x1x8x8xf32> to vector<8x8xf32>
    %1068 = vector.shape_cast %1065 : vector<8x8xf32> to vector<1x1x8x8xf32>
    tpu.vector_store %arg33[%c1_296, %c5_297, %c0_298, %c0_299], %1068 {strides = array<i32>} : memref<2x8x8x8xf32, #tpu.memory_space<vmem>>, vector<1x1x8x8xf32>,
    %1069 = vector.extract_strided_slice %901 {offsets = [0, 192], sizes = [16, 32], strides = [1, 1]} : vector<16x256xf32> to vector<16x32xf32>
    %cst_300 = arith.constant dense<0.000000e+00> : vector<16x16xf32>
    %1070 = tpu.matmul %1069, %897, %cst_300 {dimension_numbers = #tpu.dot_dimension_numbers<[1], [1], [0], [0], [0, 0, 1, 0], [], []>} : vector<16x32xf32>, vector<16x32xf32>, vector<16x16xf32> -> vector<16x16xf32>
    %1071 = vector.extract_strided_slice %1070 {offsets = [0, 0], sizes = [8, 8], strides = [1, 1]} : vector<16x16xf32> to vector<8x8xf32>
    %1072 = vector.extract_strided_slice %911 {offsets = [0, 6], sizes = [8, 1], strides = [1, 1]} : vector<16x8xf32> to vector<8x1xf32>
    %1073 = vector.broadcast %1072 : vector<8x1xf32> to vector<8x8xf32>
    %1074 = arith.addf %1071, %1073 : vector<8x8xf32>
    %1075 = vector.extract_strided_slice %915 {offsets = [6, 0], sizes = [1, 8], strides = [1, 1]} : vector<8x16xf32> to vector<1x8xf32>
    %1076 = vector.broadcast %1075 : vector<1x8xf32> to vector<8x8xf32>
    %1077 = arith.addf %1074, %1076 : vector<8x8xf32>
    %c0_301 = arith.constant 0 : index
    %c6_302 = arith.constant 6 : index
    %c0_303 = arith.constant 0 : index
    %c0_304 = arith.constant 0 : index
    %1078 = vector.load %arg33[%c0_301, %c6_302, %c0_303, %c0_304] : memref<2x8x8x8xf32, #tpu.memory_space<vmem>>, vector<1x1x8x8xf32>
    %1079 = vector.shape_cast %1078 : vector<1x1x8x8xf32> to vector<8x8xf32>
    %1080 = vector.shape_cast %1077 : vector<8x8xf32> to vector<1x1x8x8xf32>
    tpu.vector_store %arg33[%c0_301, %c6_302, %c0_303, %c0_304], %1080 {strides = array<i32>} : memref<2x8x8x8xf32, #tpu.memory_space<vmem>>, vector<1x1x8x8xf32>,
    %1081 = vector.extract_strided_slice %1070 {offsets = [8, 8], sizes = [8, 8], strides = [1, 1]} : vector<16x16xf32> to vector<8x8xf32>
    %1082 = vector.extract_strided_slice %911 {offsets = [8, 6], sizes = [8, 1], strides = [1, 1]} : vector<16x8xf32> to vector<8x1xf32>
    %1083 = vector.broadcast %1082 : vector<8x1xf32> to vector<8x8xf32>
    %1084 = arith.addf %1081, %1083 : vector<8x8xf32>
    %1085 = vector.extract_strided_slice %915 {offsets = [6, 8], sizes = [1, 8], strides = [1, 1]} : vector<8x16xf32> to vector<1x8xf32>
    %1086 = vector.broadcast %1085 : vector<1x8xf32> to vector<8x8xf32>
    %1087 = arith.addf %1084, %1086 : vector<8x8xf32>
    %c1_305 = arith.constant 1 : index
    %c6_306 = arith.constant 6 : index
    %c0_307 = arith.constant 0 : index
    %c0_308 = arith.constant 0 : index
    %1088 = vector.load %arg33[%c1_305, %c6_306, %c0_307, %c0_308] : memref<2x8x8x8xf32, #tpu.memory_space<vmem>>, vector<1x1x8x8xf32>
    %1089 = vector.shape_cast %1088 : vector<1x1x8x8xf32> to vector<8x8xf32>
    %1090 = vector.shape_cast %1087 : vector<8x8xf32> to vector<1x1x8x8xf32>
    tpu.vector_store %arg33[%c1_305, %c6_306, %c0_307, %c0_308], %1090 {strides = array<i32>} : memref<2x8x8x8xf32, #tpu.memory_space<vmem>>, vector<1x1x8x8xf32>,
    %1091 = vector.extract_strided_slice %901 {offsets = [0, 224], sizes = [16, 32], strides = [1, 1]} : vector<16x256xf32> to vector<16x32xf32>
    %cst_309 = arith.constant dense<0.000000e+00> : vector<16x16xf32>
    %1092 = tpu.matmul %1091, %897, %cst_309 {dimension_numbers = #tpu.dot_dimension_numbers<[1], [1], [0], [0], [0, 0, 1, 0], [], []>} : vector<16x32xf32>, vector<16x32xf32>, vector<16x16xf32> -> vector<16x16xf32>
    %1093 = vector.extract_strided_slice %1092 {offsets = [0, 0], sizes = [8, 8], strides = [1, 1]} : vector<16x16xf32> to vector<8x8xf32>
    %1094 = vector.extract_strided_slice %911 {offsets = [0, 7], sizes = [8, 1], strides = [1, 1]} : vector<16x8xf32> to vector<8x1xf32>
    %1095 = vector.broadcast %1094 : vector<8x1xf32> to vector<8x8xf32>
    %1096 = arith.addf %1093, %1095 : vector<8x8xf32>
    %1097 = vector.extract_strided_slice %915 {offsets = [7, 0], sizes = [1, 8], strides = [1, 1]} : vector<8x16xf32> to vector<1x8xf32>
    %1098 = vector.broadcast %1097 : vector<1x8xf32> to vector<8x8xf32>
    %1099 = arith.addf %1096, %1098 : vector<8x8xf32>
    %c0_310 = arith.constant 0 : index
    %c7 = arith.constant 7 : index
    %c0_311 = arith.constant 0 : index
    %c0_312 = arith.constant 0 : index
    %1100 = vector.load %arg33[%c0_310, %c7, %c0_311, %c0_312] : memref<2x8x8x8xf32, #tpu.memory_space<vmem>>, vector<1x1x8x8xf32>
    %1101 = vector.shape_cast %1100 : vector<1x1x8x8xf32> to vector<8x8xf32>
    %1102 = vector.shape_cast %1099 : vector<8x8xf32> to vector<1x1x8x8xf32>
    tpu.vector_store %arg33[%c0_310, %c7, %c0_311, %c0_312], %1102 {strides = array<i32>} : memref<2x8x8x8xf32, #tpu.memory_space<vmem>>, vector<1x1x8x8xf32>,
    %1103 = vector.extract_strided_slice %1092 {offsets = [8, 8], sizes = [8, 8], strides = [1, 1]} : vector<16x16xf32> to vector<8x8xf32>
    %1104 = vector.extract_strided_slice %911 {offsets = [8, 7], sizes = [8, 1], strides = [1, 1]} : vector<16x8xf32> to vector<8x1xf32>
    %1105 = vector.broadcast %1104 : vector<8x1xf32> to vector<8x8xf32>
    %1106 = arith.addf %1103, %1105 : vector<8x8xf32>
    %1107 = vector.extract_strided_slice %915 {offsets = [7, 8], sizes = [1, 8], strides = [1, 1]} : vector<8x16xf32> to vector<1x8xf32>
    %1108 = vector.broadcast %1107 : vector<1x8xf32> to vector<8x8xf32>
    %1109 = arith.addf %1106, %1108 : vector<8x8xf32>
    %c1_313 = arith.constant 1 : index
    %c7_314 = arith.constant 7 : index
    %c0_315 = arith.constant 0 : index
    %c0_316 = arith.constant 0 : index
    %1110 = vector.load %arg33[%c1_313, %c7_314, %c0_315, %c0_316] : memref<2x8x8x8xf32, #tpu.memory_space<vmem>>, vector<1x1x8x8xf32>
    %1111 = vector.shape_cast %1110 : vector<1x1x8x8xf32> to vector<8x8xf32>
    %1112 = vector.shape_cast %1109 : vector<8x8xf32> to vector<1x1x8x8xf32>
    tpu.vector_store %arg33[%c1_313, %c7_314, %c0_315, %c0_316], %1112 {strides = array<i32>} : memref<2x8x8x8xf32, #tpu.memory_space<vmem>>, vector<1x1x8x8xf32>,
    return
  }
  func.func @transform_0(%arg0: i32) -> (i32, i32) {
    %c0_i32 = arith.constant 0 : i32
    %c0_i32_0 = arith.constant 0 : i32
    %c0_i32_1 = arith.constant 0 : i32
    return %c0_i32, %c0_i32_0 : i32, i32
  }
  func.func @transform_1(%arg0: i32) -> (i32, i32) {
    %c0_i32 = arith.constant 0 : i32
    %c0_i32_0 = arith.constant 0 : i32
    %c0_i32_1 = arith.constant 0 : i32
    return %c0_i32, %c0_i32_0 : i32, i32
  }
  func.func @transform_2(%arg0: i32) -> (i32, i32) {
    %c0_i32 = arith.constant 0 : i32
    %c0_i32_0 = arith.constant 0 : i32
    %c0_i32_1 = arith.constant 0 : i32
    return %c0_i32, %c0_i32_0 : i32, i32
  }
  func.func @transform_3(%arg0: i32) -> (i32, i32) {
    %c0_i32 = arith.constant 0 : i32
    %c0_i32_0 = arith.constant 0 : i32
    %c0_i32_1 = arith.constant 0 : i32
    return %c0_i32, %c0_i32_0 : i32, i32
  }
  func.func @transform_4(%arg0: i32) -> (i32, i32) {
    %c0_i32 = arith.constant 0 : i32
    %c0_i32_0 = arith.constant 0 : i32
    %c0_i32_1 = arith.constant 0 : i32
    return %c0_i32, %c0_i32_0 : i32, i32
  }
  func.func @transform_5(%arg0: i32) -> (i32, i32) {
    %c0_i32 = arith.constant 0 : i32
    %c0_i32_0 = arith.constant 0 : i32
    %c0_i32_1 = arith.constant 0 : i32
    return %c0_i32, %c0_i32_0 : i32, i32
  }
  func.func @transform_6(%arg0: i32) -> (i32, i32) {
    %c0_i32 = arith.constant 0 : i32
    %c0_i32_0 = arith.constant 0 : i32
    %c0_i32_1 = arith.constant 0 : i32
    return %c0_i32, %c0_i32_0 : i32, i32
  }
  func.func @transform_7(%arg0: i32) -> (i32, i32) {
    %c0_i32 = arith.constant 0 : i32
    %c0_i32_0 = arith.constant 0 : i32
    %c0_i32_1 = arith.constant 0 : i32
    return %c0_i32, %c0_i32_0 : i32, i32
  }
  func.func @transform_8(%arg0: i32) -> (i32, i32) {
    %c0_i32 = arith.constant 0 : i32
    %c0_i32_0 = arith.constant 0 : i32
    %c0_i32_1 = arith.constant 0 : i32
    return %c0_i32, %c0_i32_0 : i32, i32
  }
  func.func @transform_9(%arg0: i32) -> (i32, i32) {
    %c0_i32 = arith.constant 0 : i32
    %c0_i32_0 = arith.constant 0 : i32
    %c0_i32_1 = arith.constant 0 : i32
    return %c0_i32, %c0_i32_0 : i32, i32
  }
  func.func @transform_10(%arg0: i32) -> (i32, i32) {
    %c0_i32 = arith.constant 0 : i32
    %c0_i32_0 = arith.constant 0 : i32
    %c0_i32_1 = arith.constant 0 : i32
    return %c0_i32, %c0_i32_0 : i32, i32
  }
  func.func @transform_11(%arg0: i32) -> (i32, i32) {
    %c0_i32 = arith.constant 0 : i32
    %c0_i32_0 = arith.constant 0 : i32
    %c0_i32_1 = arith.constant 0 : i32
    return %c0_i32, %c0_i32_0 : i32, i32
  }
  func.func @transform_12(%arg0: i32) -> (i32, i32) {
    %c0_i32 = arith.constant 0 : i32
    %c0_i32_0 = arith.constant 0 : i32
    %c0_i32_1 = arith.constant 0 : i32
    return %c0_i32, %c0_i32_0 : i32, i32
  }
  func.func @transform_13(%arg0: i32) -> (i32, i32) {
    %c0_i32 = arith.constant 0 : i32
    %c0_i32_0 = arith.constant 0 : i32
    %c0_i32_1 = arith.constant 0 : i32
    return %c0_i32, %c0_i32_0 : i32, i32
  }
  func.func @transform_14(%arg0: i32) -> (i32, i32) {
    %c0_i32 = arith.constant 0 : i32
    %c0_i32_0 = arith.constant 0 : i32
    %c0_i32_1 = arith.constant 0 : i32
    return %c0_i32, %c0_i32_0 : i32, i32
  }
  func.func @transform_15(%arg0: i32) -> (i32, i32) {
    %c0_i32 = arith.constant 0 : i32
    %c0_i32_0 = arith.constant 0 : i32
    %c0_i32_1 = arith.constant 0 : i32
    return %c0_i32, %c0_i32_0 : i32, i32
  }
  func.func @transform_16(%arg0: i32) -> (i32, i32) {
    %c0_i32 = arith.constant 0 : i32
    %c0_i32_0 = arith.constant 0 : i32
    %c0_i32_1 = arith.constant 0 : i32
    return %c0_i32, %c0_i32_0 : i32, i32
  }
  func.func @transform_17(%arg0: i32) -> (i32, i32) {
    %c0_i32 = arith.constant 0 : i32
    %c0_i32_0 = arith.constant 0 : i32
    %c0_i32_1 = arith.constant 0 : i32
    return %c0_i32, %c0_i32_0 : i32, i32
  }
  func.func @transform_18(%arg0: i32) -> (i32, i32) {
    %c0_i32 = arith.constant 0 : i32
    %c0_i32_0 = arith.constant 0 : i32
    %c0_i32_1 = arith.constant 0 : i32
    return %c0_i32, %c0_i32_0 : i32, i32
  }
  func.func @transform_19(%arg0: i32) -> (i32, i32) {
    %c0_i32 = arith.constant 0 : i32
    %c0_i32_0 = arith.constant 0 : i32
    %c0_i32_1 = arith.constant 0 : i32
    return %c0_i32, %c0_i32_0 : i32, i32
  }
  func.func @transform_20(%arg0: i32) -> (i32, i32) {
    %c0_i32 = arith.constant 0 : i32
    %c0_i32_0 = arith.constant 0 : i32
    %c0_i32_1 = arith.constant 0 : i32
    return %c0_i32, %c0_i32_0 : i32, i32
  }
  func.func @transform_21(%arg0: i32) -> (i32, i32) {
    %c0_i32 = arith.constant 0 : i32
    %c0_i32_0 = arith.constant 0 : i32
    %c0_i32_1 = arith.constant 0 : i32
    return %c0_i32, %c0_i32_0 : i32, i32
  }
  func.func @transform_22(%arg0: i32) -> (i32, i32) {
    %c0_i32 = arith.constant 0 : i32
    %c0_i32_0 = arith.constant 0 : i32
    %c0_i32_1 = arith.constant 0 : i32
    return %c0_i32, %c0_i32_0 : i32, i32
  }
  func.func @transform_23(%arg0: i32) -> (i32, i32) {
    %c0_i32 = arith.constant 0 : i32
    %c0_i32_0 = arith.constant 0 : i32
    %c0_i32_1 = arith.constant 0 : i32
    return %c0_i32, %c0_i32_0 : i32, i32
  }
  func.func @transform_24(%arg0: i32) -> (i32, i32) {
    %c0_i32 = arith.constant 0 : i32
    %c0_i32_0 = arith.constant 0 : i32
    %c0_i32_1 = arith.constant 0 : i32
    return %c0_i32, %c0_i32_0 : i32, i32
  }
  func.func @transform_25(%arg0: i32) -> (i32, i32) {
    %c0_i32 = arith.constant 0 : i32
    %c0_i32_0 = arith.constant 0 : i32
    %c0_i32_1 = arith.constant 0 : i32
    return %c0_i32, %c0_i32_0 : i32, i32
  }
  func.func @transform_26(%arg0: i32) -> (i32, i32) {
    %c0_i32 = arith.constant 0 : i32
    %c0_i32_0 = arith.constant 0 : i32
    %c0_i32_1 = arith.constant 0 : i32
    return %c0_i32, %c0_i32_0 : i32, i32
  }
  func.func @transform_27(%arg0: i32) -> (i32, i32) {
    %c0_i32 = arith.constant 0 : i32
    %c0_i32_0 = arith.constant 0 : i32
    %c0_i32_1 = arith.constant 0 : i32
    return %c0_i32, %c0_i32_0 : i32, i32
  }
  func.func @transform_28(%arg0: i32) -> (i32, i32) {
    %c0_i32 = arith.constant 0 : i32
    %c0_i32_0 = arith.constant 0 : i32
    %c0_i32_1 = arith.constant 0 : i32
    return %c0_i32, %c0_i32_0 : i32, i32
  }
  func.func @transform_29(%arg0: i32) -> (i32, i32) {
    %c0_i32 = arith.constant 0 : i32
    %c0_i32_0 = arith.constant 0 : i32
    %c0_i32_1 = arith.constant 0 : i32
    return %c0_i32, %c0_i32_0 : i32, i32
  }
  func.func @transform_30(%arg0: i32) -> (i32, i32) {
    %c0_i32 = arith.constant 0 : i32
    %c0_i32_0 = arith.constant 0 : i32
    %c0_i32_1 = arith.constant 0 : i32
    return %c0_i32, %c0_i32_0 : i32, i32
  }
  func.func @transform_31(%arg0: i32) -> (i32, i32, i32) {
    %c0_i32 = arith.constant 0 : i32
    %c0_i32_0 = arith.constant 0 : i32
    %c0_i32_1 = arith.constant 0 : i32
    %c0_i32_2 = arith.constant 0 : i32
    return %c0_i32, %c0_i32_0, %c0_i32_1 : i32, i32, i32
  }
  func.func @transform_32(%arg0: i32) -> (i32, i32, i32, i32) {
    %c0_i32 = arith.constant 0 : i32
    %c0_i32_0 = arith.constant 0 : i32
    %c0_i32_1 = arith.constant 0 : i32
    %c0_i32_2 = arith.constant 0 : i32
    %c0_i32_3 = arith.constant 0 : i32
    return %c0_i32, %c0_i32_0, %c0_i32_1, %c0_i32_2 : i32, i32, i32, i32
  }
}

</mosaic_0001>

<llo_original>
// kernel: joint_parser_forward.1
$region0: #{joint_parser_forward.1}
  #allocation0 [shape = 'u32[]', space=smem, size = 0x4, offset = 0x4, fixed_abs, tag = 'smem constant byte address 0x4 - core index']
  #allocation1 [shape = 'u32[144,128]{1,0:T(1,128)}', space=vmem, size = 0x12000, scoped, tag = 'internal scratch']
  #allocation2 [shape = 'f32[16,32]{1,0:T(8,128)}', space=vmem, size = 0x2000, scoped, tag = 'scratch operand']
  #allocation3 [shape = 'f32[1,1]{1,0:T(1,128)S(1)}', space=vmem, size = 0x200, scoped, tag = 'scoped memory for joint_parser_forward.1']
  %s0 = inlined_call_operand.smem [shape: u32[33], index: -1, kind: input, shape index: {}]
  %s1 = sld [smem:[%s0]]
  %s2 = scalar_lea.smem %s0, 1
  %s3 = sld [smem:[%s2]]
  %s4 = scalar_lea.smem %s0, 2
  %s5 = sld [smem:[%s4]]
  %s6 = scalar_lea.smem %s0, 3
  %s7 = sld [smem:[%s6]]
  %s8 = scalar_lea.smem %s0, 4
  %s9 = sld [smem:[%s8]]
  %s10 = scalar_lea.smem %s0, 5
  %s11 = sld [smem:[%s10]]
  %s12 = scalar_lea.smem %s0, 6
  %s13 = sld [smem:[%s12]]
  %s14 = scalar_lea.smem %s0, 7
  %s15 = sld [smem:[%s14]]
  %s16 = scalar_lea.smem %s0, 8
  %s17 = sld [smem:[%s16]]
  %s18 = scalar_lea.smem %s0, 9
  %s19 = sld [smem:[%s18]]
  %s20 = scalar_lea.smem %s0, 10
  %s21 = sld [smem:[%s20]]
  %s22 = scalar_lea.smem %s0, 11
  %s23 = sld [smem:[%s22]]
  %s24 = scalar_lea.smem %s0, 12
  %s25 = sld [smem:[%s24]]
  %s26 = scalar_lea.smem %s0, 13
  %s27 = sld [smem:[%s26]]
  %s28 = scalar_lea.smem %s0, 14
  %s29 = sld [smem:[%s28]]
  %s30 = scalar_lea.smem %s0, 15
  %s31 = sld [smem:[%s30]]
  %s32 = scalar_lea.smem %s0, 16
  %s33 = sld [smem:[%s32]]
  %s34 = scalar_lea.smem %s0, 17
  %s35 = sld [smem:[%s34]]
  %s36 = scalar_lea.smem %s0, 18
  %s37 = sld [smem:[%s36]]
  %s38 = scalar_lea.smem %s0, 19
  %s39 = sld [smem:[%s38]]
  %s40 = scalar_lea.smem %s0, 20
  %s41 = sld [smem:[%s40]]
  %s42 = scalar_lea.smem %s0, 21
  %s43 = sld [smem:[%s42]]
  %s44 = scalar_lea.smem %s0, 22
  %s45 = sld [smem:[%s44]]
  %s46 = scalar_lea.smem %s0, 23
  %s47 = sld [smem:[%s46]]
  %s48 = scalar_lea.smem %s0, 24
  %s49 = sld [smem:[%s48]]
  %s50 = scalar_lea.smem %s0, 25
  %s51 = sld [smem:[%s50]]
  %s52 = scalar_lea.smem %s0, 26
  %s53 = sld [smem:[%s52]]
  %s54 = scalar_lea.smem %s0, 27
  %s55 = sld [smem:[%s54]]
  %s56 = scalar_lea.smem %s0, 28
  %s57 = sld [smem:[%s56]]
  %s58 = scalar_lea.smem %s0, 29
  %s59 = sld [smem:[%s58]]
  %s60 = scalar_lea.smem %s0, 30
  %s61 = sld [smem:[%s60]]
  %s62 = scalar_lea.smem %s0, 31
  %s63 = sld [smem:[%s62]]
  %s64 = scalar_lea.smem %s0, 32
  %s65 = sld [smem:[%s64]]
  %66 = xla_tuple %s63, %s65
  %s67 = sld [smem:[#allocation0]]
  $region142: #{joint_parser_forward.1} parent=0
    _
  %s69 = ssub.s32 1, %s67
  %s70 = scalar_select 0, %s69, %s67
  %v71 = vstv %s53
  %72 = vst [vmem:[#allocation3] sm:$0x1] %v71
  // Predicated region
  $region2: #{joint_parser_forward.1} parent=0 // pred_check
    _
  $region3: #{joint_parser_forward.1} parent=0 // pred_check_branch
    %74 = sbr.rel (0) target = $region5
  $region4: #{joint_parser_forward.1} parent=0 // pred_region
    _
  $region5: #{joint_parser_forward.1} parent=0 // pred_fallthru
    _
  // Predicated region
  $region6: #{joint_parser_forward.1} parent=0 // pred_check
    _
  $region7: #{joint_parser_forward.1} parent=0 // pred_check_branch
    %76 = sbr.rel (0) target = $region9
  $region8: #{joint_parser_forward.1} parent=0 // pred_region
    _
  $region9: #{joint_parser_forward.1} parent=0 // pred_fallthru
    _
  // Predicated region
  $region10: #{joint_parser_forward.1} parent=0 // pred_check
    _
  $region11: #{joint_parser_forward.1} parent=0 // pred_check_branch
    %78 = sbr.rel (0) target = $region13
  $region12: #{joint_parser_forward.1} parent=0 // pred_region
    _
  $region13: #{joint_parser_forward.1} parent=0 // pred_fallthru
    _
  // Predicated region
  $region14: #{joint_parser_forward.1} parent=0 // pred_check
    _
  $region15: #{joint_parser_forward.1} parent=0 // pred_check_branch
    %80 = sbr.rel (0) target = $region17
  $region16: #{joint_parser_forward.1} parent=0 // pred_region
    _
  $region17: #{joint_parser_forward.1} parent=0 // pred_fallthru
    _
  // Predicated region
  $region18: #{joint_parser_forward.1} parent=0 // pred_check
    _
  $region19: #{joint_parser_forward.1} parent=0 // pred_check_branch
    %82 = sbr.rel (0) target = $region21
  $region20: #{joint_parser_forward.1} parent=0 // pred_region
    _
  $region21: #{joint_parser_forward.1} parent=0 // pred_fallthru
    _
  // Predicated region
  $region22: #{joint_parser_forward.1} parent=0 // pred_check
    _
  $region23: #{joint_parser_forward.1} parent=0 // pred_check_branch
    %84 = sbr.rel (0) target = $region25
  $region24: #{joint_parser_forward.1} parent=0 // pred_region
    _
  $region25: #{joint_parser_forward.1} parent=0 // pred_fallthru
    _
  // Predicated region
  $region26: #{joint_parser_forward.1} parent=0 // pred_check
    _
  $region27: #{joint_parser_forward.1} parent=0 // pred_check_branch
    %86 = sbr.rel (0) target = $region29
  $region28: #{joint_parser_forward.1} parent=0 // pred_region
    _
  $region29: #{joint_parser_forward.1} parent=0 // pred_fallthru
    _
  // Predicated region
  $region30: #{joint_parser_forward.1} parent=0 // pred_check
    _
  $region31: #{joint_parser_forward.1} parent=0 // pred_check_branch
    %88 = sbr.rel (0) target = $region33
  $region32: #{joint_parser_forward.1} parent=0 // pred_region
    _
  $region33: #{joint_parser_forward.1} parent=0 // pred_fallthru
    _
  // Predicated region
  $region34: #{joint_parser_forward.1} parent=0 // pred_check
    _
  $region35: #{joint_parser_forward.1} parent=0 // pred_check_branch
    %90 = sbr.rel (0) target = $region37
  $region36: #{joint_parser_forward.1} parent=0 // pred_region
    _
  $region37: #{joint_parser_forward.1} parent=0 // pred_fallthru
    _
  // Predicated region
  $region38: #{joint_parser_forward.1} parent=0 // pred_check
    _
  $region39: #{joint_parser_forward.1} parent=0 // pred_check_branch
    %92 = sbr.rel (0) target = $region41
  $region40: #{joint_parser_forward.1} parent=0 // pred_region
    _
  $region41: #{joint_parser_forward.1} parent=0 // pred_fallthru
    _
  // Predicated region
  $region42: #{joint_parser_forward.1} parent=0 // pred_check
    _
  $region43: #{joint_parser_forward.1} parent=0 // pred_check_branch
    %94 = sbr.rel (0) target = $region45
  $region44: #{joint_parser_forward.1} parent=0 // pred_region
    _
  $region45: #{joint_parser_forward.1} parent=0 // pred_fallthru
    _
  // Predicated region
  $region46: #{joint_parser_forward.1} parent=0 // pred_check
    _
  $region47: #{joint_parser_forward.1} parent=0 // pred_check_branch
    %96 = sbr.rel (0) target = $region49
  $region48: #{joint_parser_forward.1} parent=0 // pred_region
    _
  $region49: #{joint_parser_forward.1} parent=0 // pred_fallthru
    _
  // Predicated region
  $region50: #{joint_parser_forward.1} parent=0 // pred_check
    _
  $region51: #{joint_parser_forward.1} parent=0 // pred_check_branch
    %98 = sbr.rel (0) target = $region53
  $region52: #{joint_parser_forward.1} parent=0 // pred_region
    _
  $region53: #{joint_parser_forward.1} parent=0 // pred_fallthru
    _
  // Predicated region
  $region54: #{joint_parser_forward.1} parent=0 // pred_check
    _
  $region55: #{joint_parser_forward.1} parent=0 // pred_check_branch
    %100 = sbr.rel (0) target = $region57
  $region56: #{joint_parser_forward.1} parent=0 // pred_region
    _
  $region57: #{joint_parser_forward.1} parent=0 // pred_fallthru
    _
  // Predicated region
  $region58: #{joint_parser_forward.1} parent=0 // pred_check
    _
  $region59: #{joint_parser_forward.1} parent=0 // pred_check_branch
    %102 = sbr.rel (0) target = $region61
  $region60: #{joint_parser_forward.1} parent=0 // pred_region
    _
  $region61: #{joint_parser_forward.1} parent=0 // pred_fallthru
    _
  // Predicated region
  $region62: #{joint_parser_forward.1} parent=0 // pred_check
    _
  $region63: #{joint_parser_forward.1} parent=0 // pred_check_branch
    %104 = sbr.rel (0) target = $region65
  $region64: #{joint_parser_forward.1} parent=0 // pred_region
    _
  $region65: #{joint_parser_forward.1} parent=0 // pred_fallthru
    _
  // Predicated region
  $region66: #{joint_parser_forward.1} parent=0 // pred_check
    _
  $region67: #{joint_parser_forward.1} parent=0 // pred_check_branch
    %106 = sbr.rel (0) target = $region69
  $region68: #{joint_parser_forward.1} parent=0 // pred_region
    _
  $region69: #{joint_parser_forward.1} parent=0 // pred_fallthru
    _
  // Predicated region
  $region70: #{joint_parser_forward.1} parent=0 // pred_check
    _
  $region71: #{joint_parser_forward.1} parent=0 // pred_check_branch
    %108 = sbr.rel (0) target = $region73
  $region72: #{joint_parser_forward.1} parent=0 // pred_region
    _
  $region73: #{joint_parser_forward.1} parent=0 // pred_fallthru
    _
  // Predicated region
  $region74: #{joint_parser_forward.1} parent=0 // pred_check
    _
  $region75: #{joint_parser_forward.1} parent=0 // pred_check_branch
    %110 = sbr.rel (0) target = $region77
  $region76: #{joint_parser_forward.1} parent=0 // pred_region
    _
  $region77: #{joint_parser_forward.1} parent=0 // pred_fallthru
    _
  // Predicated region
  $region78: #{joint_parser_forward.1} parent=0 // pred_check
    _
  $region79: #{joint_parser_forward.1} parent=0 // pred_check_branch
    %112 = sbr.rel (0) target = $region81
  $region80: #{joint_parser_forward.1} parent=0 // pred_region
    _
  $region81: #{joint_parser_forward.1} parent=0 // pred_fallthru
    _
  // Predicated region
  $region82: #{joint_parser_forward.1} parent=0 // pred_check
    _
  $region83: #{joint_parser_forward.1} parent=0 // pred_check_branch
    %114 = sbr.rel (0) target = $region85
  $region84: #{joint_parser_forward.1} parent=0 // pred_region
    _
  $region85: #{joint_parser_forward.1} parent=0 // pred_fallthru
    _
  // Predicated region
  $region86: #{joint_parser_forward.1} parent=0 // pred_check
    _
  $region87: #{joint_parser_forward.1} parent=0 // pred_check_branch
    %116 = sbr.rel (0) target = $region89
  $region88: #{joint_parser_forward.1} parent=0 // pred_region
    _
  $region89: #{joint_parser_forward.1} parent=0 // pred_fallthru
    _
  // Predicated region
  $region90: #{joint_parser_forward.1} parent=0 // pred_check
    _
  $region91: #{joint_parser_forward.1} parent=0 // pred_check_branch
    %118 = sbr.rel (0) target = $region93
  $region92: #{joint_parser_forward.1} parent=0 // pred_region
    _
  $region93: #{joint_parser_forward.1} parent=0 // pred_fallthru
    _
  // Predicated region
  $region94: #{joint_parser_forward.1} parent=0 // pred_check
    _
  $region95: #{joint_parser_forward.1} parent=0 // pred_check_branch
    %120 = sbr.rel (0) target = $region97
  $region96: #{joint_parser_forward.1} parent=0 // pred_region
    _
  $region97: #{joint_parser_forward.1} parent=0 // pred_fallthru
    _
  // Predicated region
  $region98: #{joint_parser_forward.1} parent=0 // pred_check
    _
  $region99: #{joint_parser_forward.1} parent=0 // pred_check_branch
    %122 = sbr.rel (0) target = $region101
  $region100: #{joint_parser_forward.1} parent=0 // pred_region
    _
  $region101: #{joint_parser_forward.1} parent=0 // pred_fallthru
    _
  // Predicated region
  $region102: #{joint_parser_forward.1} parent=0 // pred_check
    _
  $region103: #{joint_parser_forward.1} parent=0 // pred_check_branch
    %124 = sbr.rel (0) target = $region105
  $region104: #{joint_parser_forward.1} parent=0 // pred_region
    _
  $region105: #{joint_parser_forward.1} parent=0 // pred_fallthru
    _
  // Predicated region
  $region106: #{joint_parser_forward.1} parent=0 // pred_check
    _
  $region107: #{joint_parser_forward.1} parent=0 // pred_check_branch
    %126 = sbr.rel (0) target = $region109
  $region108: #{joint_parser_forward.1} parent=0 // pred_region
    _
  $region109: #{joint_parser_forward.1} parent=0 // pred_fallthru
    _
  // Predicated region
  $region110: #{joint_parser_forward.1} parent=0 // pred_check
    _
  $region111: #{joint_parser_forward.1} parent=0 // pred_check_branch
    %128 = sbr.rel (0) target = $region113
  $region112: #{joint_parser_forward.1} parent=0 // pred_region
    _
  $region113: #{joint_parser_forward.1} parent=0 // pred_fallthru
    _
  // Predicated region
  $region114: #{joint_parser_forward.1} parent=0 // pred_check
    _
  $region115: #{joint_parser_forward.1} parent=0 // pred_check_branch
    %130 = sbr.rel (0) target = $region117
  $region116: #{joint_parser_forward.1} parent=0 // pred_region
    _
  $region117: #{joint_parser_forward.1} parent=0 // pred_fallthru
    _
  // Predicated region
  $region118: #{joint_parser_forward.1} parent=0 // pred_check
    _
  $region119: #{joint_parser_forward.1} parent=0 // pred_check_branch
    %132 = sbr.rel (0) target = $region121
  $region120: #{joint_parser_forward.1} parent=0 // pred_region
    _
  $region121: #{joint_parser_forward.1} parent=0 // pred_fallthru
    _
  // Predicated region
  $region122: #{joint_parser_forward.1} parent=0 // pred_check
    _
  $region123: #{joint_parser_forward.1} parent=0 // pred_check_branch
    %134 = sbr.rel (0) target = $region125
  $region124: #{joint_parser_forward.1} parent=0 // pred_region
    _
  $region125: #{joint_parser_forward.1} parent=0 // pred_fallthru
    _
  %v135 = vld [vmem:[%s3] sm:$0xff]
  %v136 = vld [vmem:[%s3 + $0x8] sm:$0xff]
  %v137 = vld [vmem:[%s5] sm:$0x1]
  %vm138 = vcmp.gt.f32.partialorder %v137, 0.0
  %v139 = vld [vmem:[%s7] sm:$0x1]
  %vm140 = vcmp.gt.f32.partialorder %v139, 0.0
  %v141 = vld [vmem:[%s1] sm:$0xff]
  %v142 = vld [vmem:[%s1 + $0x8] sm:$0xff]
  %v143 = vld [vmem:[%s11] sm:$0xff]
  %v144 = vld [vmem:[%s11 + $0x8] sm:$0xff]
  %v145 = vld [vmem:[%s11 + $0x10] sm:$0xff]
  %v146 = vld [vmem:[%s11 + $0x18] sm:$0xff]
  %v147 = vld [vmem:[%s13] sm:$0x1]
  %v149 = vlaneseq
  %v150 = vshrl.u32 %v149, 7
  %v151 = vsub.s32 0, %v150
  %v152 = vrot.slane %v147, %v151
  %vm154 = vcmask 261120
  %v156 = vsel %vm154, %v141, 0
  %v159 = vsel %vm154, %v142, 0
  %161 = vmatprep.subr.mxu0 0.0
  %162 = vmatpush1.msra.mxu0 %v143
  %163 = vmatprep.subr.mxu0 0.0
  %164 = vmatpush1.msra.mxu0 %v144
  %165 = vmatprep.subr.mxu0 0.0
  %166 = vmatpush1.msra.mxu0 %v145
  %167 = vmatprep.subr.mxu0 0.0
  %168 = vmatpush1.msra.mxu0 %v146
  %169 = vmatprep.subr.mxu0 0.0
  %170 = vmatpush1.msra.mxu0 0.0
  %171 = vmatprep.subr.mxu0 0.0
  %172 = vmatpush1.msra.mxu0 0.0
  %173 = vmatprep.subr.mxu0 0.0
  %174 = vmatpush1.msra.mxu0 0.0
  %175 = vmatprep.subr.mxu0 0.0
  %176 = vmatpush1.msra.mxu0 0.0
  %177 = vmatprep.subr.mxu0 0.0
  %178 = vmatpush1.msra.mxu0 0.0
  %179 = vmatprep.subr.mxu0 0.0
  %180 = vmatpush1.msra.mxu0 0.0
  %181 = vmatprep.subr.mxu0 0.0
  %182 = vmatpush1.msra.mxu0 0.0
  %183 = vmatprep.subr.mxu0 0.0
  %184 = vmatpush1.msra.mxu0 0.0
  %185 = vmatprep.subr.mxu0 0.0
  %186 = vmatpush1.msra.mxu0 0.0
  %187 = vmatprep.subr.mxu0 0.0
  %188 = vmatpush1.msra.mxu0 0.0
  %189 = vmatprep.subr.mxu0 0.0
  %190 = vmatpush1.msra.mxu0 0.0
  %191 = vmatprep.subr.mxu0 0.0
  %192 = vmatpush1.msra.mxu0 0.0
  %193 = vmatprep.subr.mxu0 0.0
  %194 = vmatpush1.msra.mxu0 0.0
  %195 = vmatprep.subr.mxu0 0.0
  %196 = vmatpush1.msra.mxu0 0.0
  %197 = vmatprep.subr.mxu0 0.0
  %198 = vmatpush1.msra.mxu0 0.0
  %199 = vmatprep.subr.mxu0 0.0
  %200 = vmatpush1.msra.mxu0 0.0
  %201 = vmatprep.subr.mxu0 0.0
  %202 = vmatpush1.msra.mxu0 0.0
  %203 = vmatprep.subr.mxu0 0.0
  %204 = vmatpush1.msra.mxu0 0.0
  %205 = vmatprep.subr.mxu0 0.0
  %206 = vmatpush1.msra.mxu0 0.0
  %207 = vmatprep.subr.mxu0 0.0
  %208 = vmatpush1.msra.mxu0 0.0
  %209 = vmatprep.subr.mxu0 0.0
  %210 = vmatpush1.msra.mxu0 0.0
  %211 = vmatprep.subr.mxu0 0.0
  %212 = vmatpush1.msra.mxu0 0.0
  %213 = vmatprep.subr.mxu0 0.0
  %214 = vmatpush1.msra.mxu0 0.0
  %215 = vmatprep.subr.mxu0 0.0
  %216 = vmatpush1.msra.mxu0 0.0
  %217 = vmatprep.subr.mxu0 0.0
  %218 = vmatpush1.msra.mxu0 0.0
  %219 = vmatprep.subr.mxu0 0.0
  %220 = vmatpush1.msra.mxu0 0.0
  %221 = vmatprep.subr.mxu0 0.0
  %222 = vmatpush1.msra.mxu0 0.0
  %223 = vmatprep.subr.mxu0 0.0
  %224 = vmatpush1.msra.mxu0 0.0
  %225 = vmatprep.mubr.f32.mxu0 0.0
  %226 = vmatmul.mubr.f32.gmra.mrb[0].mxu0 %v156
  %v227 = vpop.f32.mrb[0].mxu0
  %v228 = vadd.f32 %v152, %v227
  %v229 = vpop.f32.mrb[0].mxu0
  %230 = vmatprep.mubr.f32.mxu0 0.0
  %231 = vmatmul.mubr.f32.gmra.mrb[0].mxu0 %v159
  %v232 = vpop.f32.mrb[0].mxu0
  %v233 = vadd.f32 %v152, %v232
  %v234 = vpop.f32.mrb[0].mxu0
  %235 = vdwg.mxu0
  %v236 = vld [vmem:[%s17] sm:$0xff]
  %v237 = vld [vmem:[%s17 + $0x8] sm:$0xff]
  %v238 = vld [vmem:[%s17 + $0x10] sm:$0xff]
  %v239 = vld [vmem:[%s17 + $0x18] sm:$0xff]
  %v240 = vld [vmem:[%s19] sm:$0x1]
  %v242 = vlaneseq
  %v243 = vshrl.u32 %v242, 7
  %v244 = vsub.s32 0, %v243
  %v245 = vrot.slane %v240, %v244
  %247 = vmatprep.subr.mxu0 0.0
  %248 = vmatpush1.msra.mxu0 %v236
  %249 = vmatprep.subr.mxu0 0.0
  %250 = vmatpush1.msra.mxu0 %v237
  %251 = vmatprep.subr.mxu0 0.0
  %252 = vmatpush1.msra.mxu0 %v238
  %253 = vmatprep.subr.mxu0 0.0
  %254 = vmatpush1.msra.mxu0 %v239
  %255 = vmatprep.subr.mxu0 0.0
  %256 = vmatpush1.msra.mxu0 0.0
  %257 = vmatprep.subr.mxu0 0.0
  %258 = vmatpush1.msra.mxu0 0.0
  %259 = vmatprep.subr.mxu0 0.0
  %260 = vmatpush1.msra.mxu0 0.0
  %261 = vmatprep.subr.mxu0 0.0
  %262 = vmatpush1.msra.mxu0 0.0
  %263 = vmatprep.subr.mxu0 0.0
  %264 = vmatpush1.msra.mxu0 0.0
  %265 = vmatprep.subr.mxu0 0.0
  %266 = vmatpush1.msra.mxu0 0.0
  %267 = vmatprep.subr.mxu0 0.0
  %268 = vmatpush1.msra.mxu0 0.0
  %269 = vmatprep.subr.mxu0 0.0
  %270 = vmatpush1.msra.mxu0 0.0
  %271 = vmatprep.subr.mxu0 0.0
  %272 = vmatpush1.msra.mxu0 0.0
  %273 = vmatprep.subr.mxu0 0.0
  %274 = vmatpush1.msra.mxu0 0.0
  %275 = vmatprep.subr.mxu0 0.0
  %276 = vmatpush1.msra.mxu0 0.0
  %277 = vmatprep.subr.mxu0 0.0
  %278 = vmatpush1.msra.mxu0 0.0
  %279 = vmatprep.subr.mxu0 0.0
  %280 = vmatpush1.msra.mxu0 0.0
  %281 = vmatprep.subr.mxu0 0.0
  %282 = vmatpush1.msra.mxu0 0.0
  %283 = vmatprep.subr.mxu0 0.0
  %284 = vmatpush1.msra.mxu0 0.0
  %285 = vmatprep.subr.mxu0 0.0
  %286 = vmatpush1.msra.mxu0 0.0
  %287 = vmatprep.subr.mxu0 0.0
  %288 = vmatpush1.msra.mxu0 0.0
  %289 = vmatprep.subr.mxu0 0.0
  %290 = vmatpush1.msra.mxu0 0.0
  %291 = vmatprep.subr.mxu0 0.0
  %292 = vmatpush1.msra.mxu0 0.0
  %293 = vmatprep.subr.mxu0 0.0
  %294 = vmatpush1.msra.mxu0 0.0
  %295 = vmatprep.subr.mxu0 0.0
  %296 = vmatpush1.msra.mxu0 0.0
  %297 = vmatprep.subr.mxu0 0.0
  %298 = vmatpush1.msra.mxu0 0.0
  %299 = vmatprep.subr.mxu0 0.0
  %300 = vmatpush1.msra.mxu0 0.0
  %301 = vmatprep.subr.mxu0 0.0
  %302 = vmatpush1.msra.mxu0 0.0
  %303 = vmatprep.subr.mxu0 0.0
  %304 = vmatpush1.msra.mxu0 0.0
  %305 = vmatprep.subr.mxu0 0.0
  %306 = vmatpush1.msra.mxu0 0.0
  %307 = vmatprep.subr.mxu0 0.0
  %308 = vmatpush1.msra.mxu0 0.0
  %309 = vmatprep.subr.mxu0 0.0
  %310 = vmatpush1.msra.mxu0 0.0
  %311 = vmatprep.mubr.f32.mxu0 0.0
  %312 = vmatmul.mubr.f32.gmra.mrb[0].mxu0 %v156
  %v313 = vpop.f32.mrb[0].mxu0
  %v314 = vadd.f32 %v245, %v313
  %v315 = vpop.f32.mrb[0].mxu0
  %316 = vmatprep.mubr.f32.mxu0 0.0
  %317 = vmatmul.mubr.f32.gmra.mrb[0].mxu0 %v159
  %v318 = vpop.f32.mrb[0].mxu0
  %v319 = vadd.f32 %v245, %v318
  %v320 = vpop.f32.mrb[0].mxu0
  %321 = vdwg.mxu0
  %v322 = vxor.u32 %v314, 2147483648
  %v323 = vxor.u32 %v319, 2147483648
  %v324 = vmul.f32 %v322, 1.442695
  %v325 = vpow.pop %v324
  %v326 = vmul.f32 %v323, 1.442695
  %v327 = vpow.pop %v326
  %v328 = vadd.f32 %v325, 1.0
  %v329 = vadd.f32 %v327, 1.0
  %v330 = vrcp.pop %v328
  %v331 = vmul.f32 1.0, %v330
  %v332 = vrcp.pop %v329
  %v333 = vmul.f32 1.0, %v332
  %v334 = vld [vmem:[%s21] sm:$0xff]
  %v335 = vld [vmem:[%s21 + $0x8] sm:$0xff]
  %v336 = vld [vmem:[%s21 + $0x10] sm:$0xff]
  %v337 = vld [vmem:[%s21 + $0x18] sm:$0xff]
  %v338 = vld [vmem:[%s23] sm:$0x1]
  %v340 = vlaneseq
  %v341 = vshrl.u32 %v340, 7
  %v342 = vsub.s32 0, %v341
  %v343 = vrot.slane %v338, %v342
  %345 = vmatprep.subr.mxu0 0.0
  %346 = vmatpush1.msra.mxu0 %v334
  %347 = vmatprep.subr.mxu0 0.0
  %348 = vmatpush1.msra.mxu0 %v335
  %349 = vmatprep.subr.mxu0 0.0
  %350 = vmatpush1.msra.mxu0 %v336
  %351 = vmatprep.subr.mxu0 0.0
  %352 = vmatpush1.msra.mxu0 %v337
  %353 = vmatprep.subr.mxu0 0.0
  %354 = vmatpush1.msra.mxu0 0.0
  %355 = vmatprep.subr.mxu0 0.0
  %356 = vmatpush1.msra.mxu0 0.0
  %357 = vmatprep.subr.mxu0 0.0
  %358 = vmatpush1.msra.mxu0 0.0
  %359 = vmatprep.subr.mxu0 0.0
  %360 = vmatpush1.msra.mxu0 0.0
  %361 = vmatprep.subr.mxu0 0.0
  %362 = vmatpush1.msra.mxu0 0.0
  %363 = vmatprep.subr.mxu0 0.0
  %364 = vmatpush1.msra.mxu0 0.0
  %365 = vmatprep.subr.mxu0 0.0
  %366 = vmatpush1.msra.mxu0 0.0
  %367 = vmatprep.subr.mxu0 0.0
  %368 = vmatpush1.msra.mxu0 0.0
  %369 = vmatprep.subr.mxu0 0.0
  %370 = vmatpush1.msra.mxu0 0.0
  %371 = vmatprep.subr.mxu0 0.0
  %372 = vmatpush1.msra.mxu0 0.0
  %373 = vmatprep.subr.mxu0 0.0
  %374 = vmatpush1.msra.mxu0 0.0
  %375 = vmatprep.subr.mxu0 0.0
  %376 = vmatpush1.msra.mxu0 0.0
  %377 = vmatprep.subr.mxu0 0.0
  %378 = vmatpush1.msra.mxu0 0.0
  %379 = vmatprep.subr.mxu0 0.0
  %380 = vmatpush1.msra.mxu0 0.0
  %381 = vmatprep.subr.mxu0 0.0
  %382 = vmatpush1.msra.mxu0 0.0
  %383 = vmatprep.subr.mxu0 0.0
  %384 = vmatpush1.msra.mxu0 0.0
  %385 = vmatprep.subr.mxu0 0.0
  %386 = vmatpush1.msra.mxu0 0.0
  %387 = vmatprep.subr.mxu0 0.0
  %388 = vmatpush1.msra.mxu0 0.0
  %389 = vmatprep.subr.mxu0 0.0
  %390 = vmatpush1.msra.mxu0 0.0
  %391 = vmatprep.subr.mxu0 0.0
  %392 = vmatpush1.msra.mxu0 0.0
  %393 = vmatprep.subr.mxu0 0.0
  %394 = vmatpush1.msra.mxu0 0.0
  %395 = vmatprep.subr.mxu0 0.0
  %396 = vmatpush1.msra.mxu0 0.0
  %397 = vmatprep.subr.mxu0 0.0
  %398 = vmatpush1.msra.mxu0 0.0
  %399 = vmatprep.subr.mxu0 0.0
  %400 = vmatpush1.msra.mxu0 0.0
  %401 = vmatprep.subr.mxu0 0.0
  %402 = vmatpush1.msra.mxu0 0.0
  %403 = vmatprep.subr.mxu0 0.0
  %404 = vmatpush1.msra.mxu0 0.0
  %405 = vmatprep.subr.mxu0 0.0
  %406 = vmatpush1.msra.mxu0 0.0
  %407 = vmatprep.subr.mxu0 0.0
  %408 = vmatpush1.msra.mxu0 0.0
  %409 = vmatprep.mubr.f32.mxu0 0.0
  %410 = vmatmul.mubr.f32.gmra.mrb[0].mxu0 %v156
  %v411 = vpop.f32.mrb[0].mxu0
  %v412 = vadd.f32 %v343, %v411
  %v413 = vpop.f32.mrb[0].mxu0
  %414 = vmatprep.mubr.f32.mxu0 0.0
  %415 = vmatmul.mubr.f32.gmra.mrb[0].mxu0 %v159
  %v416 = vpop.f32.mrb[0].mxu0
  %v417 = vadd.f32 %v343, %v416
  %v418 = vpop.f32.mrb[0].mxu0
  %419 = vdwg.mxu0
  %v420 = vld [vmem:[%s15] sm:$0xff]
  %v421 = vld [vmem:[%s15 + $0x8] sm:$0xff]
  %v422 = vld [vmem:[%s15 + $0x10] sm:$0xff]
  %v423 = vld [vmem:[%s15 + $0x18] sm:$0xff]
  %v424 = vsel %vm138, 1, 0
  %v425 = vlaneseq
  %v426 = vshrl.u32 %v425, 7
  %v427 = vsub.s32 0, %v426
  %v428 = vrot.slane %v424, %v427
  %vm429 = vcmp.eq.s32.totalorder %v428, 1
  %v431 = vrot.slane %v233, 6
  %v433 = vsel %vm429, %v228, %v431
  %v435 = vsel %vm154, 0.0, 0
  %437 = vmatprep.subr.mxu0 0.0
  %438 = vmatpush1.msra.mxu0 %v420
  %439 = vmatprep.subr.mxu0 0.0
  %440 = vmatpush1.msra.mxu0 %v421
  %441 = vmatprep.subr.mxu0 0.0
  %442 = vmatpush1.msra.mxu0 %v422
  %443 = vmatprep.subr.mxu0 0.0
  %444 = vmatpush1.msra.mxu0 %v423
  %445 = vmatprep.subr.mxu0 0.0
  %446 = vmatpush1.msra.mxu0 0.0
  %447 = vmatprep.subr.mxu0 0.0
  %448 = vmatpush1.msra.mxu0 0.0
  %449 = vmatprep.subr.mxu0 0.0
  %450 = vmatpush1.msra.mxu0 0.0
  %451 = vmatprep.subr.mxu0 0.0
  %452 = vmatpush1.msra.mxu0 0.0
  %453 = vmatprep.subr.mxu0 0.0
  %454 = vmatpush1.msra.mxu0 0.0
  %455 = vmatprep.subr.mxu0 0.0
  %456 = vmatpush1.msra.mxu0 0.0
  %457 = vmatprep.subr.mxu0 0.0
  %458 = vmatpush1.msra.mxu0 0.0
  %459 = vmatprep.subr.mxu0 0.0
  %460 = vmatpush1.msra.mxu0 0.0
  %461 = vmatprep.subr.mxu0 0.0
  %462 = vmatpush1.msra.mxu0 0.0
  %463 = vmatprep.subr.mxu0 0.0
  %464 = vmatpush1.msra.mxu0 0.0
  %465 = vmatprep.subr.mxu0 0.0
  %466 = vmatpush1.msra.mxu0 0.0
  %467 = vmatprep.subr.mxu0 0.0
  %468 = vmatpush1.msra.mxu0 0.0
  %469 = vmatprep.subr.mxu0 0.0
  %470 = vmatpush1.msra.mxu0 0.0
  %471 = vmatprep.subr.mxu0 0.0
  %472 = vmatpush1.msra.mxu0 0.0
  %473 = vmatprep.subr.mxu0 0.0
  %474 = vmatpush1.msra.mxu0 0.0
  %475 = vmatprep.subr.mxu0 0.0
  %476 = vmatpush1.msra.mxu0 0.0
  %477 = vmatprep.subr.mxu0 0.0
  %478 = vmatpush1.msra.mxu0 0.0
  %479 = vmatprep.subr.mxu0 0.0
  %480 = vmatpush1.msra.mxu0 0.0
  %481 = vmatprep.subr.mxu0 0.0
  %482 = vmatpush1.msra.mxu0 0.0
  %483 = vmatprep.subr.mxu0 0.0
  %484 = vmatpush1.msra.mxu0 0.0
  %485 = vmatprep.subr.mxu0 0.0
  %486 = vmatpush1.msra.mxu0 0.0
  %487 = vmatprep.subr.mxu0 0.0
  %488 = vmatpush1.msra.mxu0 0.0
  %489 = vmatprep.subr.mxu0 0.0
  %490 = vmatpush1.msra.mxu0 0.0
  %491 = vmatprep.subr.mxu0 0.0
  %492 = vmatpush1.msra.mxu0 0.0
  %493 = vmatprep.subr.mxu0 0.0
  %494 = vmatpush1.msra.mxu0 0.0
  %495 = vmatprep.subr.mxu0 0.0
  %496 = vmatpush1.msra.mxu0 0.0
  %497 = vmatprep.subr.mxu0 0.0
  %498 = vmatpush1.msra.mxu0 0.0
  %499 = vmatprep.subr.mxu0 0.0
  %500 = vmatpush1.msra.mxu0 0.0
  %501 = vmatprep.mubr.f32.mxu0 0.0
  %502 = vmatmul.mubr.f32.gmra.mrb[0].mxu0 %v435
  %v503 = vpop.f32.mrb[0].mxu0
  %v504 = vadd.f32 0.0, %v503
  %v505 = vpop.f32.mrb[0].mxu0
  %506 = vdwg.mxu0
  %v507 = vadd.f32 %v433, %v504
  %v508 = vxor.u32 %v507, 2147483648
  %v509 = vmul.f32 %v508, 1.442695
  %v510 = vpow.pop %v509
  %v511 = vadd.f32 %v510, 1.0
  %v512 = vrcp.pop %v511
  %v513 = vmul.f32 1.0, %v512
  %v514 = vtanh.pop %v507
  %v515 = vmul.f32 %v513, 0.0
  %517 = vrot.lane.b32.xlu0 %v514, 64
  %v518 = vpop.permute.xlu0 %517
  %v520 = vmul.f32 %v513, %v518
  %522 = vrot.lane.b32.xlu0 %v520, 32
  %v523 = vpop.permute.xlu0 %522
  %v525 = vadd.f32 %v515, %v523
  %v526 = vtanh.pop %v525
  %528 = vrot.lane.b32.xlu0 %v526, 64
  %v529 = vpop.permute.xlu0 %528
  %v531 = vmul.f32 %v513, %v529
  %v532 = vsel %vm140, 1, 0
  %v533 = vlaneseq
  %v534 = vshrl.u32 %v533, 7
  %v535 = vsub.s32 0, %v534
  %v536 = vrot.slane %v532, %v535
  %vm537 = vcmp.eq.s32.totalorder %v536, 1
  %539 = vset.pattern.permute.xlu0 0
  %540 = vperm.xlu0 %539, %v135
  %v541 = vpop.permute.xlu0 %540
  %544 = vset.pattern.permute.xlu0 0
  %545 = vperm.xlu0 %544, %v136
  %v546 = vpop.permute.xlu0 %545
  %v548 = vrot.slane %v546, 6
  %v550 = vsel %vm537, %v541, %v548
  %vm551 = vcmp.gt.f32.partialorder %v550, 0.0
  %553 = vrot.lane.b32.xlu0 %v531, 32
  %v554 = vpop.permute.xlu0 %553
  %v556 = vsel %vm551, %v554, 0.0
  %558 = vrot.lane.b32.xlu0 %v525, 96
  %v559 = vpop.permute.xlu0 %558
  %v561 = vsel %vm551, %v559, 0.0
  %vm562 = vcmask 123904
  %563 = vst.msk [vmem:[#allocation2] sm:$0x3] %vm562, %v556
  %vm564 = vcmask 255104
  %565 = vst.msk [vmem:[#allocation2 + $0xe] sm:$0x3] %vm564, %v556
  %v566 = vrot.slane %v233, 2
  %v568 = vsel %vm429, %v228, %v566
  %v570 = vsel %vm154, %v556, 0
  %572 = vmatprep.subr.mxu0 0.0
  %573 = vmatpush1.msra.mxu0 %v420
  %574 = vmatprep.subr.mxu0 0.0
  %575 = vmatpush1.msra.mxu0 %v421
  %576 = vmatprep.subr.mxu0 0.0
  %577 = vmatpush1.msra.mxu0 %v422
  %578 = vmatprep.subr.mxu0 0.0
  %579 = vmatpush1.msra.mxu0 %v423
  %580 = vmatprep.subr.mxu0 0.0
  %581 = vmatpush1.msra.mxu0 0.0
  %582 = vmatprep.subr.mxu0 0.0
  %583 = vmatpush1.msra.mxu0 0.0
  %584 = vmatprep.subr.mxu0 0.0
  %585 = vmatpush1.msra.mxu0 0.0
  %586 = vmatprep.subr.mxu0 0.0
  %587 = vmatpush1.msra.mxu0 0.0
  %588 = vmatprep.subr.mxu0 0.0
  %589 = vmatpush1.msra.mxu0 0.0
  %590 = vmatprep.subr.mxu0 0.0
  %591 = vmatpush1.msra.mxu0 0.0
  %592 = vmatprep.subr.mxu0 0.0
  %593 = vmatpush1.msra.mxu0 0.0
  %594 = vmatprep.subr.mxu0 0.0
  %595 = vmatpush1.msra.mxu0 0.0
  %596 = vmatprep.subr.mxu0 0.0
  %597 = vmatpush1.msra.mxu0 0.0
  %598 = vmatprep.subr.mxu0 0.0
  %599 = vmatpush1.msra.mxu0 0.0
  %600 = vmatprep.subr.mxu0 0.0
  %601 = vmatpush1.msra.mxu0 0.0
  %602 = vmatprep.subr.mxu0 0.0
  %603 = vmatpush1.msra.mxu0 0.0
  %604 = vmatprep.subr.mxu0 0.0
  %605 = vmatpush1.msra.mxu0 0.0
  %606 = vmatprep.subr.mxu0 0.0
  %607 = vmatpush1.msra.mxu0 0.0
  %608 = vmatprep.subr.mxu0 0.0
  %609 = vmatpush1.msra.mxu0 0.0
  %610 = vmatprep.subr.mxu0 0.0
  %611 = vmatpush1.msra.mxu0 0.0
  %612 = vmatprep.subr.mxu0 0.0
  %613 = vmatpush1.msra.mxu0 0.0
  %614 = vmatprep.subr.mxu0 0.0
  %615 = vmatpush1.msra.mxu0 0.0
  %616 = vmatprep.subr.mxu0 0.0
  %617 = vmatpush1.msra.mxu0 0.0
  %618 = vmatprep.subr.mxu0 0.0
  %619 = vmatpush1.msra.mxu0 0.0
  %620 = vmatprep.subr.mxu0 0.0
  %621 = vmatpush1.msra.mxu0 0.0
  %622 = vmatprep.subr.mxu0 0.0
  %623 = vmatpush1.msra.mxu0 0.0
  %624 = vmatprep.subr.mxu0 0.0
  %625 = vmatpush1.msra.mxu0 0.0
  %626 = vmatprep.subr.mxu0 0.0
  %627 = vmatpush1.msra.mxu0 0.0
  %628 = vmatprep.subr.mxu0 0.0
  %629 = vmatpush1.msra.mxu0 0.0
  %630 = vmatprep.subr.mxu0 0.0
  %631 = vmatpush1.msra.mxu0 0.0
  %632 = vmatprep.subr.mxu0 0.0
  %633 = vmatpush1.msra.mxu0 0.0
  %634 = vmatprep.subr.mxu0 0.0
  %635 = vmatpush1.msra.mxu0 0.0
  %636 = vmatprep.mubr.f32.mxu0 0.0
  %637 = vmatmul.mubr.f32.gmra.mrb[0].mxu0 %v570
  %v638 = vpop.f32.mrb[0].mxu0
  %v639 = vadd.f32 0.0, %v638
  %v640 = vpop.f32.mrb[0].mxu0
  %641 = vdwg.mxu0
  %v643 = vrot.slane %v639, 6
  %v645 = vadd.f32 %v568, %v643
  %v646 = vxor.u32 %v645, 2147483648
  %v647 = vmul.f32 %v646, 1.442695
  %v648 = vpow.pop %v647
  %v649 = vadd.f32 %v648, 1.0
  %v650 = vrcp.pop %v649
  %v651 = vmul.f32 1.0, %v650
  %v652 = vtanh.pop %v645
  %v654 = vrot.slane %v561, 6
  %655 = vrot.lane.b32.xlu0 %v654, 32
  %v656 = vpop.permute.xlu0 %655
  %v658 = vmul.f32 %v651, %v656
  %660 = vrot.lane.b32.xlu0 %v652, 64
  %v661 = vpop.permute.xlu0 %660
  %v663 = vmul.f32 %v651, %v661
  %665 = vrot.lane.b32.xlu0 %v663, 32
  %v666 = vpop.permute.xlu0 %665
  %v668 = vadd.f32 %v658, %v666
  %v669 = vtanh.pop %v668
  %671 = vrot.lane.b32.xlu0 %v669, 64
  %v672 = vpop.permute.xlu0 %671
  %v674 = vmul.f32 %v651, %v672
  %v675 = vrot.slane %v546, 2
  %v677 = vsel %vm537, %v541, %v675
  %vm678 = vcmp.gt.f32.partialorder %v677, 0.0
  %680 = vrot.lane.b32.xlu0 %v674, 32
  %v681 = vpop.permute.xlu0 %680
  %v683 = vrot.slane %v556, 6
  %v685 = vsel %vm678, %v681, %v683
  %687 = vrot.lane.b32.xlu0 %v668, 96
  %v688 = vpop.permute.xlu0 %687
  %v691 = vsel %vm678, %v688, %v654
  %v692 = vsel %vm678, %v681, 0.0
  %vm693 = vcmask 125954
  %694 = vst.msk [vmem:[#allocation2] sm:$0xc] %vm693, %v692
  %vm695 = vcmask 257154
  %696 = vst.msk [vmem:[#allocation2 + $0xa] sm:$0xc] %vm695, %v692
  %v698 = vrot.slane %v685, 2
  %v699 = vsel %vm154, %v698, 0
  %701 = vmatprep.subr.mxu0 0.0
  %702 = vmatpush1.msra.mxu0 %v420
  %703 = vmatprep.subr.mxu0 0.0
  %704 = vmatpush1.msra.mxu0 %v421
  %705 = vmatprep.subr.mxu0 0.0
  %706 = vmatpush1.msra.mxu0 %v422
  %707 = vmatprep.subr.mxu0 0.0
  %708 = vmatpush1.msra.mxu0 %v423
  %709 = vmatprep.subr.mxu0 0.0
  %710 = vmatpush1.msra.mxu0 0.0
  %711 = vmatprep.subr.mxu0 0.0
  %712 = vmatpush1.msra.mxu0 0.0
  %713 = vmatprep.subr.mxu0 0.0
  %714 = vmatpush1.msra.mxu0 0.0
  %715 = vmatprep.subr.mxu0 0.0
  %716 = vmatpush1.msra.mxu0 0.0
  %717 = vmatprep.subr.mxu0 0.0
  %718 = vmatpush1.msra.mxu0 0.0
  %719 = vmatprep.subr.mxu0 0.0
  %720 = vmatpush1.msra.mxu0 0.0
  %721 = vmatprep.subr.mxu0 0.0
  %722 = vmatpush1.msra.mxu0 0.0
  %723 = vmatprep.subr.mxu0 0.0
  %724 = vmatpush1.msra.mxu0 0.0
  %725 = vmatprep.subr.mxu0 0.0
  %726 = vmatpush1.msra.mxu0 0.0
  %727 = vmatprep.subr.mxu0 0.0
  %728 = vmatpush1.msra.mxu0 0.0
  %729 = vmatprep.subr.mxu0 0.0
  %730 = vmatpush1.msra.mxu0 0.0
  %731 = vmatprep.subr.mxu0 0.0
  %732 = vmatpush1.msra.mxu0 0.0
  %733 = vmatprep.subr.mxu0 0.0
  %734 = vmatpush1.msra.mxu0 0.0
  %735 = vmatprep.subr.mxu0 0.0
  %736 = vmatpush1.msra.mxu0 0.0
  %737 = vmatprep.subr.mxu0 0.0
  %738 = vmatpush1.msra.mxu0 0.0
  %739 = vmatprep.subr.mxu0 0.0
  %740 = vmatpush1.msra.mxu0 0.0
  %741 = vmatprep.subr.mxu0 0.0
  %742 = vmatpush1.msra.mxu0 0.0
  %743 = vmatprep.subr.mxu0 0.0
  %744 = vmatpush1.msra.mxu0 0.0
  %745 = vmatprep.subr.mxu0 0.0
  %746 = vmatpush1.msra.mxu0 0.0
  %747 = vmatprep.subr.mxu0 0.0
  %748 = vmatpush1.msra.mxu0 0.0
  %749 = vmatprep.subr.mxu0 0.0
  %750 = vmatpush1.msra.mxu0 0.0
  %751 = vmatprep.subr.mxu0 0.0
  %752 = vmatpush1.msra.mxu0 0.0
  %753 = vmatprep.subr.mxu0 0.0
  %754 = vmatpush1.msra.mxu0 0.0
  %755 = vmatprep.subr.mxu0 0.0
  %756 = vmatpush1.msra.mxu0 0.0
  %757 = vmatprep.subr.mxu0 0.0
  %758 = vmatpush1.msra.mxu0 0.0
  %759 = vmatprep.subr.mxu0 0.0
  %760 = vmatpush1.msra.mxu0 0.0
  %761 = vmatprep.subr.mxu0 0.0
  %762 = vmatpush1.msra.mxu0 0.0
  %763 = vmatprep.subr.mxu0 0.0
  %764 = vmatpush1.msra.mxu0 0.0
  %765 = vmatprep.mubr.f32.mxu0 0.0
  %766 = vmatmul.mubr.f32.gmra.mrb[0].mxu0 %v699
  %v767 = vpop.f32.mrb[0].mxu0
  %v768 = vadd.f32 0.0, %v767
  %v769 = vpop.f32.mrb[0].mxu0
  %770 = vdwg.mxu0
  %v772 = vrot.slane %v768, 4
  %v774 = vadd.f32 %v433, %v772
  %v775 = vxor.u32 %v774, 2147483648
  %v776 = vmul.f32 %v775, 1.442695
  %v777 = vpow.pop %v776
  %v778 = vadd.f32 %v777, 1.0
  %v779 = vrcp.pop %v778
  %v780 = vmul.f32 1.0, %v779
  %v781 = vtanh.pop %v774
  %v783 = vrot.slane %v691, 6
  %784 = vrot.lane.b32.xlu0 %v783, 32
  %v785 = vpop.permute.xlu0 %784
  %v787 = vmul.f32 %v780, %v785
  %789 = vrot.lane.b32.xlu0 %v781, 64
  %v790 = vpop.permute.xlu0 %789
  %v792 = vmul.f32 %v780, %v790
  %794 = vrot.lane.b32.xlu0 %v792, 32
  %v795 = vpop.permute.xlu0 %794
  %v797 = vadd.f32 %v787, %v795
  %v798 = vtanh.pop %v797
  %800 = vrot.lane.b32.xlu0 %v798, 64
  %v801 = vpop.permute.xlu0 %800
  %v803 = vmul.f32 %v780, %v801
  %805 = vrot.lane.b32.xlu0 %v803, 32
  %v806 = vpop.permute.xlu0 %805
  %v808 = vrot.slane %v685, 6
  %v810 = vsel %vm551, %v806, %v808
  %812 = vrot.lane.b32.xlu0 %v797, 96
  %v813 = vpop.permute.xlu0 %812
  %v816 = vsel %vm551, %v813, %v783
  %v817 = vsel %vm551, %v806, 0.0
  %vm818 = vcmask 128004
  %819 = vst.msk [vmem:[#allocation2] sm:$0x30] %vm818, %v817
  %vm820 = vcmask 259204
  %821 = vst.msk [vmem:[#allocation2 + $0x6] sm:$0x30] %vm820, %v817
  %v823 = vrot.slane %v810, 4
  %v824 = vsel %vm154, %v823, 0
  %826 = vmatprep.subr.mxu0 0.0
  %827 = vmatpush1.msra.mxu0 %v420
  %828 = vmatprep.subr.mxu0 0.0
  %829 = vmatpush1.msra.mxu0 %v421
  %830 = vmatprep.subr.mxu0 0.0
  %831 = vmatpush1.msra.mxu0 %v422
  %832 = vmatprep.subr.mxu0 0.0
  %833 = vmatpush1.msra.mxu0 %v423
  %834 = vmatprep.subr.mxu0 0.0
  %835 = vmatpush1.msra.mxu0 0.0
  %836 = vmatprep.subr.mxu0 0.0
  %837 = vmatpush1.msra.mxu0 0.0
  %838 = vmatprep.subr.mxu0 0.0
  %839 = vmatpush1.msra.mxu0 0.0
  %840 = vmatprep.subr.mxu0 0.0
  %841 = vmatpush1.msra.mxu0 0.0
  %842 = vmatprep.subr.mxu0 0.0
  %843 = vmatpush1.msra.mxu0 0.0
  %844 = vmatprep.subr.mxu0 0.0
  %845 = vmatpush1.msra.mxu0 0.0
  %846 = vmatprep.subr.mxu0 0.0
  %847 = vmatpush1.msra.mxu0 0.0
  %848 = vmatprep.subr.mxu0 0.0
  %849 = vmatpush1.msra.mxu0 0.0
  %850 = vmatprep.subr.mxu0 0.0
  %851 = vmatpush1.msra.mxu0 0.0
  %852 = vmatprep.subr.mxu0 0.0
  %853 = vmatpush1.msra.mxu0 0.0
  %854 = vmatprep.subr.mxu0 0.0
  %855 = vmatpush1.msra.mxu0 0.0
  %856 = vmatprep.subr.mxu0 0.0
  %857 = vmatpush1.msra.mxu0 0.0
  %858 = vmatprep.subr.mxu0 0.0
  %859 = vmatpush1.msra.mxu0 0.0
  %860 = vmatprep.subr.mxu0 0.0
  %861 = vmatpush1.msra.mxu0 0.0
  %862 = vmatprep.subr.mxu0 0.0
  %863 = vmatpush1.msra.mxu0 0.0
  %864 = vmatprep.subr.mxu0 0.0
  %865 = vmatpush1.msra.mxu0 0.0
  %866 = vmatprep.subr.mxu0 0.0
  %867 = vmatpush1.msra.mxu0 0.0
  %868 = vmatprep.subr.mxu0 0.0
  %869 = vmatpush1.msra.mxu0 0.0
  %870 = vmatprep.subr.mxu0 0.0
  %871 = vmatpush1.msra.mxu0 0.0
  %872 = vmatprep.subr.mxu0 0.0
  %873 = vmatpush1.msra.mxu0 0.0
  %874 = vmatprep.subr.mxu0 0.0
  %875 = vmatpush1.msra.mxu0 0.0
  %876 = vmatprep.subr.mxu0 0.0
  %877 = vmatpush1.msra.mxu0 0.0
  %878 = vmatprep.subr.mxu0 0.0
  %879 = vmatpush1.msra.mxu0 0.0
  %880 = vmatprep.subr.mxu0 0.0
  %881 = vmatpush1.msra.mxu0 0.0
  %882 = vmatprep.subr.mxu0 0.0
  %883 = vmatpush1.msra.mxu0 0.0
  %884 = vmatprep.subr.mxu0 0.0
  %885 = vmatpush1.msra.mxu0 0.0
  %886 = vmatprep.subr.mxu0 0.0
  %887 = vmatpush1.msra.mxu0 0.0
  %888 = vmatprep.subr.mxu0 0.0
  %889 = vmatpush1.msra.mxu0 0.0
  %890 = vmatprep.mubr.f32.mxu0 0.0
  %891 = vmatmul.mubr.f32.gmra.mrb[0].mxu0 %v824
  %v892 = vpop.f32.mrb[0].mxu0
  %v893 = vadd.f32 0.0, %v892
  %v894 = vpop.f32.mrb[0].mxu0
  %895 = vdwg.mxu0
  %v897 = vrot.slane %v893, 2
  %v899 = vadd.f32 %v568, %v897
  %v900 = vxor.u32 %v899, 2147483648
  %v901 = vmul.f32 %v900, 1.442695
  %v902 = vpow.pop %v901
  %v903 = vadd.f32 %v902, 1.0
  %v904 = vrcp.pop %v903
  %v905 = vmul.f32 1.0, %v904
  %v906 = vtanh.pop %v899
  %v908 = vrot.slane %v816, 6
  %909 = vrot.lane.b32.xlu0 %v908, 32
  %v910 = vpop.permute.xlu0 %909
  %v912 = vmul.f32 %v905, %v910
  %914 = vrot.lane.b32.xlu0 %v906, 64
  %v915 = vpop.permute.xlu0 %914
  %v917 = vmul.f32 %v905, %v915
  %919 = vrot.lane.b32.xlu0 %v917, 32
  %v920 = vpop.permute.xlu0 %919
  %v922 = vadd.f32 %v912, %v920
  %v923 = vtanh.pop %v922
  %925 = vrot.lane.b32.xlu0 %v923, 64
  %v926 = vpop.permute.xlu0 %925
  %v928 = vmul.f32 %v905, %v926
  %930 = vrot.lane.b32.xlu0 %v928, 32
  %v931 = vpop.permute.xlu0 %930
  %v933 = vrot.slane %v810, 6
  %v935 = vsel %vm678, %v931, %v933
  %937 = vrot.lane.b32.xlu0 %v922, 96
  %v938 = vpop.permute.xlu0 %937
  %v941 = vsel %vm678, %v938, %v908
  %v942 = vsel %vm678, %v931, 0.0
  %vm943 = vcmask 130054
  %944 = vst.msk [vmem:[#allocation2] sm:$0xc0] %vm943, %v942
  %vm945 = vcmask 261254
  %946 = vst.msk [vmem:[#allocation2 + $0x2] sm:$0xc0] %vm945, %v942
  %v948 = vrot.slane %v228, 6
  %v950 = vsel %vm429, %v233, %v948
  %v952 = vrot.slane %v935, 6
  %v953 = vsel %vm154, %v952, 0
  %955 = vmatprep.subr.mxu0 0.0
  %956 = vmatpush1.msra.mxu0 %v420
  %957 = vmatprep.subr.mxu0 0.0
  %958 = vmatpush1.msra.mxu0 %v421
  %959 = vmatprep.subr.mxu0 0.0
  %960 = vmatpush1.msra.mxu0 %v422
  %961 = vmatprep.subr.mxu0 0.0
  %962 = vmatpush1.msra.mxu0 %v423
  %963 = vmatprep.subr.mxu0 0.0
  %964 = vmatpush1.msra.mxu0 0.0
  %965 = vmatprep.subr.mxu0 0.0
  %966 = vmatpush1.msra.mxu0 0.0
  %967 = vmatprep.subr.mxu0 0.0
  %968 = vmatpush1.msra.mxu0 0.0
  %969 = vmatprep.subr.mxu0 0.0
  %970 = vmatpush1.msra.mxu0 0.0
  %971 = vmatprep.subr.mxu0 0.0
  %972 = vmatpush1.msra.mxu0 0.0
  %973 = vmatprep.subr.mxu0 0.0
  %974 = vmatpush1.msra.mxu0 0.0
  %975 = vmatprep.subr.mxu0 0.0
  %976 = vmatpush1.msra.mxu0 0.0
  %977 = vmatprep.subr.mxu0 0.0
  %978 = vmatpush1.msra.mxu0 0.0
  %979 = vmatprep.subr.mxu0 0.0
  %980 = vmatpush1.msra.mxu0 0.0
  %981 = vmatprep.subr.mxu0 0.0
  %982 = vmatpush1.msra.mxu0 0.0
  %983 = vmatprep.subr.mxu0 0.0
  %984 = vmatpush1.msra.mxu0 0.0
  %985 = vmatprep.subr.mxu0 0.0
  %986 = vmatpush1.msra.mxu0 0.0
  %987 = vmatprep.subr.mxu0 0.0
  %988 = vmatpush1.msra.mxu0 0.0
  %989 = vmatprep.subr.mxu0 0.0
  %990 = vmatpush1.msra.mxu0 0.0
  %991 = vmatprep.subr.mxu0 0.0
  %992 = vmatpush1.msra.mxu0 0.0
  %993 = vmatprep.subr.mxu0 0.0
  %994 = vmatpush1.msra.mxu0 0.0
  %995 = vmatprep.subr.mxu0 0.0
  %996 = vmatpush1.msra.mxu0 0.0
  %997 = vmatprep.subr.mxu0 0.0
  %998 = vmatpush1.msra.mxu0 0.0
  %999 = vmatprep.subr.mxu0 0.0
  %1000 = vmatpush1.msra.mxu0 0.0
  %1001 = vmatprep.subr.mxu0 0.0
  %1002 = vmatpush1.msra.mxu0 0.0
  %1003 = vmatprep.subr.mxu0 0.0
  %1004 = vmatpush1.msra.mxu0 0.0
  %1005 = vmatprep.subr.mxu0 0.0
  %1006 = vmatpush1.msra.mxu0 0.0
  %1007 = vmatprep.subr.mxu0 0.0
  %1008 = vmatpush1.msra.mxu0 0.0
  %1009 = vmatprep.subr.mxu0 0.0
  %1010 = vmatpush1.msra.mxu0 0.0
  %1011 = vmatprep.subr.mxu0 0.0
  %1012 = vmatpush1.msra.mxu0 0.0
  %1013 = vmatprep.subr.mxu0 0.0
  %1014 = vmatpush1.msra.mxu0 0.0
  %1015 = vmatprep.subr.mxu0 0.0
  %1016 = vmatpush1.msra.mxu0 0.0
  %1017 = vmatprep.subr.mxu0 0.0
  %1018 = vmatpush1.msra.mxu0 0.0
  %1019 = vmatprep.mubr.f32.mxu0 0.0
  %1020 = vmatmul.mubr.f32.gmra.mrb[0].mxu0 %v953
  %v1021 = vpop.f32.mrb[0].mxu0
  %v1022 = vadd.f32 0.0, %v1021
  %v1023 = vpop.f32.mrb[0].mxu0
  %1024 = vdwg.mxu0
  %v1025 = vadd.f32 %v950, %v1022
  %v1026 = vxor.u32 %v1025, 2147483648
  %v1027 = vmul.f32 %v1026, 1.442695
  %v1028 = vpow.pop %v1027
  %v1029 = vadd.f32 %v1028, 1.0
  %v1030 = vrcp.pop %v1029
  %v1031 = vmul.f32 1.0, %v1030
  %v1032 = vtanh.pop %v1025
  %v1034 = vrot.slane %v941, 6
  %1035 = vrot.lane.b32.xlu0 %v1034, 32
  %v1036 = vpop.permute.xlu0 %1035
  %v1038 = vmul.f32 %v1031, %v1036
  %1040 = vrot.lane.b32.xlu0 %v1032, 64
  %v1041 = vpop.permute.xlu0 %1040
  %v1043 = vmul.f32 %v1031, %v1041
  %1045 = vrot.lane.b32.xlu0 %v1043, 32
  %v1046 = vpop.permute.xlu0 %1045
  %v1048 = vadd.f32 %v1038, %v1046
  %v1049 = vtanh.pop %v1048
  %1051 = vrot.lane.b32.xlu0 %v1049, 64
  %v1052 = vpop.permute.xlu0 %1051
  %v1054 = vmul.f32 %v1031, %v1052
  %v1055 = vrot.slane %v541, 6
  %v1057 = vsel %vm537, %v546, %v1055
  %vm1058 = vcmp.gt.f32.partialorder %v1057, 0.0
  %1060 = vrot.lane.b32.xlu0 %v1054, 32
  %v1061 = vpop.permute.xlu0 %1060
  %v1064 = vsel %vm1058, %v1061, %v952
  %1066 = vrot.lane.b32.xlu0 %v1048, 96
  %v1067 = vpop.permute.xlu0 %1066
  %v1070 = vsel %vm1058, %v1067, %v1034
  %v1071 = vsel %vm1058, %v1061, 0.0
  %1072 = vst.msk [vmem:[#allocation2 + $0x8] sm:$0x3] %vm562, %v1071
  %1073 = vst.msk [vmem:[#allocation2 + $0x6] sm:$0x3] %vm564, %v1071
  %v1074 = vrot.slane %v228, 2
  %v1076 = vsel %vm429, %v233, %v1074
  %v1078 = vsel %vm154, %v1064, 0
  %1080 = vmatprep.subr.mxu0 0.0
  %1081 = vmatpush1.msra.mxu0 %v420
  %1082 = vmatprep.subr.mxu0 0.0
  %1083 = vmatpush1.msra.mxu0 %v421
  %1084 = vmatprep.subr.mxu0 0.0
  %1085 = vmatpush1.msra.mxu0 %v422
  %1086 = vmatprep.subr.mxu0 0.0
  %1087 = vmatpush1.msra.mxu0 %v423
  %1088 = vmatprep.subr.mxu0 0.0
  %1089 = vmatpush1.msra.mxu0 0.0
  %1090 = vmatprep.subr.mxu0 0.0
  %1091 = vmatpush1.msra.mxu0 0.0
  %1092 = vmatprep.subr.mxu0 0.0
  %1093 = vmatpush1.msra.mxu0 0.0
  %1094 = vmatprep.subr.mxu0 0.0
  %1095 = vmatpush1.msra.mxu0 0.0
  %1096 = vmatprep.subr.mxu0 0.0
  %1097 = vmatpush1.msra.mxu0 0.0
  %1098 = vmatprep.subr.mxu0 0.0
  %1099 = vmatpush1.msra.mxu0 0.0
  %1100 = vmatprep.subr.mxu0 0.0
  %1101 = vmatpush1.msra.mxu0 0.0
  %1102 = vmatprep.subr.mxu0 0.0
  %1103 = vmatpush1.msra.mxu0 0.0
  %1104 = vmatprep.subr.mxu0 0.0
  %1105 = vmatpush1.msra.mxu0 0.0
  %1106 = vmatprep.subr.mxu0 0.0
  %1107 = vmatpush1.msra.mxu0 0.0
  %1108 = vmatprep.subr.mxu0 0.0
  %1109 = vmatpush1.msra.mxu0 0.0
  %1110 = vmatprep.subr.mxu0 0.0
  %1111 = vmatpush1.msra.mxu0 0.0
  %1112 = vmatprep.subr.mxu0 0.0
  %1113 = vmatpush1.msra.mxu0 0.0
  %1114 = vmatprep.subr.mxu0 0.0
  %1115 = vmatpush1.msra.mxu0 0.0
  %1116 = vmatprep.subr.mxu0 0.0
  %1117 = vmatpush1.msra.mxu0 0.0
  %1118 = vmatprep.subr.mxu0 0.0
  %1119 = vmatpush1.msra.mxu0 0.0
  %1120 = vmatprep.subr.mxu0 0.0
  %1121 = vmatpush1.msra.mxu0 0.0
  %1122 = vmatprep.subr.mxu0 0.0
  %1123 = vmatpush1.msra.mxu0 0.0
  %1124 = vmatprep.subr.mxu0 0.0
  %1125 = vmatpush1.msra.mxu0 0.0
  %1126 = vmatprep.subr.mxu0 0.0
  %1127 = vmatpush1.msra.mxu0 0.0
  %1128 = vmatprep.subr.mxu0 0.0
  %1129 = vmatpush1.msra.mxu0 0.0
  %1130 = vmatprep.subr.mxu0 0.0
  %1131 = vmatpush1.msra.mxu0 0.0
  %1132 = vmatprep.subr.mxu0 0.0
  %1133 = vmatpush1.msra.mxu0 0.0
  %1134 = vmatprep.subr.mxu0 0.0
  %1135 = vmatpush1.msra.mxu0 0.0
  %1136 = vmatprep.subr.mxu0 0.0
  %1137 = vmatpush1.msra.mxu0 0.0
  %1138 = vmatprep.subr.mxu0 0.0
  %1139 = vmatpush1.msra.mxu0 0.0
  %1140 = vmatprep.subr.mxu0 0.0
  %1141 = vmatpush1.msra.mxu0 0.0
  %1142 = vmatprep.subr.mxu0 0.0
  %1143 = vmatpush1.msra.mxu0 0.0
  %1144 = vmatprep.mubr.f32.mxu0 0.0
  %1145 = vmatmul.mubr.f32.gmra.mrb[0].mxu0 %v1078
  %v1146 = vpop.f32.mrb[0].mxu0
  %v1147 = vadd.f32 0.0, %v1146
  %v1148 = vpop.f32.mrb[0].mxu0
  %1149 = vdwg.mxu0
  %v1151 = vrot.slane %v1147, 6
  %v1153 = vadd.f32 %v1076, %v1151
  %v1154 = vxor.u32 %v1153, 2147483648
  %v1155 = vmul.f32 %v1154, 1.442695
  %v1156 = vpow.pop %v1155
  %v1157 = vadd.f32 %v1156, 1.0
  %v1158 = vrcp.pop %v1157
  %v1159 = vmul.f32 1.0, %v1158
  %v1160 = vtanh.pop %v1153
  %v1162 = vrot.slane %v1070, 6
  %1163 = vrot.lane.b32.xlu0 %v1162, 32
  %v1164 = vpop.permute.xlu0 %1163
  %v1166 = vmul.f32 %v1159, %v1164
  %1168 = vrot.lane.b32.xlu0 %v1160, 64
  %v1169 = vpop.permute.xlu0 %1168
  %v1171 = vmul.f32 %v1159, %v1169
  %1173 = vrot.lane.b32.xlu0 %v1171, 32
  %v1174 = vpop.permute.xlu0 %1173
  %v1176 = vadd.f32 %v1166, %v1174
  %v1177 = vtanh.pop %v1176
  %1179 = vrot.lane.b32.xlu0 %v1177, 64
  %v1180 = vpop.permute.xlu0 %1179
  %v1182 = vmul.f32 %v1159, %v1180
  %v1183 = vrot.slane %v541, 2
  %v1185 = vsel %vm537, %v546, %v1183
  %vm1186 = vcmp.gt.f32.partialorder %v1185, 0.0
  %1188 = vrot.lane.b32.xlu0 %v1182, 32
  %v1189 = vpop.permute.xlu0 %1188
  %v1191 = vrot.slane %v1064, 6
  %v1193 = vsel %vm1186, %v1189, %v1191
  %1195 = vrot.lane.b32.xlu0 %v1176, 96
  %v1196 = vpop.permute.xlu0 %1195
  %v1199 = vsel %vm1186, %v1196, %v1162
  %v1200 = vsel %vm1186, %v1189, 0.0
  %1201 = vst.msk [vmem:[#allocation2 + $0x8] sm:$0xc] %vm693, %v1200
  %1202 = vst.msk [vmem:[#allocation2 + $0x2] sm:$0xc] %vm695, %v1200
  %v1204 = vrot.slane %v1193, 2
  %v1205 = vsel %vm154, %v1204, 0
  %1207 = vmatprep.subr.mxu0 0.0
  %1208 = vmatpush1.msra.mxu0 %v420
  %1209 = vmatprep.subr.mxu0 0.0
  %1210 = vmatpush1.msra.mxu0 %v421
  %1211 = vmatprep.subr.mxu0 0.0
  %1212 = vmatpush1.msra.mxu0 %v422
  %1213 = vmatprep.subr.mxu0 0.0
  %1214 = vmatpush1.msra.mxu0 %v423
  %1215 = vmatprep.subr.mxu0 0.0
  %1216 = vmatpush1.msra.mxu0 0.0
  %1217 = vmatprep.subr.mxu0 0.0
  %1218 = vmatpush1.msra.mxu0 0.0
  %1219 = vmatprep.subr.mxu0 0.0
  %1220 = vmatpush1.msra.mxu0 0.0
  %1221 = vmatprep.subr.mxu0 0.0
  %1222 = vmatpush1.msra.mxu0 0.0
  %1223 = vmatprep.subr.mxu0 0.0
  %1224 = vmatpush1.msra.mxu0 0.0
  %1225 = vmatprep.subr.mxu0 0.0
  %1226 = vmatpush1.msra.mxu0 0.0
  %1227 = vmatprep.subr.mxu0 0.0
  %1228 = vmatpush1.msra.mxu0 0.0
  %1229 = vmatprep.subr.mxu0 0.0
  %1230 = vmatpush1.msra.mxu0 0.0
  %1231 = vmatprep.subr.mxu0 0.0
  %1232 = vmatpush1.msra.mxu0 0.0
  %1233 = vmatprep.subr.mxu0 0.0
  %1234 = vmatpush1.msra.mxu0 0.0
  %1235 = vmatprep.subr.mxu0 0.0
  %1236 = vmatpush1.msra.mxu0 0.0
  %1237 = vmatprep.subr.mxu0 0.0
  %1238 = vmatpush1.msra.mxu0 0.0
  %1239 = vmatprep.subr.mxu0 0.0
  %1240 = vmatpush1.msra.mxu0 0.0
  %1241 = vmatprep.subr.mxu0 0.0
  %1242 = vmatpush1.msra.mxu0 0.0
  %1243 = vmatprep.subr.mxu0 0.0
  %1244 = vmatpush1.msra.mxu0 0.0
  %1245 = vmatprep.subr.mxu0 0.0
  %1246 = vmatpush1.msra.mxu0 0.0
  %1247 = vmatprep.subr.mxu0 0.0
  %1248 = vmatpush1.msra.mxu0 0.0
  %1249 = vmatprep.subr.mxu0 0.0
  %1250 = vmatpush1.msra.mxu0 0.0
  %1251 = vmatprep.subr.mxu0 0.0
  %1252 = vmatpush1.msra.mxu0 0.0
  %1253 = vmatprep.subr.mxu0 0.0
  %1254 = vmatpush1.msra.mxu0 0.0
  %1255 = vmatprep.subr.mxu0 0.0
  %1256 = vmatpush1.msra.mxu0 0.0
  %1257 = vmatprep.subr.mxu0 0.0
  %1258 = vmatpush1.msra.mxu0 0.0
  %1259 = vmatprep.subr.mxu0 0.0
  %1260 = vmatpush1.msra.mxu0 0.0
  %1261 = vmatprep.subr.mxu0 0.0
  %1262 = vmatpush1.msra.mxu0 0.0
  %1263 = vmatprep.subr.mxu0 0.0
  %1264 = vmatpush1.msra.mxu0 0.0
  %1265 = vmatprep.subr.mxu0 0.0
  %1266 = vmatpush1.msra.mxu0 0.0
  %1267 = vmatprep.subr.mxu0 0.0
  %1268 = vmatpush1.msra.mxu0 0.0
  %1269 = vmatprep.subr.mxu0 0.0
  %1270 = vmatpush1.msra.mxu0 0.0
  %1271 = vmatprep.mubr.f32.mxu0 0.0
  %1272 = vmatmul.mubr.f32.gmra.mrb[0].mxu0 %v1205
  %v1273 = vpop.f32.mrb[0].mxu0
  %v1274 = vadd.f32 0.0, %v1273
  %v1275 = vpop.f32.mrb[0].mxu0
  %1276 = vdwg.mxu0
  %v1278 = vrot.slane %v1274, 4
  %v1280 = vadd.f32 %v950, %v1278
  %v1281 = vxor.u32 %v1280, 2147483648
  %v1282 = vmul.f32 %v1281, 1.442695
  %v1283 = vpow.pop %v1282
  %v1284 = vadd.f32 %v1283, 1.0
  %v1285 = vrcp.pop %v1284
  %v1286 = vmul.f32 1.0, %v1285
  %v1287 = vtanh.pop %v1280
  %v1289 = vrot.slane %v1199, 6
  %1290 = vrot.lane.b32.xlu0 %v1289, 32
  %v1291 = vpop.permute.xlu0 %1290
  %v1293 = vmul.f32 %v1286, %v1291
  %1295 = vrot.lane.b32.xlu0 %v1287, 64
  %v1296 = vpop.permute.xlu0 %1295
  %v1298 = vmul.f32 %v1286, %v1296
  %1300 = vrot.lane.b32.xlu0 %v1298, 32
  %v1301 = vpop.permute.xlu0 %1300
  %v1303 = vadd.f32 %v1293, %v1301
  %v1304 = vtanh.pop %v1303
  %1306 = vrot.lane.b32.xlu0 %v1304, 64
  %v1307 = vpop.permute.xlu0 %1306
  %v1309 = vmul.f32 %v1286, %v1307
  %1311 = vrot.lane.b32.xlu0 %v1309, 32
  %v1312 = vpop.permute.xlu0 %1311
  %v1314 = vrot.slane %v1193, 6
  %v1316 = vsel %vm1058, %v1312, %v1314
  %1318 = vrot.lane.b32.xlu0 %v1303, 96
  %v1319 = vpop.permute.xlu0 %1318
  %v1322 = vsel %vm1058, %v1319, %v1289
  %v1323 = vsel %vm1058, %v1312, 0.0
  %1324 = vst.msk [vmem:[#allocation2 + $0x8] sm:$0x30] %vm818, %v1323
  %1325 = vst.msk [vmem:[#allocation2 - $0x2] sm:$0x30] %vm820, %v1323
  %v1327 = vrot.slane %v1316, 4
  %v1328 = vsel %vm154, %v1327, 0
  %1330 = vmatprep.subr.mxu0 0.0
  %1331 = vmatpush1.msra.mxu0 %v420
  %1332 = vmatprep.subr.mxu0 0.0
  %1333 = vmatpush1.msra.mxu0 %v421
  %1334 = vmatprep.subr.mxu0 0.0
  %1335 = vmatpush1.msra.mxu0 %v422
  %1336 = vmatprep.subr.mxu0 0.0
  %1337 = vmatpush1.msra.mxu0 %v423
  %1338 = vmatprep.subr.mxu0 0.0
  %1339 = vmatpush1.msra.mxu0 0.0
  %1340 = vmatprep.subr.mxu0 0.0
  %1341 = vmatpush1.msra.mxu0 0.0
  %1342 = vmatprep.subr.mxu0 0.0
  %1343 = vmatpush1.msra.mxu0 0.0
  %1344 = vmatprep.subr.mxu0 0.0
  %1345 = vmatpush1.msra.mxu0 0.0
  %1346 = vmatprep.subr.mxu0 0.0
  %1347 = vmatpush1.msra.mxu0 0.0
  %1348 = vmatprep.subr.mxu0 0.0
  %1349 = vmatpush1.msra.mxu0 0.0
  %1350 = vmatprep.subr.mxu0 0.0
  %1351 = vmatpush1.msra.mxu0 0.0
  %1352 = vmatprep.subr.mxu0 0.0
  %1353 = vmatpush1.msra.mxu0 0.0
  %1354 = vmatprep.subr.mxu0 0.0
  %1355 = vmatpush1.msra.mxu0 0.0
  %1356 = vmatprep.subr.mxu0 0.0
  %1357 = vmatpush1.msra.mxu0 0.0
  %1358 = vmatprep.subr.mxu0 0.0
  %1359 = vmatpush1.msra.mxu0 0.0
  %1360 = vmatprep.subr.mxu0 0.0
  %1361 = vmatpush1.msra.mxu0 0.0
  %1362 = vmatprep.subr.mxu0 0.0
  %1363 = vmatpush1.msra.mxu0 0.0
  %1364 = vmatprep.subr.mxu0 0.0
  %1365 = vmatpush1.msra.mxu0 0.0
  %1366 = vmatprep.subr.mxu0 0.0
  %1367 = vmatpush1.msra.mxu0 0.0
  %1368 = vmatprep.subr.mxu0 0.0
  %1369 = vmatpush1.msra.mxu0 0.0
  %1370 = vmatprep.subr.mxu0 0.0
  %1371 = vmatpush1.msra.mxu0 0.0
  %1372 = vmatprep.subr.mxu0 0.0
  %1373 = vmatpush1.msra.mxu0 0.0
  %1374 = vmatprep.subr.mxu0 0.0
  %1375 = vmatpush1.msra.mxu0 0.0
  %1376 = vmatprep.subr.mxu0 0.0
  %1377 = vmatpush1.msra.mxu0 0.0
  %1378 = vmatprep.subr.mxu0 0.0
  %1379 = vmatpush1.msra.mxu0 0.0
  %1380 = vmatprep.subr.mxu0 0.0
  %1381 = vmatpush1.msra.mxu0 0.0
  %1382 = vmatprep.subr.mxu0 0.0
  %1383 = vmatpush1.msra.mxu0 0.0
  %1384 = vmatprep.subr.mxu0 0.0
  %1385 = vmatpush1.msra.mxu0 0.0
  %1386 = vmatprep.subr.mxu0 0.0
  %1387 = vmatpush1.msra.mxu0 0.0
  %1388 = vmatprep.subr.mxu0 0.0
  %1389 = vmatpush1.msra.mxu0 0.0
  %1390 = vmatprep.subr.mxu0 0.0
  %1391 = vmatpush1.msra.mxu0 0.0
  %1392 = vmatprep.subr.mxu0 0.0
  %1393 = vmatpush1.msra.mxu0 0.0
  %1394 = vmatprep.mubr.f32.mxu0 0.0
  %1395 = vmatmul.mubr.f32.gmra.mrb[0].mxu0 %v1328
  %v1396 = vpop.f32.mrb[0].mxu0
  %v1397 = vadd.f32 0.0, %v1396
  %v1398 = vpop.f32.mrb[0].mxu0
  %1399 = vdwg.mxu0
  %v1401 = vrot.slane %v1397, 2
  %v1403 = vadd.f32 %v1076, %v1401
  %v1404 = vxor.u32 %v1403, 2147483648
  %v1405 = vmul.f32 %v1404, 1.442695
  %v1406 = vpow.pop %v1405
  %v1407 = vadd.f32 %v1406, 1.0
  %v1408 = vrcp.pop %v1407
  %v1409 = vmul.f32 1.0, %v1408
  %v1410 = vtanh.pop %v1403
  %v1412 = vrot.slane %v1322, 6
  %1413 = vrot.lane.b32.xlu0 %v1412, 32
  %v1414 = vpop.permute.xlu0 %1413
  %v1416 = vmul.f32 %v1409, %v1414
  %1418 = vrot.lane.b32.xlu0 %v1410, 64
  %v1419 = vpop.permute.xlu0 %1418
  %v1421 = vmul.f32 %v1409, %v1419
  %1423 = vrot.lane.b32.xlu0 %v1421, 32
  %v1424 = vpop.permute.xlu0 %1423
  %v1426 = vadd.f32 %v1416, %v1424
  %v1427 = vtanh.pop %v1426
  %1429 = vrot.lane.b32.xlu0 %v1427, 64
  %v1430 = vpop.permute.xlu0 %1429
  %v1432 = vmul.f32 %v1409, %v1430
  %1434 = vrot.lane.b32.xlu0 %v1432, 32
  %v1435 = vpop.permute.xlu0 %1434
  %v1437 = vsel %vm1186, %v1435, 0.0
  %1438 = vst.msk [vmem:[#allocation2 + $0x8] sm:$0xc0] %vm943, %v1437
  %1439 = vst.msk [vmem:[#allocation2 - $0x6] sm:$0xc0] %vm945, %v1437
  %v1440 = vld [vmem:[#allocation2] sm:$0xff]
  %v1441 = vld [vmem:[#allocation2 + $0x8] sm:$0xff]
  %v1442 = vmul.f32 %v331, %v412
  %v1443 = vmul.f32 %v333, %v417
  %v1444 = vadd.f32 %v1440, %v1442
  %v1445 = vadd.f32 %v1441, %v1443
  %v1446 = vmul.f32 %v1444, %v541
  %v1447 = vmul.f32 %v1445, %v546
  %v1448 = vld [vmem:[%s25] sm:$0xff]
  %v1449 = vld [vmem:[%s25 + $0x8] sm:$0xff]
  %v1450 = vld [vmem:[%s25 + $0x10] sm:$0xff]
  %v1451 = vld [vmem:[%s25 + $0x18] sm:$0xff]
  %v1452 = vld [vmem:[%s27] sm:$0x1]
  %v1454 = vlaneseq
  %v1455 = vshrl.u32 %v1454, 7
  %v1456 = vsub.s32 0, %v1455
  %v1457 = vrot.slane %v1452, %v1456
  %v1460 = vsel %vm154, %v1446, 0
  %v1463 = vsel %vm154, %v1447, 0
  %1465 = vmatprep.subr.mxu0 0.0
  %1466 = vmatpush1.msra.mxu0 %v1448
  %1467 = vmatprep.subr.mxu0 0.0
  %1468 = vmatpush1.msra.mxu0 %v1449
  %1469 = vmatprep.subr.mxu0 0.0
  %1470 = vmatpush1.msra.mxu0 %v1450
  %1471 = vmatprep.subr.mxu0 0.0
  %1472 = vmatpush1.msra.mxu0 %v1451
  %1473 = vmatprep.subr.mxu0 0.0
  %1474 = vmatpush1.msra.mxu0 0.0
  %1475 = vmatprep.subr.mxu0 0.0
  %1476 = vmatpush1.msra.mxu0 0.0
  %1477 = vmatprep.subr.mxu0 0.0
  %1478 = vmatpush1.msra.mxu0 0.0
  %1479 = vmatprep.subr.mxu0 0.0
  %1480 = vmatpush1.msra.mxu0 0.0
  %1481 = vmatprep.subr.mxu0 0.0
  %1482 = vmatpush1.msra.mxu0 0.0
  %1483 = vmatprep.subr.mxu0 0.0
  %1484 = vmatpush1.msra.mxu0 0.0
  %1485 = vmatprep.subr.mxu0 0.0
  %1486 = vmatpush1.msra.mxu0 0.0
  %1487 = vmatprep.subr.mxu0 0.0
  %1488 = vmatpush1.msra.mxu0 0.0
  %1489 = vmatprep.subr.mxu0 0.0
  %1490 = vmatpush1.msra.mxu0 0.0
  %1491 = vmatprep.subr.mxu0 0.0
  %1492 = vmatpush1.msra.mxu0 0.0
  %1493 = vmatprep.subr.mxu0 0.0
  %1494 = vmatpush1.msra.mxu0 0.0
  %1495 = vmatprep.subr.mxu0 0.0
  %1496 = vmatpush1.msra.mxu0 0.0
  %1497 = vmatprep.subr.mxu0 0.0
  %1498 = vmatpush1.msra.mxu0 0.0
  %1499 = vmatprep.subr.mxu0 0.0
  %1500 = vmatpush1.msra.mxu0 0.0
  %1501 = vmatprep.subr.mxu0 0.0
  %1502 = vmatpush1.msra.mxu0 0.0
  %1503 = vmatprep.subr.mxu0 0.0
  %1504 = vmatpush1.msra.mxu0 0.0
  %1505 = vmatprep.subr.mxu0 0.0
  %1506 = vmatpush1.msra.mxu0 0.0
  %1507 = vmatprep.subr.mxu0 0.0
  %1508 = vmatpush1.msra.mxu0 0.0
  %1509 = vmatprep.subr.mxu0 0.0
  %1510 = vmatpush1.msra.mxu0 0.0
  %1511 = vmatprep.subr.mxu0 0.0
  %1512 = vmatpush1.msra.mxu0 0.0
  %1513 = vmatprep.subr.mxu0 0.0
  %1514 = vmatpush1.msra.mxu0 0.0
  %1515 = vmatprep.subr.mxu0 0.0
  %1516 = vmatpush1.msra.mxu0 0.0
  %1517 = vmatprep.subr.mxu0 0.0
  %1518 = vmatpush1.msra.mxu0 0.0
  %1519 = vmatprep.subr.mxu0 0.0
  %1520 = vmatpush1.msra.mxu0 0.0
  %1521 = vmatprep.subr.mxu0 0.0
  %1522 = vmatpush1.msra.mxu0 0.0
  %1523 = vmatprep.subr.mxu0 0.0
  %1524 = vmatpush1.msra.mxu0 0.0
  %1525 = vmatprep.subr.mxu0 0.0
  %1526 = vmatpush1.msra.mxu0 0.0
  %1527 = vmatprep.subr.mxu0 0.0
  %1528 = vmatpush1.msra.mxu0 0.0
  %1529 = vmatprep.mubr.f32.mxu0 0.0
  %1530 = vmatmul.mubr.f32.gmra.mrb[0].mxu0 %v1460
  %v1531 = vpop.f32.mrb[0].mxu0
  %v1532 = vadd.f32 %v1457, %v1531
  %v1533 = vpop.f32.mrb[0].mxu0
  %1534 = vmatprep.mubr.f32.mxu0 0.0
  %1535 = vmatmul.mubr.f32.gmra.mrb[0].mxu0 %v1463
  %v1536 = vpop.f32.mrb[0].mxu0
  %v1537 = vadd.f32 %v1457, %v1536
  %v1538 = vpop.f32.mrb[0].mxu0
  %1539 = vdwg.mxu0
  %v1540 = vld [vmem:[%s31] sm:$0xff]
  %v1541 = vld [vmem:[%s31 + $0x8] sm:$0xff]
  %v1542 = vld [vmem:[%s31 + $0x10] sm:$0xff]
  %v1543 = vld [vmem:[%s31 + $0x18] sm:$0xff]
  %v1544 = vld [vmem:[%s33] sm:$0x1]
  %v1546 = vlaneseq
  %v1547 = vshrl.u32 %v1546, 7
  %v1548 = vsub.s32 0, %v1547
  %v1549 = vrot.slane %v1544, %v1548
  %1551 = vmatprep.subr.mxu0 0.0
  %1552 = vmatpush1.msra.mxu0 %v1540
  %1553 = vmatprep.subr.mxu0 0.0
  %1554 = vmatpush1.msra.mxu0 %v1541
  %1555 = vmatprep.subr.mxu0 0.0
  %1556 = vmatpush1.msra.mxu0 %v1542
  %1557 = vmatprep.subr.mxu0 0.0
  %1558 = vmatpush1.msra.mxu0 %v1543
  %1559 = vmatprep.subr.mxu0 0.0
  %1560 = vmatpush1.msra.mxu0 0.0
  %1561 = vmatprep.subr.mxu0 0.0
  %1562 = vmatpush1.msra.mxu0 0.0
  %1563 = vmatprep.subr.mxu0 0.0
  %1564 = vmatpush1.msra.mxu0 0.0
  %1565 = vmatprep.subr.mxu0 0.0
  %1566 = vmatpush1.msra.mxu0 0.0
  %1567 = vmatprep.subr.mxu0 0.0
  %1568 = vmatpush1.msra.mxu0 0.0
  %1569 = vmatprep.subr.mxu0 0.0
  %1570 = vmatpush1.msra.mxu0 0.0
  %1571 = vmatprep.subr.mxu0 0.0
  %1572 = vmatpush1.msra.mxu0 0.0
  %1573 = vmatprep.subr.mxu0 0.0
  %1574 = vmatpush1.msra.mxu0 0.0
  %1575 = vmatprep.subr.mxu0 0.0
  %1576 = vmatpush1.msra.mxu0 0.0
  %1577 = vmatprep.subr.mxu0 0.0
  %1578 = vmatpush1.msra.mxu0 0.0
  %1579 = vmatprep.subr.mxu0 0.0
  %1580 = vmatpush1.msra.mxu0 0.0
  %1581 = vmatprep.subr.mxu0 0.0
  %1582 = vmatpush1.msra.mxu0 0.0
  %1583 = vmatprep.subr.mxu0 0.0
  %1584 = vmatpush1.msra.mxu0 0.0
  %1585 = vmatprep.subr.mxu0 0.0
  %1586 = vmatpush1.msra.mxu0 0.0
  %1587 = vmatprep.subr.mxu0 0.0
  %1588 = vmatpush1.msra.mxu0 0.0
  %1589 = vmatprep.subr.mxu0 0.0
  %1590 = vmatpush1.msra.mxu0 0.0
  %1591 = vmatprep.subr.mxu0 0.0
  %1592 = vmatpush1.msra.mxu0 0.0
  %1593 = vmatprep.subr.mxu0 0.0
  %1594 = vmatpush1.msra.mxu0 0.0
  %1595 = vmatprep.subr.mxu0 0.0
  %1596 = vmatpush1.msra.mxu0 0.0
  %1597 = vmatprep.subr.mxu0 0.0
  %1598 = vmatpush1.msra.mxu0 0.0
  %1599 = vmatprep.subr.mxu0 0.0
  %1600 = vmatpush1.msra.mxu0 0.0
  %1601 = vmatprep.subr.mxu0 0.0
  %1602 = vmatpush1.msra.mxu0 0.0
  %1603 = vmatprep.subr.mxu0 0.0
  %1604 = vmatpush1.msra.mxu0 0.0
  %1605 = vmatprep.subr.mxu0 0.0
  %1606 = vmatpush1.msra.mxu0 0.0
  %1607 = vmatprep.subr.mxu0 0.0
  %1608 = vmatpush1.msra.mxu0 0.0
  %1609 = vmatprep.subr.mxu0 0.0
  %1610 = vmatpush1.msra.mxu0 0.0
  %1611 = vmatprep.subr.mxu0 0.0
  %1612 = vmatpush1.msra.mxu0 0.0
  %1613 = vmatprep.subr.mxu0 0.0
  %1614 = vmatpush1.msra.mxu0 0.0
  %1615 = vmatprep.mubr.f32.mxu0 0.0
  %1616 = vmatmul.mubr.f32.gmra.mrb[0].mxu0 %v1460
  %v1617 = vpop.f32.mrb[0].mxu0
  %v1618 = vadd.f32 %v1549, %v1617
  %v1619 = vpop.f32.mrb[0].mxu0
  %1620 = vmatprep.mubr.f32.mxu0 0.0
  %1621 = vmatmul.mubr.f32.gmra.mrb[0].mxu0 %v1463
  %v1622 = vpop.f32.mrb[0].mxu0
  %v1623 = vadd.f32 %v1549, %v1622
  %v1624 = vpop.f32.mrb[0].mxu0
  %1625 = vdwg.mxu0
  %v1626 = vxor.u32 %v1618, 2147483648
  %v1627 = vxor.u32 %v1623, 2147483648
  %v1628 = vmul.f32 %v1626, 1.442695
  %v1629 = vpow.pop %v1628
  %v1630 = vmul.f32 %v1627, 1.442695
  %v1631 = vpow.pop %v1630
  %v1632 = vadd.f32 %v1629, 1.0
  %v1633 = vadd.f32 %v1631, 1.0
  %v1634 = vrcp.pop %v1632
  %v1635 = vmul.f32 1.0, %v1634
  %v1636 = vrcp.pop %v1633
  %v1637 = vmul.f32 1.0, %v1636
  %v1638 = vld [vmem:[%s35] sm:$0xff]
  %v1639 = vld [vmem:[%s35 + $0x8] sm:$0xff]
  %v1640 = vld [vmem:[%s35 + $0x10] sm:$0xff]
  %v1641 = vld [vmem:[%s35 + $0x18] sm:$0xff]
  %v1642 = vld [vmem:[%s37] sm:$0x1]
  %v1644 = vlaneseq
  %v1645 = vshrl.u32 %v1644, 7
  %v1646 = vsub.s32 0, %v1645
  %v1647 = vrot.slane %v1642, %v1646
  %1649 = vmatprep.subr.mxu0 0.0
  %1650 = vmatpush1.msra.mxu0 %v1638
  %1651 = vmatprep.subr.mxu0 0.0
  %1652 = vmatpush1.msra.mxu0 %v1639
  %1653 = vmatprep.subr.mxu0 0.0
  %1654 = vmatpush1.msra.mxu0 %v1640
  %1655 = vmatprep.subr.mxu0 0.0
  %1656 = vmatpush1.msra.mxu0 %v1641
  %1657 = vmatprep.subr.mxu0 0.0
  %1658 = vmatpush1.msra.mxu0 0.0
  %1659 = vmatprep.subr.mxu0 0.0
  %1660 = vmatpush1.msra.mxu0 0.0
  %1661 = vmatprep.subr.mxu0 0.0
  %1662 = vmatpush1.msra.mxu0 0.0
  %1663 = vmatprep.subr.mxu0 0.0
  %1664 = vmatpush1.msra.mxu0 0.0
  %1665 = vmatprep.subr.mxu0 0.0
  %1666 = vmatpush1.msra.mxu0 0.0
  %1667 = vmatprep.subr.mxu0 0.0
  %1668 = vmatpush1.msra.mxu0 0.0
  %1669 = vmatprep.subr.mxu0 0.0
  %1670 = vmatpush1.msra.mxu0 0.0
  %1671 = vmatprep.subr.mxu0 0.0
  %1672 = vmatpush1.msra.mxu0 0.0
  %1673 = vmatprep.subr.mxu0 0.0
  %1674 = vmatpush1.msra.mxu0 0.0
  %1675 = vmatprep.subr.mxu0 0.0
  %1676 = vmatpush1.msra.mxu0 0.0
  %1677 = vmatprep.subr.mxu0 0.0
  %1678 = vmatpush1.msra.mxu0 0.0
  %1679 = vmatprep.subr.mxu0 0.0
  %1680 = vmatpush1.msra.mxu0 0.0
  %1681 = vmatprep.subr.mxu0 0.0
  %1682 = vmatpush1.msra.mxu0 0.0
  %1683 = vmatprep.subr.mxu0 0.0
  %1684 = vmatpush1.msra.mxu0 0.0
  %1685 = vmatprep.subr.mxu0 0.0
  %1686 = vmatpush1.msra.mxu0 0.0
  %1687 = vmatprep.subr.mxu0 0.0
  %1688 = vmatpush1.msra.mxu0 0.0
  %1689 = vmatprep.subr.mxu0 0.0
  %1690 = vmatpush1.msra.mxu0 0.0
  %1691 = vmatprep.subr.mxu0 0.0
  %1692 = vmatpush1.msra.mxu0 0.0
  %1693 = vmatprep.subr.mxu0 0.0
  %1694 = vmatpush1.msra.mxu0 0.0
  %1695 = vmatprep.subr.mxu0 0.0
  %1696 = vmatpush1.msra.mxu0 0.0
  %1697 = vmatprep.subr.mxu0 0.0
  %1698 = vmatpush1.msra.mxu0 0.0
  %1699 = vmatprep.subr.mxu0 0.0
  %1700 = vmatpush1.msra.mxu0 0.0
  %1701 = vmatprep.subr.mxu0 0.0
  %1702 = vmatpush1.msra.mxu0 0.0
  %1703 = vmatprep.subr.mxu0 0.0
  %1704 = vmatpush1.msra.mxu0 0.0
  %1705 = vmatprep.subr.mxu0 0.0
  %1706 = vmatpush1.msra.mxu0 0.0
  %1707 = vmatprep.subr.mxu0 0.0
  %1708 = vmatpush1.msra.mxu0 0.0
  %1709 = vmatprep.subr.mxu0 0.0
  %1710 = vmatpush1.msra.mxu0 0.0
  %1711 = vmatprep.subr.mxu0 0.0
  %1712 = vmatpush1.msra.mxu0 0.0
  %1713 = vmatprep.mubr.f32.mxu0 0.0
  %1714 = vmatmul.mubr.f32.gmra.mrb[0].mxu0 %v1460
  %v1715 = vpop.f32.mrb[0].mxu0
  %v1716 = vadd.f32 %v1647, %v1715
  %v1717 = vpop.f32.mrb[0].mxu0
  %1718 = vmatprep.mubr.f32.mxu0 0.0
  %1719 = vmatmul.mubr.f32.gmra.mrb[0].mxu0 %v1463
  %v1720 = vpop.f32.mrb[0].mxu0
  %v1721 = vadd.f32 %v1647, %v1720
  %v1722 = vpop.f32.mrb[0].mxu0
  %1723 = vdwg.mxu0
  %v1724 = vld [vmem:[%s29] sm:$0xff]
  %v1725 = vld [vmem:[%s29 + $0x8] sm:$0xff]
  %v1726 = vld [vmem:[%s29 + $0x10] sm:$0xff]
  %v1727 = vld [vmem:[%s29 + $0x18] sm:$0xff]
  %v1729 = vrot.slane %v1537, 6
  %v1731 = vsel %vm429, %v1532, %v1729
  %1732 = vmatprep.subr.mxu0 0.0
  %1733 = vmatpush1.msra.mxu0 %v1724
  %1734 = vmatprep.subr.mxu0 0.0
  %1735 = vmatpush1.msra.mxu0 %v1725
  %1736 = vmatprep.subr.mxu0 0.0
  %1737 = vmatpush1.msra.mxu0 %v1726
  %1738 = vmatprep.subr.mxu0 0.0
  %1739 = vmatpush1.msra.mxu0 %v1727
  %1740 = vmatprep.subr.mxu0 0.0
  %1741 = vmatpush1.msra.mxu0 0.0
  %1742 = vmatprep.subr.mxu0 0.0
  %1743 = vmatpush1.msra.mxu0 0.0
  %1744 = vmatprep.subr.mxu0 0.0
  %1745 = vmatpush1.msra.mxu0 0.0
  %1746 = vmatprep.subr.mxu0 0.0
  %1747 = vmatpush1.msra.mxu0 0.0
  %1748 = vmatprep.subr.mxu0 0.0
  %1749 = vmatpush1.msra.mxu0 0.0
  %1750 = vmatprep.subr.mxu0 0.0
  %1751 = vmatpush1.msra.mxu0 0.0
  %1752 = vmatprep.subr.mxu0 0.0
  %1753 = vmatpush1.msra.mxu0 0.0
  %1754 = vmatprep.subr.mxu0 0.0
  %1755 = vmatpush1.msra.mxu0 0.0
  %1756 = vmatprep.subr.mxu0 0.0
  %1757 = vmatpush1.msra.mxu0 0.0
  %1758 = vmatprep.subr.mxu0 0.0
  %1759 = vmatpush1.msra.mxu0 0.0
  %1760 = vmatprep.subr.mxu0 0.0
  %1761 = vmatpush1.msra.mxu0 0.0
  %1762 = vmatprep.subr.mxu0 0.0
  %1763 = vmatpush1.msra.mxu0 0.0
  %1764 = vmatprep.subr.mxu0 0.0
  %1765 = vmatpush1.msra.mxu0 0.0
  %1766 = vmatprep.subr.mxu0 0.0
  %1767 = vmatpush1.msra.mxu0 0.0
  %1768 = vmatprep.subr.mxu0 0.0
  %1769 = vmatpush1.msra.mxu0 0.0
  %1770 = vmatprep.subr.mxu0 0.0
  %1771 = vmatpush1.msra.mxu0 0.0
  %1772 = vmatprep.subr.mxu0 0.0
  %1773 = vmatpush1.msra.mxu0 0.0
  %1774 = vmatprep.subr.mxu0 0.0
  %1775 = vmatpush1.msra.mxu0 0.0
  %1776 = vmatprep.subr.mxu0 0.0
  %1777 = vmatpush1.msra.mxu0 0.0
  %1778 = vmatprep.subr.mxu0 0.0
  %1779 = vmatpush1.msra.mxu0 0.0
  %1780 = vmatprep.subr.mxu0 0.0
  %1781 = vmatpush1.msra.mxu0 0.0
  %1782 = vmatprep.subr.mxu0 0.0
  %1783 = vmatpush1.msra.mxu0 0.0
  %1784 = vmatprep.subr.mxu0 0.0
  %1785 = vmatpush1.msra.mxu0 0.0
  %1786 = vmatprep.subr.mxu0 0.0
  %1787 = vmatpush1.msra.mxu0 0.0
  %1788 = vmatprep.subr.mxu0 0.0
  %1789 = vmatpush1.msra.mxu0 0.0
  %1790 = vmatprep.subr.mxu0 0.0
  %1791 = vmatpush1.msra.mxu0 0.0
  %1792 = vmatprep.subr.mxu0 0.0
  %1793 = vmatpush1.msra.mxu0 0.0
  %1794 = vmatprep.subr.mxu0 0.0
  %1795 = vmatpush1.msra.mxu0 0.0
  %1796 = vmatprep.mubr.f32.mxu0 0.0
  %1797 = vmatmul.mubr.f32.gmra.mrb[0].mxu0 %v435
  %v1798 = vpop.f32.mrb[0].mxu0
  %v1799 = vadd.f32 0.0, %v1798
  %v1800 = vpop.f32.mrb[0].mxu0
  %1801 = vdwg.mxu0
  %v1802 = vadd.f32 %v1731, %v1799
  %v1803 = vxor.u32 %v1802, 2147483648
  %v1804 = vmul.f32 %v1803, 1.442695
  %v1805 = vpow.pop %v1804
  %v1806 = vadd.f32 %v1805, 1.0
  %v1807 = vrcp.pop %v1806
  %v1808 = vmul.f32 1.0, %v1807
  %v1809 = vtanh.pop %v1802
  %v1810 = vmul.f32 %v1808, 0.0
  %1812 = vrot.lane.b32.xlu0 %v1809, 64
  %v1813 = vpop.permute.xlu0 %1812
  %v1815 = vmul.f32 %v1808, %v1813
  %1817 = vrot.lane.b32.xlu0 %v1815, 32
  %v1818 = vpop.permute.xlu0 %1817
  %v1820 = vadd.f32 %v1810, %v1818
  %v1821 = vtanh.pop %v1820
  %1823 = vrot.lane.b32.xlu0 %v1821, 64
  %v1824 = vpop.permute.xlu0 %1823
  %v1826 = vmul.f32 %v1808, %v1824
  %1828 = vrot.lane.b32.xlu0 %v1826, 32
  %v1829 = vpop.permute.xlu0 %1828
  %v1831 = vsel %vm551, %v1829, 0.0
  %1833 = vrot.lane.b32.xlu0 %v1820, 96
  %v1834 = vpop.permute.xlu0 %1833
  %v1836 = vsel %vm551, %v1834, 0.0
  %1837 = vst.msk [vmem:[#allocation2] sm:$0x3] %vm562, %v1831
  %1838 = vst.msk [vmem:[#allocation2 + $0xe] sm:$0x3] %vm564, %v1831
  %v1839 = vrot.slane %v1537, 2
  %v1841 = vsel %vm429, %v1532, %v1839
  %v1843 = vsel %vm154, %v1831, 0
  %1845 = vmatprep.subr.mxu0 0.0
  %1846 = vmatpush1.msra.mxu0 %v1724
  %1847 = vmatprep.subr.mxu0 0.0
  %1848 = vmatpush1.msra.mxu0 %v1725
  %1849 = vmatprep.subr.mxu0 0.0
  %1850 = vmatpush1.msra.mxu0 %v1726
  %1851 = vmatprep.subr.mxu0 0.0
  %1852 = vmatpush1.msra.mxu0 %v1727
  %1853 = vmatprep.subr.mxu0 0.0
  %1854 = vmatpush1.msra.mxu0 0.0
  %1855 = vmatprep.subr.mxu0 0.0
  %1856 = vmatpush1.msra.mxu0 0.0
  %1857 = vmatprep.subr.mxu0 0.0
  %1858 = vmatpush1.msra.mxu0 0.0
  %1859 = vmatprep.subr.mxu0 0.0
  %1860 = vmatpush1.msra.mxu0 0.0
  %1861 = vmatprep.subr.mxu0 0.0
  %1862 = vmatpush1.msra.mxu0 0.0
  %1863 = vmatprep.subr.mxu0 0.0
  %1864 = vmatpush1.msra.mxu0 0.0
  %1865 = vmatprep.subr.mxu0 0.0
  %1866 = vmatpush1.msra.mxu0 0.0
  %1867 = vmatprep.subr.mxu0 0.0
  %1868 = vmatpush1.msra.mxu0 0.0
  %1869 = vmatprep.subr.mxu0 0.0
  %1870 = vmatpush1.msra.mxu0 0.0
  %1871 = vmatprep.subr.mxu0 0.0
  %1872 = vmatpush1.msra.mxu0 0.0
  %1873 = vmatprep.subr.mxu0 0.0
  %1874 = vmatpush1.msra.mxu0 0.0
  %1875 = vmatprep.subr.mxu0 0.0
  %1876 = vmatpush1.msra.mxu0 0.0
  %1877 = vmatprep.subr.mxu0 0.0
  %1878 = vmatpush1.msra.mxu0 0.0
  %1879 = vmatprep.subr.mxu0 0.0
  %1880 = vmatpush1.msra.mxu0 0.0
  %1881 = vmatprep.subr.mxu0 0.0
  %1882 = vmatpush1.msra.mxu0 0.0
  %1883 = vmatprep.subr.mxu0 0.0
  %1884 = vmatpush1.msra.mxu0 0.0
  %1885 = vmatprep.subr.mxu0 0.0
  %1886 = vmatpush1.msra.mxu0 0.0
  %1887 = vmatprep.subr.mxu0 0.0
  %1888 = vmatpush1.msra.mxu0 0.0
  %1889 = vmatprep.subr.mxu0 0.0
  %1890 = vmatpush1.msra.mxu0 0.0
  %1891 = vmatprep.subr.mxu0 0.0
  %1892 = vmatpush1.msra.mxu0 0.0
  %1893 = vmatprep.subr.mxu0 0.0
  %1894 = vmatpush1.msra.mxu0 0.0
  %1895 = vmatprep.subr.mxu0 0.0
  %1896 = vmatpush1.msra.mxu0 0.0
  %1897 = vmatprep.subr.mxu0 0.0
  %1898 = vmatpush1.msra.mxu0 0.0
  %1899 = vmatprep.subr.mxu0 0.0
  %1900 = vmatpush1.msra.mxu0 0.0
  %1901 = vmatprep.subr.mxu0 0.0
  %1902 = vmatpush1.msra.mxu0 0.0
  %1903 = vmatprep.subr.mxu0 0.0
  %1904 = vmatpush1.msra.mxu0 0.0
  %1905 = vmatprep.subr.mxu0 0.0
  %1906 = vmatpush1.msra.mxu0 0.0
  %1907 = vmatprep.subr.mxu0 0.0
  %1908 = vmatpush1.msra.mxu0 0.0
  %1909 = vmatprep.mubr.f32.mxu0 0.0
  %1910 = vmatmul.mubr.f32.gmra.mrb[0].mxu0 %v1843
  %v1911 = vpop.f32.mrb[0].mxu0
  %v1912 = vadd.f32 0.0, %v1911
  %v1913 = vpop.f32.mrb[0].mxu0
  %1914 = vdwg.mxu0
  %v1916 = vrot.slane %v1912, 6
  %v1918 = vadd.f32 %v1841, %v1916
  %v1919 = vxor.u32 %v1918, 2147483648
  %v1920 = vmul.f32 %v1919, 1.442695
  %v1921 = vpow.pop %v1920
  %v1922 = vadd.f32 %v1921, 1.0
  %v1923 = vrcp.pop %v1922
  %v1924 = vmul.f32 1.0, %v1923
  %v1925 = vtanh.pop %v1918
  %v1927 = vrot.slane %v1836, 6
  %1928 = vrot.lane.b32.xlu0 %v1927, 32
  %v1929 = vpop.permute.xlu0 %1928
  %v1931 = vmul.f32 %v1924, %v1929
  %1933 = vrot.lane.b32.xlu0 %v1925, 64
  %v1934 = vpop.permute.xlu0 %1933
  %v1936 = vmul.f32 %v1924, %v1934
  %1938 = vrot.lane.b32.xlu0 %v1936, 32
  %v1939 = vpop.permute.xlu0 %1938
  %v1941 = vadd.f32 %v1931, %v1939
  %v1942 = vtanh.pop %v1941
  %1944 = vrot.lane.b32.xlu0 %v1942, 64
  %v1945 = vpop.permute.xlu0 %1944
  %v1947 = vmul.f32 %v1924, %v1945
  %1949 = vrot.lane.b32.xlu0 %v1947, 32
  %v1950 = vpop.permute.xlu0 %1949
  %v1952 = vrot.slane %v1831, 6
  %v1954 = vsel %vm678, %v1950, %v1952
  %1956 = vrot.lane.b32.xlu0 %v1941, 96
  %v1957 = vpop.permute.xlu0 %1956
  %v1960 = vsel %vm678, %v1957, %v1927
  %v1961 = vsel %vm678, %v1950, 0.0
  %1962 = vst.msk [vmem:[#allocation2] sm:$0xc] %vm693, %v1961
  %1963 = vst.msk [vmem:[#allocation2 + $0xa] sm:$0xc] %vm695, %v1961
  %v1965 = vrot.slane %v1954, 2
  %v1966 = vsel %vm154, %v1965, 0
  %1968 = vmatprep.subr.mxu0 0.0
  %1969 = vmatpush1.msra.mxu0 %v1724
  %1970 = vmatprep.subr.mxu0 0.0
  %1971 = vmatpush1.msra.mxu0 %v1725
  %1972 = vmatprep.subr.mxu0 0.0
  %1973 = vmatpush1.msra.mxu0 %v1726
  %1974 = vmatprep.subr.mxu0 0.0
  %1975 = vmatpush1.msra.mxu0 %v1727
  %1976 = vmatprep.subr.mxu0 0.0
  %1977 = vmatpush1.msra.mxu0 0.0
  %1978 = vmatprep.subr.mxu0 0.0
  %1979 = vmatpush1.msra.mxu0 0.0
  %1980 = vmatprep.subr.mxu0 0.0
  %1981 = vmatpush1.msra.mxu0 0.0
  %1982 = vmatprep.subr.mxu0 0.0
  %1983 = vmatpush1.msra.mxu0 0.0
  %1984 = vmatprep.subr.mxu0 0.0
  %1985 = vmatpush1.msra.mxu0 0.0
  %1986 = vmatprep.subr.mxu0 0.0
  %1987 = vmatpush1.msra.mxu0 0.0
  %1988 = vmatprep.subr.mxu0 0.0
  %1989 = vmatpush1.msra.mxu0 0.0
  %1990 = vmatprep.subr.mxu0 0.0
  %1991 = vmatpush1.msra.mxu0 0.0
  %1992 = vmatprep.subr.mxu0 0.0
  %1993 = vmatpush1.msra.mxu0 0.0
  %1994 = vmatprep.subr.mxu0 0.0
  %1995 = vmatpush1.msra.mxu0 0.0
  %1996 = vmatprep.subr.mxu0 0.0
  %1997 = vmatpush1.msra.mxu0 0.0
  %1998 = vmatprep.subr.mxu0 0.0
  %1999 = vmatpush1.msra.mxu0 0.0
  %2000 = vmatprep.subr.mxu0 0.0
  %2001 = vmatpush1.msra.mxu0 0.0
  %2002 = vmatprep.subr.mxu0 0.0
  %2003 = vmatpush1.msra.mxu0 0.0
  %2004 = vmatprep.subr.mxu0 0.0
  %2005 = vmatpush1.msra.mxu0 0.0
  %2006 = vmatprep.subr.mxu0 0.0
  %2007 = vmatpush1.msra.mxu0 0.0
  %2008 = vmatprep.subr.mxu0 0.0
  %2009 = vmatpush1.msra.mxu0 0.0
  %2010 = vmatprep.subr.mxu0 0.0
  %2011 = vmatpush1.msra.mxu0 0.0
  %2012 = vmatprep.subr.mxu0 0.0
  %2013 = vmatpush1.msra.mxu0 0.0
  %2014 = vmatprep.subr.mxu0 0.0
  %2015 = vmatpush1.msra.mxu0 0.0
  %2016 = vmatprep.subr.mxu0 0.0
  %2017 = vmatpush1.msra.mxu0 0.0
  %2018 = vmatprep.subr.mxu0 0.0
  %2019 = vmatpush1.msra.mxu0 0.0
  %2020 = vmatprep.subr.mxu0 0.0
  %2021 = vmatpush1.msra.mxu0 0.0
  %2022 = vmatprep.subr.mxu0 0.0
  %2023 = vmatpush1.msra.mxu0 0.0
  %2024 = vmatprep.subr.mxu0 0.0
  %2025 = vmatpush1.msra.mxu0 0.0
  %2026 = vmatprep.subr.mxu0 0.0
  %2027 = vmatpush1.msra.mxu0 0.0
  %2028 = vmatprep.subr.mxu0 0.0
  %2029 = vmatpush1.msra.mxu0 0.0
  %2030 = vmatprep.subr.mxu0 0.0
  %2031 = vmatpush1.msra.mxu0 0.0
  %2032 = vmatprep.mubr.f32.mxu0 0.0
  %2033 = vmatmul.mubr.f32.gmra.mrb[0].mxu0 %v1966
  %v2034 = vpop.f32.mrb[0].mxu0
  %v2035 = vadd.f32 0.0, %v2034
  %v2036 = vpop.f32.mrb[0].mxu0
  %2037 = vdwg.mxu0
  %v2039 = vrot.slane %v2035, 4
  %v2041 = vadd.f32 %v1731, %v2039
  %v2042 = vxor.u32 %v2041, 2147483648
  %v2043 = vmul.f32 %v2042, 1.442695
  %v2044 = vpow.pop %v2043
  %v2045 = vadd.f32 %v2044, 1.0
  %v2046 = vrcp.pop %v2045
  %v2047 = vmul.f32 1.0, %v2046
  %v2048 = vtanh.pop %v2041
  %v2050 = vrot.slane %v1960, 6
  %2051 = vrot.lane.b32.xlu0 %v2050, 32
  %v2052 = vpop.permute.xlu0 %2051
  %v2054 = vmul.f32 %v2047, %v2052
  %2056 = vrot.lane.b32.xlu0 %v2048, 64
  %v2057 = vpop.permute.xlu0 %2056
  %v2059 = vmul.f32 %v2047, %v2057
  %2061 = vrot.lane.b32.xlu0 %v2059, 32
  %v2062 = vpop.permute.xlu0 %2061
  %v2064 = vadd.f32 %v2054, %v2062
  %v2065 = vtanh.pop %v2064
  %2067 = vrot.lane.b32.xlu0 %v2065, 64
  %v2068 = vpop.permute.xlu0 %2067
  %v2070 = vmul.f32 %v2047, %v2068
  %2072 = vrot.lane.b32.xlu0 %v2070, 32
  %v2073 = vpop.permute.xlu0 %2072
  %v2075 = vrot.slane %v1954, 6
  %v2077 = vsel %vm551, %v2073, %v2075
  %2079 = vrot.lane.b32.xlu0 %v2064, 96
  %v2080 = vpop.permute.xlu0 %2079
  %v2083 = vsel %vm551, %v2080, %v2050
  %v2084 = vsel %vm551, %v2073, 0.0
  %2085 = vst.msk [vmem:[#allocation2] sm:$0x30] %vm818, %v2084
  %2086 = vst.msk [vmem:[#allocation2 + $0x6] sm:$0x30] %vm820, %v2084
  %v2088 = vrot.slane %v2077, 4
  %v2089 = vsel %vm154, %v2088, 0
  %2091 = vmatprep.subr.mxu0 0.0
  %2092 = vmatpush1.msra.mxu0 %v1724
  %2093 = vmatprep.subr.mxu0 0.0
  %2094 = vmatpush1.msra.mxu0 %v1725
  %2095 = vmatprep.subr.mxu0 0.0
  %2096 = vmatpush1.msra.mxu0 %v1726
  %2097 = vmatprep.subr.mxu0 0.0
  %2098 = vmatpush1.msra.mxu0 %v1727
  %2099 = vmatprep.subr.mxu0 0.0
  %2100 = vmatpush1.msra.mxu0 0.0
  %2101 = vmatprep.subr.mxu0 0.0
  %2102 = vmatpush1.msra.mxu0 0.0
  %2103 = vmatprep.subr.mxu0 0.0
  %2104 = vmatpush1.msra.mxu0 0.0
  %2105 = vmatprep.subr.mxu0 0.0
  %2106 = vmatpush1.msra.mxu0 0.0
  %2107 = vmatprep.subr.mxu0 0.0
  %2108 = vmatpush1.msra.mxu0 0.0
  %2109 = vmatprep.subr.mxu0 0.0
  %2110 = vmatpush1.msra.mxu0 0.0
  %2111 = vmatprep.subr.mxu0 0.0
  %2112 = vmatpush1.msra.mxu0 0.0
  %2113 = vmatprep.subr.mxu0 0.0
  %2114 = vmatpush1.msra.mxu0 0.0
  %2115 = vmatprep.subr.mxu0 0.0
  %2116 = vmatpush1.msra.mxu0 0.0
  %2117 = vmatprep.subr.mxu0 0.0
  %2118 = vmatpush1.msra.mxu0 0.0
  %2119 = vmatprep.subr.mxu0 0.0
  %2120 = vmatpush1.msra.mxu0 0.0
  %2121 = vmatprep.subr.mxu0 0.0
  %2122 = vmatpush1.msra.mxu0 0.0
  %2123 = vmatprep.subr.mxu0 0.0
  %2124 = vmatpush1.msra.mxu0 0.0
  %2125 = vmatprep.subr.mxu0 0.0
  %2126 = vmatpush1.msra.mxu0 0.0
  %2127 = vmatprep.subr.mxu0 0.0
  %2128 = vmatpush1.msra.mxu0 0.0
  %2129 = vmatprep.subr.mxu0 0.0
  %2130 = vmatpush1.msra.mxu0 0.0
  %2131 = vmatprep.subr.mxu0 0.0
  %2132 = vmatpush1.msra.mxu0 0.0
  %2133 = vmatprep.subr.mxu0 0.0
  %2134 = vmatpush1.msra.mxu0 0.0
  %2135 = vmatprep.subr.mxu0 0.0
  %2136 = vmatpush1.msra.mxu0 0.0
  %2137 = vmatprep.subr.mxu0 0.0
  %2138 = vmatpush1.msra.mxu0 0.0
  %2139 = vmatprep.subr.mxu0 0.0
  %2140 = vmatpush1.msra.mxu0 0.0
  %2141 = vmatprep.subr.mxu0 0.0
  %2142 = vmatpush1.msra.mxu0 0.0
  %2143 = vmatprep.subr.mxu0 0.0
  %2144 = vmatpush1.msra.mxu0 0.0
  %2145 = vmatprep.subr.mxu0 0.0
  %2146 = vmatpush1.msra.mxu0 0.0
  %2147 = vmatprep.subr.mxu0 0.0
  %2148 = vmatpush1.msra.mxu0 0.0
  %2149 = vmatprep.subr.mxu0 0.0
  %2150 = vmatpush1.msra.mxu0 0.0
  %2151 = vmatprep.subr.mxu0 0.0
  %2152 = vmatpush1.msra.mxu0 0.0
  %2153 = vmatprep.subr.mxu0 0.0
  %2154 = vmatpush1.msra.mxu0 0.0
  %2155 = vmatprep.mubr.f32.mxu0 0.0
  %2156 = vmatmul.mubr.f32.gmra.mrb[0].mxu0 %v2089
  %v2157 = vpop.f32.mrb[0].mxu0
  %v2158 = vadd.f32 0.0, %v2157
  %v2159 = vpop.f32.mrb[0].mxu0
  %2160 = vdwg.mxu0
  %v2162 = vrot.slane %v2158, 2
  %v2164 = vadd.f32 %v1841, %v2162
  %v2165 = vxor.u32 %v2164, 2147483648
  %v2166 = vmul.f32 %v2165, 1.442695
  %v2167 = vpow.pop %v2166
  %v2168 = vadd.f32 %v2167, 1.0
  %v2169 = vrcp.pop %v2168
  %v2170 = vmul.f32 1.0, %v2169
  %v2171 = vtanh.pop %v2164
  %v2173 = vrot.slane %v2083, 6
  %2174 = vrot.lane.b32.xlu0 %v2173, 32
  %v2175 = vpop.permute.xlu0 %2174
  %v2177 = vmul.f32 %v2170, %v2175
  %2179 = vrot.lane.b32.xlu0 %v2171, 64
  %v2180 = vpop.permute.xlu0 %2179
  %v2182 = vmul.f32 %v2170, %v2180
  %2184 = vrot.lane.b32.xlu0 %v2182, 32
  %v2185 = vpop.permute.xlu0 %2184
  %v2187 = vadd.f32 %v2177, %v2185
  %v2188 = vtanh.pop %v2187
  %2190 = vrot.lane.b32.xlu0 %v2188, 64
  %v2191 = vpop.permute.xlu0 %2190
  %v2193 = vmul.f32 %v2170, %v2191
  %2195 = vrot.lane.b32.xlu0 %v2193, 32
  %v2196 = vpop.permute.xlu0 %2195
  %v2198 = vrot.slane %v2077, 6
  %v2200 = vsel %vm678, %v2196, %v2198
  %2202 = vrot.lane.b32.xlu0 %v2187, 96
  %v2203 = vpop.permute.xlu0 %2202
  %v2206 = vsel %vm678, %v2203, %v2173
  %v2207 = vsel %vm678, %v2196, 0.0
  %2208 = vst.msk [vmem:[#allocation2] sm:$0xc0] %vm943, %v2207
  %2209 = vst.msk [vmem:[#allocation2 + $0x2] sm:$0xc0] %vm945, %v2207
  %v2211 = vrot.slane %v1532, 6
  %v2213 = vsel %vm429, %v1537, %v2211
  %v2215 = vrot.slane %v2200, 6
  %v2216 = vsel %vm154, %v2215, 0
  %2218 = vmatprep.subr.mxu0 0.0
  %2219 = vmatpush1.msra.mxu0 %v1724
  %2220 = vmatprep.subr.mxu0 0.0
  %2221 = vmatpush1.msra.mxu0 %v1725
  %2222 = vmatprep.subr.mxu0 0.0
  %2223 = vmatpush1.msra.mxu0 %v1726
  %2224 = vmatprep.subr.mxu0 0.0
  %2225 = vmatpush1.msra.mxu0 %v1727
  %2226 = vmatprep.subr.mxu0 0.0
  %2227 = vmatpush1.msra.mxu0 0.0
  %2228 = vmatprep.subr.mxu0 0.0
  %2229 = vmatpush1.msra.mxu0 0.0
  %2230 = vmatprep.subr.mxu0 0.0
  %2231 = vmatpush1.msra.mxu0 0.0
  %2232 = vmatprep.subr.mxu0 0.0
  %2233 = vmatpush1.msra.mxu0 0.0
  %2234 = vmatprep.subr.mxu0 0.0
  %2235 = vmatpush1.msra.mxu0 0.0
  %2236 = vmatprep.subr.mxu0 0.0
  %2237 = vmatpush1.msra.mxu0 0.0
  %2238 = vmatprep.subr.mxu0 0.0
  %2239 = vmatpush1.msra.mxu0 0.0
  %2240 = vmatprep.subr.mxu0 0.0
  %2241 = vmatpush1.msra.mxu0 0.0
  %2242 = vmatprep.subr.mxu0 0.0
  %2243 = vmatpush1.msra.mxu0 0.0
  %2244 = vmatprep.subr.mxu0 0.0
  %2245 = vmatpush1.msra.mxu0 0.0
  %2246 = vmatprep.subr.mxu0 0.0
  %2247 = vmatpush1.msra.mxu0 0.0
  %2248 = vmatprep.subr.mxu0 0.0
  %2249 = vmatpush1.msra.mxu0 0.0
  %2250 = vmatprep.subr.mxu0 0.0
  %2251 = vmatpush1.msra.mxu0 0.0
  %2252 = vmatprep.subr.mxu0 0.0
  %2253 = vmatpush1.msra.mxu0 0.0
  %2254 = vmatprep.subr.mxu0 0.0
  %2255 = vmatpush1.msra.mxu0 0.0
  %2256 = vmatprep.subr.mxu0 0.0
  %2257 = vmatpush1.msra.mxu0 0.0
  %2258 = vmatprep.subr.mxu0 0.0
  %2259 = vmatpush1.msra.mxu0 0.0
  %2260 = vmatprep.subr.mxu0 0.0
  %2261 = vmatpush1.msra.mxu0 0.0
  %2262 = vmatprep.subr.mxu0 0.0
  %2263 = vmatpush1.msra.mxu0 0.0
  %2264 = vmatprep.subr.mxu0 0.0
  %2265 = vmatpush1.msra.mxu0 0.0
  %2266 = vmatprep.subr.mxu0 0.0
  %2267 = vmatpush1.msra.mxu0 0.0
  %2268 = vmatprep.subr.mxu0 0.0
  %2269 = vmatpush1.msra.mxu0 0.0
  %2270 = vmatprep.subr.mxu0 0.0
  %2271 = vmatpush1.msra.mxu0 0.0
  %2272 = vmatprep.subr.mxu0 0.0
  %2273 = vmatpush1.msra.mxu0 0.0
  %2274 = vmatprep.subr.mxu0 0.0
  %2275 = vmatpush1.msra.mxu0 0.0
  %2276 = vmatprep.subr.mxu0 0.0
  %2277 = vmatpush1.msra.mxu0 0.0
  %2278 = vmatprep.subr.mxu0 0.0
  %2279 = vmatpush1.msra.mxu0 0.0
  %2280 = vmatprep.subr.mxu0 0.0
  %2281 = vmatpush1.msra.mxu0 0.0
  %2282 = vmatprep.mubr.f32.mxu0 0.0
  %2283 = vmatmul.mubr.f32.gmra.mrb[0].mxu0 %v2216
  %v2284 = vpop.f32.mrb[0].mxu0
  %v2285 = vadd.f32 0.0, %v2284
  %v2286 = vpop.f32.mrb[0].mxu0
  %2287 = vdwg.mxu0
  %v2288 = vadd.f32 %v2213, %v2285
  %v2289 = vxor.u32 %v2288, 2147483648
  %v2290 = vmul.f32 %v2289, 1.442695
  %v2291 = vpow.pop %v2290
  %v2292 = vadd.f32 %v2291, 1.0
  %v2293 = vrcp.pop %v2292
  %v2294 = vmul.f32 1.0, %v2293
  %v2295 = vtanh.pop %v2288
  %v2297 = vrot.slane %v2206, 6
  %2298 = vrot.lane.b32.xlu0 %v2297, 32
  %v2299 = vpop.permute.xlu0 %2298
  %v2301 = vmul.f32 %v2294, %v2299
  %2303 = vrot.lane.b32.xlu0 %v2295, 64
  %v2304 = vpop.permute.xlu0 %2303
  %v2306 = vmul.f32 %v2294, %v2304
  %2308 = vrot.lane.b32.xlu0 %v2306, 32
  %v2309 = vpop.permute.xlu0 %2308
  %v2311 = vadd.f32 %v2301, %v2309
  %v2312 = vtanh.pop %v2311
  %2314 = vrot.lane.b32.xlu0 %v2312, 64
  %v2315 = vpop.permute.xlu0 %2314
  %v2317 = vmul.f32 %v2294, %v2315
  %2319 = vrot.lane.b32.xlu0 %v2317, 32
  %v2320 = vpop.permute.xlu0 %2319
  %v2323 = vsel %vm1058, %v2320, %v2215
  %2325 = vrot.lane.b32.xlu0 %v2311, 96
  %v2326 = vpop.permute.xlu0 %2325
  %v2329 = vsel %vm1058, %v2326, %v2297
  %v2330 = vsel %vm1058, %v2320, 0.0
  %2331 = vst.msk [vmem:[#allocation2 + $0x8] sm:$0x3] %vm562, %v2330
  %2332 = vst.msk [vmem:[#allocation2 + $0x6] sm:$0x3] %vm564, %v2330
  %v2333 = vrot.slane %v1532, 2
  %v2335 = vsel %vm429, %v1537, %v2333
  %v2337 = vsel %vm154, %v2323, 0
  %2339 = vmatprep.subr.mxu0 0.0
  %2340 = vmatpush1.msra.mxu0 %v1724
  %2341 = vmatprep.subr.mxu0 0.0
  %2342 = vmatpush1.msra.mxu0 %v1725
  %2343 = vmatprep.subr.mxu0 0.0
  %2344 = vmatpush1.msra.mxu0 %v1726
  %2345 = vmatprep.subr.mxu0 0.0
  %2346 = vmatpush1.msra.mxu0 %v1727
  %2347 = vmatprep.subr.mxu0 0.0
  %2348 = vmatpush1.msra.mxu0 0.0
  %2349 = vmatprep.subr.mxu0 0.0
  %2350 = vmatpush1.msra.mxu0 0.0
  %2351 = vmatprep.subr.mxu0 0.0
  %2352 = vmatpush1.msra.mxu0 0.0
  %2353 = vmatprep.subr.mxu0 0.0
  %2354 = vmatpush1.msra.mxu0 0.0
  %2355 = vmatprep.subr.mxu0 0.0
  %2356 = vmatpush1.msra.mxu0 0.0
  %2357 = vmatprep.subr.mxu0 0.0
  %2358 = vmatpush1.msra.mxu0 0.0
  %2359 = vmatprep.subr.mxu0 0.0
  %2360 = vmatpush1.msra.mxu0 0.0
  %2361 = vmatprep.subr.mxu0 0.0
  %2362 = vmatpush1.msra.mxu0 0.0
  %2363 = vmatprep.subr.mxu0 0.0
  %2364 = vmatpush1.msra.mxu0 0.0
  %2365 = vmatprep.subr.mxu0 0.0
  %2366 = vmatpush1.msra.mxu0 0.0
  %2367 = vmatprep.subr.mxu0 0.0
  %2368 = vmatpush1.msra.mxu0 0.0
  %2369 = vmatprep.subr.mxu0 0.0
  %2370 = vmatpush1.msra.mxu0 0.0
  %2371 = vmatprep.subr.mxu0 0.0
  %2372 = vmatpush1.msra.mxu0 0.0
  %2373 = vmatprep.subr.mxu0 0.0
  %2374 = vmatpush1.msra.mxu0 0.0
  %2375 = vmatprep.subr.mxu0 0.0
  %2376 = vmatpush1.msra.mxu0 0.0
  %2377 = vmatprep.subr.mxu0 0.0
  %2378 = vmatpush1.msra.mxu0 0.0
  %2379 = vmatprep.subr.mxu0 0.0
  %2380 = vmatpush1.msra.mxu0 0.0
  %2381 = vmatprep.subr.mxu0 0.0
  %2382 = vmatpush1.msra.mxu0 0.0
  %2383 = vmatprep.subr.mxu0 0.0
  %2384 = vmatpush1.msra.mxu0 0.0
  %2385 = vmatprep.subr.mxu0 0.0
  %2386 = vmatpush1.msra.mxu0 0.0
  %2387 = vmatprep.subr.mxu0 0.0
  %2388 = vmatpush1.msra.mxu0 0.0
  %2389 = vmatprep.subr.mxu0 0.0
  %2390 = vmatpush1.msra.mxu0 0.0
  %2391 = vmatprep.subr.mxu0 0.0
  %2392 = vmatpush1.msra.mxu0 0.0
  %2393 = vmatprep.subr.mxu0 0.0
  %2394 = vmatpush1.msra.mxu0 0.0
  %2395 = vmatprep.subr.mxu0 0.0
  %2396 = vmatpush1.msra.mxu0 0.0
  %2397 = vmatprep.subr.mxu0 0.0
  %2398 = vmatpush1.msra.mxu0 0.0
  %2399 = vmatprep.subr.mxu0 0.0
  %2400 = vmatpush1.msra.mxu0 0.0
  %2401 = vmatprep.subr.mxu0 0.0
  %2402 = vmatpush1.msra.mxu0 0.0
  %2403 = vmatprep.mubr.f32.mxu0 0.0
  %2404 = vmatmul.mubr.f32.gmra.mrb[0].mxu0 %v2337
  %v2405 = vpop.f32.mrb[0].mxu0
  %v2406 = vadd.f32 0.0, %v2405
  %v2407 = vpop.f32.mrb[0].mxu0
  %2408 = vdwg.mxu0
  %v2410 = vrot.slane %v2406, 6
  %v2412 = vadd.f32 %v2335, %v2410
  %v2413 = vxor.u32 %v2412, 2147483648
  %v2414 = vmul.f32 %v2413, 1.442695
  %v2415 = vpow.pop %v2414
  %v2416 = vadd.f32 %v2415, 1.0
  %v2417 = vrcp.pop %v2416
  %v2418 = vmul.f32 1.0, %v2417
  %v2419 = vtanh.pop %v2412
  %v2421 = vrot.slane %v2329, 6
  %2422 = vrot.lane.b32.xlu0 %v2421, 32
  %v2423 = vpop.permute.xlu0 %2422
  %v2425 = vmul.f32 %v2418, %v2423
  %2427 = vrot.lane.b32.xlu0 %v2419, 64
  %v2428 = vpop.permute.xlu0 %2427
  %v2430 = vmul.f32 %v2418, %v2428
  %2432 = vrot.lane.b32.xlu0 %v2430, 32
  %v2433 = vpop.permute.xlu0 %2432
  %v2435 = vadd.f32 %v2425, %v2433
  %v2436 = vtanh.pop %v2435
  %2438 = vrot.lane.b32.xlu0 %v2436, 64
  %v2439 = vpop.permute.xlu0 %2438
  %v2441 = vmul.f32 %v2418, %v2439
  %2443 = vrot.lane.b32.xlu0 %v2441, 32
  %v2444 = vpop.permute.xlu0 %2443
  %v2446 = vrot.slane %v2323, 6
  %v2448 = vsel %vm1186, %v2444, %v2446
  %2450 = vrot.lane.b32.xlu0 %v2435, 96
  %v2451 = vpop.permute.xlu0 %2450
  %v2454 = vsel %vm1186, %v2451, %v2421
  %v2455 = vsel %vm1186, %v2444, 0.0
  %2456 = vst.msk [vmem:[#allocation2 + $0x8] sm:$0xc] %vm693, %v2455
  %2457 = vst.msk [vmem:[#allocation2 + $0x2] sm:$0xc] %vm695, %v2455
  %v2459 = vrot.slane %v2448, 2
  %v2460 = vsel %vm154, %v2459, 0
  %2462 = vmatprep.subr.mxu0 0.0
  %2463 = vmatpush1.msra.mxu0 %v1724
  %2464 = vmatprep.subr.mxu0 0.0
  %2465 = vmatpush1.msra.mxu0 %v1725
  %2466 = vmatprep.subr.mxu0 0.0
  %2467 = vmatpush1.msra.mxu0 %v1726
  %2468 = vmatprep.subr.mxu0 0.0
  %2469 = vmatpush1.msra.mxu0 %v1727
  %2470 = vmatprep.subr.mxu0 0.0
  %2471 = vmatpush1.msra.mxu0 0.0
  %2472 = vmatprep.subr.mxu0 0.0
  %2473 = vmatpush1.msra.mxu0 0.0
  %2474 = vmatprep.subr.mxu0 0.0
  %2475 = vmatpush1.msra.mxu0 0.0
  %2476 = vmatprep.subr.mxu0 0.0
  %2477 = vmatpush1.msra.mxu0 0.0
  %2478 = vmatprep.subr.mxu0 0.0
  %2479 = vmatpush1.msra.mxu0 0.0
  %2480 = vmatprep.subr.mxu0 0.0
  %2481 = vmatpush1.msra.mxu0 0.0
  %2482 = vmatprep.subr.mxu0 0.0
  %2483 = vmatpush1.msra.mxu0 0.0
  %2484 = vmatprep.subr.mxu0 0.0
  %2485 = vmatpush1.msra.mxu0 0.0
  %2486 = vmatprep.subr.mxu0 0.0
  %2487 = vmatpush1.msra.mxu0 0.0
  %2488 = vmatprep.subr.mxu0 0.0
  %2489 = vmatpush1.msra.mxu0 0.0
  %2490 = vmatprep.subr.mxu0 0.0
  %2491 = vmatpush1.msra.mxu0 0.0
  %2492 = vmatprep.subr.mxu0 0.0
  %2493 = vmatpush1.msra.mxu0 0.0
  %2494 = vmatprep.subr.mxu0 0.0
  %2495 = vmatpush1.msra.mxu0 0.0
  %2496 = vmatprep.subr.mxu0 0.0
  %2497 = vmatpush1.msra.mxu0 0.0
  %2498 = vmatprep.subr.mxu0 0.0
  %2499 = vmatpush1.msra.mxu0 0.0
  %2500 = vmatprep.subr.mxu0 0.0
  %2501 = vmatpush1.msra.mxu0 0.0
  %2502 = vmatprep.subr.mxu0 0.0
  %2503 = vmatpush1.msra.mxu0 0.0
  %2504 = vmatprep.subr.mxu0 0.0
  %2505 = vmatpush1.msra.mxu0 0.0
  %2506 = vmatprep.subr.mxu0 0.0
  %2507 = vmatpush1.msra.mxu0 0.0
  %2508 = vmatprep.subr.mxu0 0.0
  %2509 = vmatpush1.msra.mxu0 0.0
  %2510 = vmatprep.subr.mxu0 0.0
  %2511 = vmatpush1.msra.mxu0 0.0
  %2512 = vmatprep.subr.mxu0 0.0
  %2513 = vmatpush1.msra.mxu0 0.0
  %2514 = vmatprep.subr.mxu0 0.0
  %2515 = vmatpush1.msra.mxu0 0.0
  %2516 = vmatprep.subr.mxu0 0.0
  %2517 = vmatpush1.msra.mxu0 0.0
  %2518 = vmatprep.subr.mxu0 0.0
  %2519 = vmatpush1.msra.mxu0 0.0
  %2520 = vmatprep.subr.mxu0 0.0
  %2521 = vmatpush1.msra.mxu0 0.0
  %2522 = vmatprep.subr.mxu0 0.0
  %2523 = vmatpush1.msra.mxu0 0.0
  %2524 = vmatprep.subr.mxu0 0.0
  %2525 = vmatpush1.msra.mxu0 0.0
  %2526 = vmatprep.mubr.f32.mxu0 0.0
  %2527 = vmatmul.mubr.f32.gmra.mrb[0].mxu0 %v2460
  %v2528 = vpop.f32.mrb[0].mxu0
  %v2529 = vadd.f32 0.0, %v2528
  %v2530 = vpop.f32.mrb[0].mxu0
  %2531 = vdwg.mxu0
  %v2533 = vrot.slane %v2529, 4
  %v2535 = vadd.f32 %v2213, %v2533
  %v2536 = vxor.u32 %v2535, 2147483648
  %v2537 = vmul.f32 %v2536, 1.442695
  %v2538 = vpow.pop %v2537
  %v2539 = vadd.f32 %v2538, 1.0
  %v2540 = vrcp.pop %v2539
  %v2541 = vmul.f32 1.0, %v2540
  %v2542 = vtanh.pop %v2535
  %v2544 = vrot.slane %v2454, 6
  %2545 = vrot.lane.b32.xlu0 %v2544, 32
  %v2546 = vpop.permute.xlu0 %2545
  %v2548 = vmul.f32 %v2541, %v2546
  %2550 = vrot.lane.b32.xlu0 %v2542, 64
  %v2551 = vpop.permute.xlu0 %2550
  %v2553 = vmul.f32 %v2541, %v2551
  %2555 = vrot.lane.b32.xlu0 %v2553, 32
  %v2556 = vpop.permute.xlu0 %2555
  %v2558 = vadd.f32 %v2548, %v2556
  %v2559 = vtanh.pop %v2558
  %2561 = vrot.lane.b32.xlu0 %v2559, 64
  %v2562 = vpop.permute.xlu0 %2561
  %v2564 = vmul.f32 %v2541, %v2562
  %2566 = vrot.lane.b32.xlu0 %v2564, 32
  %v2567 = vpop.permute.xlu0 %2566
  %v2569 = vrot.slane %v2448, 6
  %v2571 = vsel %vm1058, %v2567, %v2569
  %2573 = vrot.lane.b32.xlu0 %v2558, 96
  %v2574 = vpop.permute.xlu0 %2573
  %v2577 = vsel %vm1058, %v2574, %v2544
  %v2578 = vsel %vm1058, %v2567, 0.0
  %2579 = vst.msk [vmem:[#allocation2 + $0x8] sm:$0x30] %vm818, %v2578
  %2580 = vst.msk [vmem:[#allocation2 - $0x2] sm:$0x30] %vm820, %v2578
  %v2582 = vrot.slane %v2571, 4
  %v2583 = vsel %vm154, %v2582, 0
  %2585 = vmatprep.subr.mxu0 0.0
  %2586 = vmatpush1.msra.mxu0 %v1724
  %2587 = vmatprep.subr.mxu0 0.0
  %2588 = vmatpush1.msra.mxu0 %v1725
  %2589 = vmatprep.subr.mxu0 0.0
  %2590 = vmatpush1.msra.mxu0 %v1726
  %2591 = vmatprep.subr.mxu0 0.0
  %2592 = vmatpush1.msra.mxu0 %v1727
  %2593 = vmatprep.subr.mxu0 0.0
  %2594 = vmatpush1.msra.mxu0 0.0
  %2595 = vmatprep.subr.mxu0 0.0
  %2596 = vmatpush1.msra.mxu0 0.0
  %2597 = vmatprep.subr.mxu0 0.0
  %2598 = vmatpush1.msra.mxu0 0.0
  %2599 = vmatprep.subr.mxu0 0.0
  %2600 = vmatpush1.msra.mxu0 0.0
  %2601 = vmatprep.subr.mxu0 0.0
  %2602 = vmatpush1.msra.mxu0 0.0
  %2603 = vmatprep.subr.mxu0 0.0
  %2604 = vmatpush1.msra.mxu0 0.0
  %2605 = vmatprep.subr.mxu0 0.0
  %2606 = vmatpush1.msra.mxu0 0.0
  %2607 = vmatprep.subr.mxu0 0.0
  %2608 = vmatpush1.msra.mxu0 0.0
  %2609 = vmatprep.subr.mxu0 0.0
  %2610 = vmatpush1.msra.mxu0 0.0
  %2611 = vmatprep.subr.mxu0 0.0
  %2612 = vmatpush1.msra.mxu0 0.0
  %2613 = vmatprep.subr.mxu0 0.0
  %2614 = vmatpush1.msra.mxu0 0.0
  %2615 = vmatprep.subr.mxu0 0.0
  %2616 = vmatpush1.msra.mxu0 0.0
  %2617 = vmatprep.subr.mxu0 0.0
  %2618 = vmatpush1.msra.mxu0 0.0
  %2619 = vmatprep.subr.mxu0 0.0
  %2620 = vmatpush1.msra.mxu0 0.0
  %2621 = vmatprep.subr.mxu0 0.0
  %2622 = vmatpush1.msra.mxu0 0.0
  %2623 = vmatprep.subr.mxu0 0.0
  %2624 = vmatpush1.msra.mxu0 0.0
  %2625 = vmatprep.subr.mxu0 0.0
  %2626 = vmatpush1.msra.mxu0 0.0
  %2627 = vmatprep.subr.mxu0 0.0
  %2628 = vmatpush1.msra.mxu0 0.0
  %2629 = vmatprep.subr.mxu0 0.0
  %2630 = vmatpush1.msra.mxu0 0.0
  %2631 = vmatprep.subr.mxu0 0.0
  %2632 = vmatpush1.msra.mxu0 0.0
  %2633 = vmatprep.subr.mxu0 0.0
  %2634 = vmatpush1.msra.mxu0 0.0
  %2635 = vmatprep.subr.mxu0 0.0
  %2636 = vmatpush1.msra.mxu0 0.0
  %2637 = vmatprep.subr.mxu0 0.0
  %2638 = vmatpush1.msra.mxu0 0.0
  %2639 = vmatprep.subr.mxu0 0.0
  %2640 = vmatpush1.msra.mxu0 0.0
  %2641 = vmatprep.subr.mxu0 0.0
  %2642 = vmatpush1.msra.mxu0 0.0
  %2643 = vmatprep.subr.mxu0 0.0
  %2644 = vmatpush1.msra.mxu0 0.0
  %2645 = vmatprep.subr.mxu0 0.0
  %2646 = vmatpush1.msra.mxu0 0.0
  %2647 = vmatprep.subr.mxu0 0.0
  %2648 = vmatpush1.msra.mxu0 0.0
  %2649 = vmatprep.mubr.f32.mxu0 0.0
  %2650 = vmatmul.mubr.f32.gmra.mrb[0].mxu0 %v2583
  %v2651 = vpop.f32.mrb[0].mxu0
  %v2652 = vadd.f32 0.0, %v2651
  %v2653 = vpop.f32.mrb[0].mxu0
  %2654 = vdwg.mxu0
  %v2656 = vrot.slane %v2652, 2
  %v2658 = vadd.f32 %v2335, %v2656
  %v2659 = vxor.u32 %v2658, 2147483648
  %v2660 = vmul.f32 %v2659, 1.442695
  %v2661 = vpow.pop %v2660
  %v2662 = vadd.f32 %v2661, 1.0
  %v2663 = vrcp.pop %v2662
  %v2664 = vmul.f32 1.0, %v2663
  %v2665 = vtanh.pop %v2658
  %v2667 = vrot.slane %v2577, 6
  %2668 = vrot.lane.b32.xlu0 %v2667, 32
  %v2669 = vpop.permute.xlu0 %2668
  %v2671 = vmul.f32 %v2664, %v2669
  %2673 = vrot.lane.b32.xlu0 %v2665, 64
  %v2674 = vpop.permute.xlu0 %2673
  %v2676 = vmul.f32 %v2664, %v2674
  %2678 = vrot.lane.b32.xlu0 %v2676, 32
  %v2679 = vpop.permute.xlu0 %2678
  %v2681 = vadd.f32 %v2671, %v2679
  %v2682 = vtanh.pop %v2681
  %2684 = vrot.lane.b32.xlu0 %v2682, 64
  %v2685 = vpop.permute.xlu0 %2684
  %v2687 = vmul.f32 %v2664, %v2685
  %2689 = vrot.lane.b32.xlu0 %v2687, 32
  %v2690 = vpop.permute.xlu0 %2689
  %v2692 = vsel %vm1186, %v2690, 0.0
  %2693 = vst.msk [vmem:[#allocation2 + $0x8] sm:$0xc0] %vm943, %v2692
  %2694 = vst.msk [vmem:[#allocation2 - $0x6] sm:$0xc0] %vm945, %v2692
  %v2695 = vld [vmem:[#allocation2] sm:$0xff]
  %v2696 = vld [vmem:[#allocation2 + $0x8] sm:$0xff]
  %v2697 = vmul.f32 %v1635, %v1716
  %v2698 = vmul.f32 %v1637, %v1721
  %v2699 = vadd.f32 %v2695, %v2697
  %v2700 = vadd.f32 %v2696, %v2698
  %v2701 = vmul.f32 %v2699, %v541
  %v2702 = vmul.f32 %v2700, %v546
  %v2703 = vmax.f32 %v2701, 0.0
  %v2704 = vmax.f32 %v2702, 0.0
  %v2705 = vld [vmem:[%s9] sm:$0xff]
  %v2706 = vld [vmem:[%s9 + $0x8] sm:$0xff]
  %vm2707 = vcmask 130048
  %v2709 = vsel %vm2707, %v2705, 0
  %v2712 = vsel %vm2707, %v2706, 0
  %2714 = vmatprep.subr.mxu0 0.0
  %2715 = vmatpush1.msra.mxu0 %v2703
  %2716 = vmatprep.subr.mxu0 0.0
  %2717 = vmatpush1.msra.mxu0 %v2704
  %2718 = vmatprep.subr.mxu0 0.0
  %2719 = vmatpush1.msra.mxu0 0.0
  %2720 = vmatprep.subr.mxu0 0.0
  %2721 = vmatpush1.msra.mxu0 0.0
  %2722 = vmatprep.subr.mxu0 0.0
  %2723 = vmatpush1.msra.mxu0 0.0
  %2724 = vmatprep.subr.mxu0 0.0
  %2725 = vmatpush1.msra.mxu0 0.0
  %2726 = vmatprep.subr.mxu0 0.0
  %2727 = vmatpush1.msra.mxu0 0.0
  %2728 = vmatprep.subr.mxu0 0.0
  %2729 = vmatpush1.msra.mxu0 0.0
  %2730 = vmatprep.subr.mxu0 0.0
  %2731 = vmatpush1.msra.mxu0 0.0
  %2732 = vmatprep.subr.mxu0 0.0
  %2733 = vmatpush1.msra.mxu0 0.0
  %2734 = vmatprep.subr.mxu0 0.0
  %2735 = vmatpush1.msra.mxu0 0.0
  %2736 = vmatprep.subr.mxu0 0.0
  %2737 = vmatpush1.msra.mxu0 0.0
  %2738 = vmatprep.subr.mxu0 0.0
  %2739 = vmatpush1.msra.mxu0 0.0
  %2740 = vmatprep.subr.mxu0 0.0
  %2741 = vmatpush1.msra.mxu0 0.0
  %2742 = vmatprep.subr.mxu0 0.0
  %2743 = vmatpush1.msra.mxu0 0.0
  %2744 = vmatprep.subr.mxu0 0.0
  %2745 = vmatpush1.msra.mxu0 0.0
  %2746 = vmatprep.subr.mxu0 0.0
  %2747 = vmatpush1.msra.mxu0 0.0
  %2748 = vmatprep.subr.mxu0 0.0
  %2749 = vmatpush1.msra.mxu0 0.0
  %2750 = vmatprep.subr.mxu0 0.0
  %2751 = vmatpush1.msra.mxu0 0.0
  %2752 = vmatprep.subr.mxu0 0.0
  %2753 = vmatpush1.msra.mxu0 0.0
  %2754 = vmatprep.subr.mxu0 0.0
  %2755 = vmatpush1.msra.mxu0 0.0
  %2756 = vmatprep.subr.mxu0 0.0
  %2757 = vmatpush1.msra.mxu0 0.0
  %2758 = vmatprep.subr.mxu0 0.0
  %2759 = vmatpush1.msra.mxu0 0.0
  %2760 = vmatprep.subr.mxu0 0.0
  %2761 = vmatpush1.msra.mxu0 0.0
  %2762 = vmatprep.subr.mxu0 0.0
  %2763 = vmatpush1.msra.mxu0 0.0
  %2764 = vmatprep.subr.mxu0 0.0
  %2765 = vmatpush1.msra.mxu0 0.0
  %2766 = vmatprep.subr.mxu0 0.0
  %2767 = vmatpush1.msra.mxu0 0.0
  %2768 = vmatprep.subr.mxu0 0.0
  %2769 = vmatpush1.msra.mxu0 0.0
  %2770 = vmatprep.subr.mxu0 0.0
  %2771 = vmatpush1.msra.mxu0 0.0
  %2772 = vmatprep.subr.mxu0 0.0
  %2773 = vmatpush1.msra.mxu0 0.0
  %2774 = vmatprep.subr.mxu0 0.0
  %2775 = vmatpush1.msra.mxu0 0.0
  %2776 = vmatprep.subr.mxu0 0.0
  %2777 = vmatpush1.msra.mxu0 0.0
  %2778 = vmatprep.mubr.f32.mxu0 0.0
  %2779 = vmatmul.mubr.f32.gmra.mrb[0].mxu0 %v2709
  %v2780 = vpop.f32.mrb[0].mxu0
  %v2781 = vadd.f32 0.0, %v2780
  %v2782 = vpop.f32.mrb[0].mxu0
  %2783 = vmatprep.mubr.f32.mxu0 0.0
  %2784 = vmatmul.mubr.f32.gmra.mrb[0].mxu0 %v2712
  %v2785 = vpop.f32.mrb[0].mxu0
  %v2786 = vadd.f32 0.0, %v2785
  %v2787 = vpop.f32.mrb[0].mxu0
  %2788 = vdwg.mxu0
  %v2789 = vld [vmem:[%s39] sm:$0xff]
  %v2790 = vld [vmem:[%s39 + $0x8] sm:$0xff]
  %v2791 = vld [vmem:[%s39 + $0x10] sm:$0xff]
  %v2792 = vld [vmem:[%s39 + $0x18] sm:$0xff]
  %v2793 = vld [vmem:[%s41] sm:$0x1]
  %v2795 = vlaneseq
  %v2796 = vshrl.u32 %v2795, 7
  %v2797 = vsub.s32 0, %v2796
  %v2798 = vrot.slane %v2793, %v2797
  %v2801 = vsel %vm154, %v2781, 0
  %v2804 = vsel %vm154, %v2786, 0
  %2806 = vmatprep.subr.mxu0 0.0
  %2807 = vmatpush1.msra.mxu0 %v2789
  %2808 = vmatprep.subr.mxu0 0.0
  %2809 = vmatpush1.msra.mxu0 %v2790
  %2810 = vmatprep.subr.mxu0 0.0
  %2811 = vmatpush1.msra.mxu0 %v2791
  %2812 = vmatprep.subr.mxu0 0.0
  %2813 = vmatpush1.msra.mxu0 %v2792
  %2814 = vmatprep.subr.mxu0 0.0
  %2815 = vmatpush1.msra.mxu0 0.0
  %2816 = vmatprep.subr.mxu0 0.0
  %2817 = vmatpush1.msra.mxu0 0.0
  %2818 = vmatprep.subr.mxu0 0.0
  %2819 = vmatpush1.msra.mxu0 0.0
  %2820 = vmatprep.subr.mxu0 0.0
  %2821 = vmatpush1.msra.mxu0 0.0
  %2822 = vmatprep.subr.mxu0 0.0
  %2823 = vmatpush1.msra.mxu0 0.0
  %2824 = vmatprep.subr.mxu0 0.0
  %2825 = vmatpush1.msra.mxu0 0.0
  %2826 = vmatprep.subr.mxu0 0.0
  %2827 = vmatpush1.msra.mxu0 0.0
  %2828 = vmatprep.subr.mxu0 0.0
  %2829 = vmatpush1.msra.mxu0 0.0
  %2830 = vmatprep.subr.mxu0 0.0
  %2831 = vmatpush1.msra.mxu0 0.0
  %2832 = vmatprep.subr.mxu0 0.0
  %2833 = vmatpush1.msra.mxu0 0.0
  %2834 = vmatprep.subr.mxu0 0.0
  %2835 = vmatpush1.msra.mxu0 0.0
  %2836 = vmatprep.subr.mxu0 0.0
  %2837 = vmatpush1.msra.mxu0 0.0
  %2838 = vmatprep.subr.mxu0 0.0
  %2839 = vmatpush1.msra.mxu0 0.0
  %2840 = vmatprep.subr.mxu0 0.0
  %2841 = vmatpush1.msra.mxu0 0.0
  %2842 = vmatprep.subr.mxu0 0.0
  %2843 = vmatpush1.msra.mxu0 0.0
  %2844 = vmatprep.subr.mxu0 0.0
  %2845 = vmatpush1.msra.mxu0 0.0
  %2846 = vmatprep.subr.mxu0 0.0
  %2847 = vmatpush1.msra.mxu0 0.0
  %2848 = vmatprep.subr.mxu0 0.0
  %2849 = vmatpush1.msra.mxu0 0.0
  %2850 = vmatprep.subr.mxu0 0.0
  %2851 = vmatpush1.msra.mxu0 0.0
  %2852 = vmatprep.subr.mxu0 0.0
  %2853 = vmatpush1.msra.mxu0 0.0
  %2854 = vmatprep.subr.mxu0 0.0
  %2855 = vmatpush1.msra.mxu0 0.0
  %2856 = vmatprep.subr.mxu0 0.0
  %2857 = vmatpush1.msra.mxu0 0.0
  %2858 = vmatprep.subr.mxu0 0.0
  %2859 = vmatpush1.msra.mxu0 0.0
  %2860 = vmatprep.subr.mxu0 0.0
  %2861 = vmatpush1.msra.mxu0 0.0
  %2862 = vmatprep.subr.mxu0 0.0
  %2863 = vmatpush1.msra.mxu0 0.0
  %2864 = vmatprep.subr.mxu0 0.0
  %2865 = vmatpush1.msra.mxu0 0.0
  %2866 = vmatprep.subr.mxu0 0.0
  %2867 = vmatpush1.msra.mxu0 0.0
  %2868 = vmatprep.subr.mxu0 0.0
  %2869 = vmatpush1.msra.mxu0 0.0
  %2870 = vmatprep.mubr.f32.mxu0 0.0
  %2871 = vmatmul.mubr.f32.gmra.mrb[0].mxu0 %v2801
  %v2872 = vpop.f32.mrb[0].mxu0
  %v2873 = vadd.f32 %v2798, %v2872
  %v2874 = vpop.f32.mrb[0].mxu0
  %2875 = vmatprep.mubr.f32.mxu0 0.0
  %2876 = vmatmul.mubr.f32.gmra.mrb[0].mxu0 %v2804
  %v2877 = vpop.f32.mrb[0].mxu0
  %v2878 = vadd.f32 %v2798, %v2877
  %v2879 = vpop.f32.mrb[0].mxu0
  %2880 = vdwg.mxu0
  %v2881 = vmax.f32 %v2873, 0.0
  %v2882 = vmax.f32 %v2878, 0.0
  %v2883 = vld [vmem:[%s43] sm:$0xff]
  %v2884 = vld [vmem:[%s43 + $0x8] sm:$0xff]
  %v2885 = vld [vmem:[%s43 + $0x10] sm:$0xff]
  %v2886 = vld [vmem:[%s43 + $0x18] sm:$0xff]
  %v2887 = vld [vmem:[%s45] sm:$0x1]
  %v2889 = vlaneseq
  %v2890 = vshrl.u32 %v2889, 7
  %v2891 = vsub.s32 0, %v2890
  %v2892 = vrot.slane %v2887, %v2891
  %2894 = vmatprep.subr.mxu0 0.0
  %2895 = vmatpush1.msra.mxu0 %v2883
  %2896 = vmatprep.subr.mxu0 0.0
  %2897 = vmatpush1.msra.mxu0 %v2884
  %2898 = vmatprep.subr.mxu0 0.0
  %2899 = vmatpush1.msra.mxu0 %v2885
  %2900 = vmatprep.subr.mxu0 0.0
  %2901 = vmatpush1.msra.mxu0 %v2886
  %2902 = vmatprep.subr.mxu0 0.0
  %2903 = vmatpush1.msra.mxu0 0.0
  %2904 = vmatprep.subr.mxu0 0.0
  %2905 = vmatpush1.msra.mxu0 0.0
  %2906 = vmatprep.subr.mxu0 0.0
  %2907 = vmatpush1.msra.mxu0 0.0
  %2908 = vmatprep.subr.mxu0 0.0
  %2909 = vmatpush1.msra.mxu0 0.0
  %2910 = vmatprep.subr.mxu0 0.0
  %2911 = vmatpush1.msra.mxu0 0.0
  %2912 = vmatprep.subr.mxu0 0.0
  %2913 = vmatpush1.msra.mxu0 0.0
  %2914 = vmatprep.subr.mxu0 0.0
  %2915 = vmatpush1.msra.mxu0 0.0
  %2916 = vmatprep.subr.mxu0 0.0
  %2917 = vmatpush1.msra.mxu0 0.0
  %2918 = vmatprep.subr.mxu0 0.0
  %2919 = vmatpush1.msra.mxu0 0.0
  %2920 = vmatprep.subr.mxu0 0.0
  %2921 = vmatpush1.msra.mxu0 0.0
  %2922 = vmatprep.subr.mxu0 0.0
  %2923 = vmatpush1.msra.mxu0 0.0
  %2924 = vmatprep.subr.mxu0 0.0
  %2925 = vmatpush1.msra.mxu0 0.0
  %2926 = vmatprep.subr.mxu0 0.0
  %2927 = vmatpush1.msra.mxu0 0.0
  %2928 = vmatprep.subr.mxu0 0.0
  %2929 = vmatpush1.msra.mxu0 0.0
  %2930 = vmatprep.subr.mxu0 0.0
  %2931 = vmatpush1.msra.mxu0 0.0
  %2932 = vmatprep.subr.mxu0 0.0
  %2933 = vmatpush1.msra.mxu0 0.0
  %2934 = vmatprep.subr.mxu0 0.0
  %2935 = vmatpush1.msra.mxu0 0.0
  %2936 = vmatprep.subr.mxu0 0.0
  %2937 = vmatpush1.msra.mxu0 0.0
  %2938 = vmatprep.subr.mxu0 0.0
  %2939 = vmatpush1.msra.mxu0 0.0
  %2940 = vmatprep.subr.mxu0 0.0
  %2941 = vmatpush1.msra.mxu0 0.0
  %2942 = vmatprep.subr.mxu0 0.0
  %2943 = vmatpush1.msra.mxu0 0.0
  %2944 = vmatprep.subr.mxu0 0.0
  %2945 = vmatpush1.msra.mxu0 0.0
  %2946 = vmatprep.subr.mxu0 0.0
  %2947 = vmatpush1.msra.mxu0 0.0
  %2948 = vmatprep.subr.mxu0 0.0
  %2949 = vmatpush1.msra.mxu0 0.0
  %2950 = vmatprep.subr.mxu0 0.0
  %2951 = vmatpush1.msra.mxu0 0.0
  %2952 = vmatprep.subr.mxu0 0.0
  %2953 = vmatpush1.msra.mxu0 0.0
  %2954 = vmatprep.subr.mxu0 0.0
  %2955 = vmatpush1.msra.mxu0 0.0
  %2956 = vmatprep.subr.mxu0 0.0
  %2957 = vmatpush1.msra.mxu0 0.0
  %2958 = vmatprep.mubr.f32.mxu0 0.0
  %2959 = vmatmul.mubr.f32.gmra.mrb[0].mxu0 %v2801
  %v2960 = vpop.f32.mrb[0].mxu0
  %v2961 = vadd.f32 %v2892, %v2960
  %v2962 = vpop.f32.mrb[0].mxu0
  %2963 = vmatprep.mubr.f32.mxu0 0.0
  %2964 = vmatmul.mubr.f32.gmra.mrb[0].mxu0 %v2804
  %v2965 = vpop.f32.mrb[0].mxu0
  %v2966 = vadd.f32 %v2892, %v2965
  %v2967 = vpop.f32.mrb[0].mxu0
  %2968 = vdwg.mxu0
  %v2969 = vmax.f32 %v2961, 0.0
  %v2970 = vmax.f32 %v2966, 0.0
  %v2971 = vld [vmem:[%s47] sm:$0xff]
  %v2972 = vld [vmem:[%s47 + $0x8] sm:$0xff]
  %v2973 = vld [vmem:[%s47 + $0x10] sm:$0xff]
  %v2974 = vld [vmem:[%s47 + $0x18] sm:$0xff]
  %v2976 = vsel %vm154, %v2881, 0
  %v2979 = vsel %vm154, %v2882, 0
  %2981 = vmatprep.subr.mxu0 0.0
  %2982 = vmatpush1.msra.mxu0 %v2971
  %2983 = vmatprep.subr.mxu0 0.0
  %2984 = vmatpush1.msra.mxu0 %v2972
  %2985 = vmatprep.subr.mxu0 0.0
  %2986 = vmatpush1.msra.mxu0 %v2973
  %2987 = vmatprep.subr.mxu0 0.0
  %2988 = vmatpush1.msra.mxu0 %v2974
  %2989 = vmatprep.subr.mxu0 0.0
  %2990 = vmatpush1.msra.mxu0 0.0
  %2991 = vmatprep.subr.mxu0 0.0
  %2992 = vmatpush1.msra.mxu0 0.0
  %2993 = vmatprep.subr.mxu0 0.0
  %2994 = vmatpush1.msra.mxu0 0.0
  %2995 = vmatprep.subr.mxu0 0.0
  %2996 = vmatpush1.msra.mxu0 0.0
  %2997 = vmatprep.subr.mxu0 0.0
  %2998 = vmatpush1.msra.mxu0 0.0
  %2999 = vmatprep.subr.mxu0 0.0
  %3000 = vmatpush1.msra.mxu0 0.0
  %3001 = vmatprep.subr.mxu0 0.0
  %3002 = vmatpush1.msra.mxu0 0.0
  %3003 = vmatprep.subr.mxu0 0.0
  %3004 = vmatpush1.msra.mxu0 0.0
  %3005 = vmatprep.subr.mxu0 0.0
  %3006 = vmatpush1.msra.mxu0 0.0
  %3007 = vmatprep.subr.mxu0 0.0
  %3008 = vmatpush1.msra.mxu0 0.0
  %3009 = vmatprep.subr.mxu0 0.0
  %3010 = vmatpush1.msra.mxu0 0.0
  %3011 = vmatprep.subr.mxu0 0.0
  %3012 = vmatpush1.msra.mxu0 0.0
  %3013 = vmatprep.subr.mxu0 0.0
  %3014 = vmatpush1.msra.mxu0 0.0
  %3015 = vmatprep.subr.mxu0 0.0
  %3016 = vmatpush1.msra.mxu0 0.0
  %3017 = vmatprep.subr.mxu0 0.0
  %3018 = vmatpush1.msra.mxu0 0.0
  %3019 = vmatprep.subr.mxu0 0.0
  %3020 = vmatpush1.msra.mxu0 0.0
  %3021 = vmatprep.subr.mxu0 0.0
  %3022 = vmatpush1.msra.mxu0 0.0
  %3023 = vmatprep.subr.mxu0 0.0
  %3024 = vmatpush1.msra.mxu0 0.0
  %3025 = vmatprep.subr.mxu0 0.0
  %3026 = vmatpush1.msra.mxu0 0.0
  %3027 = vmatprep.subr.mxu0 0.0
  %3028 = vmatpush1.msra.mxu0 0.0
  %3029 = vmatprep.subr.mxu0 0.0
  %3030 = vmatpush1.msra.mxu0 0.0
  %3031 = vmatprep.subr.mxu0 0.0
  %3032 = vmatpush1.msra.mxu0 0.0
  %3033 = vmatprep.subr.mxu0 0.0
  %3034 = vmatpush1.msra.mxu0 0.0
  %3035 = vmatprep.subr.mxu0 0.0
  %3036 = vmatpush1.msra.mxu0 0.0
  %3037 = vmatprep.subr.mxu0 0.0
  %3038 = vmatpush1.msra.mxu0 0.0
  %3039 = vmatprep.subr.mxu0 0.0
  %3040 = vmatpush1.msra.mxu0 0.0
  %3041 = vmatprep.subr.mxu0 0.0
  %3042 = vmatpush1.msra.mxu0 0.0
  %3043 = vmatprep.subr.mxu0 0.0
  %3044 = vmatpush1.msra.mxu0 0.0
  %3045 = vmatprep.mubr.f32.mxu0 0.0
  %3046 = vmatmul.mubr.f32.gmra.mrb[0].mxu0 %v2976
  %v3047 = vpop.f32.mrb[0].mxu0
  %v3048 = vadd.f32 0.0, %v3047
  %v3049 = vpop.f32.mrb[0].mxu0
  %3050 = vmatprep.mubr.f32.mxu0 0.0
  %3051 = vmatmul.mubr.f32.gmra.mrb[0].mxu0 %v2979
  %v3052 = vpop.f32.mrb[0].mxu0
  %v3053 = vadd.f32 0.0, %v3052
  %v3054 = vpop.f32.mrb[0].mxu0
  %3055 = vdwg.mxu0
  %v3056 = vld [vmem:[%s55] sm:$0xff]
  %v3057 = vld [vmem:[%s55 + $0x8] sm:$0xff]
  %v3058 = vld [vmem:[%s55 + $0x10] sm:$0xff]
  %v3059 = vld [vmem:[%s55 + $0x18] sm:$0xff]
  %v3060 = vld [vmem:[%s55 + $0x20] sm:$0xff]
  %v3061 = vld [vmem:[%s55 + $0x28] sm:$0xff]
  %v3062 = vld [vmem:[%s55 + $0x30] sm:$0xff]
  %v3063 = vld [vmem:[%s55 + $0x38] sm:$0xff]
  %3064 = vrot.lane.b32.xlu0 %v2881, 96
  %v3065 = vpop.permute.xlu0 %3064
  %3066 = vrot.lane.b32.xlu0 %v2882, 96
  %v3067 = vpop.permute.xlu0 %3066
  %v3068 = vsel %vm154, %v3065, 0
  %v3070 = vsel %vm154, %v3067, 0
  %3072 = vmatprep.subr.mxu0 %v3057
  %3073 = vmatpush1.msra.mxu0 %v3056
  %3074 = vmatprep.subr.mxu0 %v3059
  %3075 = vmatpush1.msra.mxu0 %v3058
  %3076 = vmatprep.subr.mxu0 %v3061
  %3077 = vmatpush1.msra.mxu0 %v3060
  %3078 = vmatprep.subr.mxu0 %v3063
  %3079 = vmatpush1.msra.mxu0 %v3062
  %3080 = vmatprep.subr.mxu0 0.0
  %3081 = vmatpush1.msra.mxu0 0.0
  %3082 = vmatprep.subr.mxu0 0.0
  %3083 = vmatpush1.msra.mxu0 0.0
  %3084 = vmatprep.subr.mxu0 0.0
  %3085 = vmatpush1.msra.mxu0 0.0
  %3086 = vmatprep.subr.mxu0 0.0
  %3087 = vmatpush1.msra.mxu0 0.0
  %3088 = vmatprep.subr.mxu0 0.0
  %3089 = vmatpush1.msra.mxu0 0.0
  %3090 = vmatprep.subr.mxu0 0.0
  %3091 = vmatpush1.msra.mxu0 0.0
  %3092 = vmatprep.subr.mxu0 0.0
  %3093 = vmatpush1.msra.mxu0 0.0
  %3094 = vmatprep.subr.mxu0 0.0
  %3095 = vmatpush1.msra.mxu0 0.0
  %3096 = vmatprep.subr.mxu0 0.0
  %3097 = vmatpush1.msra.mxu0 0.0
  %3098 = vmatprep.subr.mxu0 0.0
  %3099 = vmatpush1.msra.mxu0 0.0
  %3100 = vmatprep.subr.mxu0 0.0
  %3101 = vmatpush1.msra.mxu0 0.0
  %3102 = vmatprep.subr.mxu0 0.0
  %3103 = vmatpush1.msra.mxu0 0.0
  %3104 = vmatprep.subr.mxu0 0.0
  %3105 = vmatpush1.msra.mxu0 0.0
  %3106 = vmatprep.subr.mxu0 0.0
  %3107 = vmatpush1.msra.mxu0 0.0
  %3108 = vmatprep.subr.mxu0 0.0
  %3109 = vmatpush1.msra.mxu0 0.0
  %3110 = vmatprep.subr.mxu0 0.0
  %3111 = vmatpush1.msra.mxu0 0.0
  %3112 = vmatprep.subr.mxu0 0.0
  %3113 = vmatpush1.msra.mxu0 0.0
  %3114 = vmatprep.subr.mxu0 0.0
  %3115 = vmatpush1.msra.mxu0 0.0
  %3116 = vmatprep.subr.mxu0 0.0
  %3117 = vmatpush1.msra.mxu0 0.0
  %3118 = vmatprep.subr.mxu0 0.0
  %3119 = vmatpush1.msra.mxu0 0.0
  %3120 = vmatprep.subr.mxu0 0.0
  %3121 = vmatpush1.msra.mxu0 0.0
  %3122 = vmatprep.subr.mxu0 0.0
  %3123 = vmatpush1.msra.mxu0 0.0
  %3124 = vmatprep.subr.mxu0 0.0
  %3125 = vmatpush1.msra.mxu0 0.0
  %3126 = vmatprep.subr.mxu0 0.0
  %3127 = vmatpush1.msra.mxu0 0.0
  %3128 = vmatprep.subr.mxu0 0.0
  %3129 = vmatpush1.msra.mxu0 0.0
  %3130 = vmatprep.subr.mxu0 0.0
  %3131 = vmatpush1.msra.mxu0 0.0
  %3132 = vmatprep.subr.mxu0 0.0
  %3133 = vmatpush1.msra.mxu0 0.0
  %3134 = vmatprep.subr.mxu0 0.0
  %3135 = vmatpush1.msra.mxu0 0.0
  %3136 = vmatprep.mubr.f32.mxu0 0.0
  %3137 = vmatmul.mubr.f32.gmra.mrb[0].mxu0 %v3068
  %v3138 = vpop.f32.mrb[0].mxu0
  %v3139 = vadd.f32 0.0, %v3138
  %v3140 = vpop.f32.mrb[0].mxu0
  %v3141 = vadd.f32 0.0, %v3140
  %3142 = vmatprep.mubr.f32.mxu0 0.0
  %3143 = vmatmul.mubr.f32.gmra.mrb[0].mxu0 %v3070
  %v3144 = vpop.f32.mrb[0].mxu0
  %v3145 = vadd.f32 0.0, %v3144
  %v3146 = vpop.f32.mrb[0].mxu0
  %v3147 = vadd.f32 0.0, %v3146
  %3148 = vdwg.mxu0
  %v3149 = vld [vmem:[%s49] sm:$0xff]
  %v3150 = vld [vmem:[%s49 + $0x8] sm:$0xff]
  %v3151 = vld [vmem:[%s49 + $0x10] sm:$0xff]
  %v3152 = vld [vmem:[%s49 + $0x18] sm:$0xff]
  %v3153 = vld [vmem:[#allocation3] sm:$0x1]
  %v3155 = vlaneseq
  %v3156 = vshrl.u32 %v3155, 7
  %v3157 = vsub.s32 0, %v3156
  %v3158 = vrot.slane %v3153, %v3157
  %3160 = vmatprep.subr.mxu0 0.0
  %3161 = vmatpush1.msra.mxu0 %v3149
  %3162 = vmatprep.subr.mxu0 0.0
  %3163 = vmatpush1.msra.mxu0 %v3150
  %3164 = vmatprep.subr.mxu0 0.0
  %3165 = vmatpush1.msra.mxu0 %v3151
  %3166 = vmatprep.subr.mxu0 0.0
  %3167 = vmatpush1.msra.mxu0 %v3152
  %3168 = vmatprep.subr.mxu0 0.0
  %3169 = vmatpush1.msra.mxu0 0.0
  %3170 = vmatprep.subr.mxu0 0.0
  %3171 = vmatpush1.msra.mxu0 0.0
  %3172 = vmatprep.subr.mxu0 0.0
  %3173 = vmatpush1.msra.mxu0 0.0
  %3174 = vmatprep.subr.mxu0 0.0
  %3175 = vmatpush1.msra.mxu0 0.0
  %3176 = vmatprep.subr.mxu0 0.0
  %3177 = vmatpush1.msra.mxu0 0.0
  %3178 = vmatprep.subr.mxu0 0.0
  %3179 = vmatpush1.msra.mxu0 0.0
  %3180 = vmatprep.subr.mxu0 0.0
  %3181 = vmatpush1.msra.mxu0 0.0
  %3182 = vmatprep.subr.mxu0 0.0
  %3183 = vmatpush1.msra.mxu0 0.0
  %3184 = vmatprep.subr.mxu0 0.0
  %3185 = vmatpush1.msra.mxu0 0.0
  %3186 = vmatprep.subr.mxu0 0.0
  %3187 = vmatpush1.msra.mxu0 0.0
  %3188 = vmatprep.subr.mxu0 0.0
  %3189 = vmatpush1.msra.mxu0 0.0
  %3190 = vmatprep.subr.mxu0 0.0
  %3191 = vmatpush1.msra.mxu0 0.0
  %3192 = vmatprep.subr.mxu0 0.0
  %3193 = vmatpush1.msra.mxu0 0.0
  %3194 = vmatprep.subr.mxu0 0.0
  %3195 = vmatpush1.msra.mxu0 0.0
  %3196 = vmatprep.subr.mxu0 0.0
  %3197 = vmatpush1.msra.mxu0 0.0
  %3198 = vmatprep.subr.mxu0 0.0
  %3199 = vmatpush1.msra.mxu0 0.0
  %3200 = vmatprep.subr.mxu0 0.0
  %3201 = vmatpush1.msra.mxu0 0.0
  %3202 = vmatprep.subr.mxu0 0.0
  %3203 = vmatpush1.msra.mxu0 0.0
  %3204 = vmatprep.subr.mxu0 0.0
  %3205 = vmatpush1.msra.mxu0 0.0
  %3206 = vmatprep.subr.mxu0 0.0
  %3207 = vmatpush1.msra.mxu0 0.0
  %3208 = vmatprep.subr.mxu0 0.0
  %3209 = vmatpush1.msra.mxu0 0.0
  %3210 = vmatprep.subr.mxu0 0.0
  %3211 = vmatpush1.msra.mxu0 0.0
  %3212 = vmatprep.subr.mxu0 0.0
  %3213 = vmatpush1.msra.mxu0 0.0
  %3214 = vmatprep.subr.mxu0 0.0
  %3215 = vmatpush1.msra.mxu0 0.0
  %3216 = vmatprep.subr.mxu0 0.0
  %3217 = vmatpush1.msra.mxu0 0.0
  %3218 = vmatprep.subr.mxu0 0.0
  %3219 = vmatpush1.msra.mxu0 0.0
  %3220 = vmatprep.subr.mxu0 0.0
  %3221 = vmatpush1.msra.mxu0 0.0
  %3222 = vmatprep.subr.mxu0 0.0
  %3223 = vmatpush1.msra.mxu0 0.0
  %3224 = vmatprep.mubr.f32.mxu0 0.0
  %3225 = vmatmul.mubr.f32.gmra.mrb[0].mxu0 %v2976
  %v3226 = vpop.f32.mrb[0].mxu0
  %v3227 = vadd.f32 %v3158, %v3226
  %v3228 = vpop.f32.mrb[0].mxu0
  %3229 = vmatprep.mubr.f32.mxu0 0.0
  %3230 = vmatmul.mubr.f32.gmra.mrb[0].mxu0 %v2979
  %v3231 = vpop.f32.mrb[0].mxu0
  %v3232 = vadd.f32 %v3158, %v3231
  %v3233 = vpop.f32.mrb[0].mxu0
  %3234 = vdwg.mxu0
  %v3235 = vld [vmem:[%s57] sm:$0xff]
  %v3236 = vld [vmem:[%s57 + $0x8] sm:$0xff]
  %v3237 = vld [vmem:[%s57 + $0x10] sm:$0xff]
  %v3238 = vld [vmem:[%s57 + $0x18] sm:$0xff]
  %v3239 = vld [vmem:[%s61] sm:$0x1]
  %v3241 = vlaneseq
  %v3242 = vshrl.u32 %v3241, 7
  %v3243 = vsub.s32 0, %v3242
  %v3244 = vrot.slane %v3239, %v3243
  %3246 = vmatprep.subr.mxu0 0.0
  %3247 = vmatpush1.msra.mxu0 %v3235
  %3248 = vmatprep.subr.mxu0 0.0
  %3249 = vmatpush1.msra.mxu0 %v3236
  %3250 = vmatprep.subr.mxu0 0.0
  %3251 = vmatpush1.msra.mxu0 %v3237
  %3252 = vmatprep.subr.mxu0 0.0
  %3253 = vmatpush1.msra.mxu0 %v3238
  %3254 = vmatprep.subr.mxu0 0.0
  %3255 = vmatpush1.msra.mxu0 0.0
  %3256 = vmatprep.subr.mxu0 0.0
  %3257 = vmatpush1.msra.mxu0 0.0
  %3258 = vmatprep.subr.mxu0 0.0
  %3259 = vmatpush1.msra.mxu0 0.0
  %3260 = vmatprep.subr.mxu0 0.0
  %3261 = vmatpush1.msra.mxu0 0.0
  %3262 = vmatprep.subr.mxu0 0.0
  %3263 = vmatpush1.msra.mxu0 0.0
  %3264 = vmatprep.subr.mxu0 0.0
  %3265 = vmatpush1.msra.mxu0 0.0
  %3266 = vmatprep.subr.mxu0 0.0
  %3267 = vmatpush1.msra.mxu0 0.0
  %3268 = vmatprep.subr.mxu0 0.0
  %3269 = vmatpush1.msra.mxu0 0.0
  %3270 = vmatprep.subr.mxu0 0.0
  %3271 = vmatpush1.msra.mxu0 0.0
  %3272 = vmatprep.subr.mxu0 0.0
  %3273 = vmatpush1.msra.mxu0 0.0
  %3274 = vmatprep.subr.mxu0 0.0
  %3275 = vmatpush1.msra.mxu0 0.0
  %3276 = vmatprep.subr.mxu0 0.0
  %3277 = vmatpush1.msra.mxu0 0.0
  %3278 = vmatprep.subr.mxu0 0.0
  %3279 = vmatpush1.msra.mxu0 0.0
  %3280 = vmatprep.subr.mxu0 0.0
  %3281 = vmatpush1.msra.mxu0 0.0
  %3282 = vmatprep.subr.mxu0 0.0
  %3283 = vmatpush1.msra.mxu0 0.0
  %3284 = vmatprep.subr.mxu0 0.0
  %3285 = vmatpush1.msra.mxu0 0.0
  %3286 = vmatprep.subr.mxu0 0.0
  %3287 = vmatpush1.msra.mxu0 0.0
  %3288 = vmatprep.subr.mxu0 0.0
  %3289 = vmatpush1.msra.mxu0 0.0
  %3290 = vmatprep.subr.mxu0 0.0
  %3291 = vmatpush1.msra.mxu0 0.0
  %3292 = vmatprep.subr.mxu0 0.0
  %3293 = vmatpush1.msra.mxu0 0.0
  %3294 = vmatprep.subr.mxu0 0.0
  %3295 = vmatpush1.msra.mxu0 0.0
  %3296 = vmatprep.subr.mxu0 0.0
  %3297 = vmatpush1.msra.mxu0 0.0
  %3298 = vmatprep.subr.mxu0 0.0
  %3299 = vmatpush1.msra.mxu0 0.0
  %3300 = vmatprep.subr.mxu0 0.0
  %3301 = vmatpush1.msra.mxu0 0.0
  %3302 = vmatprep.subr.mxu0 0.0
  %3303 = vmatpush1.msra.mxu0 0.0
  %3304 = vmatprep.subr.mxu0 0.0
  %3305 = vmatpush1.msra.mxu0 0.0
  %3306 = vmatprep.subr.mxu0 0.0
  %3307 = vmatpush1.msra.mxu0 0.0
  %3308 = vmatprep.subr.mxu0 0.0
  %3309 = vmatpush1.msra.mxu0 0.0
  %3310 = vmatprep.mubr.f32.mxu0 0.0
  %3311 = vmatmul.mubr.f32.gmra.mrb[0].mxu0 %v3068
  %v3312 = vpop.f32.mrb[0].mxu0
  %v3313 = vadd.f32 %v3244, %v3312
  %v3314 = vpop.f32.mrb[0].mxu0
  %3315 = vmatprep.mubr.f32.mxu0 0.0
  %3316 = vmatmul.mubr.f32.gmra.mrb[0].mxu0 %v3070
  %v3317 = vpop.f32.mrb[0].mxu0
  %v3318 = vadd.f32 %v3244, %v3317
  %v3319 = vpop.f32.mrb[0].mxu0
  %3320 = vdwg.mxu0
  %v3321 = vld [vmem:[%s51] sm:$0x1]
  %v3323 = vsel %vm154, %v3321, 0
  %v3326 = vsel %vm154, %v2969, 0
  %v3329 = vsel %vm154, %v2970, 0
  %3331 = vmatprep.subr.mxu0 0.0
  %3332 = vmatpush1.xpose.msra.mxu0 %v3326
  %3333 = vmatprep.subr.mxu0 0.0
  %3334 = vmatpush1.xpose.msra.mxu0 %v3329
  %3335 = vmatprep.subr.mxu0 0.0
  %3336 = vmatpush1.xpose.msra.mxu0 0.0
  %3337 = vmatprep.subr.mxu0 0.0
  %3338 = vmatpush1.xpose.msra.mxu0 0.0
  %3339 = vmatprep.subr.mxu0 0.0
  %3340 = vmatpush1.xpose.msra.mxu0 0.0
  %3341 = vmatprep.subr.mxu0 0.0
  %3342 = vmatpush1.xpose.msra.mxu0 0.0
  %3343 = vmatprep.subr.mxu0 0.0
  %3344 = vmatpush1.xpose.msra.mxu0 0.0
  %3345 = vmatprep.subr.mxu0 0.0
  %3346 = vmatpush1.xpose.msra.mxu0 0.0
  %3347 = vmatprep.subr.mxu0 0.0
  %3348 = vmatpush1.xpose.msra.mxu0 0.0
  %3349 = vmatprep.subr.mxu0 0.0
  %3350 = vmatpush1.xpose.msra.mxu0 0.0
  %3351 = vmatprep.subr.mxu0 0.0
  %3352 = vmatpush1.xpose.msra.mxu0 0.0
  %3353 = vmatprep.subr.mxu0 0.0
  %3354 = vmatpush1.xpose.msra.mxu0 0.0
  %3355 = vmatprep.subr.mxu0 0.0
  %3356 = vmatpush1.xpose.msra.mxu0 0.0
  %3357 = vmatprep.subr.mxu0 0.0
  %3358 = vmatpush1.xpose.msra.mxu0 0.0
  %3359 = vmatprep.subr.mxu0 0.0
  %3360 = vmatpush1.xpose.msra.mxu0 0.0
  %3361 = vmatprep.subr.mxu0 0.0
  %3362 = vmatpush1.xpose.msra.mxu0 0.0
  %3363 = vmatprep.subr.mxu0 0.0
  %3364 = vmatpush1.xpose.msra.mxu0 0.0
  %3365 = vmatprep.subr.mxu0 0.0
  %3366 = vmatpush1.xpose.msra.mxu0 0.0
  %3367 = vmatprep.subr.mxu0 0.0
  %3368 = vmatpush1.xpose.msra.mxu0 0.0
  %3369 = vmatprep.subr.mxu0 0.0
  %3370 = vmatpush1.xpose.msra.mxu0 0.0
  %3371 = vmatprep.subr.mxu0 0.0
  %3372 = vmatpush1.xpose.msra.mxu0 0.0
  %3373 = vmatprep.subr.mxu0 0.0
  %3374 = vmatpush1.xpose.msra.mxu0 0.0
  %3375 = vmatprep.subr.mxu0 0.0
  %3376 = vmatpush1.xpose.msra.mxu0 0.0
  %3377 = vmatprep.subr.mxu0 0.0
  %3378 = vmatpush1.xpose.msra.mxu0 0.0
  %3379 = vmatprep.subr.mxu0 0.0
  %3380 = vmatpush1.xpose.msra.mxu0 0.0
  %3381 = vmatprep.subr.mxu0 0.0
  %3382 = vmatpush1.xpose.msra.mxu0 0.0
  %3383 = vmatprep.subr.mxu0 0.0
  %3384 = vmatpush1.xpose.msra.mxu0 0.0
  %3385 = vmatprep.subr.mxu0 0.0
  %3386 = vmatpush1.xpose.msra.mxu0 0.0
  %3387 = vmatprep.subr.mxu0 0.0
  %3388 = vmatpush1.xpose.msra.mxu0 0.0
  %3389 = vmatprep.subr.mxu0 0.0
  %3390 = vmatpush1.xpose.msra.mxu0 0.0
  %3391 = vmatprep.subr.mxu0 0.0
  %3392 = vmatpush1.xpose.msra.mxu0 0.0
  %3393 = vmatprep.subr.mxu0 0.0
  %3394 = vmatpush1.xpose.msra.mxu0 0.0
  %3395 = vmatprep.mubr.f32.mxu0 0.0
  %3396 = vmatmul.mubr.f32.gmra.mrb[0].mxu0 %v3323
  %v3397 = vpop.f32.mrb[0].mxu0
  %v3398 = vadd.f32 0.0, %v3397
  %v3399 = vpop.f32.mrb[0].mxu0
  %3400 = vdwg.mxu0
  %v3401 = vld [vmem:[%s59] sm:$0xff]
  %3402 = vrot.lane.b32.xlu0 %v2969, 96
  %v3403 = vpop.permute.xlu0 %3402
  %3404 = vrot.lane.b32.xlu0 %v2970, 96
  %v3405 = vpop.permute.xlu0 %3404
  %v3407 = vsel %vm154, %v3401, 0
  %v3409 = vsel %vm154, %v3403, 0
  %v3411 = vsel %vm154, %v3405, 0
  %3413 = vmatprep.subr.mxu0 0.0
  %3414 = vmatpush1.xpose.msra.mxu0 %v3409
  %3415 = vmatprep.subr.mxu0 0.0
  %3416 = vmatpush1.xpose.msra.mxu0 %v3411
  %3417 = vmatprep.subr.mxu0 0.0
  %3418 = vmatpush1.xpose.msra.mxu0 0.0
  %3419 = vmatprep.subr.mxu0 0.0
  %3420 = vmatpush1.xpose.msra.mxu0 0.0
  %3421 = vmatprep.subr.mxu0 0.0
  %3422 = vmatpush1.xpose.msra.mxu0 0.0
  %3423 = vmatprep.subr.mxu0 0.0
  %3424 = vmatpush1.xpose.msra.mxu0 0.0
  %3425 = vmatprep.subr.mxu0 0.0
  %3426 = vmatpush1.xpose.msra.mxu0 0.0
  %3427 = vmatprep.subr.mxu0 0.0
  %3428 = vmatpush1.xpose.msra.mxu0 0.0
  %3429 = vmatprep.subr.mxu0 0.0
  %3430 = vmatpush1.xpose.msra.mxu0 0.0
  %3431 = vmatprep.subr.mxu0 0.0
  %3432 = vmatpush1.xpose.msra.mxu0 0.0
  %3433 = vmatprep.subr.mxu0 0.0
  %3434 = vmatpush1.xpose.msra.mxu0 0.0
  %3435 = vmatprep.subr.mxu0 0.0
  %3436 = vmatpush1.xpose.msra.mxu0 0.0
  %3437 = vmatprep.subr.mxu0 0.0
  %3438 = vmatpush1.xpose.msra.mxu0 0.0
  %3439 = vmatprep.subr.mxu0 0.0
  %3440 = vmatpush1.xpose.msra.mxu0 0.0
  %3441 = vmatprep.subr.mxu0 0.0
  %3442 = vmatpush1.xpose.msra.mxu0 0.0
  %3443 = vmatprep.subr.mxu0 0.0
  %3444 = vmatpush1.xpose.msra.mxu0 0.0
  %3445 = vmatprep.subr.mxu0 0.0
  %3446 = vmatpush1.xpose.msra.mxu0 0.0
  %3447 = vmatprep.subr.mxu0 0.0
  %3448 = vmatpush1.xpose.msra.mxu0 0.0
  %3449 = vmatprep.subr.mxu0 0.0
  %3450 = vmatpush1.xpose.msra.mxu0 0.0
  %3451 = vmatprep.subr.mxu0 0.0
  %3452 = vmatpush1.xpose.msra.mxu0 0.0
  %3453 = vmatprep.subr.mxu0 0.0
  %3454 = vmatpush1.xpose.msra.mxu0 0.0
  %3455 = vmatprep.subr.mxu0 0.0
  %3456 = vmatpush1.xpose.msra.mxu0 0.0
  %3457 = vmatprep.subr.mxu0 0.0
  %3458 = vmatpush1.xpose.msra.mxu0 0.0
  %3459 = vmatprep.subr.mxu0 0.0
  %3460 = vmatpush1.xpose.msra.mxu0 0.0
  %3461 = vmatprep.subr.mxu0 0.0
  %3462 = vmatpush1.xpose.msra.mxu0 0.0
  %3463 = vmatprep.subr.mxu0 0.0
  %3464 = vmatpush1.xpose.msra.mxu0 0.0
  %3465 = vmatprep.subr.mxu0 0.0
  %3466 = vmatpush1.xpose.msra.mxu0 0.0
  %3467 = vmatprep.subr.mxu0 0.0
  %3468 = vmatpush1.xpose.msra.mxu0 0.0
  %3469 = vmatprep.subr.mxu0 0.0
  %3470 = vmatpush1.xpose.msra.mxu0 0.0
  %3471 = vmatprep.subr.mxu0 0.0
  %3472 = vmatpush1.xpose.msra.mxu0 0.0
  %3473 = vmatprep.subr.mxu0 0.0
  %3474 = vmatpush1.xpose.msra.mxu0 0.0
  %3475 = vmatprep.subr.mxu0 0.0
  %3476 = vmatpush1.xpose.msra.mxu0 0.0
  %3477 = vmatprep.mubr.f32.mxu0 0.0
  %3478 = vmatmul.mubr.f32.gmra.mrb[0].mxu0 %v3407
  %v3479 = vpop.f32.mrb[0].mxu0
  %v3480 = vadd.f32 0.0, %v3479
  %v3481 = vpop.f32.mrb[0].mxu0
  %3482 = vdwg.mxu0
  %v3484 = vsel %vm154, %v3048, 0
  %v3487 = vsel %vm154, %v3053, 0
  %3489 = vmatprep.subr.mxu0 0.0
  %3490 = vmatpush1.xpose.msra.mxu0 %v3326
  %3491 = vmatprep.subr.mxu0 0.0
  %3492 = vmatpush1.xpose.msra.mxu0 %v3329
  %3493 = vmatprep.subr.mxu0 0.0
  %3494 = vmatpush1.xpose.msra.mxu0 0.0
  %3495 = vmatprep.subr.mxu0 0.0
  %3496 = vmatpush1.xpose.msra.mxu0 0.0
  %3497 = vmatprep.subr.mxu0 0.0
  %3498 = vmatpush1.xpose.msra.mxu0 0.0
  %3499 = vmatprep.subr.mxu0 0.0
  %3500 = vmatpush1.xpose.msra.mxu0 0.0
  %3501 = vmatprep.subr.mxu0 0.0
  %3502 = vmatpush1.xpose.msra.mxu0 0.0
  %3503 = vmatprep.subr.mxu0 0.0
  %3504 = vmatpush1.xpose.msra.mxu0 0.0
  %3505 = vmatprep.subr.mxu0 0.0
  %3506 = vmatpush1.xpose.msra.mxu0 0.0
  %3507 = vmatprep.subr.mxu0 0.0
  %3508 = vmatpush1.xpose.msra.mxu0 0.0
  %3509 = vmatprep.subr.mxu0 0.0
  %3510 = vmatpush1.xpose.msra.mxu0 0.0
  %3511 = vmatprep.subr.mxu0 0.0
  %3512 = vmatpush1.xpose.msra.mxu0 0.0
  %3513 = vmatprep.subr.mxu0 0.0
  %3514 = vmatpush1.xpose.msra.mxu0 0.0
  %3515 = vmatprep.subr.mxu0 0.0
  %3516 = vmatpush1.xpose.msra.mxu0 0.0
  %3517 = vmatprep.subr.mxu0 0.0
  %3518 = vmatpush1.xpose.msra.mxu0 0.0
  %3519 = vmatprep.subr.mxu0 0.0
  %3520 = vmatpush1.xpose.msra.mxu0 0.0
  %3521 = vmatprep.subr.mxu0 0.0
  %3522 = vmatpush1.xpose.msra.mxu0 0.0
  %3523 = vmatprep.subr.mxu0 0.0
  %3524 = vmatpush1.xpose.msra.mxu0 0.0
  %3525 = vmatprep.subr.mxu0 0.0
  %3526 = vmatpush1.xpose.msra.mxu0 0.0
  %3527 = vmatprep.subr.mxu0 0.0
  %3528 = vmatpush1.xpose.msra.mxu0 0.0
  %3529 = vmatprep.subr.mxu0 0.0
  %3530 = vmatpush1.xpose.msra.mxu0 0.0
  %3531 = vmatprep.subr.mxu0 0.0
  %3532 = vmatpush1.xpose.msra.mxu0 0.0
  %3533 = vmatprep.subr.mxu0 0.0
  %3534 = vmatpush1.xpose.msra.mxu0 0.0
  %3535 = vmatprep.subr.mxu0 0.0
  %3536 = vmatpush1.xpose.msra.mxu0 0.0
  %3537 = vmatprep.subr.mxu0 0.0
  %3538 = vmatpush1.xpose.msra.mxu0 0.0
  %3539 = vmatprep.subr.mxu0 0.0
  %3540 = vmatpush1.xpose.msra.mxu0 0.0
  %3541 = vmatprep.subr.mxu0 0.0
  %3542 = vmatpush1.xpose.msra.mxu0 0.0
  %3543 = vmatprep.subr.mxu0 0.0
  %3544 = vmatpush1.xpose.msra.mxu0 0.0
  %3545 = vmatprep.subr.mxu0 0.0
  %3546 = vmatpush1.xpose.msra.mxu0 0.0
  %3547 = vmatprep.subr.mxu0 0.0
  %3548 = vmatpush1.xpose.msra.mxu0 0.0
  %3549 = vmatprep.subr.mxu0 0.0
  %3550 = vmatpush1.xpose.msra.mxu0 0.0
  %3551 = vmatprep.subr.mxu0 0.0
  %3552 = vmatpush1.xpose.msra.mxu0 0.0
  %3553 = vmatprep.mubr.f32.mxu0 0.0
  %3554 = vmatmul.mubr.f32.gmra.mrb[0].mxu0 %v3484
  %v3555 = vpop.f32.mrb[0].mxu0
  %v3556 = vadd.f32 0.0, %v3555
  %v3557 = vpop.f32.mrb[0].mxu0
  %3558 = vmatprep.mubr.f32.mxu0 0.0
  %3559 = vmatmul.mubr.f32.gmra.mrb[0].mxu0 %v3487
  %v3560 = vpop.f32.mrb[0].mxu0
  %v3561 = vadd.f32 0.0, %v3560
  %v3562 = vpop.f32.mrb[0].mxu0
  %3563 = vdwg.mxu0
  %3565 = vset.pattern.permute.xlu0 0
  %3566 = vperm.xlu0 %3565, %v3227
  %v3567 = vpop.permute.xlu0 %3566
  %v3569 = vadd.f32 %v3556, %v3567
  %v3570 = vlaneseq
  %v3571 = vshrl.u32 %v3570, 7
  %v3572 = vsub.s32 0, %v3571
  %v3573 = vrot.slane %v3398, %v3572
  %v3574 = vadd.f32 %v3569, %v3573
  %vm3575 = vcmask 64512
  %3576 = vst.msk [vmem:[%s63] sm:$0xff] %vm3575, %v3574
  %3578 = vset.pattern.permute.xlu0 0
  %3579 = vperm.xlu0 %3578, %v3232
  %v3580 = vpop.permute.xlu0 %3579
  %v3582 = vadd.f32 %v3561, %v3580
  %v3583 = vadd.f32 %v3582, %v3573
  %3585 = vrot.lane.b32.xlu0 %v3583, 120
  %v3586 = vpop.permute.xlu0 %3585
  %s3588 = scalar_lea.vmem %s63, 8
  %3589 = vst.msk [vmem:[%s3588] sm:$0xff] %vm3575, %v3586
  %v3591 = vsel %vm154, %v3139, 0
  %v3594 = vsel %vm154, %v3145, 0
  %3596 = vmatprep.subr.mxu0 0.0
  %3597 = vmatpush1.xpose.msra.mxu0 %v3409
  %3598 = vmatprep.subr.mxu0 0.0
  %3599 = vmatpush1.xpose.msra.mxu0 %v3411
  %3600 = vmatprep.subr.mxu0 0.0
  %3601 = vmatpush1.xpose.msra.mxu0 0.0
  %3602 = vmatprep.subr.mxu0 0.0
  %3603 = vmatpush1.xpose.msra.mxu0 0.0
  %3604 = vmatprep.subr.mxu0 0.0
  %3605 = vmatpush1.xpose.msra.mxu0 0.0
  %3606 = vmatprep.subr.mxu0 0.0
  %3607 = vmatpush1.xpose.msra.mxu0 0.0
  %3608 = vmatprep.subr.mxu0 0.0
  %3609 = vmatpush1.xpose.msra.mxu0 0.0
  %3610 = vmatprep.subr.mxu0 0.0
  %3611 = vmatpush1.xpose.msra.mxu0 0.0
  %3612 = vmatprep.subr.mxu0 0.0
  %3613 = vmatpush1.xpose.msra.mxu0 0.0
  %3614 = vmatprep.subr.mxu0 0.0
  %3615 = vmatpush1.xpose.msra.mxu0 0.0
  %3616 = vmatprep.subr.mxu0 0.0
  %3617 = vmatpush1.xpose.msra.mxu0 0.0
  %3618 = vmatprep.subr.mxu0 0.0
  %3619 = vmatpush1.xpose.msra.mxu0 0.0
  %3620 = vmatprep.subr.mxu0 0.0
  %3621 = vmatpush1.xpose.msra.mxu0 0.0
  %3622 = vmatprep.subr.mxu0 0.0
  %3623 = vmatpush1.xpose.msra.mxu0 0.0
  %3624 = vmatprep.subr.mxu0 0.0
  %3625 = vmatpush1.xpose.msra.mxu0 0.0
  %3626 = vmatprep.subr.mxu0 0.0
  %3627 = vmatpush1.xpose.msra.mxu0 0.0
  %3628 = vmatprep.subr.mxu0 0.0
  %3629 = vmatpush1.xpose.msra.mxu0 0.0
  %3630 = vmatprep.subr.mxu0 0.0
  %3631 = vmatpush1.xpose.msra.mxu0 0.0
  %3632 = vmatprep.subr.mxu0 0.0
  %3633 = vmatpush1.xpose.msra.mxu0 0.0
  %3634 = vmatprep.subr.mxu0 0.0
  %3635 = vmatpush1.xpose.msra.mxu0 0.0
  %3636 = vmatprep.subr.mxu0 0.0
  %3637 = vmatpush1.xpose.msra.mxu0 0.0
  %3638 = vmatprep.subr.mxu0 0.0
  %3639 = vmatpush1.xpose.msra.mxu0 0.0
  %3640 = vmatprep.subr.mxu0 0.0
  %3641 = vmatpush1.xpose.msra.mxu0 0.0
  %3642 = vmatprep.subr.mxu0 0.0
  %3643 = vmatpush1.xpose.msra.mxu0 0.0
  %3644 = vmatprep.subr.mxu0 0.0
  %3645 = vmatpush1.xpose.msra.mxu0 0.0
  %3646 = vmatprep.subr.mxu0 0.0
  %3647 = vmatpush1.xpose.msra.mxu0 0.0
  %3648 = vmatprep.subr.mxu0 0.0
  %3649 = vmatpush1.xpose.msra.mxu0 0.0
  %3650 = vmatprep.subr.mxu0 0.0
  %3651 = vmatpush1.xpose.msra.mxu0 0.0
  %3652 = vmatprep.subr.mxu0 0.0
  %3653 = vmatpush1.xpose.msra.mxu0 0.0
  %3654 = vmatprep.subr.mxu0 0.0
  %3655 = vmatpush1.xpose.msra.mxu0 0.0
  %3656 = vmatprep.subr.mxu0 0.0
  %3657 = vmatpush1.xpose.msra.mxu0 0.0
  %3658 = vmatprep.subr.mxu0 0.0
  %3659 = vmatpush1.xpose.msra.mxu0 0.0
  %3660 = vmatprep.mubr.f32.mxu0 0.0
  %3661 = vmatmul.mubr.f32.gmra.mrb[0].mxu0 %v3591
  %v3662 = vpop.f32.mrb[0].mxu0
  %v3663 = vadd.f32 0.0, %v3662
  %v3664 = vpop.f32.mrb[0].mxu0
  %3665 = vmatprep.mubr.f32.mxu0 0.0
  %3666 = vmatmul.mubr.f32.gmra.mrb[0].mxu0 %v3594
  %v3667 = vpop.f32.mrb[0].mxu0
  %v3668 = vadd.f32 0.0, %v3667
  %v3669 = vpop.f32.mrb[0].mxu0
  %3670 = vdwg.mxu0
  %3672 = vset.pattern.permute.xlu0 0
  %3673 = vperm.xlu0 %3672, %v3313
  %v3674 = vpop.permute.xlu0 %3673
  %v3676 = vadd.f32 %v3663, %v3674
  %v3677 = vlaneseq
  %v3678 = vshrl.u32 %v3677, 7
  %v3679 = vsub.s32 0, %v3678
  %v3680 = vrot.slane %v3480, %v3679
  %v3681 = vadd.f32 %v3676, %v3680
  %3682 = vst.msk [vmem:[%s65] sm:$0xff] %vm3575, %v3681
  %3684 = vset.pattern.permute.xlu0 0
  %3685 = vperm.xlu0 %3684, %v3318
  %v3686 = vpop.permute.xlu0 %3685
  %v3688 = vadd.f32 %v3668, %v3686
  %v3689 = vadd.f32 %v3688, %v3680
  %3691 = vrot.lane.b32.xlu0 %v3689, 120
  %v3692 = vpop.permute.xlu0 %3691
  %s3694 = scalar_lea.vmem %s65, 64
  %3695 = vst.msk [vmem:[%s3694] sm:$0xff] %vm3575, %v3692
  %3696 = vrot.lane.b32.xlu0 %v3139, 96
  %v3697 = vpop.permute.xlu0 %3696
  %3698 = vrot.lane.b32.xlu0 %v3145, 96
  %v3699 = vpop.permute.xlu0 %3698
  %v3700 = vsel %vm154, %v3697, 0
  %v3702 = vsel %vm154, %v3699, 0
  %3704 = vmatprep.subr.mxu0 0.0
  %3705 = vmatpush1.xpose.msra.mxu0 %v3409
  %3706 = vmatprep.subr.mxu0 0.0
  %3707 = vmatpush1.xpose.msra.mxu0 %v3411
  %3708 = vmatprep.subr.mxu0 0.0
  %3709 = vmatpush1.xpose.msra.mxu0 0.0
  %3710 = vmatprep.subr.mxu0 0.0
  %3711 = vmatpush1.xpose.msra.mxu0 0.0
  %3712 = vmatprep.subr.mxu0 0.0
  %3713 = vmatpush1.xpose.msra.mxu0 0.0
  %3714 = vmatprep.subr.mxu0 0.0
  %3715 = vmatpush1.xpose.msra.mxu0 0.0
  %3716 = vmatprep.subr.mxu0 0.0
  %3717 = vmatpush1.xpose.msra.mxu0 0.0
  %3718 = vmatprep.subr.mxu0 0.0
  %3719 = vmatpush1.xpose.msra.mxu0 0.0
  %3720 = vmatprep.subr.mxu0 0.0
  %3721 = vmatpush1.xpose.msra.mxu0 0.0
  %3722 = vmatprep.subr.mxu0 0.0
  %3723 = vmatpush1.xpose.msra.mxu0 0.0
  %3724 = vmatprep.subr.mxu0 0.0
  %3725 = vmatpush1.xpose.msra.mxu0 0.0
  %3726 = vmatprep.subr.mxu0 0.0
  %3727 = vmatpush1.xpose.msra.mxu0 0.0
  %3728 = vmatprep.subr.mxu0 0.0
  %3729 = vmatpush1.xpose.msra.mxu0 0.0
  %3730 = vmatprep.subr.mxu0 0.0
  %3731 = vmatpush1.xpose.msra.mxu0 0.0
  %3732 = vmatprep.subr.mxu0 0.0
  %3733 = vmatpush1.xpose.msra.mxu0 0.0
  %3734 = vmatprep.subr.mxu0 0.0
  %3735 = vmatpush1.xpose.msra.mxu0 0.0
  %3736 = vmatprep.subr.mxu0 0.0
  %3737 = vmatpush1.xpose.msra.mxu0 0.0
  %3738 = vmatprep.subr.mxu0 0.0
  %3739 = vmatpush1.xpose.msra.mxu0 0.0
  %3740 = vmatprep.subr.mxu0 0.0
  %3741 = vmatpush1.xpose.msra.mxu0 0.0
  %3742 = vmatprep.subr.mxu0 0.0
  %3743 = vmatpush1.xpose.msra.mxu0 0.0
  %3744 = vmatprep.subr.mxu0 0.0
  %3745 = vmatpush1.xpose.msra.mxu0 0.0
  %3746 = vmatprep.subr.mxu0 0.0
  %3747 = vmatpush1.xpose.msra.mxu0 0.0
  %3748 = vmatprep.subr.mxu0 0.0
  %3749 = vmatpush1.xpose.msra.mxu0 0.0
  %3750 = vmatprep.subr.mxu0 0.0
  %3751 = vmatpush1.xpose.msra.mxu0 0.0
  %3752 = vmatprep.subr.mxu0 0.0
  %3753 = vmatpush1.xpose.msra.mxu0 0.0
  %3754 = vmatprep.subr.mxu0 0.0
  %3755 = vmatpush1.xpose.msra.mxu0 0.0
  %3756 = vmatprep.subr.mxu0 0.0
  %3757 = vmatpush1.xpose.msra.mxu0 0.0
  %3758 = vmatprep.subr.mxu0 0.0
  %3759 = vmatpush1.xpose.msra.mxu0 0.0
  %3760 = vmatprep.subr.mxu0 0.0
  %3761 = vmatpush1.xpose.msra.mxu0 0.0
  %3762 = vmatprep.subr.mxu0 0.0
  %3763 = vmatpush1.xpose.msra.mxu0 0.0
  %3764 = vmatprep.subr.mxu0 0.0
  %3765 = vmatpush1.xpose.msra.mxu0 0.0
  %3766 = vmatprep.subr.mxu0 0.0
  %3767 = vmatpush1.xpose.msra.mxu0 0.0
  %3768 = vmatprep.mubr.f32.mxu0 0.0
  %3769 = vmatmul.mubr.f32.gmra.mrb[0].mxu0 %v3700
  %v3770 = vpop.f32.mrb[0].mxu0
  %v3771 = vadd.f32 0.0, %v3770
  %v3772 = vpop.f32.mrb[0].mxu0
  %3773 = vmatprep.mubr.f32.mxu0 0.0
  %3774 = vmatmul.mubr.f32.gmra.mrb[0].mxu0 %v3702
  %v3775 = vpop.f32.mrb[0].mxu0
  %v3776 = vadd.f32 0.0, %v3775
  %v3777 = vpop.f32.mrb[0].mxu0
  %3778 = vdwg.mxu0
  %3779 = vset.pattern.permute.xlu0 1
  %3780 = vperm.xlu0 %3779, %v3313
  %v3781 = vpop.permute.xlu0 %3780
  %v3783 = vadd.f32 %v3771, %v3781
  %v3784 = vlaneseq
  %v3785 = vshrl.u32 %v3784, 7
  %v3786 = vsub.s32 1, %v3785
  %v3787 = vrot.slane %v3480, %v3786
  %v3788 = vadd.f32 %v3783, %v3787
  %s3789 = scalar_lea.vmem %s65, 8
  %3790 = vst.msk [vmem:[%s3789] sm:$0xff] %vm3575, %v3788
  %3791 = vset.pattern.permute.xlu0 1
  %3792 = vperm.xlu0 %3791, %v3318
  %v3793 = vpop.permute.xlu0 %3792
  %v3795 = vadd.f32 %v3776, %v3793
  %v3796 = vadd.f32 %v3795, %v3787
  %3798 = vrot.lane.b32.xlu0 %v3796, 120
  %v3799 = vpop.permute.xlu0 %3798
  %s3801 = scalar_lea.vmem %s65, 72
  %3802 = vst.msk [vmem:[%s3801] sm:$0xff] %vm3575, %v3799
  %3803 = vrot.lane.b32.xlu0 %v3139, 64
  %v3804 = vpop.permute.xlu0 %3803
  %3805 = vrot.lane.b32.xlu0 %v3145, 64
  %v3806 = vpop.permute.xlu0 %3805
  %v3807 = vsel %vm154, %v3804, 0
  %v3809 = vsel %vm154, %v3806, 0
  %3811 = vmatprep.subr.mxu0 0.0
  %3812 = vmatpush1.xpose.msra.mxu0 %v3409
  %3813 = vmatprep.subr.mxu0 0.0
  %3814 = vmatpush1.xpose.msra.mxu0 %v3411
  %3815 = vmatprep.subr.mxu0 0.0
  %3816 = vmatpush1.xpose.msra.mxu0 0.0
  %3817 = vmatprep.subr.mxu0 0.0
  %3818 = vmatpush1.xpose.msra.mxu0 0.0
  %3819 = vmatprep.subr.mxu0 0.0
  %3820 = vmatpush1.xpose.msra.mxu0 0.0
  %3821 = vmatprep.subr.mxu0 0.0
  %3822 = vmatpush1.xpose.msra.mxu0 0.0
  %3823 = vmatprep.subr.mxu0 0.0
  %3824 = vmatpush1.xpose.msra.mxu0 0.0
  %3825 = vmatprep.subr.mxu0 0.0
  %3826 = vmatpush1.xpose.msra.mxu0 0.0
  %3827 = vmatprep.subr.mxu0 0.0
  %3828 = vmatpush1.xpose.msra.mxu0 0.0
  %3829 = vmatprep.subr.mxu0 0.0
  %3830 = vmatpush1.xpose.msra.mxu0 0.0
  %3831 = vmatprep.subr.mxu0 0.0
  %3832 = vmatpush1.xpose.msra.mxu0 0.0
  %3833 = vmatprep.subr.mxu0 0.0
  %3834 = vmatpush1.xpose.msra.mxu0 0.0
  %3835 = vmatprep.subr.mxu0 0.0
  %3836 = vmatpush1.xpose.msra.mxu0 0.0
  %3837 = vmatprep.subr.mxu0 0.0
  %3838 = vmatpush1.xpose.msra.mxu0 0.0
  %3839 = vmatprep.subr.mxu0 0.0
  %3840 = vmatpush1.xpose.msra.mxu0 0.0
  %3841 = vmatprep.subr.mxu0 0.0
  %3842 = vmatpush1.xpose.msra.mxu0 0.0
  %3843 = vmatprep.subr.mxu0 0.0
  %3844 = vmatpush1.xpose.msra.mxu0 0.0
  %3845 = vmatprep.subr.mxu0 0.0
  %3846 = vmatpush1.xpose.msra.mxu0 0.0
  %3847 = vmatprep.subr.mxu0 0.0
  %3848 = vmatpush1.xpose.msra.mxu0 0.0
  %3849 = vmatprep.subr.mxu0 0.0
  %3850 = vmatpush1.xpose.msra.mxu0 0.0
  %3851 = vmatprep.subr.mxu0 0.0
  %3852 = vmatpush1.xpose.msra.mxu0 0.0
  %3853 = vmatprep.subr.mxu0 0.0
  %3854 = vmatpush1.xpose.msra.mxu0 0.0
  %3855 = vmatprep.subr.mxu0 0.0
  %3856 = vmatpush1.xpose.msra.mxu0 0.0
  %3857 = vmatprep.subr.mxu0 0.0
  %3858 = vmatpush1.xpose.msra.mxu0 0.0
  %3859 = vmatprep.subr.mxu0 0.0
  %3860 = vmatpush1.xpose.msra.mxu0 0.0
  %3861 = vmatprep.subr.mxu0 0.0
  %3862 = vmatpush1.xpose.msra.mxu0 0.0
  %3863 = vmatprep.subr.mxu0 0.0
  %3864 = vmatpush1.xpose.msra.mxu0 0.0
  %3865 = vmatprep.subr.mxu0 0.0
  %3866 = vmatpush1.xpose.msra.mxu0 0.0
  %3867 = vmatprep.subr.mxu0 0.0
  %3868 = vmatpush1.xpose.msra.mxu0 0.0
  %3869 = vmatprep.subr.mxu0 0.0
  %3870 = vmatpush1.xpose.msra.mxu0 0.0
  %3871 = vmatprep.subr.mxu0 0.0
  %3872 = vmatpush1.xpose.msra.mxu0 0.0
  %3873 = vmatprep.subr.mxu0 0.0
  %3874 = vmatpush1.xpose.msra.mxu0 0.0
  %3875 = vmatprep.mubr.f32.mxu0 0.0
  %3876 = vmatmul.mubr.f32.gmra.mrb[0].mxu0 %v3807
  %v3877 = vpop.f32.mrb[0].mxu0
  %v3878 = vadd.f32 0.0, %v3877
  %v3879 = vpop.f32.mrb[0].mxu0
  %3880 = vmatprep.mubr.f32.mxu0 0.0
  %3881 = vmatmul.mubr.f32.gmra.mrb[0].mxu0 %v3809
  %v3882 = vpop.f32.mrb[0].mxu0
  %v3883 = vadd.f32 0.0, %v3882
  %v3884 = vpop.f32.mrb[0].mxu0
  %3885 = vdwg.mxu0
  %3886 = vset.pattern.permute.xlu0 2
  %3887 = vperm.xlu0 %3886, %v3313
  %v3888 = vpop.permute.xlu0 %3887
  %v3890 = vadd.f32 %v3878, %v3888
  %v3891 = vlaneseq
  %v3892 = vshrl.u32 %v3891, 7
  %v3893 = vsub.s32 2, %v3892
  %v3894 = vrot.slane %v3480, %v3893
  %v3895 = vadd.f32 %v3890, %v3894
  %s3896 = scalar_lea.vmem %s65, 16
  %3897 = vst.msk [vmem:[%s3896] sm:$0xff] %vm3575, %v3895
  %3898 = vset.pattern.permute.xlu0 2
  %3899 = vperm.xlu0 %3898, %v3318
  %v3900 = vpop.permute.xlu0 %3899
  %v3902 = vadd.f32 %v3883, %v3900
  %v3903 = vadd.f32 %v3902, %v3894
  %3905 = vrot.lane.b32.xlu0 %v3903, 120
  %v3906 = vpop.permute.xlu0 %3905
  %s3908 = scalar_lea.vmem %s65, 80
  %3909 = vst.msk [vmem:[%s3908] sm:$0xff] %vm3575, %v3906
  %3910 = vrot.lane.b32.xlu0 %v3139, 32
  %v3911 = vpop.permute.xlu0 %3910
  %3912 = vrot.lane.b32.xlu0 %v3145, 32
  %v3913 = vpop.permute.xlu0 %3912
  %v3914 = vsel %vm154, %v3911, 0
  %v3916 = vsel %vm154, %v3913, 0
  %3918 = vmatprep.subr.mxu0 0.0
  %3919 = vmatpush1.xpose.msra.mxu0 %v3409
  %3920 = vmatprep.subr.mxu0 0.0
  %3921 = vmatpush1.xpose.msra.mxu0 %v3411
  %3922 = vmatprep.subr.mxu0 0.0
  %3923 = vmatpush1.xpose.msra.mxu0 0.0
  %3924 = vmatprep.subr.mxu0 0.0
  %3925 = vmatpush1.xpose.msra.mxu0 0.0
  %3926 = vmatprep.subr.mxu0 0.0
  %3927 = vmatpush1.xpose.msra.mxu0 0.0
  %3928 = vmatprep.subr.mxu0 0.0
  %3929 = vmatpush1.xpose.msra.mxu0 0.0
  %3930 = vmatprep.subr.mxu0 0.0
  %3931 = vmatpush1.xpose.msra.mxu0 0.0
  %3932 = vmatprep.subr.mxu0 0.0
  %3933 = vmatpush1.xpose.msra.mxu0 0.0
  %3934 = vmatprep.subr.mxu0 0.0
  %3935 = vmatpush1.xpose.msra.mxu0 0.0
  %3936 = vmatprep.subr.mxu0 0.0
  %3937 = vmatpush1.xpose.msra.mxu0 0.0
  %3938 = vmatprep.subr.mxu0 0.0
  %3939 = vmatpush1.xpose.msra.mxu0 0.0
  %3940 = vmatprep.subr.mxu0 0.0
  %3941 = vmatpush1.xpose.msra.mxu0 0.0
  %3942 = vmatprep.subr.mxu0 0.0
  %3943 = vmatpush1.xpose.msra.mxu0 0.0
  %3944 = vmatprep.subr.mxu0 0.0
  %3945 = vmatpush1.xpose.msra.mxu0 0.0
  %3946 = vmatprep.subr.mxu0 0.0
  %3947 = vmatpush1.xpose.msra.mxu0 0.0
  %3948 = vmatprep.subr.mxu0 0.0
  %3949 = vmatpush1.xpose.msra.mxu0 0.0
  %3950 = vmatprep.subr.mxu0 0.0
  %3951 = vmatpush1.xpose.msra.mxu0 0.0
  %3952 = vmatprep.subr.mxu0 0.0
  %3953 = vmatpush1.xpose.msra.mxu0 0.0
  %3954 = vmatprep.subr.mxu0 0.0
  %3955 = vmatpush1.xpose.msra.mxu0 0.0
  %3956 = vmatprep.subr.mxu0 0.0
  %3957 = vmatpush1.xpose.msra.mxu0 0.0
  %3958 = vmatprep.subr.mxu0 0.0
  %3959 = vmatpush1.xpose.msra.mxu0 0.0
  %3960 = vmatprep.subr.mxu0 0.0
  %3961 = vmatpush1.xpose.msra.mxu0 0.0
  %3962 = vmatprep.subr.mxu0 0.0
  %3963 = vmatpush1.xpose.msra.mxu0 0.0
  %3964 = vmatprep.subr.mxu0 0.0
  %3965 = vmatpush1.xpose.msra.mxu0 0.0
  %3966 = vmatprep.subr.mxu0 0.0
  %3967 = vmatpush1.xpose.msra.mxu0 0.0
  %3968 = vmatprep.subr.mxu0 0.0
  %3969 = vmatpush1.xpose.msra.mxu0 0.0
  %3970 = vmatprep.subr.mxu0 0.0
  %3971 = vmatpush1.xpose.msra.mxu0 0.0
  %3972 = vmatprep.subr.mxu0 0.0
  %3973 = vmatpush1.xpose.msra.mxu0 0.0
  %3974 = vmatprep.subr.mxu0 0.0
  %3975 = vmatpush1.xpose.msra.mxu0 0.0
  %3976 = vmatprep.subr.mxu0 0.0
  %3977 = vmatpush1.xpose.msra.mxu0 0.0
  %3978 = vmatprep.subr.mxu0 0.0
  %3979 = vmatpush1.xpose.msra.mxu0 0.0
  %3980 = vmatprep.subr.mxu0 0.0
  %3981 = vmatpush1.xpose.msra.mxu0 0.0
  %3982 = vmatprep.mubr.f32.mxu0 0.0
  %3983 = vmatmul.mubr.f32.gmra.mrb[0].mxu0 %v3914
  %v3984 = vpop.f32.mrb[0].mxu0
  %v3985 = vadd.f32 0.0, %v3984
  %v3986 = vpop.f32.mrb[0].mxu0
  %3987 = vmatprep.mubr.f32.mxu0 0.0
  %3988 = vmatmul.mubr.f32.gmra.mrb[0].mxu0 %v3916
  %v3989 = vpop.f32.mrb[0].mxu0
  %v3990 = vadd.f32 0.0, %v3989
  %v3991 = vpop.f32.mrb[0].mxu0
  %3992 = vdwg.mxu0
  %3993 = vset.pattern.permute.xlu0 3
  %3994 = vperm.xlu0 %3993, %v3313
  %v3995 = vpop.permute.xlu0 %3994
  %v3997 = vadd.f32 %v3985, %v3995
  %v3998 = vlaneseq
  %v3999 = vshrl.u32 %v3998, 7
  %v4000 = vsub.s32 3, %v3999
  %v4001 = vrot.slane %v3480, %v4000
  %v4002 = vadd.f32 %v3997, %v4001
  %s4003 = scalar_lea.vmem %s65, 24
  %4004 = vst.msk [vmem:[%s4003] sm:$0xff] %vm3575, %v4002
  %4005 = vset.pattern.permute.xlu0 3
  %4006 = vperm.xlu0 %4005, %v3318
  %v4007 = vpop.permute.xlu0 %4006
  %v4009 = vadd.f32 %v3990, %v4007
  %v4010 = vadd.f32 %v4009, %v4001
  %4012 = vrot.lane.b32.xlu0 %v4010, 120
  %v4013 = vpop.permute.xlu0 %4012
  %s4015 = scalar_lea.vmem %s65, 88
  %4016 = vst.msk [vmem:[%s4015] sm:$0xff] %vm3575, %v4013
  %v4018 = vsel %vm154, %v3141, 0
  %v4021 = vsel %vm154, %v3147, 0
  %4023 = vmatprep.subr.mxu0 0.0
  %4024 = vmatpush1.xpose.msra.mxu0 %v3409
  %4025 = vmatprep.subr.mxu0 0.0
  %4026 = vmatpush1.xpose.msra.mxu0 %v3411
  %4027 = vmatprep.subr.mxu0 0.0
  %4028 = vmatpush1.xpose.msra.mxu0 0.0
  %4029 = vmatprep.subr.mxu0 0.0
  %4030 = vmatpush1.xpose.msra.mxu0 0.0
  %4031 = vmatprep.subr.mxu0 0.0
  %4032 = vmatpush1.xpose.msra.mxu0 0.0
  %4033 = vmatprep.subr.mxu0 0.0
  %4034 = vmatpush1.xpose.msra.mxu0 0.0
  %4035 = vmatprep.subr.mxu0 0.0
  %4036 = vmatpush1.xpose.msra.mxu0 0.0
  %4037 = vmatprep.subr.mxu0 0.0
  %4038 = vmatpush1.xpose.msra.mxu0 0.0
  %4039 = vmatprep.subr.mxu0 0.0
  %4040 = vmatpush1.xpose.msra.mxu0 0.0
  %4041 = vmatprep.subr.mxu0 0.0
  %4042 = vmatpush1.xpose.msra.mxu0 0.0
  %4043 = vmatprep.subr.mxu0 0.0
  %4044 = vmatpush1.xpose.msra.mxu0 0.0
  %4045 = vmatprep.subr.mxu0 0.0
  %4046 = vmatpush1.xpose.msra.mxu0 0.0
  %4047 = vmatprep.subr.mxu0 0.0
  %4048 = vmatpush1.xpose.msra.mxu0 0.0
  %4049 = vmatprep.subr.mxu0 0.0
  %4050 = vmatpush1.xpose.msra.mxu0 0.0
  %4051 = vmatprep.subr.mxu0 0.0
  %4052 = vmatpush1.xpose.msra.mxu0 0.0
  %4053 = vmatprep.subr.mxu0 0.0
  %4054 = vmatpush1.xpose.msra.mxu0 0.0
  %4055 = vmatprep.subr.mxu0 0.0
  %4056 = vmatpush1.xpose.msra.mxu0 0.0
  %4057 = vmatprep.subr.mxu0 0.0
  %4058 = vmatpush1.xpose.msra.mxu0 0.0
  %4059 = vmatprep.subr.mxu0 0.0
  %4060 = vmatpush1.xpose.msra.mxu0 0.0
  %4061 = vmatprep.subr.mxu0 0.0
  %4062 = vmatpush1.xpose.msra.mxu0 0.0
  %4063 = vmatprep.subr.mxu0 0.0
  %4064 = vmatpush1.xpose.msra.mxu0 0.0
  %4065 = vmatprep.subr.mxu0 0.0
  %4066 = vmatpush1.xpose.msra.mxu0 0.0
  %4067 = vmatprep.subr.mxu0 0.0
  %4068 = vmatpush1.xpose.msra.mxu0 0.0
  %4069 = vmatprep.subr.mxu0 0.0
  %4070 = vmatpush1.xpose.msra.mxu0 0.0
  %4071 = vmatprep.subr.mxu0 0.0
  %4072 = vmatpush1.xpose.msra.mxu0 0.0
  %4073 = vmatprep.subr.mxu0 0.0
  %4074 = vmatpush1.xpose.msra.mxu0 0.0
  %4075 = vmatprep.subr.mxu0 0.0
  %4076 = vmatpush1.xpose.msra.mxu0 0.0
  %4077 = vmatprep.subr.mxu0 0.0
  %4078 = vmatpush1.xpose.msra.mxu0 0.0
  %4079 = vmatprep.subr.mxu0 0.0
  %4080 = vmatpush1.xpose.msra.mxu0 0.0
  %4081 = vmatprep.subr.mxu0 0.0
  %4082 = vmatpush1.xpose.msra.mxu0 0.0
  %4083 = vmatprep.subr.mxu0 0.0
  %4084 = vmatpush1.xpose.msra.mxu0 0.0
  %4085 = vmatprep.subr.mxu0 0.0
  %4086 = vmatpush1.xpose.msra.mxu0 0.0
  %4087 = vmatprep.mubr.f32.mxu0 0.0
  %4088 = vmatmul.mubr.f32.gmra.mrb[0].mxu0 %v4018
  %v4089 = vpop.f32.mrb[0].mxu0
  %v4090 = vadd.f32 0.0, %v4089
  %v4091 = vpop.f32.mrb[0].mxu0
  %4092 = vmatprep.mubr.f32.mxu0 0.0
  %4093 = vmatmul.mubr.f32.gmra.mrb[0].mxu0 %v4021
  %v4094 = vpop.f32.mrb[0].mxu0
  %v4095 = vadd.f32 0.0, %v4094
  %v4096 = vpop.f32.mrb[0].mxu0
  %4097 = vdwg.mxu0
  %4098 = vset.pattern.permute.xlu0 4
  %4099 = vperm.xlu0 %4098, %v3313
  %v4100 = vpop.permute.xlu0 %4099
  %v4102 = vadd.f32 %v4090, %v4100
  %v4103 = vlaneseq
  %v4104 = vshrl.u32 %v4103, 7
  %v4105 = vsub.s32 4, %v4104
  %v4106 = vrot.slane %v3480, %v4105
  %v4107 = vadd.f32 %v4102, %v4106
  %s4108 = scalar_lea.vmem %s65, 32
  %4109 = vst.msk [vmem:[%s4108] sm:$0xff] %vm3575, %v4107
  %4110 = vset.pattern.permute.xlu0 4
  %4111 = vperm.xlu0 %4110, %v3318
  %v4112 = vpop.permute.xlu0 %4111
  %v4114 = vadd.f32 %v4095, %v4112
  %v4115 = vadd.f32 %v4114, %v4106
  %4117 = vrot.lane.b32.xlu0 %v4115, 120
  %v4118 = vpop.permute.xlu0 %4117
  %s4120 = scalar_lea.vmem %s65, 96
  %4121 = vst.msk [vmem:[%s4120] sm:$0xff] %vm3575, %v4118
  %4122 = vrot.lane.b32.xlu0 %v3141, 96
  %v4123 = vpop.permute.xlu0 %4122
  %4124 = vrot.lane.b32.xlu0 %v3147, 96
  %v4125 = vpop.permute.xlu0 %4124
  %v4126 = vsel %vm154, %v4123, 0
  %v4128 = vsel %vm154, %v4125, 0
  %4130 = vmatprep.subr.mxu0 0.0
  %4131 = vmatpush1.xpose.msra.mxu0 %v3409
  %4132 = vmatprep.subr.mxu0 0.0
  %4133 = vmatpush1.xpose.msra.mxu0 %v3411
  %4134 = vmatprep.subr.mxu0 0.0
  %4135 = vmatpush1.xpose.msra.mxu0 0.0
  %4136 = vmatprep.subr.mxu0 0.0
  %4137 = vmatpush1.xpose.msra.mxu0 0.0
  %4138 = vmatprep.subr.mxu0 0.0
  %4139 = vmatpush1.xpose.msra.mxu0 0.0
  %4140 = vmatprep.subr.mxu0 0.0
  %4141 = vmatpush1.xpose.msra.mxu0 0.0
  %4142 = vmatprep.subr.mxu0 0.0
  %4143 = vmatpush1.xpose.msra.mxu0 0.0
  %4144 = vmatprep.subr.mxu0 0.0
  %4145 = vmatpush1.xpose.msra.mxu0 0.0
  %4146 = vmatprep.subr.mxu0 0.0
  %4147 = vmatpush1.xpose.msra.mxu0 0.0
  %4148 = vmatprep.subr.mxu0 0.0
  %4149 = vmatpush1.xpose.msra.mxu0 0.0
  %4150 = vmatprep.subr.mxu0 0.0
  %4151 = vmatpush1.xpose.msra.mxu0 0.0
  %4152 = vmatprep.subr.mxu0 0.0
  %4153 = vmatpush1.xpose.msra.mxu0 0.0
  %4154 = vmatprep.subr.mxu0 0.0
  %4155 = vmatpush1.xpose.msra.mxu0 0.0
  %4156 = vmatprep.subr.mxu0 0.0
  %4157 = vmatpush1.xpose.msra.mxu0 0.0
  %4158 = vmatprep.subr.mxu0 0.0
  %4159 = vmatpush1.xpose.msra.mxu0 0.0
  %4160 = vmatprep.subr.mxu0 0.0
  %4161 = vmatpush1.xpose.msra.mxu0 0.0
  %4162 = vmatprep.subr.mxu0 0.0
  %4163 = vmatpush1.xpose.msra.mxu0 0.0
  %4164 = vmatprep.subr.mxu0 0.0
  %4165 = vmatpush1.xpose.msra.mxu0 0.0
  %4166 = vmatprep.subr.mxu0 0.0
  %4167 = vmatpush1.xpose.msra.mxu0 0.0
  %4168 = vmatprep.subr.mxu0 0.0
  %4169 = vmatpush1.xpose.msra.mxu0 0.0
  %4170 = vmatprep.subr.mxu0 0.0
  %4171 = vmatpush1.xpose.msra.mxu0 0.0
  %4172 = vmatprep.subr.mxu0 0.0
  %4173 = vmatpush1.xpose.msra.mxu0 0.0
  %4174 = vmatprep.subr.mxu0 0.0
  %4175 = vmatpush1.xpose.msra.mxu0 0.0
  %4176 = vmatprep.subr.mxu0 0.0
  %4177 = vmatpush1.xpose.msra.mxu0 0.0
  %4178 = vmatprep.subr.mxu0 0.0
  %4179 = vmatpush1.xpose.msra.mxu0 0.0
  %4180 = vmatprep.subr.mxu0 0.0
  %4181 = vmatpush1.xpose.msra.mxu0 0.0
  %4182 = vmatprep.subr.mxu0 0.0
  %4183 = vmatpush1.xpose.msra.mxu0 0.0
  %4184 = vmatprep.subr.mxu0 0.0
  %4185 = vmatpush1.xpose.msra.mxu0 0.0
  %4186 = vmatprep.subr.mxu0 0.0
  %4187 = vmatpush1.xpose.msra.mxu0 0.0
  %4188 = vmatprep.subr.mxu0 0.0
  %4189 = vmatpush1.xpose.msra.mxu0 0.0
  %4190 = vmatprep.subr.mxu0 0.0
  %4191 = vmatpush1.xpose.msra.mxu0 0.0
  %4192 = vmatprep.subr.mxu0 0.0
  %4193 = vmatpush1.xpose.msra.mxu0 0.0
  %4194 = vmatprep.mubr.f32.mxu0 0.0
  %4195 = vmatmul.mubr.f32.gmra.mrb[0].mxu0 %v4126
  %v4196 = vpop.f32.mrb[0].mxu0
  %v4197 = vadd.f32 0.0, %v4196
  %v4198 = vpop.f32.mrb[0].mxu0
  %4199 = vmatprep.mubr.f32.mxu0 0.0
  %4200 = vmatmul.mubr.f32.gmra.mrb[0].mxu0 %v4128
  %v4201 = vpop.f32.mrb[0].mxu0
  %v4202 = vadd.f32 0.0, %v4201
  %v4203 = vpop.f32.mrb[0].mxu0
  %4204 = vdwg.mxu0
  %4205 = vset.pattern.permute.xlu0 5
  %4206 = vperm.xlu0 %4205, %v3313
  %v4207 = vpop.permute.xlu0 %4206
  %v4209 = vadd.f32 %v4197, %v4207
  %v4210 = vlaneseq
  %v4211 = vshrl.u32 %v4210, 7
  %v4212 = vsub.s32 5, %v4211
  %v4213 = vrot.slane %v3480, %v4212
  %v4214 = vadd.f32 %v4209, %v4213
  %s4215 = scalar_lea.vmem %s65, 40
  %4216 = vst.msk [vmem:[%s4215] sm:$0xff] %vm3575, %v4214
  %4217 = vset.pattern.permute.xlu0 5
  %4218 = vperm.xlu0 %4217, %v3318
  %v4219 = vpop.permute.xlu0 %4218
  %v4221 = vadd.f32 %v4202, %v4219
  %v4222 = vadd.f32 %v4221, %v4213
  %4224 = vrot.lane.b32.xlu0 %v4222, 120
  %v4225 = vpop.permute.xlu0 %4224
  %s4227 = scalar_lea.vmem %s65, 104
  %4228 = vst.msk [vmem:[%s4227] sm:$0xff] %vm3575, %v4225
  %4229 = vrot.lane.b32.xlu0 %v3141, 64
  %v4230 = vpop.permute.xlu0 %4229
  %4231 = vrot.lane.b32.xlu0 %v3147, 64
  %v4232 = vpop.permute.xlu0 %4231
  %v4233 = vsel %vm154, %v4230, 0
  %v4235 = vsel %vm154, %v4232, 0
  %4237 = vmatprep.subr.mxu0 0.0
  %4238 = vmatpush1.xpose.msra.mxu0 %v3409
  %4239 = vmatprep.subr.mxu0 0.0
  %4240 = vmatpush1.xpose.msra.mxu0 %v3411
  %4241 = vmatprep.subr.mxu0 0.0
  %4242 = vmatpush1.xpose.msra.mxu0 0.0
  %4243 = vmatprep.subr.mxu0 0.0
  %4244 = vmatpush1.xpose.msra.mxu0 0.0
  %4245 = vmatprep.subr.mxu0 0.0
  %4246 = vmatpush1.xpose.msra.mxu0 0.0
  %4247 = vmatprep.subr.mxu0 0.0
  %4248 = vmatpush1.xpose.msra.mxu0 0.0
  %4249 = vmatprep.subr.mxu0 0.0
  %4250 = vmatpush1.xpose.msra.mxu0 0.0
  %4251 = vmatprep.subr.mxu0 0.0
  %4252 = vmatpush1.xpose.msra.mxu0 0.0
  %4253 = vmatprep.subr.mxu0 0.0
  %4254 = vmatpush1.xpose.msra.mxu0 0.0
  %4255 = vmatprep.subr.mxu0 0.0
  %4256 = vmatpush1.xpose.msra.mxu0 0.0
  %4257 = vmatprep.subr.mxu0 0.0
  %4258 = vmatpush1.xpose.msra.mxu0 0.0
  %4259 = vmatprep.subr.mxu0 0.0
  %4260 = vmatpush1.xpose.msra.mxu0 0.0
  %4261 = vmatprep.subr.mxu0 0.0
  %4262 = vmatpush1.xpose.msra.mxu0 0.0
  %4263 = vmatprep.subr.mxu0 0.0
  %4264 = vmatpush1.xpose.msra.mxu0 0.0
  %4265 = vmatprep.subr.mxu0 0.0
  %4266 = vmatpush1.xpose.msra.mxu0 0.0
  %4267 = vmatprep.subr.mxu0 0.0
  %4268 = vmatpush1.xpose.msra.mxu0 0.0
  %4269 = vmatprep.subr.mxu0 0.0
  %4270 = vmatpush1.xpose.msra.mxu0 0.0
  %4271 = vmatprep.subr.mxu0 0.0
  %4272 = vmatpush1.xpose.msra.mxu0 0.0
  %4273 = vmatprep.subr.mxu0 0.0
  %4274 = vmatpush1.xpose.msra.mxu0 0.0
  %4275 = vmatprep.subr.mxu0 0.0
  %4276 = vmatpush1.xpose.msra.mxu0 0.0
  %4277 = vmatprep.subr.mxu0 0.0
  %4278 = vmatpush1.xpose.msra.mxu0 0.0
  %4279 = vmatprep.subr.mxu0 0.0
  %4280 = vmatpush1.xpose.msra.mxu0 0.0
  %4281 = vmatprep.subr.mxu0 0.0
  %4282 = vmatpush1.xpose.msra.mxu0 0.0
  %4283 = vmatprep.subr.mxu0 0.0
  %4284 = vmatpush1.xpose.msra.mxu0 0.0
  %4285 = vmatprep.subr.mxu0 0.0
  %4286 = vmatpush1.xpose.msra.mxu0 0.0
  %4287 = vmatprep.subr.mxu0 0.0
  %4288 = vmatpush1.xpose.msra.mxu0 0.0
  %4289 = vmatprep.subr.mxu0 0.0
  %4290 = vmatpush1.xpose.msra.mxu0 0.0
  %4291 = vmatprep.subr.mxu0 0.0
  %4292 = vmatpush1.xpose.msra.mxu0 0.0
  %4293 = vmatprep.subr.mxu0 0.0
  %4294 = vmatpush1.xpose.msra.mxu0 0.0
  %4295 = vmatprep.subr.mxu0 0.0
  %4296 = vmatpush1.xpose.msra.mxu0 0.0
  %4297 = vmatprep.subr.mxu0 0.0
  %4298 = vmatpush1.xpose.msra.mxu0 0.0
  %4299 = vmatprep.subr.mxu0 0.0
  %4300 = vmatpush1.xpose.msra.mxu0 0.0
  %4301 = vmatprep.mubr.f32.mxu0 0.0
  %4302 = vmatmul.mubr.f32.gmra.mrb[0].mxu0 %v4233
  %v4303 = vpop.f32.mrb[0].mxu0
  %v4304 = vadd.f32 0.0, %v4303
  %v4305 = vpop.f32.mrb[0].mxu0
  %4306 = vmatprep.mubr.f32.mxu0 0.0
  %4307 = vmatmul.mubr.f32.gmra.mrb[0].mxu0 %v4235
  %v4308 = vpop.f32.mrb[0].mxu0
  %v4309 = vadd.f32 0.0, %v4308
  %v4310 = vpop.f32.mrb[0].mxu0
  %4311 = vdwg.mxu0
  %4312 = vset.pattern.permute.xlu0 6
  %4313 = vperm.xlu0 %4312, %v3313
  %v4314 = vpop.permute.xlu0 %4313
  %v4316 = vadd.f32 %v4304, %v4314
  %v4317 = vlaneseq
  %v4318 = vshrl.u32 %v4317, 7
  %v4319 = vsub.s32 6, %v4318
  %v4320 = vrot.slane %v3480, %v4319
  %v4321 = vadd.f32 %v4316, %v4320
  %s4322 = scalar_lea.vmem %s65, 48
  %4323 = vst.msk [vmem:[%s4322] sm:$0xff] %vm3575, %v4321
  %4324 = vset.pattern.permute.xlu0 6
  %4325 = vperm.xlu0 %4324, %v3318
  %v4326 = vpop.permute.xlu0 %4325
  %v4328 = vadd.f32 %v4309, %v4326
  %v4329 = vadd.f32 %v4328, %v4320
  %4331 = vrot.lane.b32.xlu0 %v4329, 120
  %v4332 = vpop.permute.xlu0 %4331
  %s4334 = scalar_lea.vmem %s65, 112
  %4335 = vst.msk [vmem:[%s4334] sm:$0xff] %vm3575, %v4332
  %4336 = vrot.lane.b32.xlu0 %v3141, 32
  %v4337 = vpop.permute.xlu0 %4336
  %4338 = vrot.lane.b32.xlu0 %v3147, 32
  %v4339 = vpop.permute.xlu0 %4338
  %v4340 = vsel %vm154, %v4337, 0
  %v4342 = vsel %vm154, %v4339, 0
  %4344 = vmatprep.subr.mxu0 0.0
  %4345 = vmatpush1.xpose.msra.mxu0 %v3409
  %4346 = vmatprep.subr.mxu0 0.0
  %4347 = vmatpush1.xpose.msra.mxu0 %v3411
  %4348 = vmatprep.subr.mxu0 0.0
  %4349 = vmatpush1.xpose.msra.mxu0 0.0
  %4350 = vmatprep.subr.mxu0 0.0
  %4351 = vmatpush1.xpose.msra.mxu0 0.0
  %4352 = vmatprep.subr.mxu0 0.0
  %4353 = vmatpush1.xpose.msra.mxu0 0.0
  %4354 = vmatprep.subr.mxu0 0.0
  %4355 = vmatpush1.xpose.msra.mxu0 0.0
  %4356 = vmatprep.subr.mxu0 0.0
  %4357 = vmatpush1.xpose.msra.mxu0 0.0
  %4358 = vmatprep.subr.mxu0 0.0
  %4359 = vmatpush1.xpose.msra.mxu0 0.0
  %4360 = vmatprep.subr.mxu0 0.0
  %4361 = vmatpush1.xpose.msra.mxu0 0.0
  %4362 = vmatprep.subr.mxu0 0.0
  %4363 = vmatpush1.xpose.msra.mxu0 0.0
  %4364 = vmatprep.subr.mxu0 0.0
  %4365 = vmatpush1.xpose.msra.mxu0 0.0
  %4366 = vmatprep.subr.mxu0 0.0
  %4367 = vmatpush1.xpose.msra.mxu0 0.0
  %4368 = vmatprep.subr.mxu0 0.0
  %4369 = vmatpush1.xpose.msra.mxu0 0.0
  %4370 = vmatprep.subr.mxu0 0.0
  %4371 = vmatpush1.xpose.msra.mxu0 0.0
  %4372 = vmatprep.subr.mxu0 0.0
  %4373 = vmatpush1.xpose.msra.mxu0 0.0
  %4374 = vmatprep.subr.mxu0 0.0
  %4375 = vmatpush1.xpose.msra.mxu0 0.0
  %4376 = vmatprep.subr.mxu0 0.0
  %4377 = vmatpush1.xpose.msra.mxu0 0.0
  %4378 = vmatprep.subr.mxu0 0.0
  %4379 = vmatpush1.xpose.msra.mxu0 0.0
  %4380 = vmatprep.subr.mxu0 0.0
  %4381 = vmatpush1.xpose.msra.mxu0 0.0
  %4382 = vmatprep.subr.mxu0 0.0
  %4383 = vmatpush1.xpose.msra.mxu0 0.0
  %4384 = vmatprep.subr.mxu0 0.0
  %4385 = vmatpush1.xpose.msra.mxu0 0.0
  %4386 = vmatprep.subr.mxu0 0.0
  %4387 = vmatpush1.xpose.msra.mxu0 0.0
  %4388 = vmatprep.subr.mxu0 0.0
  %4389 = vmatpush1.xpose.msra.mxu0 0.0
  %4390 = vmatprep.subr.mxu0 0.0
  %4391 = vmatpush1.xpose.msra.mxu0 0.0
  %4392 = vmatprep.subr.mxu0 0.0
  %4393 = vmatpush1.xpose.msra.mxu0 0.0
  %4394 = vmatprep.subr.mxu0 0.0
  %4395 = vmatpush1.xpose.msra.mxu0 0.0
  %4396 = vmatprep.subr.mxu0 0.0
  %4397 = vmatpush1.xpose.msra.mxu0 0.0
  %4398 = vmatprep.subr.mxu0 0.0
  %4399 = vmatpush1.xpose.msra.mxu0 0.0
  %4400 = vmatprep.subr.mxu0 0.0
  %4401 = vmatpush1.xpose.msra.mxu0 0.0
  %4402 = vmatprep.subr.mxu0 0.0
  %4403 = vmatpush1.xpose.msra.mxu0 0.0
  %4404 = vmatprep.subr.mxu0 0.0
  %4405 = vmatpush1.xpose.msra.mxu0 0.0
  %4406 = vmatprep.subr.mxu0 0.0
  %4407 = vmatpush1.xpose.msra.mxu0 0.0
  %4408 = vmatprep.mubr.f32.mxu0 0.0
  %4409 = vmatmul.mubr.f32.gmra.mrb[0].mxu0 %v4340
  %v4410 = vpop.f32.mrb[0].mxu0
  %v4411 = vadd.f32 0.0, %v4410
  %v4412 = vpop.f32.mrb[0].mxu0
  %4413 = vmatprep.mubr.f32.mxu0 0.0
  %4414 = vmatmul.mubr.f32.gmra.mrb[0].mxu0 %v4342
  %v4415 = vpop.f32.mrb[0].mxu0
  %v4416 = vadd.f32 0.0, %v4415
  %v4417 = vpop.f32.mrb[0].mxu0
  %4418 = vdwg.mxu0
  %4419 = vset.pattern.permute.xlu0 7
  %4420 = vperm.xlu0 %4419, %v3313
  %v4421 = vpop.permute.xlu0 %4420
  %v4423 = vadd.f32 %v4411, %v4421
  %v4424 = vlaneseq
  %v4425 = vshrl.u32 %v4424, 7
  %v4426 = vsub.s32 7, %v4425
  %v4427 = vrot.slane %v3480, %v4426
  %v4428 = vadd.f32 %v4423, %v4427
  %s4429 = scalar_lea.vmem %s65, 56
  %4430 = vst.msk [vmem:[%s4429] sm:$0xff] %vm3575, %v4428
  %4431 = vset.pattern.permute.xlu0 7
  %4432 = vperm.xlu0 %4431, %v3318
  %v4433 = vpop.permute.xlu0 %4432
  %v4435 = vadd.f32 %v4416, %v4433
  %v4436 = vadd.f32 %v4435, %v4427
  %4438 = vrot.lane.b32.xlu0 %v4436, 120
  %v4439 = vpop.permute.xlu0 %4438
  %s4441 = scalar_lea.vmem %s65, 120
  %4442 = vst.msk [vmem:[%s4441] sm:$0xff] %vm3575, %v4439
  // Predicated region
  $region126: #{joint_parser_forward.1} parent=0 // pred_check
    _
  $region127: #{joint_parser_forward.1} parent=0 // pred_check_branch
    %4444 = sbr.rel (0) target = $region129
  $region128: #{joint_parser_forward.1} parent=0 // pred_region
    _
  $region129: #{joint_parser_forward.1} parent=0 // pred_fallthru
    _
  // Predicated region
  $region130: #{joint_parser_forward.1} parent=0 // pred_check
    _
  $region131: #{joint_parser_forward.1} parent=0 // pred_check_branch
    %4446 = sbr.rel (0) target = $region133
  $region132: #{joint_parser_forward.1} parent=0 // pred_region
    _
  $region133: #{joint_parser_forward.1} parent=0 // pred_fallthru
    _
  // Predicated region
  $region134: #{joint_parser_forward.1} parent=0 // pred_check
    _
  $region135: #{joint_parser_forward.1} parent=0 // pred_check_branch
    %4448 = sbr.rel (0) target = $region137
  $region136: #{joint_parser_forward.1} parent=0 // pred_region
    _
  $region137: #{joint_parser_forward.1} parent=0 // pred_fallthru
    _
  // Predicated region
  $region138: #{joint_parser_forward.1} parent=0 // pred_check
    _
  $region139: #{joint_parser_forward.1} parent=0 // pred_check_branch
    %4450 = sbr.rel (0) target = $region141
  $region140: #{joint_parser_forward.1} parent=0 // pred_region
    _
  $region141: #{joint_parser_forward.1} parent=0 // pred_fallthru
    _

</llo_original>
